<compile_context>
chip_gen: v6e
topology: v6e:2x2x1
jax: 0.10.0
libtpu: 0.0.40
codegen_flags: <defaults>
</compile_context>

<pallas_src>
import functools
import math

import numpy as np
import jax
import jax.numpy as jnp
from jax.experimental import pallas as pl
from jax.experimental.pallas import tpu as pltpu


# -----------------------------------------------------------------------------
# Constant matrices for the Adaptive_Spectral_Block (per sequence length N).
# -----------------------------------------------------------------------------
def make_asb_consts(n):
    f = (n - 1) // 2 + 1
    sr, fmin, fmax = 16000.0, 50.0, 6000.0            # as called in ASB.forward
    s = np.arange(n)
    start_bin = fmin * n / sr
    scaling = (fmax - fmin) * (n / sr) / f
    freq = (np.arange(f) * scaling + start_bin) * sr / n
    phase = 2.0 * np.pi * freq[:, None] * s[None, :] / sr
    wsin = np.sin(phase).astype(np.float32)
    wcos = np.cos(phase).astype(np.float32)
    # zero-padded moving average, window=128, cropped to n (F.conv1d semantics)
    w = 128
    t = np.arange(n)[:, None]
    ss = np.arange(n)[None, :]
    avg = ((ss >= t - w // 2) & (ss <= t + w // 2 - 1)).astype(np.float32) / w
    # irfft(n=N, norm='ortho') synthesis: c_0 = 1, c_k = 2.  freq_bins =
    # (N-1)//2 + 1 never reaches the Nyquist bin for even N, so the bin that
    # torch zero-pads is simply absent; the DC sin column is zero anyway.
    kk = np.arange(f)
    ck = np.where(kk == 0, 1.0, 2.0)
    ang = 2.0 * np.pi * np.outer(np.arange(n), kk) / n
    syn_cos = (ck[None, :] * np.cos(ang) / math.sqrt(n)).astype(np.float32)
    syn_sin = (ck[None, :] * np.sin(ang) / math.sqrt(n)).astype(np.float32)
    return dict(f=f, med_count=(f - 1) // 2 + 1,
                avg=jnp.asarray(avg),
                wcos=jnp.asarray(wcos), wsin=jnp.asarray(wsin),
                syn_cos=jnp.asarray(syn_cos), syn_sin=jnp.asarray(syn_sin))


# -----------------------------------------------------------------------------
# PatchEmbed (Conv1d k=8, s=4, p=2) as im2col built from 2 slices (chunk trick).
# -----------------------------------------------------------------------------
def patch_cols(h_nlc, patch_size=8):
    """(B, L, Cin) channels-last -> (B, Lo, K*Cin) with columns k-major, ci-minor."""
    bsz, length, cin = h_nlc.shape
    stride = patch_size // 2                        # 4
    pad = stride // 2                               # 2
    lp = length + 2 * pad
    assert lp % stride == 0, "sequence length must be a multiple of the stride"
    lo = (lp - patch_size) // stride + 1
    xp = jnp.pad(h_nlc, ((0, 0), (pad, pad), (0, 0)))
    chunks = xp.reshape(bsz, lp // stride, stride * cin)      # (B, Lp/4, 4*Cin)
    a = jnp.concatenate([chunks[:, :lo, :], chunks[:, 1:lo + 1, :]], axis=-1)
    return a                                                  # (B, Lo, 8*Cin)


def patch_weight(w):
    """PyTorch Conv1d weight (Cout, Cin, K) -> (K*Cin, Cout), k-major rows."""
    cout, cin, k = w.shape
    return jnp.transpose(w, (2, 1, 0)).reshape(k * cin, cout)


# -----------------------------------------------------------------------------
# Fused stage kernel: PatchEmbed + all Blocks of a stage, grid = (batch, depth).
# -----------------------------------------------------------------------------
def _stage_kernel(a_ref, w2_ref, pb_ref, g_ref, b_ref, wr_ref, wi_ref,
                  whr_ref, whi_ref, thr_ref, cs_ref, cl_ref,
                  avg_ref, wcos_ref, wsin_ref, scos_ref, ssin_ref,
                  o_ref, *, eps, med_count):
    """One Block: x = x + Adaptive_Spectral_Block(norm1(x)).

    The output block (indexed only by batch) stays resident in VMEM across the
    depth grid axis and carries the activation between consecutive Blocks.  At
    d == 0 the PatchEmbed matmul seeds the carry.
    """
    d = pl.program_id(1)

    @pl.when(d == 0)
    def _():
        # PatchEmbed: im2col (N, K*Cin) @ (K*Cin, C) + bias.
        o_ref[0] = (jnp.dot(a_ref[0], w2_ref[...],
                            preferred_element_type=jnp.float32) + pb_ref[...])

    x = o_ref[0]                              # (N, C) carried activation
    gamma = g_ref[0]                          # (1, C)
    beta = b_ref[0]
    thr = thr_ref[0]                          # (1, 1) scalars
    cs = cs_ref[0]
    cl = cl_ref[0]

    # ---- norm1 (LayerNorm over channels) ------------------------------------
    mu = jnp.mean(x, axis=-1, keepdims=True)
    var = jnp.mean(jnp.square(x - mu), axis=-1, keepdims=True)
    xn = (x - mu) * jax.lax.rsqrt(var + eps) * gamma + beta

    # ---- TemporalBackgroundEqualizer: zero-padded moving average (w=128) ----
    # TODO(synk): replace the dense (N,N) averaging matrix by a banded/cumsum
    # formulation before running at long sequence lengths (v7x VMEM).
    ma = jnp.dot(avg_ref[...], xn, preferred_element_type=jnp.float32)
    adj = jnp.where(xn > ma, xn * cs, xn * cl)

    # ---- trainable DFT analysis: x_fft = spec_real - i*spec_imag, (F, C) ----
    xr = jnp.dot(wcos_ref[...], adj, preferred_element_type=jnp.float32)
    xi = -jnp.dot(wsin_ref[...], adj, preferred_element_type=jnp.float32)

    # ---- adaptive high-frequency mask (torch.median == lower median) --------
    e = xr * xr + xi * xi                                     # (F, C)
    f = e.shape[0]
    c = e.shape[1]
    e_col = jnp.sum(e, axis=-1, keepdims=True)                # (F, 1) energy
    ones_c = jnp.ones((1, c), jnp.float32)
    e_row = jax.lax.dot_general(                              # (1, F) energy
        ones_c, e, (((1,), (1,)), ((), ())),
        preferred_element_type=jnp.float32)
    eye = (jax.lax.broadcasted_iota(jnp.int32, (f, f), 0) ==
           jax.lax.broadcasted_iota(jnp.int32, (f, f), 1))
    cmp = jnp.logical_or(e_col <= e_row, eye).astype(jnp.float32)      # (F, F)
    ones_f = jnp.ones((1, f), jnp.float32)
    counts = jnp.dot(ones_f, cmp, preferred_element_type=jnp.float32)  # (1, F)
    cand = jnp.where(counts >= med_count, e_row, jnp.inf)
    median = jnp.min(cand, axis=-1, keepdims=True)            # (1, 1)
    mask = (e_col / (median + 1e-6) > thr).astype(jnp.float32)  # (F, 1)

    # ---- complex weighting: x_fft*W + (x_fft*mask)*W_high --------------------
    wa = wr_ref[0] + mask * whr_ref[0]                        # (F, C)
    wb = wi_ref[0] + mask * whi_ref[0]
    out_r = xr * wa - xi * wb
    out_i = xr * wb + xi * wa

    # ---- irfft(n=N, norm='ortho') synthesis + residual -----------------------
    y = (jnp.dot(scos_ref[...], out_r, preferred_element_type=jnp.float32)
         - jnp.dot(ssin_ref[...], out_i, preferred_element_type=jnp.float32))
    o_ref[0] = x + y


def run_stage(a, w2, pbias, sp, consts):
    bsz, n, kc = a.shape
    c = w2.shape[1]
    depth = sp['ln_g'].shape[0]
    f = consts['f']

    per_block = pl.BlockSpec((1, 1, c), lambda b, d: (d, 0, 0))
    per_scalar = pl.BlockSpec((1, 1, 1), lambda b, d: (d, 0, 0))

    def const2d(shp):
        return pl.BlockSpec(shp, lambda b, d: (0, 0))

    kern = functools.partial(_stage_kernel, eps=1e-5,
                             med_count=consts['med_count'])
    return pl.pallas_call(
        kern,
        grid=(bsz, depth),
        in_specs=[
            pl.BlockSpec((1, n, kc), lambda b, d: (b, 0, 0)),  # im2col patches
            const2d((kc, c)),                                  # patch weight
            const2d((1, c)),                                   # patch bias
            per_block, per_block,                              # ln gamma / beta
            per_block, per_block,                              # complex_weight r/i
            per_block, per_block,                              # complex_weight_high r/i
            per_scalar, per_scalar, per_scalar,                # threshold, coef_s, coef_l
            const2d((n, n)),                                   # moving-average matrix
            const2d((f, n)), const2d((f, n)),                  # DFT cos / sin
            const2d((n, f)), const2d((n, f)),                  # irfft cos / sin
        ],
        out_specs=pl.BlockSpec((1, n, c), lambda b, d: (b, 0, 0)),
        out_shape=jax.ShapeDtypeStruct((bsz, n, c), jnp.float32),
        compiler_params=pltpu.CompilerParams(
            dimension_semantics=("parallel", "arbitrary")),
    )(a, w2, pbias,
      sp['ln_g'], sp['ln_b'], sp['w_r'], sp['w_i'], sp['wh_r'], sp['wh_i'],
      sp['thr'], sp['cs'], sp['cl'],
      consts['avg'], consts['wcos'], consts['wsin'],
      consts['syn_cos'], consts['syn_sin'])


# -----------------------------------------------------------------------------
# Fused head: LayerNorm(eps=1e-6) + AdaptiveAvgPool1d(1) + Linear, channels-last.
# -----------------------------------------------------------------------------
def _head_kernel(x_ref, g_ref, b_ref, pool_ref, w_ref, hb_ref, o_ref, *, eps):
    x = x_ref[...]                                   # (B*N, C)
    mu = jnp.mean(x, axis=-1, keepdims=True)
    var = jnp.mean(jnp.square(x - mu), axis=-1, keepdims=True)
    xn = (x - mu) * jax.lax.rsqrt(var + eps) * g_ref[...] + b_ref[...]
    pooled = jnp.dot(pool_ref[...], xn, preferred_element_type=jnp.float32)  # (B, C)
    o_ref[...] = (jnp.dot(pooled, w_ref[...], preferred_element_type=jnp.float32)
                  + hb_ref[...])


def pallas_head(h, norm_g, norm_b, head_w, head_b, eps=1e-6):
    bsz, n, c = h.shape
    k = head_w.shape[1]
    x2 = h.reshape(bsz * n, c)
    pool = jnp.asarray(np.kron(np.eye(bsz, dtype=np.float32),
                               np.full((1, n), 1.0 / n, np.float32)))
    return pl.pallas_call(
        functools.partial(_head_kernel, eps=eps),
        out_shape=jax.ShapeDtypeStruct((bsz, k), jnp.float32),
        in_specs=[pl.BlockSpec(memory_space=pltpu.MemorySpace.VMEM)] * 6,
        out_specs=pl.BlockSpec(memory_space=pltpu.MemorySpace.VMEM),
    )(x2, norm_g.reshape(1, c), norm_b.reshape(1, c), pool,
      head_w, head_b.reshape(1, k))


# -----------------------------------------------------------------------------
# Parameters (deterministic synthetic init), stacked per stage over depth.
# -----------------------------------------------------------------------------
def init_restv2_params(key, embed_dims, depths, num_classes):
    params = {'patch': [], 'stages': []}
    in_c = 1
    for dim in embed_dims:
        key, k1, k2 = jax.random.split(key, 3)
        params['patch'].append({
            'w': 0.02 * jax.random.normal(k1, (dim, in_c, 8), jnp.float32),
            'b': 0.01 * jax.random.normal(k2, (dim,), jnp.float32),
        })
        in_c = dim
    for si, dim in enumerate(embed_dims):
        dep = depths[si]
        key, k1, k2, k3, k4, k5, k6, k7 = jax.random.split(key, 8)
        params['stages'].append({
            'ln_g': jnp.ones((dep, 1, dim), jnp.float32),
            'ln_b': jnp.zeros((dep, 1, dim), jnp.float32),
            'w_r': 0.02 * jax.random.normal(k1, (dep, 1, dim), jnp.float32),
            'w_i': 0.02 * jax.random.normal(k2, (dep, 1, dim), jnp.float32),
            'wh_r': 0.02 * jax.random.normal(k3, (dep, 1, dim), jnp.float32),
            'wh_i': 0.02 * jax.random.normal(k4, (dep, 1, dim), jnp.float32),
            'thr': jax.random.uniform(k5, (dep, 1, 1), jnp.float32),
            'cs': jax.random.uniform(k6, (dep, 1, 1), jnp.float32),          # coef_small
            'cl': jax.random.uniform(k7, (dep, 1, 1), jnp.float32) + 1.0,    # coef_large
        })
    key, kh = jax.random.split(key)
    d_last = embed_dims[-1]
    params['norm_g'] = jnp.ones((d_last,), jnp.float32)
    params['norm_b'] = jnp.zeros((d_last,), jnp.float32)
    params['head_w'] = 0.02 * jax.random.normal(kh, (d_last, num_classes), jnp.float32)
    params['head_b'] = jnp.zeros((num_classes,), jnp.float32)
    return params


# -----------------------------------------------------------------------------
# Full forward: 4 fused stage kernels + 1 fused head kernel.
# -----------------------------------------------------------------------------
def restv2_forward(x_ncl, params, stage_consts):
    h = jnp.transpose(x_ncl, (0, 2, 1))            # (B, L, 1) channels-last
    for si, pe in enumerate(params['patch']):
        a = patch_cols(h)                          # (B, N_si, 8*Cin)
        w2 = patch_weight(pe['w'])
        h = run_stage(a, w2, pe['b'].reshape(1, -1),
                      params['stages'][si], stage_consts[si])   # (B, N_si, C_si)
    return pallas_head(h, params['norm_g'], params['norm_b'],
                       params['head_w'], params['head_b'])


if __name__ == "__main__":
    EMBED_DIMS = [16, 32, 64, 128]     # small synthetic dims (ICB path disabled)
    DEPTHS = [2, 2, 2, 2]
    NUM_CLASSES = 5
    B, L = 2, 1024

    key = jax.random.PRNGKey(0)
    kx, kp = jax.random.split(key)
    x = jax.random.normal(kx, (B, 1, L), dtype=jnp.float32)   # (batch, 1, length)
    params = init_restv2_params(kp, EMBED_DIMS, DEPTHS, NUM_CLASSES)

    # sequence lengths after each PatchEmbed (k=8, s=4, p=2): 256, 64, 16, 4
    seq_lens = []
    length = L
    for _ in EMBED_DIMS:
        length = (length + 4 - 8) // 4 + 1
        seq_lens.append(length)
    stage_consts = [make_asb_consts(n) for n in seq_lens]

    fwd = jax.jit(lambda inp: restv2_forward(inp, params, stage_consts))
    logits = fwd(x)
    jax.block_until_ready(logits)

    assert logits.shape == (B, NUM_CLASSES)
    assert bool(jnp.all(jnp.isfinite(logits)))
    print("KERNEL_OK")
</pallas_src>

<mosaic_0001>
module attributes {stable_mosaic.version = 11 : i64} {
  func.func @_stage_kernel(%arg0: i32, %arg1: i32, %arg2: memref<1x256x8xf32, #tpu.memory_space<vmem>>, %arg3: memref<8x16xf32, #tpu.memory_space<vmem>>, %arg4: memref<1x16xf32, #tpu.memory_space<vmem>>, %arg5: memref<1x1x16xf32, #tpu.memory_space<vmem>>, %arg6: memref<1x1x16xf32, #tpu.memory_space<vmem>>, %arg7: memref<1x1x16xf32, #tpu.memory_space<vmem>>, %arg8: memref<1x1x16xf32, #tpu.memory_space<vmem>>, %arg9: memref<1x1x16xf32, #tpu.memory_space<vmem>>, %arg10: memref<1x1x16xf32, #tpu.memory_space<vmem>>, %arg11: memref<1x1x1xf32, #tpu.memory_space<vmem>>, %arg12: memref<1x1x1xf32, #tpu.memory_space<vmem>>, %arg13: memref<1x1x1xf32, #tpu.memory_space<vmem>>, %arg14: memref<256x256xf32, #tpu.memory_space<vmem>>, %arg15: memref<128x256xf32, #tpu.memory_space<vmem>>, %arg16: memref<128x256xf32, #tpu.memory_space<vmem>>, %arg17: memref<256x128xf32, #tpu.memory_space<vmem>>, %arg18: memref<256x128xf32, #tpu.memory_space<vmem>>, %arg19: memref<1x256x16xf32, #tpu.memory_space<vmem>>) attributes {dimension_semantics = [#tpu.dimension_semantics<parallel>, #tpu.dimension_semantics<arbitrary>], iteration_bounds = array<i64: 2, 2>, scalar_prefetch = 0 : i64, scratch_operands = 0 : i64, tpu.core_type = #tpu.core_type<tc>, window_params = [{transform_indices = @transform_0, window_bounds = array<i64: 1, 256, 8>}, {pipeline_mode = #tpu.pipeline_mode<synchronous>, transform_indices = @transform_1, window_bounds = array<i64: 8, 16>}, {pipeline_mode = #tpu.pipeline_mode<synchronous>, transform_indices = @transform_2, window_bounds = array<i64: 1, 16>}, {transform_indices = @transform_3, window_bounds = array<i64: 1, 1, 16>}, {transform_indices = @transform_4, window_bounds = array<i64: 1, 1, 16>}, {transform_indices = @transform_5, window_bounds = array<i64: 1, 1, 16>}, {transform_indices = @transform_6, window_bounds = array<i64: 1, 1, 16>}, {transform_indices = @transform_7, window_bounds = array<i64: 1, 1, 16>}, {transform_indices = @transform_8, window_bounds = array<i64: 1, 1, 16>}, {transform_indices = @transform_9, window_bounds = array<i64: 1, 1, 1>}, {transform_indices = @transform_10, window_bounds = array<i64: 1, 1, 1>}, {transform_indices = @transform_11, window_bounds = array<i64: 1, 1, 1>}, {pipeline_mode = #tpu.pipeline_mode<synchronous>, transform_indices = @transform_12, window_bounds = array<i64: 256, 256>}, {pipeline_mode = #tpu.pipeline_mode<synchronous>, transform_indices = @transform_13, window_bounds = array<i64: 128, 256>}, {pipeline_mode = #tpu.pipeline_mode<synchronous>, transform_indices = @transform_14, window_bounds = array<i64: 128, 256>}, {pipeline_mode = #tpu.pipeline_mode<synchronous>, transform_indices = @transform_15, window_bounds = array<i64: 256, 128>}, {pipeline_mode = #tpu.pipeline_mode<synchronous>, transform_indices = @transform_16, window_bounds = array<i64: 256, 128>}, {transform_indices = @transform_17, window_bounds = array<i64: 1, 256, 16>}]} {
    %c0_i32 = arith.constant 0 : i32
    %0 = arith.cmpi eq, %arg1, %c0_i32 : i32
    %1 = arith.extui %0 : i1 to i32
    %c0_i32_0 = arith.constant 0 : i32
    %2 = arith.cmpi ne, %1, %c0_i32_0 : i32
    scf.if %2 {
      %c0_62 = arith.constant 0 : index
      %c0_63 = arith.constant 0 : index
      %c0_64 = arith.constant 0 : index
      %116 = vector.load %arg2[%c0_62, %c0_63, %c0_64] : memref<1x256x8xf32, #tpu.memory_space<vmem>>, vector<1x256x8xf32>
      %117 = vector.shape_cast %116 : vector<1x256x8xf32> to vector<256x8xf32>
      %c0_65 = arith.constant 0 : index
      %c0_66 = arith.constant 0 : index
      %118 = vector.load %arg3[%c0_65, %c0_66] : memref<8x16xf32, #tpu.memory_space<vmem>>, vector<8x16xf32>
      %cst_67 = arith.constant dense<0.000000e+00> : vector<256x16xf32>
      %119 = tpu.matmul %117, %118, %cst_67 {dimension_numbers = #tpu.dot_dimension_numbers<[1], [0], [0], [1], [0, 0, 1, 1], [], []>} : vector<256x8xf32>, vector<8x16xf32>, vector<256x16xf32> -> vector<256x16xf32>
      %c0_68 = arith.constant 0 : index
      %c0_69 = arith.constant 0 : index
      %120 = vector.load %arg4[%c0_68, %c0_69] : memref<1x16xf32, #tpu.memory_space<vmem>>, vector<1x16xf32>
      %121 = vector.broadcast %120 : vector<1x16xf32> to vector<256x16xf32>
      %122 = arith.addf %119, %121 : vector<256x16xf32>
      %c0_70 = arith.constant 0 : index
      %c0_71 = arith.constant 0 : index
      %c0_72 = arith.constant 0 : index
      %123 = vector.load %arg19[%c0_70, %c0_71, %c0_72] : memref<1x256x16xf32, #tpu.memory_space<vmem>>, vector<1x256x16xf32>
      %124 = vector.shape_cast %123 : vector<1x256x16xf32> to vector<256x16xf32>
      %125 = vector.shape_cast %122 : vector<256x16xf32> to vector<1x256x16xf32>
      tpu.vector_store %arg19[%c0_70, %c0_71, %c0_72], %125 {strides = array<i32>} : memref<1x256x16xf32, #tpu.memory_space<vmem>>, vector<1x256x16xf32>,
    } else {
    }
    %c0 = arith.constant 0 : index
    %c0_1 = arith.constant 0 : index
    %c0_2 = arith.constant 0 : index
    %3 = vector.load %arg19[%c0, %c0_1, %c0_2] : memref<1x256x16xf32, #tpu.memory_space<vmem>>, vector<1x256x16xf32>
    %4 = vector.shape_cast %3 : vector<1x256x16xf32> to vector<256x16xf32>
    %c0_3 = arith.constant 0 : index
    %c0_4 = arith.constant 0 : index
    %c0_5 = arith.constant 0 : index
    %5 = vector.load %arg5[%c0_3, %c0_4, %c0_5] : memref<1x1x16xf32, #tpu.memory_space<vmem>>, vector<1x1x16xf32>
    %6 = vector.shape_cast %5 : vector<1x1x16xf32> to vector<1x16xf32>
    %c0_6 = arith.constant 0 : index
    %c0_7 = arith.constant 0 : index
    %c0_8 = arith.constant 0 : index
    %7 = vector.load %arg6[%c0_6, %c0_7, %c0_8] : memref<1x1x16xf32, #tpu.memory_space<vmem>>, vector<1x1x16xf32>
    %8 = vector.shape_cast %7 : vector<1x1x16xf32> to vector<1x16xf32>
    %c0_9 = arith.constant 0 : index
    %c0_10 = arith.constant 0 : index
    %c0_11 = arith.constant 0 : index
    %9 = vector.load %arg11[%c0_9, %c0_10, %c0_11] : memref<1x1x1xf32, #tpu.memory_space<vmem>>, vector<1x1x1xf32>
    %10 = vector.shape_cast %9 : vector<1x1x1xf32> to vector<1x1xf32>
    %c0_12 = arith.constant 0 : index
    %c0_13 = arith.constant 0 : index
    %c0_14 = arith.constant 0 : index
    %11 = vector.load %arg12[%c0_12, %c0_13, %c0_14] : memref<1x1x1xf32, #tpu.memory_space<vmem>>, vector<1x1x1xf32>
    %12 = vector.shape_cast %11 : vector<1x1x1xf32> to vector<1x1xf32>
    %c0_15 = arith.constant 0 : index
    %c0_16 = arith.constant 0 : index
    %c0_17 = arith.constant 0 : index
    %13 = vector.load %arg13[%c0_15, %c0_16, %c0_17] : memref<1x1x1xf32, #tpu.memory_space<vmem>>, vector<1x1x1xf32>
    %14 = vector.shape_cast %13 : vector<1x1x1xf32> to vector<1x1xf32>
    %cst = arith.constant dense<0.000000e+00> : vector<256xf32>
    %15 = vector.multi_reduction <add>, %4, %cst [1] : vector<256x16xf32> to vector<256xf32>
    %16 = vector.shape_cast %15 : vector<256xf32> to vector<256x1xf32>
    %cst_18 = arith.constant 1.600000e+01 : f32
    %17 = vector.broadcast %cst_18 : f32 to vector<256x1xf32>
    %18 = arith.divf %16, %17 : vector<256x1xf32>
    %19 = vector.broadcast %18 : vector<256x1xf32> to vector<256x16xf32>
    %20 = arith.subf %4, %19 : vector<256x16xf32>
    %21 = arith.mulf %20, %20 : vector<256x16xf32>
    %cst_19 = arith.constant dense<0.000000e+00> : vector<256xf32>
    %22 = vector.multi_reduction <add>, %21, %cst_19 [1] : vector<256x16xf32> to vector<256xf32>
    %23 = vector.shape_cast %22 : vector<256xf32> to vector<256x1xf32>
    %cst_20 = arith.constant 1.600000e+01 : f32
    %24 = vector.broadcast %cst_20 : f32 to vector<256x1xf32>
    %25 = arith.divf %23, %24 : vector<256x1xf32>
    %26 = vector.broadcast %18 : vector<256x1xf32> to vector<256x16xf32>
    %27 = arith.subf %4, %26 : vector<256x16xf32>
    %cst_21 = arith.constant 9.99999974E-6 : f32
    %28 = vector.broadcast %cst_21 : f32 to vector<256x1xf32>
    %29 = arith.addf %25, %28 : vector<256x1xf32>
    %30 = math.rsqrt %29 : vector<256x1xf32>
    %31 = vector.broadcast %30 : vector<256x1xf32> to vector<256x16xf32>
    %32 = arith.mulf %27, %31 : vector<256x16xf32>
    %33 = vector.broadcast %6 : vector<1x16xf32> to vector<256x16xf32>
    %34 = arith.mulf %32, %33 : vector<256x16xf32>
    %35 = vector.broadcast %8 : vector<1x16xf32> to vector<256x16xf32>
    %36 = arith.addf %34, %35 : vector<256x16xf32>
    %c0_22 = arith.constant 0 : index
    %c0_23 = arith.constant 0 : index
    %37 = vector.load %arg14[%c0_22, %c0_23] : memref<256x256xf32, #tpu.memory_space<vmem>>, vector<256x256xf32>
    %cst_24 = arith.constant dense<0.000000e+00> : vector<256x16xf32>
    %38 = tpu.matmul %37, %36, %cst_24 {dimension_numbers = #tpu.dot_dimension_numbers<[1], [0], [0], [1], [0, 0, 1, 1], [], []>} : vector<256x256xf32>, vector<256x16xf32>, vector<256x16xf32> -> vector<256x16xf32>
    %39 = arith.cmpf ogt, %36, %38 : vector<256x16xf32>
    %40 = vector.broadcast %12 : vector<1x1xf32> to vector<256x16xf32>
    %41 = arith.mulf %36, %40 : vector<256x16xf32>
    %42 = vector.broadcast %14 : vector<1x1xf32> to vector<256x16xf32>
    %43 = arith.mulf %36, %42 : vector<256x16xf32>
    %44 = arith.select %39, %41, %43 : vector<256x16xi1>, vector<256x16xf32>
    %c0_25 = arith.constant 0 : index
    %c0_26 = arith.constant 0 : index
    %45 = vector.load %arg15[%c0_25, %c0_26] : memref<128x256xf32, #tpu.memory_space<vmem>>, vector<128x256xf32>
    %cst_27 = arith.constant dense<0.000000e+00> : vector<128x16xf32>
    %46 = tpu.matmul %45, %44, %cst_27 {dimension_numbers = #tpu.dot_dimension_numbers<[1], [0], [0], [1], [0, 0, 1, 1], [], []>} : vector<128x256xf32>, vector<256x16xf32>, vector<128x16xf32> -> vector<128x16xf32>
    %c0_28 = arith.constant 0 : index
    %c0_29 = arith.constant 0 : index
    %47 = vector.load %arg16[%c0_28, %c0_29] : memref<128x256xf32, #tpu.memory_space<vmem>>, vector<128x256xf32>
    %cst_30 = arith.constant dense<0.000000e+00> : vector<128x16xf32>
    %48 = tpu.matmul %47, %44, %cst_30 {dimension_numbers = #tpu.dot_dimension_numbers<[1], [0], [0], [1], [0, 0, 1, 1], [], []>} : vector<128x256xf32>, vector<256x16xf32>, vector<128x16xf32> -> vector<128x16xf32>
    %cst_31 = arith.constant 0.000000e+00 : f32
    %49 = vector.broadcast %cst_31 : f32 to vector<128x16xf32>
    %50 = arith.subf %49, %48 : vector<128x16xf32>
    %51 = arith.mulf %46, %46 : vector<128x16xf32>
    %52 = arith.mulf %50, %50 : vector<128x16xf32>
    %53 = arith.addf %51, %52 : vector<128x16xf32>
    %cst_32 = arith.constant dense<0.000000e+00> : vector<128xf32>
    %54 = vector.multi_reduction <add>, %53, %cst_32 [1] : vector<128x16xf32> to vector<128xf32>
    %55 = vector.shape_cast %54 : vector<128xf32> to vector<128x1xf32>
    %cst_33 = arith.constant 1.000000e+00 : f32
    %56 = vector.broadcast %cst_33 : f32 to vector<1x16xf32>
    %cst_34 = arith.constant dense<0.000000e+00> : vector<1x128xf32>
    %57 = tpu.matmul %56, %53, %cst_34 {dimension_numbers = #tpu.dot_dimension_numbers<[1], [1], [0], [0], [0, 0, 1, 0], [], []>} : vector<1x16xf32>, vector<128x16xf32>, vector<1x128xf32> -> vector<1x128xf32>
    %58 = tpu.iota {dimensions = array<i32: 0>} : vector<128x128xi32>
    %59 = tpu.iota {dimensions = array<i32: 1>} : vector<128x128xi32>
    %60 = arith.cmpi eq, %58, %59 : vector<128x128xi32>
    %61 = vector.broadcast %55 : vector<128x1xf32> to vector<128x128xf32>
    %62 = vector.broadcast %57 : vector<1x128xf32> to vector<128x128xf32>
    %63 = arith.cmpf ole, %61, %62 : vector<128x128xf32>
    %64 = arith.ori %63, %60 : vector<128x128xi1>
    %65 = arith.extui %64 : vector<128x128xi1> to vector<128x128xi32>
    %66 = arith.sitofp %65 : vector<128x128xi32> to vector<128x128xf32>
    %cst_35 = arith.constant 1.000000e+00 : f32
    %67 = vector.broadcast %cst_35 : f32 to vector<1x128xf32>
    %cst_36 = arith.constant dense<0.000000e+00> : vector<1x128xf32>
    %68 = tpu.matmul %67, %66, %cst_36 {dimension_numbers = #tpu.dot_dimension_numbers<[1], [0], [0], [1], [0, 0, 1, 1], [], []>} : vector<1x128xf32>, vector<128x128xf32>, vector<1x128xf32> -> vector<1x128xf32>
    %cst_37 = arith.constant 6.400000e+01 : f32
    %69 = vector.broadcast %cst_37 : f32 to vector<1x128xf32>
    %70 = arith.cmpf oge, %68, %69 : vector<1x128xf32>
    %cst_38 = arith.constant 0x7F800000 : f32
    %71 = vector.broadcast %cst_38 : f32 to vector<1x128xf32>
    %72 = arith.select %70, %57, %71 : vector<1x128xi1>, vector<1x128xf32>
    %cst_39 = arith.constant dense<0x7F800000> : vector<1xf32>
    %73 = vector.multi_reduction <minimumf>, %72, %cst_39 [1] : vector<1x128xf32> to vector<1xf32>
    %74 = vector.shape_cast %73 : vector<1xf32> to vector<1x1xf32>
    %cst_40 = arith.constant 9.99999997E-7 : f32
    %75 = vector.broadcast %cst_40 : f32 to vector<1x1xf32>
    %76 = arith.addf %74, %75 : vector<1x1xf32>
    %77 = vector.broadcast %76 : vector<1x1xf32> to vector<128x1xf32>
    %78 = arith.divf %55, %77 : vector<128x1xf32>
    %79 = vector.broadcast %10 : vector<1x1xf32> to vector<128x1xf32>
    %80 = arith.cmpf ogt, %78, %79 : vector<128x1xf32>
    %81 = arith.extui %80 : vector<128x1xi1> to vector<128x1xi32>
    %82 = arith.sitofp %81 : vector<128x1xi32> to vector<128x1xf32>
    %c0_41 = arith.constant 0 : index
    %c0_42 = arith.constant 0 : index
    %c0_43 = arith.constant 0 : index
    %83 = vector.load %arg7[%c0_41, %c0_42, %c0_43] : memref<1x1x16xf32, #tpu.memory_space<vmem>>, vector<1x1x16xf32>
    %84 = vector.shape_cast %83 : vector<1x1x16xf32> to vector<1x16xf32>
    %c0_44 = arith.constant 0 : index
    %c0_45 = arith.constant 0 : index
    %c0_46 = arith.constant 0 : index
    %85 = vector.load %arg9[%c0_44, %c0_45, %c0_46] : memref<1x1x16xf32, #tpu.memory_space<vmem>>, vector<1x1x16xf32>
    %86 = vector.shape_cast %85 : vector<1x1x16xf32> to vector<1x16xf32>
    %87 = vector.broadcast %82 : vector<128x1xf32> to vector<128x16xf32>
    %88 = vector.broadcast %86 : vector<1x16xf32> to vector<128x16xf32>
    %89 = arith.mulf %87, %88 : vector<128x16xf32>
    %90 = vector.broadcast %84 : vector<1x16xf32> to vector<128x16xf32>
    %91 = arith.addf %90, %89 : vector<128x16xf32>
    %c0_47 = arith.constant 0 : index
    %c0_48 = arith.constant 0 : index
    %c0_49 = arith.constant 0 : index
    %92 = vector.load %arg8[%c0_47, %c0_48, %c0_49] : memref<1x1x16xf32, #tpu.memory_space<vmem>>, vector<1x1x16xf32>
    %93 = vector.shape_cast %92 : vector<1x1x16xf32> to vector<1x16xf32>
    %c0_50 = arith.constant 0 : index
    %c0_51 = arith.constant 0 : index
    %c0_52 = arith.constant 0 : index
    %94 = vector.load %arg10[%c0_50, %c0_51, %c0_52] : memref<1x1x16xf32, #tpu.memory_space<vmem>>, vector<1x1x16xf32>
    %95 = vector.shape_cast %94 : vector<1x1x16xf32> to vector<1x16xf32>
    %96 = vector.broadcast %82 : vector<128x1xf32> to vector<128x16xf32>
    %97 = vector.broadcast %95 : vector<1x16xf32> to vector<128x16xf32>
    %98 = arith.mulf %96, %97 : vector<128x16xf32>
    %99 = vector.broadcast %93 : vector<1x16xf32> to vector<128x16xf32>
    %100 = arith.addf %99, %98 : vector<128x16xf32>
    %101 = arith.mulf %46, %91 : vector<128x16xf32>
    %102 = arith.mulf %50, %100 : vector<128x16xf32>
    %103 = arith.subf %101, %102 : vector<128x16xf32>
    %104 = arith.mulf %46, %100 : vector<128x16xf32>
    %105 = arith.mulf %50, %91 : vector<128x16xf32>
    %106 = arith.addf %104, %105 : vector<128x16xf32>
    %c0_53 = arith.constant 0 : index
    %c0_54 = arith.constant 0 : index
    %107 = vector.load %arg17[%c0_53, %c0_54] : memref<256x128xf32, #tpu.memory_space<vmem>>, vector<256x128xf32>
    %cst_55 = arith.constant dense<0.000000e+00> : vector<256x16xf32>
    %108 = tpu.matmul %107, %103, %cst_55 {dimension_numbers = #tpu.dot_dimension_numbers<[1], [0], [0], [1], [0, 0, 1, 1], [], []>} : vector<256x128xf32>, vector<128x16xf32>, vector<256x16xf32> -> vector<256x16xf32>
    %c0_56 = arith.constant 0 : index
    %c0_57 = arith.constant 0 : index
    %109 = vector.load %arg18[%c0_56, %c0_57] : memref<256x128xf32, #tpu.memory_space<vmem>>, vector<256x128xf32>
    %cst_58 = arith.constant dense<0.000000e+00> : vector<256x16xf32>
    %110 = tpu.matmul %109, %106, %cst_58 {dimension_numbers = #tpu.dot_dimension_numbers<[1], [0], [0], [1], [0, 0, 1, 1], [], []>} : vector<256x128xf32>, vector<128x16xf32>, vector<256x16xf32> -> vector<256x16xf32>
    %111 = arith.subf %108, %110 : vector<256x16xf32>
    %112 = arith.addf %4, %111 : vector<256x16xf32>
    %c0_59 = arith.constant 0 : index
    %c0_60 = arith.constant 0 : index
    %c0_61 = arith.constant 0 : index
    %113 = vector.load %arg19[%c0_59, %c0_60, %c0_61] : memref<1x256x16xf32, #tpu.memory_space<vmem>>, vector<1x256x16xf32>
    %114 = vector.shape_cast %113 : vector<1x256x16xf32> to vector<256x16xf32>
    %115 = vector.shape_cast %112 : vector<256x16xf32> to vector<1x256x16xf32>
    tpu.vector_store %arg19[%c0_59, %c0_60, %c0_61], %115 {strides = array<i32>} : memref<1x256x16xf32, #tpu.memory_space<vmem>>, vector<1x256x16xf32>,
    return
  }
  func.func @transform_0(%arg0: i32, %arg1: i32) -> (i32, i32, i32) {
    %c0_i32 = arith.constant 0 : i32
    %c0_i32_0 = arith.constant 0 : i32
    %c0_i32_1 = arith.constant 0 : i32
    return %arg0, %c0_i32, %c0_i32_0 : i32, i32, i32
  }
  func.func @transform_1(%arg0: i32, %arg1: i32) -> (i32, i32) {
    %c0_i32 = arith.constant 0 : i32
    %c0_i32_0 = arith.constant 0 : i32
    %c0_i32_1 = arith.constant 0 : i32
    return %c0_i32, %c0_i32_0 : i32, i32
  }
  func.func @transform_2(%arg0: i32, %arg1: i32) -> (i32, i32) {
    %c0_i32 = arith.constant 0 : i32
    %c0_i32_0 = arith.constant 0 : i32
    %c0_i32_1 = arith.constant 0 : i32
    return %c0_i32, %c0_i32_0 : i32, i32
  }
  func.func @transform_3(%arg0: i32, %arg1: i32) -> (i32, i32, i32) {
    %c0_i32 = arith.constant 0 : i32
    %c0_i32_0 = arith.constant 0 : i32
    %c0_i32_1 = arith.constant 0 : i32
    return %arg1, %c0_i32, %c0_i32_0 : i32, i32, i32
  }
  func.func @transform_4(%arg0: i32, %arg1: i32) -> (i32, i32, i32) {
    %c0_i32 = arith.constant 0 : i32
    %c0_i32_0 = arith.constant 0 : i32
    %c0_i32_1 = arith.constant 0 : i32
    return %arg1, %c0_i32, %c0_i32_0 : i32, i32, i32
  }
  func.func @transform_5(%arg0: i32, %arg1: i32) -> (i32, i32, i32) {
    %c0_i32 = arith.constant 0 : i32
    %c0_i32_0 = arith.constant 0 : i32
    %c0_i32_1 = arith.constant 0 : i32
    return %arg1, %c0_i32, %c0_i32_0 : i32, i32, i32
  }
  func.func @transform_6(%arg0: i32, %arg1: i32) -> (i32, i32, i32) {
    %c0_i32 = arith.constant 0 : i32
    %c0_i32_0 = arith.constant 0 : i32
    %c0_i32_1 = arith.constant 0 : i32
    return %arg1, %c0_i32, %c0_i32_0 : i32, i32, i32
  }
  func.func @transform_7(%arg0: i32, %arg1: i32) -> (i32, i32, i32) {
    %c0_i32 = arith.constant 0 : i32
    %c0_i32_0 = arith.constant 0 : i32
    %c0_i32_1 = arith.constant 0 : i32
    return %arg1, %c0_i32, %c0_i32_0 : i32, i32, i32
  }
  func.func @transform_8(%arg0: i32, %arg1: i32) -> (i32, i32, i32) {
    %c0_i32 = arith.constant 0 : i32
    %c0_i32_0 = arith.constant 0 : i32
    %c0_i32_1 = arith.constant 0 : i32
    return %arg1, %c0_i32, %c0_i32_0 : i32, i32, i32
  }
  func.func @transform_9(%arg0: i32, %arg1: i32) -> (i32, i32, i32) {
    %c0_i32 = arith.constant 0 : i32
    %c0_i32_0 = arith.constant 0 : i32
    %c0_i32_1 = arith.constant 0 : i32
    return %arg1, %c0_i32, %c0_i32_0 : i32, i32, i32
  }
  func.func @transform_10(%arg0: i32, %arg1: i32) -> (i32, i32, i32) {
    %c0_i32 = arith.constant 0 : i32
    %c0_i32_0 = arith.constant 0 : i32
    %c0_i32_1 = arith.constant 0 : i32
    return %arg1, %c0_i32, %c0_i32_0 : i32, i32, i32
  }
  func.func @transform_11(%arg0: i32, %arg1: i32) -> (i32, i32, i32) {
    %c0_i32 = arith.constant 0 : i32
    %c0_i32_0 = arith.constant 0 : i32
    %c0_i32_1 = arith.constant 0 : i32
    return %arg1, %c0_i32, %c0_i32_0 : i32, i32, i32
  }
  func.func @transform_12(%arg0: i32, %arg1: i32) -> (i32, i32) {
    %c0_i32 = arith.constant 0 : i32
    %c0_i32_0 = arith.constant 0 : i32
    %c0_i32_1 = arith.constant 0 : i32
    return %c0_i32, %c0_i32_0 : i32, i32
  }
  func.func @transform_13(%arg0: i32, %arg1: i32) -> (i32, i32) {
    %c0_i32 = arith.constant 0 : i32
    %c0_i32_0 = arith.constant 0 : i32
    %c0_i32_1 = arith.constant 0 : i32
    return %c0_i32, %c0_i32_0 : i32, i32
  }
  func.func @transform_14(%arg0: i32, %arg1: i32) -> (i32, i32) {
    %c0_i32 = arith.constant 0 : i32
    %c0_i32_0 = arith.constant 0 : i32
    %c0_i32_1 = arith.constant 0 : i32
    return %c0_i32, %c0_i32_0 : i32, i32
  }
  func.func @transform_15(%arg0: i32, %arg1: i32) -> (i32, i32) {
    %c0_i32 = arith.constant 0 : i32
    %c0_i32_0 = arith.constant 0 : i32
    %c0_i32_1 = arith.constant 0 : i32
    return %c0_i32, %c0_i32_0 : i32, i32
  }
  func.func @transform_16(%arg0: i32, %arg1: i32) -> (i32, i32) {
    %c0_i32 = arith.constant 0 : i32
    %c0_i32_0 = arith.constant 0 : i32
    %c0_i32_1 = arith.constant 0 : i32
    return %c0_i32, %c0_i32_0 : i32, i32
  }
  func.func @transform_17(%arg0: i32, %arg1: i32) -> (i32, i32, i32) {
    %c0_i32 = arith.constant 0 : i32
    %c0_i32_0 = arith.constant 0 : i32
    %c0_i32_1 = arith.constant 0 : i32
    return %arg0, %c0_i32, %c0_i32_0 : i32, i32, i32
  }
}

module attributes {stable_mosaic.version = 11 : i64} {
  func.func @_stage_kernel(%arg0: i32, %arg1: i32, %arg2: memref<1x64x128xf32, #tpu.memory_space<vmem>>, %arg3: memref<128x32xf32, #tpu.memory_space<vmem>>, %arg4: memref<1x32xf32, #tpu.memory_space<vmem>>, %arg5: memref<1x1x32xf32, #tpu.memory_space<vmem>>, %arg6: memref<1x1x32xf32, #tpu.memory_space<vmem>>, %arg7: memref<1x1x32xf32, #tpu.memory_space<vmem>>, %arg8: memref<1x1x32xf32, #tpu.memory_space<vmem>>, %arg9: memref<1x1x32xf32, #tpu.memory_space<vmem>>, %arg10: memref<1x1x32xf32, #tpu.memory_space<vmem>>, %arg11: memref<1x1x1xf32, #tpu.memory_space<vmem>>, %arg12: memref<1x1x1xf32, #tpu.memory_space<vmem>>, %arg13: memref<1x1x1xf32, #tpu.memory_space<vmem>>, %arg14: memref<64x64xf32, #tpu.memory_space<vmem>>, %arg15: memref<32x64xf32, #tpu.memory_space<vmem>>, %arg16: memref<32x64xf32, #tpu.memory_space<vmem>>, %arg17: memref<64x32xf32, #tpu.memory_space<vmem>>, %arg18: memref<64x32xf32, #tpu.memory_space<vmem>>, %arg19: memref<1x64x32xf32, #tpu.memory_space<vmem>>) attributes {dimension_semantics = [#tpu.dimension_semantics<parallel>, #tpu.dimension_semantics<arbitrary>], iteration_bounds = array<i64: 2, 2>, scalar_prefetch = 0 : i64, scratch_operands = 0 : i64, tpu.core_type = #tpu.core_type<tc>, window_params = [{transform_indices = @transform_0, window_bounds = array<i64: 1, 64, 128>}, {pipeline_mode = #tpu.pipeline_mode<synchronous>, transform_indices = @transform_1, window_bounds = array<i64: 128, 32>}, {pipeline_mode = #tpu.pipeline_mode<synchronous>, transform_indices = @transform_2, window_bounds = array<i64: 1, 32>}, {transform_indices = @transform_3, window_bounds = array<i64: 1, 1, 32>}, {transform_indices = @transform_4, window_bounds = array<i64: 1, 1, 32>}, {transform_indices = @transform_5, window_bounds = array<i64: 1, 1, 32>}, {transform_indices = @transform_6, window_bounds = array<i64: 1, 1, 32>}, {transform_indices = @transform_7, window_bounds = array<i64: 1, 1, 32>}, {transform_indices = @transform_8, window_bounds = array<i64: 1, 1, 32>}, {transform_indices = @transform_9, window_bounds = array<i64: 1, 1, 1>}, {transform_indices = @transform_10, window_bounds = array<i64: 1, 1, 1>}, {transform_indices = @transform_11, window_bounds = array<i64: 1, 1, 1>}, {pipeline_mode = #tpu.pipeline_mode<synchronous>, transform_indices = @transform_12, window_bounds = array<i64: 64, 64>}, {pipeline_mode = #tpu.pipeline_mode<synchronous>, transform_indices = @transform_13, window_bounds = array<i64: 32, 64>}, {pipeline_mode = #tpu.pipeline_mode<synchronous>, transform_indices = @transform_14, window_bounds = array<i64: 32, 64>}, {pipeline_mode = #tpu.pipeline_mode<synchronous>, transform_indices = @transform_15, window_bounds = array<i64: 64, 32>}, {pipeline_mode = #tpu.pipeline_mode<synchronous>, transform_indices = @transform_16, window_bounds = array<i64: 64, 32>}, {transform_indices = @transform_17, window_bounds = array<i64: 1, 64, 32>}]} {
    %c0_i32 = arith.constant 0 : i32
    %0 = arith.cmpi eq, %arg1, %c0_i32 : i32
    %1 = arith.extui %0 : i1 to i32
    %c0_i32_0 = arith.constant 0 : i32
    %2 = arith.cmpi ne, %1, %c0_i32_0 : i32
    scf.if %2 {
      %c0_62 = arith.constant 0 : index
      %c0_63 = arith.constant 0 : index
      %c0_64 = arith.constant 0 : index
      %116 = vector.load %arg2[%c0_62, %c0_63, %c0_64] : memref<1x64x128xf32, #tpu.memory_space<vmem>>, vector<1x64x128xf32>
      %117 = vector.shape_cast %116 : vector<1x64x128xf32> to vector<64x128xf32>
      %c0_65 = arith.constant 0 : index
      %c0_66 = arith.constant 0 : index
      %118 = vector.load %arg3[%c0_65, %c0_66] : memref<128x32xf32, #tpu.memory_space<vmem>>, vector<128x32xf32>
      %cst_67 = arith.constant dense<0.000000e+00> : vector<64x32xf32>
      %119 = tpu.matmul %117, %118, %cst_67 {dimension_numbers = #tpu.dot_dimension_numbers<[1], [0], [0], [1], [0, 0, 1, 1], [], []>} : vector<64x128xf32>, vector<128x32xf32>, vector<64x32xf32> -> vector<64x32xf32>
      %c0_68 = arith.constant 0 : index
      %c0_69 = arith.constant 0 : index
      %120 = vector.load %arg4[%c0_68, %c0_69] : memref<1x32xf32, #tpu.memory_space<vmem>>, vector<1x32xf32>
      %121 = vector.broadcast %120 : vector<1x32xf32> to vector<64x32xf32>
      %122 = arith.addf %119, %121 : vector<64x32xf32>
      %c0_70 = arith.constant 0 : index
      %c0_71 = arith.constant 0 : index
      %c0_72 = arith.constant 0 : index
      %123 = vector.load %arg19[%c0_70, %c0_71, %c0_72] : memref<1x64x32xf32, #tpu.memory_space<vmem>>, vector<1x64x32xf32>
      %124 = vector.shape_cast %123 : vector<1x64x32xf32> to vector<64x32xf32>
      %125 = vector.shape_cast %122 : vector<64x32xf32> to vector<1x64x32xf32>
      tpu.vector_store %arg19[%c0_70, %c0_71, %c0_72], %125 {strides = array<i32>} : memref<1x64x32xf32, #tpu.memory_space<vmem>>, vector<1x64x32xf32>,
    } else {
    }
    %c0 = arith.constant 0 : index
    %c0_1 = arith.constant 0 : index
    %c0_2 = arith.constant 0 : index
    %3 = vector.load %arg19[%c0, %c0_1, %c0_2] : memref<1x64x32xf32, #tpu.memory_space<vmem>>, vector<1x64x32xf32>
    %4 = vector.shape_cast %3 : vector<1x64x32xf32> to vector<64x32xf32>
    %c0_3 = arith.constant 0 : index
    %c0_4 = arith.constant 0 : index
    %c0_5 = arith.constant 0 : index
    %5 = vector.load %arg5[%c0_3, %c0_4, %c0_5] : memref<1x1x32xf32, #tpu.memory_space<vmem>>, vector<1x1x32xf32>
    %6 = vector.shape_cast %5 : vector<1x1x32xf32> to vector<1x32xf32>
    %c0_6 = arith.constant 0 : index
    %c0_7 = arith.constant 0 : index
    %c0_8 = arith.constant 0 : index
    %7 = vector.load %arg6[%c0_6, %c0_7, %c0_8] : memref<1x1x32xf32, #tpu.memory_space<vmem>>, vector<1x1x32xf32>
    %8 = vector.shape_cast %7 : vector<1x1x32xf32> to vector<1x32xf32>
    %c0_9 = arith.constant 0 : index
    %c0_10 = arith.constant 0 : index
    %c0_11 = arith.constant 0 : index
    %9 = vector.load %arg11[%c0_9, %c0_10, %c0_11] : memref<1x1x1xf32, #tpu.memory_space<vmem>>, vector<1x1x1xf32>
    %10 = vector.shape_cast %9 : vector<1x1x1xf32> to vector<1x1xf32>
    %c0_12 = arith.constant 0 : index
    %c0_13 = arith.constant 0 : index
    %c0_14 = arith.constant 0 : index
    %11 = vector.load %arg12[%c0_12, %c0_13, %c0_14] : memref<1x1x1xf32, #tpu.memory_space<vmem>>, vector<1x1x1xf32>
    %12 = vector.shape_cast %11 : vector<1x1x1xf32> to vector<1x1xf32>
    %c0_15 = arith.constant 0 : index
    %c0_16 = arith.constant 0 : index
    %c0_17 = arith.constant 0 : index
    %13 = vector.load %arg13[%c0_15, %c0_16, %c0_17] : memref<1x1x1xf32, #tpu.memory_space<vmem>>, vector<1x1x1xf32>
    %14 = vector.shape_cast %13 : vector<1x1x1xf32> to vector<1x1xf32>
    %cst = arith.constant dense<0.000000e+00> : vector<64xf32>
    %15 = vector.multi_reduction <add>, %4, %cst [1] : vector<64x32xf32> to vector<64xf32>
    %16 = vector.shape_cast %15 : vector<64xf32> to vector<64x1xf32>
    %cst_18 = arith.constant 3.200000e+01 : f32
    %17 = vector.broadcast %cst_18 : f32 to vector<64x1xf32>
    %18 = arith.divf %16, %17 : vector<64x1xf32>
    %19 = vector.broadcast %18 : vector<64x1xf32> to vector<64x32xf32>
    %20 = arith.subf %4, %19 : vector<64x32xf32>
    %21 = arith.mulf %20, %20 : vector<64x32xf32>
    %cst_19 = arith.constant dense<0.000000e+00> : vector<64xf32>
    %22 = vector.multi_reduction <add>, %21, %cst_19 [1] : vector<64x32xf32> to vector<64xf32>
    %23 = vector.shape_cast %22 : vector<64xf32> to vector<64x1xf32>
    %cst_20 = arith.constant 3.200000e+01 : f32
    %24 = vector.broadcast %cst_20 : f32 to vector<64x1xf32>
    %25 = arith.divf %23, %24 : vector<64x1xf32>
    %26 = vector.broadcast %18 : vector<64x1xf32> to vector<64x32xf32>
    %27 = arith.subf %4, %26 : vector<64x32xf32>
    %cst_21 = arith.constant 9.99999974E-6 : f32
    %28 = vector.broadcast %cst_21 : f32 to vector<64x1xf32>
    %29 = arith.addf %25, %28 : vector<64x1xf32>
    %30 = math.rsqrt %29 : vector<64x1xf32>
    %31 = vector.broadcast %30 : vector<64x1xf32> to vector<64x32xf32>
    %32 = arith.mulf %27, %31 : vector<64x32xf32>
    %33 = vector.broadcast %6 : vector<1x32xf32> to vector<64x32xf32>
    %34 = arith.mulf %32, %33 : vector<64x32xf32>
    %35 = vector.broadcast %8 : vector<1x32xf32> to vector<64x32xf32>
    %36 = arith.addf %34, %35 : vector<64x32xf32>
    %c0_22 = arith.constant 0 : index
    %c0_23 = arith.constant 0 : index
    %37 = vector.load %arg14[%c0_22, %c0_23] : memref<64x64xf32, #tpu.memory_space<vmem>>, vector<64x64xf32>
    %cst_24 = arith.constant dense<0.000000e+00> : vector<64x32xf32>
    %38 = tpu.matmul %37, %36, %cst_24 {dimension_numbers = #tpu.dot_dimension_numbers<[1], [0], [0], [1], [0, 0, 1, 1], [], []>} : vector<64x64xf32>, vector<64x32xf32>, vector<64x32xf32> -> vector<64x32xf32>
    %39 = arith.cmpf ogt, %36, %38 : vector<64x32xf32>
    %40 = vector.broadcast %12 : vector<1x1xf32> to vector<64x32xf32>
    %41 = arith.mulf %36, %40 : vector<64x32xf32>
    %42 = vector.broadcast %14 : vector<1x1xf32> to vector<64x32xf32>
    %43 = arith.mulf %36, %42 : vector<64x32xf32>
    %44 = arith.select %39, %41, %43 : vector<64x32xi1>, vector<64x32xf32>
    %c0_25 = arith.constant 0 : index
    %c0_26 = arith.constant 0 : index
    %45 = vector.load %arg15[%c0_25, %c0_26] : memref<32x64xf32, #tpu.memory_space<vmem>>, vector<32x64xf32>
    %cst_27 = arith.constant dense<0.000000e+00> : vector<32x32xf32>
    %46 = tpu.matmul %45, %44, %cst_27 {dimension_numbers = #tpu.dot_dimension_numbers<[1], [0], [0], [1], [0, 0, 1, 1], [], []>} : vector<32x64xf32>, vector<64x32xf32>, vector<32x32xf32> -> vector<32x32xf32>
    %c0_28 = arith.constant 0 : index
    %c0_29 = arith.constant 0 : index
    %47 = vector.load %arg16[%c0_28, %c0_29] : memref<32x64xf32, #tpu.memory_space<vmem>>, vector<32x64xf32>
    %cst_30 = arith.constant dense<0.000000e+00> : vector<32x32xf32>
    %48 = tpu.matmul %47, %44, %cst_30 {dimension_numbers = #tpu.dot_dimension_numbers<[1], [0], [0], [1], [0, 0, 1, 1], [], []>} : vector<32x64xf32>, vector<64x32xf32>, vector<32x32xf32> -> vector<32x32xf32>
    %cst_31 = arith.constant 0.000000e+00 : f32
    %49 = vector.broadcast %cst_31 : f32 to vector<32x32xf32>
    %50 = arith.subf %49, %48 : vector<32x32xf32>
    %51 = arith.mulf %46, %46 : vector<32x32xf32>
    %52 = arith.mulf %50, %50 : vector<32x32xf32>
    %53 = arith.addf %51, %52 : vector<32x32xf32>
    %cst_32 = arith.constant dense<0.000000e+00> : vector<32xf32>
    %54 = vector.multi_reduction <add>, %53, %cst_32 [1] : vector<32x32xf32> to vector<32xf32>
    %55 = vector.shape_cast %54 : vector<32xf32> to vector<32x1xf32>
    %cst_33 = arith.constant 1.000000e+00 : f32
    %56 = vector.broadcast %cst_33 : f32 to vector<1x32xf32>
    %cst_34 = arith.constant dense<0.000000e+00> : vector<1x32xf32>
    %57 = tpu.matmul %56, %53, %cst_34 {dimension_numbers = #tpu.dot_dimension_numbers<[1], [1], [0], [0], [0, 0, 1, 0], [], []>} : vector<1x32xf32>, vector<32x32xf32>, vector<1x32xf32> -> vector<1x32xf32>
    %58 = tpu.iota {dimensions = array<i32: 0>} : vector<32x32xi32>
    %59 = tpu.iota {dimensions = array<i32: 1>} : vector<32x32xi32>
    %60 = arith.cmpi eq, %58, %59 : vector<32x32xi32>
    %61 = vector.broadcast %55 : vector<32x1xf32> to vector<32x32xf32>
    %62 = vector.broadcast %57 : vector<1x32xf32> to vector<32x32xf32>
    %63 = arith.cmpf ole, %61, %62 : vector<32x32xf32>
    %64 = arith.ori %63, %60 : vector<32x32xi1>
    %65 = arith.extui %64 : vector<32x32xi1> to vector<32x32xi32>
    %66 = arith.sitofp %65 : vector<32x32xi32> to vector<32x32xf32>
    %cst_35 = arith.constant 1.000000e+00 : f32
    %67 = vector.broadcast %cst_35 : f32 to vector<1x32xf32>
    %cst_36 = arith.constant dense<0.000000e+00> : vector<1x32xf32>
    %68 = tpu.matmul %67, %66, %cst_36 {dimension_numbers = #tpu.dot_dimension_numbers<[1], [0], [0], [1], [0, 0, 1, 1], [], []>} : vector<1x32xf32>, vector<32x32xf32>, vector<1x32xf32> -> vector<1x32xf32>
    %cst_37 = arith.constant 1.600000e+01 : f32
    %69 = vector.broadcast %cst_37 : f32 to vector<1x32xf32>
    %70 = arith.cmpf oge, %68, %69 : vector<1x32xf32>
    %cst_38 = arith.constant 0x7F800000 : f32
    %71 = vector.broadcast %cst_38 : f32 to vector<1x32xf32>
    %72 = arith.select %70, %57, %71 : vector<1x32xi1>, vector<1x32xf32>
    %cst_39 = arith.constant dense<0x7F800000> : vector<1xf32>
    %73 = vector.multi_reduction <minimumf>, %72, %cst_39 [1] : vector<1x32xf32> to vector<1xf32>
    %74 = vector.shape_cast %73 : vector<1xf32> to vector<1x1xf32>
    %cst_40 = arith.constant 9.99999997E-7 : f32
    %75 = vector.broadcast %cst_40 : f32 to vector<1x1xf32>
    %76 = arith.addf %74, %75 : vector<1x1xf32>
    %77 = vector.broadcast %76 : vector<1x1xf32> to vector<32x1xf32>
    %78 = arith.divf %55, %77 : vector<32x1xf32>
    %79 = vector.broadcast %10 : vector<1x1xf32> to vector<32x1xf32>
    %80 = arith.cmpf ogt, %78, %79 : vector<32x1xf32>
    %81 = arith.extui %80 : vector<32x1xi1> to vector<32x1xi32>
    %82 = arith.sitofp %81 : vector<32x1xi32> to vector<32x1xf32>
    %c0_41 = arith.constant 0 : index
    %c0_42 = arith.constant 0 : index
    %c0_43 = arith.constant 0 : index
    %83 = vector.load %arg7[%c0_41, %c0_42, %c0_43] : memref<1x1x32xf32, #tpu.memory_space<vmem>>, vector<1x1x32xf32>
    %84 = vector.shape_cast %83 : vector<1x1x32xf32> to vector<1x32xf32>
    %c0_44 = arith.constant 0 : index
    %c0_45 = arith.constant 0 : index
    %c0_46 = arith.constant 0 : index
    %85 = vector.load %arg9[%c0_44, %c0_45, %c0_46] : memref<1x1x32xf32, #tpu.memory_space<vmem>>, vector<1x1x32xf32>
    %86 = vector.shape_cast %85 : vector<1x1x32xf32> to vector<1x32xf32>
    %87 = vector.broadcast %82 : vector<32x1xf32> to vector<32x32xf32>
    %88 = vector.broadcast %86 : vector<1x32xf32> to vector<32x32xf32>
    %89 = arith.mulf %87, %88 : vector<32x32xf32>
    %90 = vector.broadcast %84 : vector<1x32xf32> to vector<32x32xf32>
    %91 = arith.addf %90, %89 : vector<32x32xf32>
    %c0_47 = arith.constant 0 : index
    %c0_48 = arith.constant 0 : index
    %c0_49 = arith.constant 0 : index
    %92 = vector.load %arg8[%c0_47, %c0_48, %c0_49] : memref<1x1x32xf32, #tpu.memory_space<vmem>>, vector<1x1x32xf32>
    %93 = vector.shape_cast %92 : vector<1x1x32xf32> to vector<1x32xf32>
    %c0_50 = arith.constant 0 : index
    %c0_51 = arith.constant 0 : index
    %c0_52 = arith.constant 0 : index
    %94 = vector.load %arg10[%c0_50, %c0_51, %c0_52] : memref<1x1x32xf32, #tpu.memory_space<vmem>>, vector<1x1x32xf32>
    %95 = vector.shape_cast %94 : vector<1x1x32xf32> to vector<1x32xf32>
    %96 = vector.broadcast %82 : vector<32x1xf32> to vector<32x32xf32>
    %97 = vector.broadcast %95 : vector<1x32xf32> to vector<32x32xf32>
    %98 = arith.mulf %96, %97 : vector<32x32xf32>
    %99 = vector.broadcast %93 : vector<1x32xf32> to vector<32x32xf32>
    %100 = arith.addf %99, %98 : vector<32x32xf32>
    %101 = arith.mulf %46, %91 : vector<32x32xf32>
    %102 = arith.mulf %50, %100 : vector<32x32xf32>
    %103 = arith.subf %101, %102 : vector<32x32xf32>
    %104 = arith.mulf %46, %100 : vector<32x32xf32>
    %105 = arith.mulf %50, %91 : vector<32x32xf32>
    %106 = arith.addf %104, %105 : vector<32x32xf32>
    %c0_53 = arith.constant 0 : index
    %c0_54 = arith.constant 0 : index
    %107 = vector.load %arg17[%c0_53, %c0_54] : memref<64x32xf32, #tpu.memory_space<vmem>>, vector<64x32xf32>
    %cst_55 = arith.constant dense<0.000000e+00> : vector<64x32xf32>
    %108 = tpu.matmul %107, %103, %cst_55 {dimension_numbers = #tpu.dot_dimension_numbers<[1], [0], [0], [1], [0, 0, 1, 1], [], []>} : vector<64x32xf32>, vector<32x32xf32>, vector<64x32xf32> -> vector<64x32xf32>
    %c0_56 = arith.constant 0 : index
    %c0_57 = arith.constant 0 : index
    %109 = vector.load %arg18[%c0_56, %c0_57] : memref<64x32xf32, #tpu.memory_space<vmem>>, vector<64x32xf32>
    %cst_58 = arith.constant dense<0.000000e+00> : vector<64x32xf32>
    %110 = tpu.matmul %109, %106, %cst_58 {dimension_numbers = #tpu.dot_dimension_numbers<[1], [0], [0], [1], [0, 0, 1, 1], [], []>} : vector<64x32xf32>, vector<32x32xf32>, vector<64x32xf32> -> vector<64x32xf32>
    %111 = arith.subf %108, %110 : vector<64x32xf32>
    %112 = arith.addf %4, %111 : vector<64x32xf32>
    %c0_59 = arith.constant 0 : index
    %c0_60 = arith.constant 0 : index
    %c0_61 = arith.constant 0 : index
    %113 = vector.load %arg19[%c0_59, %c0_60, %c0_61] : memref<1x64x32xf32, #tpu.memory_space<vmem>>, vector<1x64x32xf32>
    %114 = vector.shape_cast %113 : vector<1x64x32xf32> to vector<64x32xf32>
    %115 = vector.shape_cast %112 : vector<64x32xf32> to vector<1x64x32xf32>
    tpu.vector_store %arg19[%c0_59, %c0_60, %c0_61], %115 {strides = array<i32>} : memref<1x64x32xf32, #tpu.memory_space<vmem>>, vector<1x64x32xf32>,
    return
  }
  func.func @transform_0(%arg0: i32, %arg1: i32) -> (i32, i32, i32) {
    %c0_i32 = arith.constant 0 : i32
    %c0_i32_0 = arith.constant 0 : i32
    %c0_i32_1 = arith.constant 0 : i32
    return %arg0, %c0_i32, %c0_i32_0 : i32, i32, i32
  }
  func.func @transform_1(%arg0: i32, %arg1: i32) -> (i32, i32) {
    %c0_i32 = arith.constant 0 : i32
    %c0_i32_0 = arith.constant 0 : i32
    %c0_i32_1 = arith.constant 0 : i32
    return %c0_i32, %c0_i32_0 : i32, i32
  }
  func.func @transform_2(%arg0: i32, %arg1: i32) -> (i32, i32) {
    %c0_i32 = arith.constant 0 : i32
    %c0_i32_0 = arith.constant 0 : i32
    %c0_i32_1 = arith.constant 0 : i32
    return %c0_i32, %c0_i32_0 : i32, i32
  }
  func.func @transform_3(%arg0: i32, %arg1: i32) -> (i32, i32, i32) {
    %c0_i32 = arith.constant 0 : i32
    %c0_i32_0 = arith.constant 0 : i32
    %c0_i32_1 = arith.constant 0 : i32
    return %arg1, %c0_i32, %c0_i32_0 : i32, i32, i32
  }
  func.func @transform_4(%arg0: i32, %arg1: i32) -> (i32, i32, i32) {
    %c0_i32 = arith.constant 0 : i32
    %c0_i32_0 = arith.constant 0 : i32
    %c0_i32_1 = arith.constant 0 : i32
    return %arg1, %c0_i32, %c0_i32_0 : i32, i32, i32
  }
  func.func @transform_5(%arg0: i32, %arg1: i32) -> (i32, i32, i32) {
    %c0_i32 = arith.constant 0 : i32
    %c0_i32_0 = arith.constant 0 : i32
    %c0_i32_1 = arith.constant 0 : i32
    return %arg1, %c0_i32, %c0_i32_0 : i32, i32, i32
  }
  func.func @transform_6(%arg0: i32, %arg1: i32) -> (i32, i32, i32) {
    %c0_i32 = arith.constant 0 : i32
    %c0_i32_0 = arith.constant 0 : i32
    %c0_i32_1 = arith.constant 0 : i32
    return %arg1, %c0_i32, %c0_i32_0 : i32, i32, i32
  }
  func.func @transform_7(%arg0: i32, %arg1: i32) -> (i32, i32, i32) {
    %c0_i32 = arith.constant 0 : i32
    %c0_i32_0 = arith.constant 0 : i32
    %c0_i32_1 = arith.constant 0 : i32
    return %arg1, %c0_i32, %c0_i32_0 : i32, i32, i32
  }
  func.func @transform_8(%arg0: i32, %arg1: i32) -> (i32, i32, i32) {
    %c0_i32 = arith.constant 0 : i32
    %c0_i32_0 = arith.constant 0 : i32
    %c0_i32_1 = arith.constant 0 : i32
    return %arg1, %c0_i32, %c0_i32_0 : i32, i32, i32
  }
  func.func @transform_9(%arg0: i32, %arg1: i32) -> (i32, i32, i32) {
    %c0_i32 = arith.constant 0 : i32
    %c0_i32_0 = arith.constant 0 : i32
    %c0_i32_1 = arith.constant 0 : i32
    return %arg1, %c0_i32, %c0_i32_0 : i32, i32, i32
  }
  func.func @transform_10(%arg0: i32, %arg1: i32) -> (i32, i32, i32) {
    %c0_i32 = arith.constant 0 : i32
    %c0_i32_0 = arith.constant 0 : i32
    %c0_i32_1 = arith.constant 0 : i32
    return %arg1, %c0_i32, %c0_i32_0 : i32, i32, i32
  }
  func.func @transform_11(%arg0: i32, %arg1: i32) -> (i32, i32, i32) {
    %c0_i32 = arith.constant 0 : i32
    %c0_i32_0 = arith.constant 0 : i32
    %c0_i32_1 = arith.constant 0 : i32
    return %arg1, %c0_i32, %c0_i32_0 : i32, i32, i32
  }
  func.func @transform_12(%arg0: i32, %arg1: i32) -> (i32, i32) {
    %c0_i32 = arith.constant 0 : i32
    %c0_i32_0 = arith.constant 0 : i32
    %c0_i32_1 = arith.constant 0 : i32
    return %c0_i32, %c0_i32_0 : i32, i32
  }
  func.func @transform_13(%arg0: i32, %arg1: i32) -> (i32, i32) {
    %c0_i32 = arith.constant 0 : i32
    %c0_i32_0 = arith.constant 0 : i32
    %c0_i32_1 = arith.constant 0 : i32
    return %c0_i32, %c0_i32_0 : i32, i32
  }
  func.func @transform_14(%arg0: i32, %arg1: i32) -> (i32, i32) {
    %c0_i32 = arith.constant 0 : i32
    %c0_i32_0 = arith.constant 0 : i32
    %c0_i32_1 = arith.constant 0 : i32
    return %c0_i32, %c0_i32_0 : i32, i32
  }
  func.func @transform_15(%arg0: i32, %arg1: i32) -> (i32, i32) {
    %c0_i32 = arith.constant 0 : i32
    %c0_i32_0 = arith.constant 0 : i32
    %c0_i32_1 = arith.constant 0 : i32
    return %c0_i32, %c0_i32_0 : i32, i32
  }
  func.func @transform_16(%arg0: i32, %arg1: i32) -> (i32, i32) {
    %c0_i32 = arith.constant 0 : i32
    %c0_i32_0 = arith.constant 0 : i32
    %c0_i32_1 = arith.constant 0 : i32
    return %c0_i32, %c0_i32_0 : i32, i32
  }
  func.func @transform_17(%arg0: i32, %arg1: i32) -> (i32, i32, i32) {
    %c0_i32 = arith.constant 0 : i32
    %c0_i32_0 = arith.constant 0 : i32
    %c0_i32_1 = arith.constant 0 : i32
    return %arg0, %c0_i32, %c0_i32_0 : i32, i32, i32
  }
}

module attributes {stable_mosaic.version = 11 : i64} {
  func.func @_stage_kernel(%arg0: i32, %arg1: i32, %arg2: memref<1x16x256xf32, #tpu.memory_space<vmem>>, %arg3: memref<256x64xf32, #tpu.memory_space<vmem>>, %arg4: memref<1x64xf32, #tpu.memory_space<vmem>>, %arg5: memref<1x1x64xf32, #tpu.memory_space<vmem>>, %arg6: memref<1x1x64xf32, #tpu.memory_space<vmem>>, %arg7: memref<1x1x64xf32, #tpu.memory_space<vmem>>, %arg8: memref<1x1x64xf32, #tpu.memory_space<vmem>>, %arg9: memref<1x1x64xf32, #tpu.memory_space<vmem>>, %arg10: memref<1x1x64xf32, #tpu.memory_space<vmem>>, %arg11: memref<1x1x1xf32, #tpu.memory_space<vmem>>, %arg12: memref<1x1x1xf32, #tpu.memory_space<vmem>>, %arg13: memref<1x1x1xf32, #tpu.memory_space<vmem>>, %arg14: memref<16x16xf32, #tpu.memory_space<vmem>>, %arg15: memref<8x16xf32, #tpu.memory_space<vmem>>, %arg16: memref<8x16xf32, #tpu.memory_space<vmem>>, %arg17: memref<16x8xf32, #tpu.memory_space<vmem>>, %arg18: memref<16x8xf32, #tpu.memory_space<vmem>>, %arg19: memref<1x16x64xf32, #tpu.memory_space<vmem>>) attributes {dimension_semantics = [#tpu.dimension_semantics<parallel>, #tpu.dimension_semantics<arbitrary>], iteration_bounds = array<i64: 2, 2>, scalar_prefetch = 0 : i64, scratch_operands = 0 : i64, tpu.core_type = #tpu.core_type<tc>, window_params = [{transform_indices = @transform_0, window_bounds = array<i64: 1, 16, 256>}, {pipeline_mode = #tpu.pipeline_mode<synchronous>, transform_indices = @transform_1, window_bounds = array<i64: 256, 64>}, {pipeline_mode = #tpu.pipeline_mode<synchronous>, transform_indices = @transform_2, window_bounds = array<i64: 1, 64>}, {transform_indices = @transform_3, window_bounds = array<i64: 1, 1, 64>}, {transform_indices = @transform_4, window_bounds = array<i64: 1, 1, 64>}, {transform_indices = @transform_5, window_bounds = array<i64: 1, 1, 64>}, {transform_indices = @transform_6, window_bounds = array<i64: 1, 1, 64>}, {transform_indices = @transform_7, window_bounds = array<i64: 1, 1, 64>}, {transform_indices = @transform_8, window_bounds = array<i64: 1, 1, 64>}, {transform_indices = @transform_9, window_bounds = array<i64: 1, 1, 1>}, {transform_indices = @transform_10, window_bounds = array<i64: 1, 1, 1>}, {transform_indices = @transform_11, window_bounds = array<i64: 1, 1, 1>}, {pipeline_mode = #tpu.pipeline_mode<synchronous>, transform_indices = @transform_12, window_bounds = array<i64: 16, 16>}, {pipeline_mode = #tpu.pipeline_mode<synchronous>, transform_indices = @transform_13, window_bounds = array<i64: 8, 16>}, {pipeline_mode = #tpu.pipeline_mode<synchronous>, transform_indices = @transform_14, window_bounds = array<i64: 8, 16>}, {pipeline_mode = #tpu.pipeline_mode<synchronous>, transform_indices = @transform_15, window_bounds = array<i64: 16, 8>}, {pipeline_mode = #tpu.pipeline_mode<synchronous>, transform_indices = @transform_16, window_bounds = array<i64: 16, 8>}, {transform_indices = @transform_17, window_bounds = array<i64: 1, 16, 64>}]} {
    %c0_i32 = arith.constant 0 : i32
    %0 = arith.cmpi eq, %arg1, %c0_i32 : i32
    %1 = arith.extui %0 : i1 to i32
    %c0_i32_0 = arith.constant 0 : i32
    %2 = arith.cmpi ne, %1, %c0_i32_0 : i32
    scf.if %2 {
      %c0_62 = arith.constant 0 : index
      %c0_63 = arith.constant 0 : index
      %c0_64 = arith.constant 0 : index
      %116 = vector.load %arg2[%c0_62, %c0_63, %c0_64] : memref<1x16x256xf32, #tpu.memory_space<vmem>>, vector<1x16x256xf32>
      %117 = vector.shape_cast %116 : vector<1x16x256xf32> to vector<16x256xf32>
      %c0_65 = arith.constant 0 : index
      %c0_66 = arith.constant 0 : index
      %118 = vector.load %arg3[%c0_65, %c0_66] : memref<256x64xf32, #tpu.memory_space<vmem>>, vector<256x64xf32>
      %cst_67 = arith.constant dense<0.000000e+00> : vector<16x64xf32>
      %119 = tpu.matmul %117, %118, %cst_67 {dimension_numbers = #tpu.dot_dimension_numbers<[1], [0], [0], [1], [0, 0, 1, 1], [], []>} : vector<16x256xf32>, vector<256x64xf32>, vector<16x64xf32> -> vector<16x64xf32>
      %c0_68 = arith.constant 0 : index
      %c0_69 = arith.constant 0 : index
      %120 = vector.load %arg4[%c0_68, %c0_69] : memref<1x64xf32, #tpu.memory_space<vmem>>, vector<1x64xf32>
      %121 = vector.broadcast %120 : vector<1x64xf32> to vector<16x64xf32>
      %122 = arith.addf %119, %121 : vector<16x64xf32>
      %c0_70 = arith.constant 0 : index
      %c0_71 = arith.constant 0 : index
      %c0_72 = arith.constant 0 : index
      %123 = vector.load %arg19[%c0_70, %c0_71, %c0_72] : memref<1x16x64xf32, #tpu.memory_space<vmem>>, vector<1x16x64xf32>
      %124 = vector.shape_cast %123 : vector<1x16x64xf32> to vector<16x64xf32>
      %125 = vector.shape_cast %122 : vector<16x64xf32> to vector<1x16x64xf32>
      tpu.vector_store %arg19[%c0_70, %c0_71, %c0_72], %125 {strides = array<i32>} : memref<1x16x64xf32, #tpu.memory_space<vmem>>, vector<1x16x64xf32>,
    } else {
    }
    %c0 = arith.constant 0 : index
    %c0_1 = arith.constant 0 : index
    %c0_2 = arith.constant 0 : index
    %3 = vector.load %arg19[%c0, %c0_1, %c0_2] : memref<1x16x64xf32, #tpu.memory_space<vmem>>, vector<1x16x64xf32>
    %4 = vector.shape_cast %3 : vector<1x16x64xf32> to vector<16x64xf32>
    %c0_3 = arith.constant 0 : index
    %c0_4 = arith.constant 0 : index
    %c0_5 = arith.constant 0 : index
    %5 = vector.load %arg5[%c0_3, %c0_4, %c0_5] : memref<1x1x64xf32, #tpu.memory_space<vmem>>, vector<1x1x64xf32>
    %6 = vector.shape_cast %5 : vector<1x1x64xf32> to vector<1x64xf32>
    %c0_6 = arith.constant 0 : index
    %c0_7 = arith.constant 0 : index
    %c0_8 = arith.constant 0 : index
    %7 = vector.load %arg6[%c0_6, %c0_7, %c0_8] : memref<1x1x64xf32, #tpu.memory_space<vmem>>, vector<1x1x64xf32>
    %8 = vector.shape_cast %7 : vector<1x1x64xf32> to vector<1x64xf32>
    %c0_9 = arith.constant 0 : index
    %c0_10 = arith.constant 0 : index
    %c0_11 = arith.constant 0 : index
    %9 = vector.load %arg11[%c0_9, %c0_10, %c0_11] : memref<1x1x1xf32, #tpu.memory_space<vmem>>, vector<1x1x1xf32>
    %10 = vector.shape_cast %9 : vector<1x1x1xf32> to vector<1x1xf32>
    %c0_12 = arith.constant 0 : index
    %c0_13 = arith.constant 0 : index
    %c0_14 = arith.constant 0 : index
    %11 = vector.load %arg12[%c0_12, %c0_13, %c0_14] : memref<1x1x1xf32, #tpu.memory_space<vmem>>, vector<1x1x1xf32>
    %12 = vector.shape_cast %11 : vector<1x1x1xf32> to vector<1x1xf32>
    %c0_15 = arith.constant 0 : index
    %c0_16 = arith.constant 0 : index
    %c0_17 = arith.constant 0 : index
    %13 = vector.load %arg13[%c0_15, %c0_16, %c0_17] : memref<1x1x1xf32, #tpu.memory_space<vmem>>, vector<1x1x1xf32>
    %14 = vector.shape_cast %13 : vector<1x1x1xf32> to vector<1x1xf32>
    %cst = arith.constant dense<0.000000e+00> : vector<16xf32>
    %15 = vector.multi_reduction <add>, %4, %cst [1] : vector<16x64xf32> to vector<16xf32>
    %16 = vector.shape_cast %15 : vector<16xf32> to vector<16x1xf32>
    %cst_18 = arith.constant 6.400000e+01 : f32
    %17 = vector.broadcast %cst_18 : f32 to vector<16x1xf32>
    %18 = arith.divf %16, %17 : vector<16x1xf32>
    %19 = vector.broadcast %18 : vector<16x1xf32> to vector<16x64xf32>
    %20 = arith.subf %4, %19 : vector<16x64xf32>
    %21 = arith.mulf %20, %20 : vector<16x64xf32>
    %cst_19 = arith.constant dense<0.000000e+00> : vector<16xf32>
    %22 = vector.multi_reduction <add>, %21, %cst_19 [1] : vector<16x64xf32> to vector<16xf32>
    %23 = vector.shape_cast %22 : vector<16xf32> to vector<16x1xf32>
    %cst_20 = arith.constant 6.400000e+01 : f32
    %24 = vector.broadcast %cst_20 : f32 to vector<16x1xf32>
    %25 = arith.divf %23, %24 : vector<16x1xf32>
    %26 = vector.broadcast %18 : vector<16x1xf32> to vector<16x64xf32>
    %27 = arith.subf %4, %26 : vector<16x64xf32>
    %cst_21 = arith.constant 9.99999974E-6 : f32
    %28 = vector.broadcast %cst_21 : f32 to vector<16x1xf32>
    %29 = arith.addf %25, %28 : vector<16x1xf32>
    %30 = math.rsqrt %29 : vector<16x1xf32>
    %31 = vector.broadcast %30 : vector<16x1xf32> to vector<16x64xf32>
    %32 = arith.mulf %27, %31 : vector<16x64xf32>
    %33 = vector.broadcast %6 : vector<1x64xf32> to vector<16x64xf32>
    %34 = arith.mulf %32, %33 : vector<16x64xf32>
    %35 = vector.broadcast %8 : vector<1x64xf32> to vector<16x64xf32>
    %36 = arith.addf %34, %35 : vector<16x64xf32>
    %c0_22 = arith.constant 0 : index
    %c0_23 = arith.constant 0 : index
    %37 = vector.load %arg14[%c0_22, %c0_23] : memref<16x16xf32, #tpu.memory_space<vmem>>, vector<16x16xf32>
    %cst_24 = arith.constant dense<0.000000e+00> : vector<16x64xf32>
    %38 = tpu.matmul %37, %36, %cst_24 {dimension_numbers = #tpu.dot_dimension_numbers<[1], [0], [0], [1], [0, 0, 1, 1], [], []>} : vector<16x16xf32>, vector<16x64xf32>, vector<16x64xf32> -> vector<16x64xf32>
    %39 = arith.cmpf ogt, %36, %38 : vector<16x64xf32>
    %40 = vector.broadcast %12 : vector<1x1xf32> to vector<16x64xf32>
    %41 = arith.mulf %36, %40 : vector<16x64xf32>
    %42 = vector.broadcast %14 : vector<1x1xf32> to vector<16x64xf32>
    %43 = arith.mulf %36, %42 : vector<16x64xf32>
    %44 = arith.select %39, %41, %43 : vector<16x64xi1>, vector<16x64xf32>
    %c0_25 = arith.constant 0 : index
    %c0_26 = arith.constant 0 : index
    %45 = vector.load %arg15[%c0_25, %c0_26] : memref<8x16xf32, #tpu.memory_space<vmem>>, vector<8x16xf32>
    %cst_27 = arith.constant dense<0.000000e+00> : vector<8x64xf32>
    %46 = tpu.matmul %45, %44, %cst_27 {dimension_numbers = #tpu.dot_dimension_numbers<[1], [0], [0], [1], [0, 0, 1, 1], [], []>} : vector<8x16xf32>, vector<16x64xf32>, vector<8x64xf32> -> vector<8x64xf32>
    %c0_28 = arith.constant 0 : index
    %c0_29 = arith.constant 0 : index
    %47 = vector.load %arg16[%c0_28, %c0_29] : memref<8x16xf32, #tpu.memory_space<vmem>>, vector<8x16xf32>
    %cst_30 = arith.constant dense<0.000000e+00> : vector<8x64xf32>
    %48 = tpu.matmul %47, %44, %cst_30 {dimension_numbers = #tpu.dot_dimension_numbers<[1], [0], [0], [1], [0, 0, 1, 1], [], []>} : vector<8x16xf32>, vector<16x64xf32>, vector<8x64xf32> -> vector<8x64xf32>
    %cst_31 = arith.constant 0.000000e+00 : f32
    %49 = vector.broadcast %cst_31 : f32 to vector<8x64xf32>
    %50 = arith.subf %49, %48 : vector<8x64xf32>
    %51 = arith.mulf %46, %46 : vector<8x64xf32>
    %52 = arith.mulf %50, %50 : vector<8x64xf32>
    %53 = arith.addf %51, %52 : vector<8x64xf32>
    %cst_32 = arith.constant dense<0.000000e+00> : vector<8xf32>
    %54 = vector.multi_reduction <add>, %53, %cst_32 [1] : vector<8x64xf32> to vector<8xf32>
    %55 = vector.shape_cast %54 : vector<8xf32> to vector<8x1xf32>
    %cst_33 = arith.constant 1.000000e+00 : f32
    %56 = vector.broadcast %cst_33 : f32 to vector<1x64xf32>
    %cst_34 = arith.constant dense<0.000000e+00> : vector<1x8xf32>
    %57 = tpu.matmul %56, %53, %cst_34 {dimension_numbers = #tpu.dot_dimension_numbers<[1], [1], [0], [0], [0, 0, 1, 0], [], []>} : vector<1x64xf32>, vector<8x64xf32>, vector<1x8xf32> -> vector<1x8xf32>
    %58 = tpu.iota {dimensions = array<i32: 0>} : vector<8x8xi32>
    %59 = tpu.iota {dimensions = array<i32: 1>} : vector<8x8xi32>
    %60 = arith.cmpi eq, %58, %59 : vector<8x8xi32>
    %61 = vector.broadcast %55 : vector<8x1xf32> to vector<8x8xf32>
    %62 = vector.broadcast %57 : vector<1x8xf32> to vector<8x8xf32>
    %63 = arith.cmpf ole, %61, %62 : vector<8x8xf32>
    %64 = arith.ori %63, %60 : vector<8x8xi1>
    %65 = arith.extui %64 : vector<8x8xi1> to vector<8x8xi32>
    %66 = arith.sitofp %65 : vector<8x8xi32> to vector<8x8xf32>
    %cst_35 = arith.constant 1.000000e+00 : f32
    %67 = vector.broadcast %cst_35 : f32 to vector<1x8xf32>
    %cst_36 = arith.constant dense<0.000000e+00> : vector<1x8xf32>
    %68 = tpu.matmul %67, %66, %cst_36 {dimension_numbers = #tpu.dot_dimension_numbers<[1], [0], [0], [1], [0, 0, 1, 1], [], []>} : vector<1x8xf32>, vector<8x8xf32>, vector<1x8xf32> -> vector<1x8xf32>
    %cst_37 = arith.constant 4.000000e+00 : f32
    %69 = vector.broadcast %cst_37 : f32 to vector<1x8xf32>
    %70 = arith.cmpf oge, %68, %69 : vector<1x8xf32>
    %cst_38 = arith.constant 0x7F800000 : f32
    %71 = vector.broadcast %cst_38 : f32 to vector<1x8xf32>
    %72 = arith.select %70, %57, %71 : vector<1x8xi1>, vector<1x8xf32>
    %cst_39 = arith.constant dense<0x7F800000> : vector<1xf32>
    %73 = vector.multi_reduction <minimumf>, %72, %cst_39 [1] : vector<1x8xf32> to vector<1xf32>
    %74 = vector.shape_cast %73 : vector<1xf32> to vector<1x1xf32>
    %cst_40 = arith.constant 9.99999997E-7 : f32
    %75 = vector.broadcast %cst_40 : f32 to vector<1x1xf32>
    %76 = arith.addf %74, %75 : vector<1x1xf32>
    %77 = vector.broadcast %76 : vector<1x1xf32> to vector<8x1xf32>
    %78 = arith.divf %55, %77 : vector<8x1xf32>
    %79 = vector.broadcast %10 : vector<1x1xf32> to vector<8x1xf32>
    %80 = arith.cmpf ogt, %78, %79 : vector<8x1xf32>
    %81 = arith.extui %80 : vector<8x1xi1> to vector<8x1xi32>
    %82 = arith.sitofp %81 : vector<8x1xi32> to vector<8x1xf32>
    %c0_41 = arith.constant 0 : index
    %c0_42 = arith.constant 0 : index
    %c0_43 = arith.constant 0 : index
    %83 = vector.load %arg7[%c0_41, %c0_42, %c0_43] : memref<1x1x64xf32, #tpu.memory_space<vmem>>, vector<1x1x64xf32>
    %84 = vector.shape_cast %83 : vector<1x1x64xf32> to vector<1x64xf32>
    %c0_44 = arith.constant 0 : index
    %c0_45 = arith.constant 0 : index
    %c0_46 = arith.constant 0 : index
    %85 = vector.load %arg9[%c0_44, %c0_45, %c0_46] : memref<1x1x64xf32, #tpu.memory_space<vmem>>, vector<1x1x64xf32>
    %86 = vector.shape_cast %85 : vector<1x1x64xf32> to vector<1x64xf32>
    %87 = vector.broadcast %82 : vector<8x1xf32> to vector<8x64xf32>
    %88 = vector.broadcast %86 : vector<1x64xf32> to vector<8x64xf32>
    %89 = arith.mulf %87, %88 : vector<8x64xf32>
    %90 = vector.broadcast %84 : vector<1x64xf32> to vector<8x64xf32>
    %91 = arith.addf %90, %89 : vector<8x64xf32>
    %c0_47 = arith.constant 0 : index
    %c0_48 = arith.constant 0 : index
    %c0_49 = arith.constant 0 : index
    %92 = vector.load %arg8[%c0_47, %c0_48, %c0_49] : memref<1x1x64xf32, #tpu.memory_space<vmem>>, vector<1x1x64xf32>
    %93 = vector.shape_cast %92 : vector<1x1x64xf32> to vector<1x64xf32>
    %c0_50 = arith.constant 0 : index
    %c0_51 = arith.constant 0 : index
    %c0_52 = arith.constant 0 : index
    %94 = vector.load %arg10[%c0_50, %c0_51, %c0_52] : memref<1x1x64xf32, #tpu.memory_space<vmem>>, vector<1x1x64xf32>
    %95 = vector.shape_cast %94 : vector<1x1x64xf32> to vector<1x64xf32>
    %96 = vector.broadcast %82 : vector<8x1xf32> to vector<8x64xf32>
    %97 = vector.broadcast %95 : vector<1x64xf32> to vector<8x64xf32>
    %98 = arith.mulf %96, %97 : vector<8x64xf32>
    %99 = vector.broadcast %93 : vector<1x64xf32> to vector<8x64xf32>
    %100 = arith.addf %99, %98 : vector<8x64xf32>
    %101 = arith.mulf %46, %91 : vector<8x64xf32>
    %102 = arith.mulf %50, %100 : vector<8x64xf32>
    %103 = arith.subf %101, %102 : vector<8x64xf32>
    %104 = arith.mulf %46, %100 : vector<8x64xf32>
    %105 = arith.mulf %50, %91 : vector<8x64xf32>
    %106 = arith.addf %104, %105 : vector<8x64xf32>
    %c0_53 = arith.constant 0 : index
    %c0_54 = arith.constant 0 : index
    %107 = vector.load %arg17[%c0_53, %c0_54] : memref<16x8xf32, #tpu.memory_space<vmem>>, vector<16x8xf32>
    %cst_55 = arith.constant dense<0.000000e+00> : vector<16x64xf32>
    %108 = tpu.matmul %107, %103, %cst_55 {dimension_numbers = #tpu.dot_dimension_numbers<[1], [0], [0], [1], [0, 0, 1, 1], [], []>} : vector<16x8xf32>, vector<8x64xf32>, vector<16x64xf32> -> vector<16x64xf32>
    %c0_56 = arith.constant 0 : index
    %c0_57 = arith.constant 0 : index
    %109 = vector.load %arg18[%c0_56, %c0_57] : memref<16x8xf32, #tpu.memory_space<vmem>>, vector<16x8xf32>
    %cst_58 = arith.constant dense<0.000000e+00> : vector<16x64xf32>
    %110 = tpu.matmul %109, %106, %cst_58 {dimension_numbers = #tpu.dot_dimension_numbers<[1], [0], [0], [1], [0, 0, 1, 1], [], []>} : vector<16x8xf32>, vector<8x64xf32>, vector<16x64xf32> -> vector<16x64xf32>
    %111 = arith.subf %108, %110 : vector<16x64xf32>
    %112 = arith.addf %4, %111 : vector<16x64xf32>
    %c0_59 = arith.constant 0 : index
    %c0_60 = arith.constant 0 : index
    %c0_61 = arith.constant 0 : index
    %113 = vector.load %arg19[%c0_59, %c0_60, %c0_61] : memref<1x16x64xf32, #tpu.memory_space<vmem>>, vector<1x16x64xf32>
    %114 = vector.shape_cast %113 : vector<1x16x64xf32> to vector<16x64xf32>
    %115 = vector.shape_cast %112 : vector<16x64xf32> to vector<1x16x64xf32>
    tpu.vector_store %arg19[%c0_59, %c0_60, %c0_61], %115 {strides = array<i32>} : memref<1x16x64xf32, #tpu.memory_space<vmem>>, vector<1x16x64xf32>,
    return
  }
  func.func @transform_0(%arg0: i32, %arg1: i32) -> (i32, i32, i32) {
    %c0_i32 = arith.constant 0 : i32
    %c0_i32_0 = arith.constant 0 : i32
    %c0_i32_1 = arith.constant 0 : i32
    return %arg0, %c0_i32, %c0_i32_0 : i32, i32, i32
  }
  func.func @transform_1(%arg0: i32, %arg1: i32) -> (i32, i32) {
    %c0_i32 = arith.constant 0 : i32
    %c0_i32_0 = arith.constant 0 : i32
    %c0_i32_1 = arith.constant 0 : i32
    return %c0_i32, %c0_i32_0 : i32, i32
  }
  func.func @transform_2(%arg0: i32, %arg1: i32) -> (i32, i32) {
    %c0_i32 = arith.constant 0 : i32
    %c0_i32_0 = arith.constant 0 : i32
    %c0_i32_1 = arith.constant 0 : i32
    return %c0_i32, %c0_i32_0 : i32, i32
  }
  func.func @transform_3(%arg0: i32, %arg1: i32) -> (i32, i32, i32) {
    %c0_i32 = arith.constant 0 : i32
    %c0_i32_0 = arith.constant 0 : i32
    %c0_i32_1 = arith.constant 0 : i32
    return %arg1, %c0_i32, %c0_i32_0 : i32, i32, i32
  }
  func.func @transform_4(%arg0: i32, %arg1: i32) -> (i32, i32, i32) {
    %c0_i32 = arith.constant 0 : i32
    %c0_i32_0 = arith.constant 0 : i32
    %c0_i32_1 = arith.constant 0 : i32
    return %arg1, %c0_i32, %c0_i32_0 : i32, i32, i32
  }
  func.func @transform_5(%arg0: i32, %arg1: i32) -> (i32, i32, i32) {
    %c0_i32 = arith.constant 0 : i32
    %c0_i32_0 = arith.constant 0 : i32
    %c0_i32_1 = arith.constant 0 : i32
    return %arg1, %c0_i32, %c0_i32_0 : i32, i32, i32
  }
  func.func @transform_6(%arg0: i32, %arg1: i32) -> (i32, i32, i32) {
    %c0_i32 = arith.constant 0 : i32
    %c0_i32_0 = arith.constant 0 : i32
    %c0_i32_1 = arith.constant 0 : i32
    return %arg1, %c0_i32, %c0_i32_0 : i32, i32, i32
  }
  func.func @transform_7(%arg0: i32, %arg1: i32) -> (i32, i32, i32) {
    %c0_i32 = arith.constant 0 : i32
    %c0_i32_0 = arith.constant 0 : i32
    %c0_i32_1 = arith.constant 0 : i32
    return %arg1, %c0_i32, %c0_i32_0 : i32, i32, i32
  }
  func.func @transform_8(%arg0: i32, %arg1: i32) -> (i32, i32, i32) {
    %c0_i32 = arith.constant 0 : i32
    %c0_i32_0 = arith.constant 0 : i32
    %c0_i32_1 = arith.constant 0 : i32
    return %arg1, %c0_i32, %c0_i32_0 : i32, i32, i32
  }
  func.func @transform_9(%arg0: i32, %arg1: i32) -> (i32, i32, i32) {
    %c0_i32 = arith.constant 0 : i32
    %c0_i32_0 = arith.constant 0 : i32
    %c0_i32_1 = arith.constant 0 : i32
    return %arg1, %c0_i32, %c0_i32_0 : i32, i32, i32
  }
  func.func @transform_10(%arg0: i32, %arg1: i32) -> (i32, i32, i32) {
    %c0_i32 = arith.constant 0 : i32
    %c0_i32_0 = arith.constant 0 : i32
    %c0_i32_1 = arith.constant 0 : i32
    return %arg1, %c0_i32, %c0_i32_0 : i32, i32, i32
  }
  func.func @transform_11(%arg0: i32, %arg1: i32) -> (i32, i32, i32) {
    %c0_i32 = arith.constant 0 : i32
    %c0_i32_0 = arith.constant 0 : i32
    %c0_i32_1 = arith.constant 0 : i32
    return %arg1, %c0_i32, %c0_i32_0 : i32, i32, i32
  }
  func.func @transform_12(%arg0: i32, %arg1: i32) -> (i32, i32) {
    %c0_i32 = arith.constant 0 : i32
    %c0_i32_0 = arith.constant 0 : i32
    %c0_i32_1 = arith.constant 0 : i32
    return %c0_i32, %c0_i32_0 : i32, i32
  }
  func.func @transform_13(%arg0: i32, %arg1: i32) -> (i32, i32) {
    %c0_i32 = arith.constant 0 : i32
    %c0_i32_0 = arith.constant 0 : i32
    %c0_i32_1 = arith.constant 0 : i32
    return %c0_i32, %c0_i32_0 : i32, i32
  }
  func.func @transform_14(%arg0: i32, %arg1: i32) -> (i32, i32) {
    %c0_i32 = arith.constant 0 : i32
    %c0_i32_0 = arith.constant 0 : i32
    %c0_i32_1 = arith.constant 0 : i32
    return %c0_i32, %c0_i32_0 : i32, i32
  }
  func.func @transform_15(%arg0: i32, %arg1: i32) -> (i32, i32) {
    %c0_i32 = arith.constant 0 : i32
    %c0_i32_0 = arith.constant 0 : i32
    %c0_i32_1 = arith.constant 0 : i32
    return %c0_i32, %c0_i32_0 : i32, i32
  }
  func.func @transform_16(%arg0: i32, %arg1: i32) -> (i32, i32) {
    %c0_i32 = arith.constant 0 : i32
    %c0_i32_0 = arith.constant 0 : i32
    %c0_i32_1 = arith.constant 0 : i32
    return %c0_i32, %c0_i32_0 : i32, i32
  }
  func.func @transform_17(%arg0: i32, %arg1: i32) -> (i32, i32, i32) {
    %c0_i32 = arith.constant 0 : i32
    %c0_i32_0 = arith.constant 0 : i32
    %c0_i32_1 = arith.constant 0 : i32
    return %arg0, %c0_i32, %c0_i32_0 : i32, i32, i32
  }
}

module attributes {stable_mosaic.version = 11 : i64} {
  func.func @_stage_kernel(%arg0: i32, %arg1: i32, %arg2: memref<1x4x512xf32, #tpu.memory_space<vmem>>, %arg3: memref<512x128xf32, #tpu.memory_space<vmem>>, %arg4: memref<1x128xf32, #tpu.memory_space<vmem>>, %arg5: memref<1x1x128xf32, #tpu.memory_space<vmem>>, %arg6: memref<1x1x128xf32, #tpu.memory_space<vmem>>, %arg7: memref<1x1x128xf32, #tpu.memory_space<vmem>>, %arg8: memref<1x1x128xf32, #tpu.memory_space<vmem>>, %arg9: memref<1x1x128xf32, #tpu.memory_space<vmem>>, %arg10: memref<1x1x128xf32, #tpu.memory_space<vmem>>, %arg11: memref<1x1x1xf32, #tpu.memory_space<vmem>>, %arg12: memref<1x1x1xf32, #tpu.memory_space<vmem>>, %arg13: memref<1x1x1xf32, #tpu.memory_space<vmem>>, %arg14: memref<4x4xf32, #tpu.memory_space<vmem>>, %arg15: memref<2x4xf32, #tpu.memory_space<vmem>>, %arg16: memref<2x4xf32, #tpu.memory_space<vmem>>, %arg17: memref<4x2xf32, #tpu.memory_space<vmem>>, %arg18: memref<4x2xf32, #tpu.memory_space<vmem>>, %arg19: memref<1x4x128xf32, #tpu.memory_space<vmem>>) attributes {dimension_semantics = [#tpu.dimension_semantics<parallel>, #tpu.dimension_semantics<arbitrary>], iteration_bounds = array<i64: 2, 2>, scalar_prefetch = 0 : i64, scratch_operands = 0 : i64, tpu.core_type = #tpu.core_type<tc>, window_params = [{transform_indices = @transform_0, window_bounds = array<i64: 1, 4, 512>}, {pipeline_mode = #tpu.pipeline_mode<synchronous>, transform_indices = @transform_1, window_bounds = array<i64: 512, 128>}, {pipeline_mode = #tpu.pipeline_mode<synchronous>, transform_indices = @transform_2, window_bounds = array<i64: 1, 128>}, {transform_indices = @transform_3, window_bounds = array<i64: 1, 1, 128>}, {transform_indices = @transform_4, window_bounds = array<i64: 1, 1, 128>}, {transform_indices = @transform_5, window_bounds = array<i64: 1, 1, 128>}, {transform_indices = @transform_6, window_bounds = array<i64: 1, 1, 128>}, {transform_indices = @transform_7, window_bounds = array<i64: 1, 1, 128>}, {transform_indices = @transform_8, window_bounds = array<i64: 1, 1, 128>}, {transform_indices = @transform_9, window_bounds = array<i64: 1, 1, 1>}, {transform_indices = @transform_10, window_bounds = array<i64: 1, 1, 1>}, {transform_indices = @transform_11, window_bounds = array<i64: 1, 1, 1>}, {pipeline_mode = #tpu.pipeline_mode<synchronous>, transform_indices = @transform_12, window_bounds = array<i64: 4, 4>}, {pipeline_mode = #tpu.pipeline_mode<synchronous>, transform_indices = @transform_13, window_bounds = array<i64: 2, 4>}, {pipeline_mode = #tpu.pipeline_mode<synchronous>, transform_indices = @transform_14, window_bounds = array<i64: 2, 4>}, {pipeline_mode = #tpu.pipeline_mode<synchronous>, transform_indices = @transform_15, window_bounds = array<i64: 4, 2>}, {pipeline_mode = #tpu.pipeline_mode<synchronous>, transform_indices = @transform_16, window_bounds = array<i64: 4, 2>}, {transform_indices = @transform_17, window_bounds = array<i64: 1, 4, 128>}]} {
    %c0_i32 = arith.constant 0 : i32
    %0 = arith.cmpi eq, %arg1, %c0_i32 : i32
    %1 = arith.extui %0 : i1 to i32
    %c0_i32_0 = arith.constant 0 : i32
    %2 = arith.cmpi ne, %1, %c0_i32_0 : i32
    scf.if %2 {
      %c0_62 = arith.constant 0 : index
      %c0_63 = arith.constant 0 : index
      %c0_64 = arith.constant 0 : index
      %116 = vector.load %arg2[%c0_62, %c0_63, %c0_64] : memref<1x4x512xf32, #tpu.memory_space<vmem>>, vector<1x4x512xf32>
      %117 = vector.shape_cast %116 : vector<1x4x512xf32> to vector<4x512xf32>
      %c0_65 = arith.constant 0 : index
      %c0_66 = arith.constant 0 : index
      %118 = vector.load %arg3[%c0_65, %c0_66] : memref<512x128xf32, #tpu.memory_space<vmem>>, vector<512x128xf32>
      %cst_67 = arith.constant dense<0.000000e+00> : vector<4x128xf32>
      %119 = tpu.matmul %117, %118, %cst_67 {dimension_numbers = #tpu.dot_dimension_numbers<[1], [0], [0], [1], [0, 0, 1, 1], [], []>} : vector<4x512xf32>, vector<512x128xf32>, vector<4x128xf32> -> vector<4x128xf32>
      %c0_68 = arith.constant 0 : index
      %c0_69 = arith.constant 0 : index
      %120 = vector.load %arg4[%c0_68, %c0_69] : memref<1x128xf32, #tpu.memory_space<vmem>>, vector<1x128xf32>
      %121 = vector.broadcast %120 : vector<1x128xf32> to vector<4x128xf32>
      %122 = arith.addf %119, %121 : vector<4x128xf32>
      %c0_70 = arith.constant 0 : index
      %c0_71 = arith.constant 0 : index
      %c0_72 = arith.constant 0 : index
      %123 = vector.load %arg19[%c0_70, %c0_71, %c0_72] : memref<1x4x128xf32, #tpu.memory_space<vmem>>, vector<1x4x128xf32>
      %124 = vector.shape_cast %123 : vector<1x4x128xf32> to vector<4x128xf32>
      %125 = vector.shape_cast %122 : vector<4x128xf32> to vector<1x4x128xf32>
      tpu.vector_store %arg19[%c0_70, %c0_71, %c0_72], %125 {strides = array<i32>} : memref<1x4x128xf32, #tpu.memory_space<vmem>>, vector<1x4x128xf32>,
    } else {
    }
    %c0 = arith.constant 0 : index
    %c0_1 = arith.constant 0 : index
    %c0_2 = arith.constant 0 : index
    %3 = vector.load %arg19[%c0, %c0_1, %c0_2] : memref<1x4x128xf32, #tpu.memory_space<vmem>>, vector<1x4x128xf32>
    %4 = vector.shape_cast %3 : vector<1x4x128xf32> to vector<4x128xf32>
    %c0_3 = arith.constant 0 : index
    %c0_4 = arith.constant 0 : index
    %c0_5 = arith.constant 0 : index
    %5 = vector.load %arg5[%c0_3, %c0_4, %c0_5] : memref<1x1x128xf32, #tpu.memory_space<vmem>>, vector<1x1x128xf32>
    %6 = vector.shape_cast %5 : vector<1x1x128xf32> to vector<1x128xf32>
    %c0_6 = arith.constant 0 : index
    %c0_7 = arith.constant 0 : index
    %c0_8 = arith.constant 0 : index
    %7 = vector.load %arg6[%c0_6, %c0_7, %c0_8] : memref<1x1x128xf32, #tpu.memory_space<vmem>>, vector<1x1x128xf32>
    %8 = vector.shape_cast %7 : vector<1x1x128xf32> to vector<1x128xf32>
    %c0_9 = arith.constant 0 : index
    %c0_10 = arith.constant 0 : index
    %c0_11 = arith.constant 0 : index
    %9 = vector.load %arg11[%c0_9, %c0_10, %c0_11] : memref<1x1x1xf32, #tpu.memory_space<vmem>>, vector<1x1x1xf32>
    %10 = vector.shape_cast %9 : vector<1x1x1xf32> to vector<1x1xf32>
    %c0_12 = arith.constant 0 : index
    %c0_13 = arith.constant 0 : index
    %c0_14 = arith.constant 0 : index
    %11 = vector.load %arg12[%c0_12, %c0_13, %c0_14] : memref<1x1x1xf32, #tpu.memory_space<vmem>>, vector<1x1x1xf32>
    %12 = vector.shape_cast %11 : vector<1x1x1xf32> to vector<1x1xf32>
    %c0_15 = arith.constant 0 : index
    %c0_16 = arith.constant 0 : index
    %c0_17 = arith.constant 0 : index
    %13 = vector.load %arg13[%c0_15, %c0_16, %c0_17] : memref<1x1x1xf32, #tpu.memory_space<vmem>>, vector<1x1x1xf32>
    %14 = vector.shape_cast %13 : vector<1x1x1xf32> to vector<1x1xf32>
    %cst = arith.constant dense<0.000000e+00> : vector<4xf32>
    %15 = vector.multi_reduction <add>, %4, %cst [1] : vector<4x128xf32> to vector<4xf32>
    %16 = vector.shape_cast %15 : vector<4xf32> to vector<4x1xf32>
    %cst_18 = arith.constant 1.280000e+02 : f32
    %17 = vector.broadcast %cst_18 : f32 to vector<4x1xf32>
    %18 = arith.divf %16, %17 : vector<4x1xf32>
    %19 = vector.broadcast %18 : vector<4x1xf32> to vector<4x128xf32>
    %20 = arith.subf %4, %19 : vector<4x128xf32>
    %21 = arith.mulf %20, %20 : vector<4x128xf32>
    %cst_19 = arith.constant dense<0.000000e+00> : vector<4xf32>
    %22 = vector.multi_reduction <add>, %21, %cst_19 [1] : vector<4x128xf32> to vector<4xf32>
    %23 = vector.shape_cast %22 : vector<4xf32> to vector<4x1xf32>
    %cst_20 = arith.constant 1.280000e+02 : f32
    %24 = vector.broadcast %cst_20 : f32 to vector<4x1xf32>
    %25 = arith.divf %23, %24 : vector<4x1xf32>
    %26 = vector.broadcast %18 : vector<4x1xf32> to vector<4x128xf32>
    %27 = arith.subf %4, %26 : vector<4x128xf32>
    %cst_21 = arith.constant 9.99999974E-6 : f32
    %28 = vector.broadcast %cst_21 : f32 to vector<4x1xf32>
    %29 = arith.addf %25, %28 : vector<4x1xf32>
    %30 = math.rsqrt %29 : vector<4x1xf32>
    %31 = vector.broadcast %30 : vector<4x1xf32> to vector<4x128xf32>
    %32 = arith.mulf %27, %31 : vector<4x128xf32>
    %33 = vector.broadcast %6 : vector<1x128xf32> to vector<4x128xf32>
    %34 = arith.mulf %32, %33 : vector<4x128xf32>
    %35 = vector.broadcast %8 : vector<1x128xf32> to vector<4x128xf32>
    %36 = arith.addf %34, %35 : vector<4x128xf32>
    %c0_22 = arith.constant 0 : index
    %c0_23 = arith.constant 0 : index
    %37 = vector.load %arg14[%c0_22, %c0_23] : memref<4x4xf32, #tpu.memory_space<vmem>>, vector<4x4xf32>
    %cst_24 = arith.constant dense<0.000000e+00> : vector<4x128xf32>
    %38 = tpu.matmul %37, %36, %cst_24 {dimension_numbers = #tpu.dot_dimension_numbers<[1], [0], [0], [1], [0, 0, 1, 1], [], []>} : vector<4x4xf32>, vector<4x128xf32>, vector<4x128xf32> -> vector<4x128xf32>
    %39 = arith.cmpf ogt, %36, %38 : vector<4x128xf32>
    %40 = vector.broadcast %12 : vector<1x1xf32> to vector<4x128xf32>
    %41 = arith.mulf %36, %40 : vector<4x128xf32>
    %42 = vector.broadcast %14 : vector<1x1xf32> to vector<4x128xf32>
    %43 = arith.mulf %36, %42 : vector<4x128xf32>
    %44 = arith.select %39, %41, %43 : vector<4x128xi1>, vector<4x128xf32>
    %c0_25 = arith.constant 0 : index
    %c0_26 = arith.constant 0 : index
    %45 = vector.load %arg15[%c0_25, %c0_26] : memref<2x4xf32, #tpu.memory_space<vmem>>, vector<2x4xf32>
    %cst_27 = arith.constant dense<0.000000e+00> : vector<2x128xf32>
    %46 = tpu.matmul %45, %44, %cst_27 {dimension_numbers = #tpu.dot_dimension_numbers<[1], [0], [0], [1], [0, 0, 1, 1], [], []>} : vector<2x4xf32>, vector<4x128xf32>, vector<2x128xf32> -> vector<2x128xf32>
    %c0_28 = arith.constant 0 : index
    %c0_29 = arith.constant 0 : index
    %47 = vector.load %arg16[%c0_28, %c0_29] : memref<2x4xf32, #tpu.memory_space<vmem>>, vector<2x4xf32>
    %cst_30 = arith.constant dense<0.000000e+00> : vector<2x128xf32>
    %48 = tpu.matmul %47, %44, %cst_30 {dimension_numbers = #tpu.dot_dimension_numbers<[1], [0], [0], [1], [0, 0, 1, 1], [], []>} : vector<2x4xf32>, vector<4x128xf32>, vector<2x128xf32> -> vector<2x128xf32>
    %cst_31 = arith.constant 0.000000e+00 : f32
    %49 = vector.broadcast %cst_31 : f32 to vector<2x128xf32>
    %50 = arith.subf %49, %48 : vector<2x128xf32>
    %51 = arith.mulf %46, %46 : vector<2x128xf32>
    %52 = arith.mulf %50, %50 : vector<2x128xf32>
    %53 = arith.addf %51, %52 : vector<2x128xf32>
    %cst_32 = arith.constant dense<0.000000e+00> : vector<2xf32>
    %54 = vector.multi_reduction <add>, %53, %cst_32 [1] : vector<2x128xf32> to vector<2xf32>
    %55 = vector.shape_cast %54 : vector<2xf32> to vector<2x1xf32>
    %cst_33 = arith.constant 1.000000e+00 : f32
    %56 = vector.broadcast %cst_33 : f32 to vector<1x128xf32>
    %cst_34 = arith.constant dense<0.000000e+00> : vector<1x2xf32>
    %57 = tpu.matmul %56, %53, %cst_34 {dimension_numbers = #tpu.dot_dimension_numbers<[1], [1], [0], [0], [0, 0, 1, 0], [], []>} : vector<1x128xf32>, vector<2x128xf32>, vector<1x2xf32> -> vector<1x2xf32>
    %58 = tpu.iota {dimensions = array<i32: 0>} : vector<2x2xi32>
    %59 = tpu.iota {dimensions = array<i32: 1>} : vector<2x2xi32>
    %60 = arith.cmpi eq, %58, %59 : vector<2x2xi32>
    %61 = vector.broadcast %55 : vector<2x1xf32> to vector<2x2xf32>
    %62 = vector.broadcast %57 : vector<1x2xf32> to vector<2x2xf32>
    %63 = arith.cmpf ole, %61, %62 : vector<2x2xf32>
    %64 = arith.ori %63, %60 : vector<2x2xi1>
    %65 = arith.extui %64 : vector<2x2xi1> to vector<2x2xi32>
    %66 = arith.sitofp %65 : vector<2x2xi32> to vector<2x2xf32>
    %cst_35 = arith.constant 1.000000e+00 : f32
    %67 = vector.broadcast %cst_35 : f32 to vector<1x2xf32>
    %cst_36 = arith.constant dense<0.000000e+00> : vector<1x2xf32>
    %68 = tpu.matmul %67, %66, %cst_36 {dimension_numbers = #tpu.dot_dimension_numbers<[1], [0], [0], [1], [0, 0, 1, 1], [], []>} : vector<1x2xf32>, vector<2x2xf32>, vector<1x2xf32> -> vector<1x2xf32>
    %cst_37 = arith.constant 1.000000e+00 : f32
    %69 = vector.broadcast %cst_37 : f32 to vector<1x2xf32>
    %70 = arith.cmpf oge, %68, %69 : vector<1x2xf32>
    %cst_38 = arith.constant 0x7F800000 : f32
    %71 = vector.broadcast %cst_38 : f32 to vector<1x2xf32>
    %72 = arith.select %70, %57, %71 : vector<1x2xi1>, vector<1x2xf32>
    %cst_39 = arith.constant dense<0x7F800000> : vector<1xf32>
    %73 = vector.multi_reduction <minimumf>, %72, %cst_39 [1] : vector<1x2xf32> to vector<1xf32>
    %74 = vector.shape_cast %73 : vector<1xf32> to vector<1x1xf32>
    %cst_40 = arith.constant 9.99999997E-7 : f32
    %75 = vector.broadcast %cst_40 : f32 to vector<1x1xf32>
    %76 = arith.addf %74, %75 : vector<1x1xf32>
    %77 = vector.broadcast %76 : vector<1x1xf32> to vector<2x1xf32>
    %78 = arith.divf %55, %77 : vector<2x1xf32>
    %79 = vector.broadcast %10 : vector<1x1xf32> to vector<2x1xf32>
    %80 = arith.cmpf ogt, %78, %79 : vector<2x1xf32>
    %81 = arith.extui %80 : vector<2x1xi1> to vector<2x1xi32>
    %82 = arith.sitofp %81 : vector<2x1xi32> to vector<2x1xf32>
    %c0_41 = arith.constant 0 : index
    %c0_42 = arith.constant 0 : index
    %c0_43 = arith.constant 0 : index
    %83 = vector.load %arg7[%c0_41, %c0_42, %c0_43] : memref<1x1x128xf32, #tpu.memory_space<vmem>>, vector<1x1x128xf32>
    %84 = vector.shape_cast %83 : vector<1x1x128xf32> to vector<1x128xf32>
    %c0_44 = arith.constant 0 : index
    %c0_45 = arith.constant 0 : index
    %c0_46 = arith.constant 0 : index
    %85 = vector.load %arg9[%c0_44, %c0_45, %c0_46] : memref<1x1x128xf32, #tpu.memory_space<vmem>>, vector<1x1x128xf32>
    %86 = vector.shape_cast %85 : vector<1x1x128xf32> to vector<1x128xf32>
    %87 = vector.broadcast %82 : vector<2x1xf32> to vector<2x128xf32>
    %88 = vector.broadcast %86 : vector<1x128xf32> to vector<2x128xf32>
    %89 = arith.mulf %87, %88 : vector<2x128xf32>
    %90 = vector.broadcast %84 : vector<1x128xf32> to vector<2x128xf32>
    %91 = arith.addf %90, %89 : vector<2x128xf32>
    %c0_47 = arith.constant 0 : index
    %c0_48 = arith.constant 0 : index
    %c0_49 = arith.constant 0 : index
    %92 = vector.load %arg8[%c0_47, %c0_48, %c0_49] : memref<1x1x128xf32, #tpu.memory_space<vmem>>, vector<1x1x128xf32>
    %93 = vector.shape_cast %92 : vector<1x1x128xf32> to vector<1x128xf32>
    %c0_50 = arith.constant 0 : index
    %c0_51 = arith.constant 0 : index
    %c0_52 = arith.constant 0 : index
    %94 = vector.load %arg10[%c0_50, %c0_51, %c0_52] : memref<1x1x128xf32, #tpu.memory_space<vmem>>, vector<1x1x128xf32>
    %95 = vector.shape_cast %94 : vector<1x1x128xf32> to vector<1x128xf32>
    %96 = vector.broadcast %82 : vector<2x1xf32> to vector<2x128xf32>
    %97 = vector.broadcast %95 : vector<1x128xf32> to vector<2x128xf32>
    %98 = arith.mulf %96, %97 : vector<2x128xf32>
    %99 = vector.broadcast %93 : vector<1x128xf32> to vector<2x128xf32>
    %100 = arith.addf %99, %98 : vector<2x128xf32>
    %101 = arith.mulf %46, %91 : vector<2x128xf32>
    %102 = arith.mulf %50, %100 : vector<2x128xf32>
    %103 = arith.subf %101, %102 : vector<2x128xf32>
    %104 = arith.mulf %46, %100 : vector<2x128xf32>
    %105 = arith.mulf %50, %91 : vector<2x128xf32>
    %106 = arith.addf %104, %105 : vector<2x128xf32>
    %c0_53 = arith.constant 0 : index
    %c0_54 = arith.constant 0 : index
    %107 = vector.load %arg17[%c0_53, %c0_54] : memref<4x2xf32, #tpu.memory_space<vmem>>, vector<4x2xf32>
    %cst_55 = arith.constant dense<0.000000e+00> : vector<4x128xf32>
    %108 = tpu.matmul %107, %103, %cst_55 {dimension_numbers = #tpu.dot_dimension_numbers<[1], [0], [0], [1], [0, 0, 1, 1], [], []>} : vector<4x2xf32>, vector<2x128xf32>, vector<4x128xf32> -> vector<4x128xf32>
    %c0_56 = arith.constant 0 : index
    %c0_57 = arith.constant 0 : index
    %109 = vector.load %arg18[%c0_56, %c0_57] : memref<4x2xf32, #tpu.memory_space<vmem>>, vector<4x2xf32>
    %cst_58 = arith.constant dense<0.000000e+00> : vector<4x128xf32>
    %110 = tpu.matmul %109, %106, %cst_58 {dimension_numbers = #tpu.dot_dimension_numbers<[1], [0], [0], [1], [0, 0, 1, 1], [], []>} : vector<4x2xf32>, vector<2x128xf32>, vector<4x128xf32> -> vector<4x128xf32>
    %111 = arith.subf %108, %110 : vector<4x128xf32>
    %112 = arith.addf %4, %111 : vector<4x128xf32>
    %c0_59 = arith.constant 0 : index
    %c0_60 = arith.constant 0 : index
    %c0_61 = arith.constant 0 : index
    %113 = vector.load %arg19[%c0_59, %c0_60, %c0_61] : memref<1x4x128xf32, #tpu.memory_space<vmem>>, vector<1x4x128xf32>
    %114 = vector.shape_cast %113 : vector<1x4x128xf32> to vector<4x128xf32>
    %115 = vector.shape_cast %112 : vector<4x128xf32> to vector<1x4x128xf32>
    tpu.vector_store %arg19[%c0_59, %c0_60, %c0_61], %115 {strides = array<i32>} : memref<1x4x128xf32, #tpu.memory_space<vmem>>, vector<1x4x128xf32>,
    return
  }
  func.func @transform_0(%arg0: i32, %arg1: i32) -> (i32, i32, i32) {
    %c0_i32 = arith.constant 0 : i32
    %c0_i32_0 = arith.constant 0 : i32
    %c0_i32_1 = arith.constant 0 : i32
    return %arg0, %c0_i32, %c0_i32_0 : i32, i32, i32
  }
  func.func @transform_1(%arg0: i32, %arg1: i32) -> (i32, i32) {
    %c0_i32 = arith.constant 0 : i32
    %c0_i32_0 = arith.constant 0 : i32
    %c0_i32_1 = arith.constant 0 : i32
    return %c0_i32, %c0_i32_0 : i32, i32
  }
  func.func @transform_2(%arg0: i32, %arg1: i32) -> (i32, i32) {
    %c0_i32 = arith.constant 0 : i32
    %c0_i32_0 = arith.constant 0 : i32
    %c0_i32_1 = arith.constant 0 : i32
    return %c0_i32, %c0_i32_0 : i32, i32
  }
  func.func @transform_3(%arg0: i32, %arg1: i32) -> (i32, i32, i32) {
    %c0_i32 = arith.constant 0 : i32
    %c0_i32_0 = arith.constant 0 : i32
    %c0_i32_1 = arith.constant 0 : i32
    return %arg1, %c0_i32, %c0_i32_0 : i32, i32, i32
  }
  func.func @transform_4(%arg0: i32, %arg1: i32) -> (i32, i32, i32) {
    %c0_i32 = arith.constant 0 : i32
    %c0_i32_0 = arith.constant 0 : i32
    %c0_i32_1 = arith.constant 0 : i32
    return %arg1, %c0_i32, %c0_i32_0 : i32, i32, i32
  }
  func.func @transform_5(%arg0: i32, %arg1: i32) -> (i32, i32, i32) {
    %c0_i32 = arith.constant 0 : i32
    %c0_i32_0 = arith.constant 0 : i32
    %c0_i32_1 = arith.constant 0 : i32
    return %arg1, %c0_i32, %c0_i32_0 : i32, i32, i32
  }
  func.func @transform_6(%arg0: i32, %arg1: i32) -> (i32, i32, i32) {
    %c0_i32 = arith.constant 0 : i32
    %c0_i32_0 = arith.constant 0 : i32
    %c0_i32_1 = arith.constant 0 : i32
    return %arg1, %c0_i32, %c0_i32_0 : i32, i32, i32
  }
  func.func @transform_7(%arg0: i32, %arg1: i32) -> (i32, i32, i32) {
    %c0_i32 = arith.constant 0 : i32
    %c0_i32_0 = arith.constant 0 : i32
    %c0_i32_1 = arith.constant 0 : i32
    return %arg1, %c0_i32, %c0_i32_0 : i32, i32, i32
  }
  func.func @transform_8(%arg0: i32, %arg1: i32) -> (i32, i32, i32) {
    %c0_i32 = arith.constant 0 : i32
    %c0_i32_0 = arith.constant 0 : i32
    %c0_i32_1 = arith.constant 0 : i32
    return %arg1, %c0_i32, %c0_i32_0 : i32, i32, i32
  }
  func.func @transform_9(%arg0: i32, %arg1: i32) -> (i32, i32, i32) {
    %c0_i32 = arith.constant 0 : i32
    %c0_i32_0 = arith.constant 0 : i32
    %c0_i32_1 = arith.constant 0 : i32
    return %arg1, %c0_i32, %c0_i32_0 : i32, i32, i32
  }
  func.func @transform_10(%arg0: i32, %arg1: i32) -> (i32, i32, i32) {
    %c0_i32 = arith.constant 0 : i32
    %c0_i32_0 = arith.constant 0 : i32
    %c0_i32_1 = arith.constant 0 : i32
    return %arg1, %c0_i32, %c0_i32_0 : i32, i32, i32
  }
  func.func @transform_11(%arg0: i32, %arg1: i32) -> (i32, i32, i32) {
    %c0_i32 = arith.constant 0 : i32
    %c0_i32_0 = arith.constant 0 : i32
    %c0_i32_1 = arith.constant 0 : i32
    return %arg1, %c0_i32, %c0_i32_0 : i32, i32, i32
  }
  func.func @transform_12(%arg0: i32, %arg1: i32) -> (i32, i32) {
    %c0_i32 = arith.constant 0 : i32
    %c0_i32_0 = arith.constant 0 : i32
    %c0_i32_1 = arith.constant 0 : i32
    return %c0_i32, %c0_i32_0 : i32, i32
  }
  func.func @transform_13(%arg0: i32, %arg1: i32) -> (i32, i32) {
    %c0_i32 = arith.constant 0 : i32
    %c0_i32_0 = arith.constant 0 : i32
    %c0_i32_1 = arith.constant 0 : i32
    return %c0_i32, %c0_i32_0 : i32, i32
  }
  func.func @transform_14(%arg0: i32, %arg1: i32) -> (i32, i32) {
    %c0_i32 = arith.constant 0 : i32
    %c0_i32_0 = arith.constant 0 : i32
    %c0_i32_1 = arith.constant 0 : i32
    return %c0_i32, %c0_i32_0 : i32, i32
  }
  func.func @transform_15(%arg0: i32, %arg1: i32) -> (i32, i32) {
    %c0_i32 = arith.constant 0 : i32
    %c0_i32_0 = arith.constant 0 : i32
    %c0_i32_1 = arith.constant 0 : i32
    return %c0_i32, %c0_i32_0 : i32, i32
  }
  func.func @transform_16(%arg0: i32, %arg1: i32) -> (i32, i32) {
    %c0_i32 = arith.constant 0 : i32
    %c0_i32_0 = arith.constant 0 : i32
    %c0_i32_1 = arith.constant 0 : i32
    return %c0_i32, %c0_i32_0 : i32, i32
  }
  func.func @transform_17(%arg0: i32, %arg1: i32) -> (i32, i32, i32) {
    %c0_i32 = arith.constant 0 : i32
    %c0_i32_0 = arith.constant 0 : i32
    %c0_i32_1 = arith.constant 0 : i32
    return %arg0, %c0_i32, %c0_i32_0 : i32, i32, i32
  }
}

module attributes {stable_mosaic.version = 11 : i64} {
  func.func @_head_kernel(%arg0: memref<8x128xf32, #tpu.memory_space<vmem>>, %arg1: memref<1x128xf32, #tpu.memory_space<vmem>>, %arg2: memref<1x128xf32, #tpu.memory_space<vmem>>, %arg3: memref<2x8xf32, #tpu.memory_space<vmem>>, %arg4: memref<128x5xf32, #tpu.memory_space<vmem>>, %arg5: memref<1x5xf32, #tpu.memory_space<vmem>>, %arg6: memref<2x5xf32, #tpu.memory_space<vmem>>) attributes {dimension_semantics = [], scalar_prefetch = 0 : i64, scratch_operands = 0 : i64, tpu.core_type = #tpu.core_type<tc>} {
    %c0 = arith.constant 0 : index
    %c0_0 = arith.constant 0 : index
    %0 = vector.load %arg0[%c0, %c0_0] : memref<8x128xf32, #tpu.memory_space<vmem>>, vector<8x128xf32>
    %cst = arith.constant dense<0.000000e+00> : vector<8xf32>
    %1 = vector.multi_reduction <add>, %0, %cst [1] : vector<8x128xf32> to vector<8xf32>
    %2 = vector.shape_cast %1 : vector<8xf32> to vector<8x1xf32>
    %cst_1 = arith.constant 1.280000e+02 : f32
    %3 = vector.broadcast %cst_1 : f32 to vector<8x1xf32>
    %4 = arith.divf %2, %3 : vector<8x1xf32>
    %5 = vector.broadcast %4 : vector<8x1xf32> to vector<8x128xf32>
    %6 = arith.subf %0, %5 : vector<8x128xf32>
    %7 = arith.mulf %6, %6 : vector<8x128xf32>
    %cst_2 = arith.constant dense<0.000000e+00> : vector<8xf32>
    %8 = vector.multi_reduction <add>, %7, %cst_2 [1] : vector<8x128xf32> to vector<8xf32>
    %9 = vector.shape_cast %8 : vector<8xf32> to vector<8x1xf32>
    %cst_3 = arith.constant 1.280000e+02 : f32
    %10 = vector.broadcast %cst_3 : f32 to vector<8x1xf32>
    %11 = arith.divf %9, %10 : vector<8x1xf32>
    %12 = vector.broadcast %4 : vector<8x1xf32> to vector<8x128xf32>
    %13 = arith.subf %0, %12 : vector<8x128xf32>
    %cst_4 = arith.constant 9.99999997E-7 : f32
    %14 = vector.broadcast %cst_4 : f32 to vector<8x1xf32>
    %15 = arith.addf %11, %14 : vector<8x1xf32>
    %16 = math.rsqrt %15 : vector<8x1xf32>
    %17 = vector.broadcast %16 : vector<8x1xf32> to vector<8x128xf32>
    %18 = arith.mulf %13, %17 : vector<8x128xf32>
    %c0_5 = arith.constant 0 : index
    %c0_6 = arith.constant 0 : index
    %19 = vector.load %arg1[%c0_5, %c0_6] : memref<1x128xf32, #tpu.memory_space<vmem>>, vector<1x128xf32>
    %20 = vector.broadcast %19 : vector<1x128xf32> to vector<8x128xf32>
    %21 = arith.mulf %18, %20 : vector<8x128xf32>
    %c0_7 = arith.constant 0 : index
    %c0_8 = arith.constant 0 : index
    %22 = vector.load %arg2[%c0_7, %c0_8] : memref<1x128xf32, #tpu.memory_space<vmem>>, vector<1x128xf32>
    %23 = vector.broadcast %22 : vector<1x128xf32> to vector<8x128xf32>
    %24 = arith.addf %21, %23 : vector<8x128xf32>
    %c0_9 = arith.constant 0 : index
    %c0_10 = arith.constant 0 : index
    %25 = vector.load %arg3[%c0_9, %c0_10] : memref<2x8xf32, #tpu.memory_space<vmem>>, vector<2x8xf32>
    %cst_11 = arith.constant dense<0.000000e+00> : vector<2x128xf32>
    %26 = tpu.matmul %25, %24, %cst_11 {dimension_numbers = #tpu.dot_dimension_numbers<[1], [0], [0], [1], [0, 0, 1, 1], [], []>} : vector<2x8xf32>, vector<8x128xf32>, vector<2x128xf32> -> vector<2x128xf32>
    %c0_12 = arith.constant 0 : index
    %c0_13 = arith.constant 0 : index
    %27 = vector.load %arg4[%c0_12, %c0_13] : memref<128x5xf32, #tpu.memory_space<vmem>>, vector<128x5xf32>
    %cst_14 = arith.constant dense<0.000000e+00> : vector<2x5xf32>
    %28 = tpu.matmul %26, %27, %cst_14 {dimension_numbers = #tpu.dot_dimension_numbers<[1], [0], [0], [1], [0, 0, 1, 1], [], []>} : vector<2x128xf32>, vector<128x5xf32>, vector<2x5xf32> -> vector<2x5xf32>
    %c0_15 = arith.constant 0 : index
    %c0_16 = arith.constant 0 : index
    %29 = vector.load %arg5[%c0_15, %c0_16] : memref<1x5xf32, #tpu.memory_space<vmem>>, vector<1x5xf32>
    %30 = vector.broadcast %29 : vector<1x5xf32> to vector<2x5xf32>
    %31 = arith.addf %28, %30 : vector<2x5xf32>
    %c0_17 = arith.constant 0 : index
    %c0_18 = arith.constant 0 : index
    %32 = vector.load %arg6[%c0_17, %c0_18] : memref<2x5xf32, #tpu.memory_space<vmem>>, vector<2x5xf32>
    tpu.vector_store %arg6[%c0_17, %c0_18], %31 {strides = array<i32>} : memref<2x5xf32, #tpu.memory_space<vmem>>, vector<2x5xf32>,
    return
  }
}

</mosaic_0001>

<llo_original>
// kernel: _lambda_.7
$region0: #{_lambda_.7}
  #allocation0 [shape = 'u32[]', space=smem, size = 0x4, offset = 0x4, fixed_abs, tag = 'smem constant byte address 0x4 - core index']
  #allocation1 [shape = 'u32[144,128]{1,0:T(1,128)}', space=vmem, size = 0x12000, scoped, tag = 'internal scratch']
  %s0 = inlined_call_operand.vmem [shape: f32[2,16,256], index: 0, kind: input, shape index: {}]
  %s1 = inlined_call_operand.vmem [shape: f32[256,64], index: 1, kind: input, shape index: {}]
  %s2 = inlined_call_operand.vmem [shape: f32[1,64], index: 2, kind: input, shape index: {}]
  %s3 = inlined_call_operand.vmem [shape: f32[2,1,64], index: 3, kind: input, shape index: {}]
  %s4 = inlined_call_operand.vmem [shape: f32[2,1,64], index: 4, kind: input, shape index: {}]
  %s5 = inlined_call_operand.vmem [shape: f32[2,1,64], index: 5, kind: input, shape index: {}]
  %s6 = inlined_call_operand.vmem [shape: f32[2,1,64], index: 6, kind: input, shape index: {}]
  %s7 = inlined_call_operand.vmem [shape: f32[2,1,64], index: 7, kind: input, shape index: {}]
  %s8 = inlined_call_operand.vmem [shape: f32[2,1,64], index: 8, kind: input, shape index: {}]
  %s9 = inlined_call_operand.vmem [shape: f32[2,1,1], index: 9, kind: input, shape index: {}]
  %s10 = inlined_call_operand.vmem [shape: f32[2,1,1], index: 10, kind: input, shape index: {}]
  %s11 = inlined_call_operand.vmem [shape: f32[2,1,1], index: 11, kind: input, shape index: {}]
  %s12 = inlined_call_operand.vmem [shape: f32[16,16], index: 12, kind: input, shape index: {}]
  %s13 = inlined_call_operand.vmem [shape: f32[8,16], index: 13, kind: input, shape index: {}]
  %s14 = inlined_call_operand.vmem [shape: f32[8,16], index: 14, kind: input, shape index: {}]
  %s15 = inlined_call_operand.vmem [shape: f32[16,8], index: 15, kind: input, shape index: {}]
  %s16 = inlined_call_operand.vmem [shape: f32[16,8], index: 16, kind: input, shape index: {}]
  %s17 = inlined_call_operand.vmem [shape: f32[2,16,64], index: 17, kind: output, shape index: {}]
  %s18 = sld [smem:[#allocation0]]
  $region105: #{_lambda_.7} parent=0
    _
  %s20 = ssub.s32 1, %s18
  %s21 = scalar_select 0, %s20, %s18
  loop: start=0, step=1, limit=6
  $region2: #{_lambda_.7} parent=0 // loop_pre_header
    _
  $region3: #{_lambda_.7} parent=0 // loop_header
    %s23 = sphi 0, %s27
    %p24 = scmp.ge.s32.totalorder %s23, 6
    %s30 = sphi 0, %s42
    %s31 = sphi 0, %s38
    %s32 = sphi 0, %s30
    %s33 = sphi 0, %s31
    %s34 = sphi 0, %s32
    %s35 = sphi 0, %s33
    %s45 = sphi 0, %s47
    %s48 = sphi 0, %s45
    %s49 = sphi 0, %s48
    %s65 = sphi 0, %s49
    %s69 = sphi 0, %s69
    %s71 = sphi 0, %s69
    %s72 = sphi 0, %s71
    %s86 = sphi 0, %s72
    %s90 = sphi 0, %s90
    %s92 = sphi 0, %s90
    %s93 = sphi 0, %s92
    %s107 = sphi 0, %s93
    %s113 = sphi 0, %s115
    %s116 = sphi 0, %s113
    %s117 = sphi 0, %s116
    %s133 = sphi 0, %s117
    %s139 = sphi 0, %s141
    %s142 = sphi 0, %s139
    %s143 = sphi 0, %s142
    %s159 = sphi 0, %s143
    %s165 = sphi 0, %s167
    %s168 = sphi 0, %s165
    %s169 = sphi 0, %s168
    %s185 = sphi 0, %s169
    %s191 = sphi 0, %s193
    %s194 = sphi 0, %s191
    %s195 = sphi 0, %s194
    %s211 = sphi 0, %s195
    %s217 = sphi 0, %s219
    %s220 = sphi 0, %s217
    %s221 = sphi 0, %s220
    %s237 = sphi 0, %s221
    %s243 = sphi 0, %s245
    %s246 = sphi 0, %s243
    %s247 = sphi 0, %s246
    %s263 = sphi 0, %s247
    %s269 = sphi 0, %s271
    %s272 = sphi 0, %s269
    %s273 = sphi 0, %s272
    %s289 = sphi 0, %s273
    %s295 = sphi 0, %s297
    %s298 = sphi 0, %s295
    %s299 = sphi 0, %s298
    %s315 = sphi 0, %s299
    %s321 = sphi 0, %s323
    %s324 = sphi 0, %s321
    %s325 = sphi 0, %s324
    %s341 = sphi 0, %s325
    %s345 = sphi 0, %s345
    %s347 = sphi 0, %s345
    %s348 = sphi 0, %s347
    %s362 = sphi 0, %s348
    %s366 = sphi 0, %s366
    %s368 = sphi 0, %s366
    %s369 = sphi 0, %s368
    %s383 = sphi 0, %s369
    %s387 = sphi 0, %s387
    %s389 = sphi 0, %s387
    %s390 = sphi 0, %s389
    %s404 = sphi 0, %s390
    %s408 = sphi 0, %s408
    %s410 = sphi 0, %s408
    %s411 = sphi 0, %s410
    %s425 = sphi 0, %s411
    %s429 = sphi 0, %s429
    %s431 = sphi 0, %s429
    %s432 = sphi 0, %s431
    %s446 = sphi 0, %s432
    %s452 = sphi 0, %s454
    %s455 = sphi 0, %s452
    %s456 = sphi 0, %s455
    %s472 = sphi 0, %s456
  $region4: #{_lambda_.7} parent=0 // loop_header_branch
    %26 = sbr.rel (%p24) target = $region8
  $region5: #{_lambda_.7} parent=0 // loop_body
    %s28 = ssub.s32 %s23, 1
    %s29 = ssub.s32 %s23, 2
    %s36 = sadd.s32 1, %s31
    %p37 = scmp.ge.s32.totalorder %s36, 2
    %s38 = scalar_select %p37, 0, %s36
    %s39 = sadd.s32 1, %s30
    %s40 = scalar_select %p37, %s39, %s30
    %p41 = scmp.ge.s32.totalorder %s40, 2
    %s42 = scalar_select %p41, 0, %s40
    %s43 = ssub.s32 %s30, %s42
    %p44 = scmp.eq.s32.totalorder %s43, 0
    %s46 = sadd.s32 %s45, 1
    %s47 = scalar_select %p44, %s45, %s46
    %p50 = pneg %p44
    %p51 = scmp.eq.s32.totalorder %s23, 3
    %p52 = por %p50, %p51
    %p53 = scmp.ne.s32.totalorder %s45, %s48
    %p54 = scmp.eq.s32.totalorder %s23, 0
    %p55 = por %p53, %p54
    %p56 = scmp.ne.s32.totalorder %s45, %s48
    %p57 = scmp.eq.s32.totalorder %s28, 3
    %p58 = por %p56, %p57
    %p59 = scmp.ne.s32.totalorder %s48, %s49
    %p60 = scmp.eq.s32.totalorder %s28, 0
    %p61 = por %p59, %p60
    %p62 = scmp.ne.s32.totalorder %s48, %s49
    %p63 = scmp.eq.s32.totalorder %s29, 3
    %p64 = por %p62, %p63
    %p66 = scmp.ne.s32.totalorder %s49, %s65
    %p67 = scmp.eq.s32.totalorder %s29, 0
    %p68 = por %p66, %p67
    %s70 = sadd.s32 %s69, 1
    %p73 = scmp.eq.s32.totalorder %s23, 3
    %p74 = scmp.ne.s32.totalorder %s69, %s71
    %p75 = scmp.eq.s32.totalorder %s23, 0
    %p76 = por %p74, %p75
    %p77 = scmp.ne.s32.totalorder %s69, %s71
    %p78 = scmp.eq.s32.totalorder %s28, 3
    %p79 = por %p77, %p78
    %p80 = scmp.ne.s32.totalorder %s71, %s72
    %p81 = scmp.eq.s32.totalorder %s28, 0
    %p82 = por %p80, %p81
    %p83 = scmp.ne.s32.totalorder %s71, %s72
    %p84 = scmp.eq.s32.totalorder %s29, 3
    %p85 = por %p83, %p84
    %p87 = scmp.ne.s32.totalorder %s72, %s86
    %p88 = scmp.eq.s32.totalorder %s29, 0
    %p89 = por %p87, %p88
    %s91 = sadd.s32 %s90, 1
    %p94 = scmp.eq.s32.totalorder %s23, 3
    %p95 = scmp.ne.s32.totalorder %s90, %s92
    %p96 = scmp.eq.s32.totalorder %s23, 0
    %p97 = por %p95, %p96
    %p98 = scmp.ne.s32.totalorder %s90, %s92
    %p99 = scmp.eq.s32.totalorder %s28, 3
    %p100 = por %p98, %p99
    %p101 = scmp.ne.s32.totalorder %s92, %s93
    %p102 = scmp.eq.s32.totalorder %s28, 0
    %p103 = por %p101, %p102
    %p104 = scmp.ne.s32.totalorder %s92, %s93
    %p105 = scmp.eq.s32.totalorder %s29, 3
    %p106 = por %p104, %p105
    %p108 = scmp.ne.s32.totalorder %s93, %s107
    %p109 = scmp.eq.s32.totalorder %s29, 0
    %p110 = por %p108, %p109
    %s111 = ssub.s32 %s31, %s38
    %p112 = scmp.eq.s32.totalorder %s111, 0
    %s114 = sadd.s32 %s113, 1
    %s115 = scalar_select %p112, %s113, %s114
    %p118 = pneg %p112
    %p119 = scmp.eq.s32.totalorder %s23, 3
    %p120 = por %p118, %p119
    %p121 = scmp.ne.s32.totalorder %s113, %s116
    %p122 = scmp.eq.s32.totalorder %s23, 0
    %p123 = por %p121, %p122
    %p124 = scmp.ne.s32.totalorder %s113, %s116
    %p125 = scmp.eq.s32.totalorder %s28, 3
    %p126 = por %p124, %p125
    %p127 = scmp.ne.s32.totalorder %s116, %s117
    %p128 = scmp.eq.s32.totalorder %s28, 0
    %p129 = por %p127, %p128
    %p130 = scmp.ne.s32.totalorder %s116, %s117
    %p131 = scmp.eq.s32.totalorder %s29, 3
    %p132 = por %p130, %p131
    %p134 = scmp.ne.s32.totalorder %s117, %s133
    %p135 = scmp.eq.s32.totalorder %s29, 0
    %p136 = por %p134, %p135
    %s137 = ssub.s32 %s31, %s38
    %p138 = scmp.eq.s32.totalorder %s137, 0
    %s140 = sadd.s32 %s139, 1
    %s141 = scalar_select %p138, %s139, %s140
    %p144 = pneg %p138
    %p145 = scmp.eq.s32.totalorder %s23, 3
    %p146 = por %p144, %p145
    %p147 = scmp.ne.s32.totalorder %s139, %s142
    %p148 = scmp.eq.s32.totalorder %s23, 0
    %p149 = por %p147, %p148
    %p150 = scmp.ne.s32.totalorder %s139, %s142
    %p151 = scmp.eq.s32.totalorder %s28, 3
    %p152 = por %p150, %p151
    %p153 = scmp.ne.s32.totalorder %s142, %s143
    %p154 = scmp.eq.s32.totalorder %s28, 0
    %p155 = por %p153, %p154
    %p156 = scmp.ne.s32.totalorder %s142, %s143
    %p157 = scmp.eq.s32.totalorder %s29, 3
    %p158 = por %p156, %p157
    %p160 = scmp.ne.s32.totalorder %s143, %s159
    %p161 = scmp.eq.s32.totalorder %s29, 0
    %p162 = por %p160, %p161
    %s163 = ssub.s32 %s31, %s38
    %p164 = scmp.eq.s32.totalorder %s163, 0
    %s166 = sadd.s32 %s165, 1
    %s167 = scalar_select %p164, %s165, %s166
    %p170 = pneg %p164
    %p171 = scmp.eq.s32.totalorder %s23, 3
    %p172 = por %p170, %p171
    %p173 = scmp.ne.s32.totalorder %s165, %s168
    %p174 = scmp.eq.s32.totalorder %s23, 0
    %p175 = por %p173, %p174
    %p176 = scmp.ne.s32.totalorder %s165, %s168
    %p177 = scmp.eq.s32.totalorder %s28, 3
    %p178 = por %p176, %p177
    %p179 = scmp.ne.s32.totalorder %s168, %s169
    %p180 = scmp.eq.s32.totalorder %s28, 0
    %p181 = por %p179, %p180
    %p182 = scmp.ne.s32.totalorder %s168, %s169
    %p183 = scmp.eq.s32.totalorder %s29, 3
    %p184 = por %p182, %p183
    %p186 = scmp.ne.s32.totalorder %s169, %s185
    %p187 = scmp.eq.s32.totalorder %s29, 0
    %p188 = por %p186, %p187
    %s189 = ssub.s32 %s31, %s38
    %p190 = scmp.eq.s32.totalorder %s189, 0
    %s192 = sadd.s32 %s191, 1
    %s193 = scalar_select %p190, %s191, %s192
    %p196 = pneg %p190
    %p197 = scmp.eq.s32.totalorder %s23, 3
    %p198 = por %p196, %p197
    %p199 = scmp.ne.s32.totalorder %s191, %s194
    %p200 = scmp.eq.s32.totalorder %s23, 0
    %p201 = por %p199, %p200
    %p202 = scmp.ne.s32.totalorder %s191, %s194
    %p203 = scmp.eq.s32.totalorder %s28, 3
    %p204 = por %p202, %p203
    %p205 = scmp.ne.s32.totalorder %s194, %s195
    %p206 = scmp.eq.s32.totalorder %s28, 0
    %p207 = por %p205, %p206
    %p208 = scmp.ne.s32.totalorder %s194, %s195
    %p209 = scmp.eq.s32.totalorder %s29, 3
    %p210 = por %p208, %p209
    %p212 = scmp.ne.s32.totalorder %s195, %s211
    %p213 = scmp.eq.s32.totalorder %s29, 0
    %p214 = por %p212, %p213
    %s215 = ssub.s32 %s31, %s38
    %p216 = scmp.eq.s32.totalorder %s215, 0
    %s218 = sadd.s32 %s217, 1
    %s219 = scalar_select %p216, %s217, %s218
    %p222 = pneg %p216
    %p223 = scmp.eq.s32.totalorder %s23, 3
    %p224 = por %p222, %p223
    %p225 = scmp.ne.s32.totalorder %s217, %s220
    %p226 = scmp.eq.s32.totalorder %s23, 0
    %p227 = por %p225, %p226
    %p228 = scmp.ne.s32.totalorder %s217, %s220
    %p229 = scmp.eq.s32.totalorder %s28, 3
    %p230 = por %p228, %p229
    %p231 = scmp.ne.s32.totalorder %s220, %s221
    %p232 = scmp.eq.s32.totalorder %s28, 0
    %p233 = por %p231, %p232
    %p234 = scmp.ne.s32.totalorder %s220, %s221
    %p235 = scmp.eq.s32.totalorder %s29, 3
    %p236 = por %p234, %p235
    %p238 = scmp.ne.s32.totalorder %s221, %s237
    %p239 = scmp.eq.s32.totalorder %s29, 0
    %p240 = por %p238, %p239
    %s241 = ssub.s32 %s31, %s38
    %p242 = scmp.eq.s32.totalorder %s241, 0
    %s244 = sadd.s32 %s243, 1
    %s245 = scalar_select %p242, %s243, %s244
    %p248 = pneg %p242
    %p249 = scmp.eq.s32.totalorder %s23, 3
    %p250 = por %p248, %p249
    %p251 = scmp.ne.s32.totalorder %s243, %s246
    %p252 = scmp.eq.s32.totalorder %s23, 0
    %p253 = por %p251, %p252
    %p254 = scmp.ne.s32.totalorder %s243, %s246
    %p255 = scmp.eq.s32.totalorder %s28, 3
    %p256 = por %p254, %p255
    %p257 = scmp.ne.s32.totalorder %s246, %s247
    %p258 = scmp.eq.s32.totalorder %s28, 0
    %p259 = por %p257, %p258
    %p260 = scmp.ne.s32.totalorder %s246, %s247
    %p261 = scmp.eq.s32.totalorder %s29, 3
    %p262 = por %p260, %p261
    %p264 = scmp.ne.s32.totalorder %s247, %s263
    %p265 = scmp.eq.s32.totalorder %s29, 0
    %p266 = por %p264, %p265
    %s267 = ssub.s32 %s31, %s38
    %p268 = scmp.eq.s32.totalorder %s267, 0
    %s270 = sadd.s32 %s269, 1
    %s271 = scalar_select %p268, %s269, %s270
    %p274 = pneg %p268
    %p275 = scmp.eq.s32.totalorder %s23, 3
    %p276 = por %p274, %p275
    %p277 = scmp.ne.s32.totalorder %s269, %s272
    %p278 = scmp.eq.s32.totalorder %s23, 0
    %p279 = por %p277, %p278
    %p280 = scmp.ne.s32.totalorder %s269, %s272
    %p281 = scmp.eq.s32.totalorder %s28, 3
    %p282 = por %p280, %p281
    %p283 = scmp.ne.s32.totalorder %s272, %s273
    %p284 = scmp.eq.s32.totalorder %s28, 0
    %p285 = por %p283, %p284
    %p286 = scmp.ne.s32.totalorder %s272, %s273
    %p287 = scmp.eq.s32.totalorder %s29, 3
    %p288 = por %p286, %p287
    %p290 = scmp.ne.s32.totalorder %s273, %s289
    %p291 = scmp.eq.s32.totalorder %s29, 0
    %p292 = por %p290, %p291
    %s293 = ssub.s32 %s31, %s38
    %p294 = scmp.eq.s32.totalorder %s293, 0
    %s296 = sadd.s32 %s295, 1
    %s297 = scalar_select %p294, %s295, %s296
    %p300 = pneg %p294
    %p301 = scmp.eq.s32.totalorder %s23, 3
    %p302 = por %p300, %p301
    %p303 = scmp.ne.s32.totalorder %s295, %s298
    %p304 = scmp.eq.s32.totalorder %s23, 0
    %p305 = por %p303, %p304
    %p306 = scmp.ne.s32.totalorder %s295, %s298
    %p307 = scmp.eq.s32.totalorder %s28, 3
    %p308 = por %p306, %p307
    %p309 = scmp.ne.s32.totalorder %s298, %s299
    %p310 = scmp.eq.s32.totalorder %s28, 0
    %p311 = por %p309, %p310
    %p312 = scmp.ne.s32.totalorder %s298, %s299
    %p313 = scmp.eq.s32.totalorder %s29, 3
    %p314 = por %p312, %p313
    %p316 = scmp.ne.s32.totalorder %s299, %s315
    %p317 = scmp.eq.s32.totalorder %s29, 0
    %p318 = por %p316, %p317
    %s319 = ssub.s32 %s31, %s38
    %p320 = scmp.eq.s32.totalorder %s319, 0
    %s322 = sadd.s32 %s321, 1
    %s323 = scalar_select %p320, %s321, %s322
    %p326 = pneg %p320
    %p327 = scmp.eq.s32.totalorder %s23, 3
    %p328 = por %p326, %p327
    %p329 = scmp.ne.s32.totalorder %s321, %s324
    %p330 = scmp.eq.s32.totalorder %s23, 0
    %p331 = por %p329, %p330
    %p332 = scmp.ne.s32.totalorder %s321, %s324
    %p333 = scmp.eq.s32.totalorder %s28, 3
    %p334 = por %p332, %p333
    %p335 = scmp.ne.s32.totalorder %s324, %s325
    %p336 = scmp.eq.s32.totalorder %s28, 0
    %p337 = por %p335, %p336
    %p338 = scmp.ne.s32.totalorder %s324, %s325
    %p339 = scmp.eq.s32.totalorder %s29, 3
    %p340 = por %p338, %p339
    %p342 = scmp.ne.s32.totalorder %s325, %s341
    %p343 = scmp.eq.s32.totalorder %s29, 0
    %p344 = por %p342, %p343
    %s346 = sadd.s32 %s345, 1
    %p349 = scmp.eq.s32.totalorder %s23, 3
    %p350 = scmp.ne.s32.totalorder %s345, %s347
    %p351 = scmp.eq.s32.totalorder %s23, 0
    %p352 = por %p350, %p351
    %p353 = scmp.ne.s32.totalorder %s345, %s347
    %p354 = scmp.eq.s32.totalorder %s28, 3
    %p355 = por %p353, %p354
    %p356 = scmp.ne.s32.totalorder %s347, %s348
    %p357 = scmp.eq.s32.totalorder %s28, 0
    %p358 = por %p356, %p357
    %p359 = scmp.ne.s32.totalorder %s347, %s348
    %p360 = scmp.eq.s32.totalorder %s29, 3
    %p361 = por %p359, %p360
    %p363 = scmp.ne.s32.totalorder %s348, %s362
    %p364 = scmp.eq.s32.totalorder %s29, 0
    %p365 = por %p363, %p364
    %s367 = sadd.s32 %s366, 1
    %p370 = scmp.eq.s32.totalorder %s23, 3
    %p371 = scmp.ne.s32.totalorder %s366, %s368
    %p372 = scmp.eq.s32.totalorder %s23, 0
    %p373 = por %p371, %p372
    %p374 = scmp.ne.s32.totalorder %s366, %s368
    %p375 = scmp.eq.s32.totalorder %s28, 3
    %p376 = por %p374, %p375
    %p377 = scmp.ne.s32.totalorder %s368, %s369
    %p378 = scmp.eq.s32.totalorder %s28, 0
    %p379 = por %p377, %p378
    %p380 = scmp.ne.s32.totalorder %s368, %s369
    %p381 = scmp.eq.s32.totalorder %s29, 3
    %p382 = por %p380, %p381
    %p384 = scmp.ne.s32.totalorder %s369, %s383
    %p385 = scmp.eq.s32.totalorder %s29, 0
    %p386 = por %p384, %p385
    %s388 = sadd.s32 %s387, 1
    %p391 = scmp.eq.s32.totalorder %s23, 3
    %p392 = scmp.ne.s32.totalorder %s387, %s389
    %p393 = scmp.eq.s32.totalorder %s23, 0
    %p394 = por %p392, %p393
    %p395 = scmp.ne.s32.totalorder %s387, %s389
    %p396 = scmp.eq.s32.totalorder %s28, 3
    %p397 = por %p395, %p396
    %p398 = scmp.ne.s32.totalorder %s389, %s390
    %p399 = scmp.eq.s32.totalorder %s28, 0
    %p400 = por %p398, %p399
    %p401 = scmp.ne.s32.totalorder %s389, %s390
    %p402 = scmp.eq.s32.totalorder %s29, 3
    %p403 = por %p401, %p402
    %p405 = scmp.ne.s32.totalorder %s390, %s404
    %p406 = scmp.eq.s32.totalorder %s29, 0
    %p407 = por %p405, %p406
    %s409 = sadd.s32 %s408, 1
    %p412 = scmp.eq.s32.totalorder %s23, 3
    %p413 = scmp.ne.s32.totalorder %s408, %s410
    %p414 = scmp.eq.s32.totalorder %s23, 0
    %p415 = por %p413, %p414
    %p416 = scmp.ne.s32.totalorder %s408, %s410
    %p417 = scmp.eq.s32.totalorder %s28, 3
    %p418 = por %p416, %p417
    %p419 = scmp.ne.s32.totalorder %s410, %s411
    %p420 = scmp.eq.s32.totalorder %s28, 0
    %p421 = por %p419, %p420
    %p422 = scmp.ne.s32.totalorder %s410, %s411
    %p423 = scmp.eq.s32.totalorder %s29, 3
    %p424 = por %p422, %p423
    %p426 = scmp.ne.s32.totalorder %s411, %s425
    %p427 = scmp.eq.s32.totalorder %s29, 0
    %p428 = por %p426, %p427
    %s430 = sadd.s32 %s429, 1
    %p433 = scmp.eq.s32.totalorder %s23, 3
    %p434 = scmp.ne.s32.totalorder %s429, %s431
    %p435 = scmp.eq.s32.totalorder %s23, 0
    %p436 = por %p434, %p435
    %p437 = scmp.ne.s32.totalorder %s429, %s431
    %p438 = scmp.eq.s32.totalorder %s28, 3
    %p439 = por %p437, %p438
    %p440 = scmp.ne.s32.totalorder %s431, %s432
    %p441 = scmp.eq.s32.totalorder %s28, 0
    %p442 = por %p440, %p441
    %p443 = scmp.ne.s32.totalorder %s431, %s432
    %p444 = scmp.eq.s32.totalorder %s29, 3
    %p445 = por %p443, %p444
    %p447 = scmp.ne.s32.totalorder %s432, %s446
    %p448 = scmp.eq.s32.totalorder %s29, 0
    %p449 = por %p447, %p448
    %s450 = ssub.s32 %s30, %s42
    %p451 = scmp.eq.s32.totalorder %s450, 0
    %s453 = sadd.s32 %s452, 1
    %s454 = scalar_select %p451, %s452, %s453
    %p457 = pneg %p451
    %p458 = scmp.eq.s32.totalorder %s23, 3
    %p459 = por %p457, %p458
    %p460 = scmp.ne.s32.totalorder %s452, %s455
    %p461 = scmp.eq.s32.totalorder %s23, 0
    %p462 = por %p460, %p461
    %p463 = scmp.ne.s32.totalorder %s452, %s455
    %p464 = scmp.eq.s32.totalorder %s28, 3
    %p465 = por %p463, %p464
    %p466 = scmp.ne.s32.totalorder %s455, %s456
    %p467 = scmp.eq.s32.totalorder %s28, 0
    %p468 = por %p466, %p467
    %p469 = scmp.ne.s32.totalorder %s455, %s456
    %p470 = scmp.eq.s32.totalorder %s29, 3
    %p471 = por %p469, %p470
    %p473 = scmp.ne.s32.totalorder %s456, %s472
    %p474 = scmp.eq.s32.totalorder %s29, 0
    %p475 = por %p473, %p474
    %p476 = scmp.le.s32.totalorder 1, %s23
    %p477 = scmp.lt.s32.totalorder %s23, 5
    %p478 = pnand %p476, %p477
    %p479 = pneg %p478
    // Predicated region
    $region9: #{_lambda_.7} parent=5 // pred_check
      _
    $region10: #{_lambda_.7} parent=5 // pred_check_branch
      %481 = sbr.rel (%p478) target = $region12
    $region11: #{_lambda_.7} parent=5 // pred_region
      %s482 = ssub.s32 %s23, 1
      // Predicated region
      $region13: #{_lambda_.7} parent=11 // pred_check
        %p483 = pneg %p82
      $region14: #{_lambda_.7} parent=11 // pred_check_branch
        %485 = sbr.rel (%p483) target = $region16
      $region15: #{_lambda_.7} parent=11 // pred_region
        _
      $region16: #{_lambda_.7} parent=11 // pred_fallthru
        _
      // Predicated region
      $region17: #{_lambda_.7} parent=11 // pred_check
        %p486 = pneg %p103
      $region18: #{_lambda_.7} parent=11 // pred_check_branch
        %488 = sbr.rel (%p486) target = $region20
      $region19: #{_lambda_.7} parent=11 // pred_region
        _
      $region20: #{_lambda_.7} parent=11 // pred_fallthru
        _
      // Predicated region
      $region21: #{_lambda_.7} parent=11 // pred_check
        %p489 = pneg %p358
      $region22: #{_lambda_.7} parent=11 // pred_check_branch
        %491 = sbr.rel (%p489) target = $region24
      $region23: #{_lambda_.7} parent=11 // pred_region
        _
      $region24: #{_lambda_.7} parent=11 // pred_fallthru
        _
      // Predicated region
      $region25: #{_lambda_.7} parent=11 // pred_check
        %p492 = pneg %p379
      $region26: #{_lambda_.7} parent=11 // pred_check_branch
        %494 = sbr.rel (%p492) target = $region28
      $region27: #{_lambda_.7} parent=11 // pred_region
        _
      $region28: #{_lambda_.7} parent=11 // pred_fallthru
        _
      // Predicated region
      $region29: #{_lambda_.7} parent=11 // pred_check
        %p495 = pneg %p400
      $region30: #{_lambda_.7} parent=11 // pred_check_branch
        %497 = sbr.rel (%p495) target = $region32
      $region31: #{_lambda_.7} parent=11 // pred_region
        _
      $region32: #{_lambda_.7} parent=11 // pred_fallthru
        _
      // Predicated region
      $region33: #{_lambda_.7} parent=11 // pred_check
        %p498 = pneg %p421
      $region34: #{_lambda_.7} parent=11 // pred_check_branch
        %500 = sbr.rel (%p498) target = $region36
      $region35: #{_lambda_.7} parent=11 // pred_region
        _
      $region36: #{_lambda_.7} parent=11 // pred_fallthru
        _
      // Predicated region
      $region37: #{_lambda_.7} parent=11 // pred_check
        %p501 = pneg %p442
      $region38: #{_lambda_.7} parent=11 // pred_check_branch
        %503 = sbr.rel (%p501) target = $region40
      $region39: #{_lambda_.7} parent=11 // pred_region
        _
      $region40: #{_lambda_.7} parent=11 // pred_fallthru
        _
    $region12: #{_lambda_.7} parent=5 // pred_fallthru
      _
    %p504 = scmp.lt.s32.totalorder %s23, 4
    // Predicated region
    $region41: #{_lambda_.7} parent=5 // pred_check
      %p505 = pneg %p504
    $region42: #{_lambda_.7} parent=5 // pred_check_branch
      %507 = sbr.rel (%p505) target = $region44
    $region43: #{_lambda_.7} parent=5 // pred_region
      // Predicated region
      $region45: #{_lambda_.7} parent=43 // pred_check
        %p508 = pneg %p55
      $region46: #{_lambda_.7} parent=43 // pred_check_branch
        %510 = sbr.rel (%p508) target = $region48
      $region47: #{_lambda_.7} parent=43 // pred_region
        %p511 = scmp.lt.s32.totalorder %s30, 1
        %s512 = scalar_select %p511, %s30, 1
        %s513 = smul.addr %s512, 4
        %s514 = smul.addr %s513, 8
        %s515 = scalar_lea.vmem %s0, %s514
      $region48: #{_lambda_.7} parent=43 // pred_fallthru
        _
      // Predicated region
      $region49: #{_lambda_.7} parent=43 // pred_check
        %p516 = pneg %p123
      $region50: #{_lambda_.7} parent=43 // pred_check_branch
        %518 = sbr.rel (%p516) target = $region52
      $region51: #{_lambda_.7} parent=43 // pred_region
        %p519 = scmp.lt.s32.totalorder %s31, 1
        %s520 = scalar_select %p519, %s31, 1
        %s521 = scalar_lea.vmem %s3, %s520
      $region52: #{_lambda_.7} parent=43 // pred_fallthru
        _
      // Predicated region
      $region53: #{_lambda_.7} parent=43 // pred_check
        %p522 = pneg %p149
      $region54: #{_lambda_.7} parent=43 // pred_check_branch
        %524 = sbr.rel (%p522) target = $region56
      $region55: #{_lambda_.7} parent=43 // pred_region
        %p525 = scmp.lt.s32.totalorder %s31, 1
        %s526 = scalar_select %p525, %s31, 1
        %s527 = scalar_lea.vmem %s4, %s526
      $region56: #{_lambda_.7} parent=43 // pred_fallthru
        _
      // Predicated region
      $region57: #{_lambda_.7} parent=43 // pred_check
        %p528 = pneg %p175
      $region58: #{_lambda_.7} parent=43 // pred_check_branch
        %530 = sbr.rel (%p528) target = $region60
      $region59: #{_lambda_.7} parent=43 // pred_region
        %p531 = scmp.lt.s32.totalorder %s31, 1
        %s532 = scalar_select %p531, %s31, 1
        %s533 = scalar_lea.vmem %s5, %s532
      $region60: #{_lambda_.7} parent=43 // pred_fallthru
        _
      // Predicated region
      $region61: #{_lambda_.7} parent=43 // pred_check
        %p534 = pneg %p201
      $region62: #{_lambda_.7} parent=43 // pred_check_branch
        %536 = sbr.rel (%p534) target = $region64
      $region63: #{_lambda_.7} parent=43 // pred_region
        %p537 = scmp.lt.s32.totalorder %s31, 1
        %s538 = scalar_select %p537, %s31, 1
        %s539 = scalar_lea.vmem %s6, %s538
      $region64: #{_lambda_.7} parent=43 // pred_fallthru
        _
      // Predicated region
      $region65: #{_lambda_.7} parent=43 // pred_check
        %p540 = pneg %p227
      $region66: #{_lambda_.7} parent=43 // pred_check_branch
        %542 = sbr.rel (%p540) target = $region68
      $region67: #{_lambda_.7} parent=43 // pred_region
        %p543 = scmp.lt.s32.totalorder %s31, 1
        %s544 = scalar_select %p543, %s31, 1
        %s545 = scalar_lea.vmem %s7, %s544
      $region68: #{_lambda_.7} parent=43 // pred_fallthru
        _
      // Predicated region
      $region69: #{_lambda_.7} parent=43 // pred_check
        %p546 = pneg %p253
      $region70: #{_lambda_.7} parent=43 // pred_check_branch
        %548 = sbr.rel (%p546) target = $region72
      $region71: #{_lambda_.7} parent=43 // pred_region
        %p549 = scmp.lt.s32.totalorder %s31, 1
        %s550 = scalar_select %p549, %s31, 1
        %s551 = scalar_lea.vmem %s8, %s550
      $region72: #{_lambda_.7} parent=43 // pred_fallthru
        _
      // Predicated region
      $region73: #{_lambda_.7} parent=43 // pred_check
        %p552 = pneg %p279
      $region74: #{_lambda_.7} parent=43 // pred_check_branch
        %554 = sbr.rel (%p552) target = $region76
      $region75: #{_lambda_.7} parent=43 // pred_region
        %p555 = scmp.lt.s32.totalorder %s31, 1
        %s556 = scalar_select %p555, %s31, 1
        %s557 = scalar_lea.vmem %s9, %s556
      $region76: #{_lambda_.7} parent=43 // pred_fallthru
        _
      // Predicated region
      $region77: #{_lambda_.7} parent=43 // pred_check
        %p558 = pneg %p305
      $region78: #{_lambda_.7} parent=43 // pred_check_branch
        %560 = sbr.rel (%p558) target = $region80
      $region79: #{_lambda_.7} parent=43 // pred_region
        %p561 = scmp.lt.s32.totalorder %s31, 1
        %s562 = scalar_select %p561, %s31, 1
        %s563 = scalar_lea.vmem %s10, %s562
      $region80: #{_lambda_.7} parent=43 // pred_fallthru
        _
      // Predicated region
      $region81: #{_lambda_.7} parent=43 // pred_check
        %p564 = pneg %p331
      $region82: #{_lambda_.7} parent=43 // pred_check_branch
        %566 = sbr.rel (%p564) target = $region84
      $region83: #{_lambda_.7} parent=43 // pred_region
        %p567 = scmp.lt.s32.totalorder %s31, 1
        %s568 = scalar_select %p567, %s31, 1
        %s569 = scalar_lea.vmem %s11, %s568
      $region84: #{_lambda_.7} parent=43 // pred_fallthru
        _
    $region44: #{_lambda_.7} parent=5 // pred_fallthru
      _
    %p570 = scmp.le.s32.totalorder 1, %s23
    %p571 = scmp.lt.s32.totalorder %s23, 5
    %p572 = pnand %p570, %p571
    %p573 = pneg %p572
    // Predicated region
    $region85: #{_lambda_.7} parent=5 // pred_check
      _
    $region86: #{_lambda_.7} parent=5 // pred_check_branch
      %575 = sbr.rel (%p572) target = $region88
    $region87: #{_lambda_.7} parent=5 // pred_region
      %s576 = ssub.s32 %s23, 1
      %p577 = scmp.lt.s32.totalorder %s32, 1
      %s578 = scalar_select %p577, %s32, 1
      %s579 = smul.addr %s578, 4
      %s580 = smul.addr %s579, 8
      %s581 = scalar_lea.vmem %s0, %s580
      %p582 = pneg %p61
      %p583 = pneg %p58
      %p584 = pneg %p82
      %p585 = pneg %p79
      %p586 = pneg %p103
      %p587 = pneg %p100
      %p588 = scmp.lt.s32.totalorder %s33, 1
      %s589 = scalar_select %p588, %s33, 1
      %s590 = scalar_lea.vmem %s3, %s589
      %p591 = pneg %p129
      %p592 = pneg %p126
      %p593 = scmp.lt.s32.totalorder %s33, 1
      %s594 = scalar_select %p593, %s33, 1
      %s595 = scalar_lea.vmem %s4, %s594
      %p596 = pneg %p155
      %p597 = pneg %p152
      %p598 = scmp.lt.s32.totalorder %s33, 1
      %s599 = scalar_select %p598, %s33, 1
      %s600 = scalar_lea.vmem %s5, %s599
      %p601 = pneg %p181
      %p602 = pneg %p178
      %p603 = scmp.lt.s32.totalorder %s33, 1
      %s604 = scalar_select %p603, %s33, 1
      %s605 = scalar_lea.vmem %s6, %s604
      %p606 = pneg %p207
      %p607 = pneg %p204
      %p608 = scmp.lt.s32.totalorder %s33, 1
      %s609 = scalar_select %p608, %s33, 1
      %s610 = scalar_lea.vmem %s7, %s609
      %p611 = pneg %p233
      %p612 = pneg %p230
      %p613 = scmp.lt.s32.totalorder %s33, 1
      %s614 = scalar_select %p613, %s33, 1
      %s615 = scalar_lea.vmem %s8, %s614
      %p616 = pneg %p259
      %p617 = pneg %p256
      %p618 = scmp.lt.s32.totalorder %s33, 1
      %s619 = scalar_select %p618, %s33, 1
      %s620 = scalar_lea.vmem %s9, %s619
      %p621 = pneg %p285
      %p622 = pneg %p282
      %p623 = scmp.lt.s32.totalorder %s33, 1
      %s624 = scalar_select %p623, %s33, 1
      %s625 = scalar_lea.vmem %s10, %s624
      %p626 = pneg %p311
      %p627 = pneg %p308
      %p628 = scmp.lt.s32.totalorder %s33, 1
      %s629 = scalar_select %p628, %s33, 1
      %s630 = scalar_lea.vmem %s11, %s629
      %p631 = pneg %p337
      %p632 = pneg %p334
      %p633 = pneg %p358
      %p634 = pneg %p355
      %p635 = pneg %p379
      %p636 = pneg %p376
      %p637 = pneg %p400
      %p638 = pneg %p397
      %p639 = pneg %p421
      %p640 = pneg %p418
      %p641 = pneg %p442
      %p642 = pneg %p439
      %p643 = pneg %p468
      %p644 = pneg %p465
      %p645 = scmp.lt.s32.totalorder %s32, 1
      %s646 = scalar_select %p645, %s32, 1
      %s647 = smul.addr %s646, 2
      %s648 = smul.addr %s647, 8
      %s649 = scalar_lea.vmem %s17, %s648
      %p650 = scmp.lt.s32.totalorder %s32, 1
      %s651 = scalar_select %p650, %s32, 1
      %s652 = smul.addr %s651, 4
      %s653 = smul.addr %s652, 8
      %s654 = scalar_lea.vmem %s0, %s653
      %p655 = scmp.lt.s32.totalorder %s33, 1
      %s656 = scalar_select %p655, %s33, 1
      %s657 = scalar_lea.vmem %s3, %s656
      %p658 = scmp.lt.s32.totalorder %s33, 1
      %s659 = scalar_select %p658, %s33, 1
      %s660 = scalar_lea.vmem %s4, %s659
      %p661 = scmp.lt.s32.totalorder %s33, 1
      %s662 = scalar_select %p661, %s33, 1
      %s663 = scalar_lea.vmem %s5, %s662
      %p664 = scmp.lt.s32.totalorder %s33, 1
      %s665 = scalar_select %p664, %s33, 1
      %s666 = scalar_lea.vmem %s6, %s665
      %p667 = scmp.lt.s32.totalorder %s33, 1
      %s668 = scalar_select %p667, %s33, 1
      %s669 = scalar_lea.vmem %s7, %s668
      %p670 = scmp.lt.s32.totalorder %s33, 1
      %s671 = scalar_select %p670, %s33, 1
      %s672 = scalar_lea.vmem %s8, %s671
      %p673 = scmp.lt.s32.totalorder %s33, 1
      %s674 = scalar_select %p673, %s33, 1
      %s675 = scalar_lea.vmem %s9, %s674
      %p676 = scmp.lt.s32.totalorder %s33, 1
      %s677 = scalar_select %p676, %s33, 1
      %s678 = scalar_lea.vmem %s10, %s677
      %p679 = scmp.lt.s32.totalorder %s33, 1
      %s680 = scalar_select %p679, %s33, 1
      %s681 = scalar_lea.vmem %s11, %s680
      %p682 = scmp.lt.s32.totalorder %s32, 1
      %s683 = scalar_select %p682, %s32, 1
      %s684 = smul.addr %s683, 2
      %s685 = smul.addr %s684, 8
      %s686 = scalar_lea.vmem %s17, %s685
      %p687 = scmp.eq.s32.totalorder %s33, 0
      // Predicated region
      $region89: #{_lambda_.7} parent=87 // pred_check
        %p688 = pneg %p687
      $region90: #{_lambda_.7} parent=87 // pred_check_branch
        %690 = sbr.rel (%p688) target = $region92
      $region91: #{_lambda_.7} parent=87 // pred_region
        %v691 = vld [vmem:[%s654] sm:$0xff]
        %v692 = vld [vmem:[%s654 + $0x8] sm:$0xff]
        %v693 = vld [vmem:[%s654 + $0x10] sm:$0xff]
        %v694 = vld [vmem:[%s654 + $0x18] sm:$0xff]
        %v695 = vld [vmem:[%s1] sm:$0xff]
        %v696 = vld [vmem:[%s1 + $0x8] sm:$0xff]
        %v697 = vld [vmem:[%s1 + $0x10] sm:$0xff]
        %v698 = vld [vmem:[%s1 + $0x18] sm:$0xff]
        %v699 = vld [vmem:[%s1 + $0x20] sm:$0xff]
        %v700 = vld [vmem:[%s1 + $0x28] sm:$0xff]
        %v701 = vld [vmem:[%s1 + $0x30] sm:$0xff]
        %v702 = vld [vmem:[%s1 + $0x38] sm:$0xff]
        %v703 = vld [vmem:[%s1 + $0x40] sm:$0xff]
        %v704 = vld [vmem:[%s1 + $0x48] sm:$0xff]
        %v705 = vld [vmem:[%s1 + $0x50] sm:$0xff]
        %v706 = vld [vmem:[%s1 + $0x58] sm:$0xff]
        %v707 = vld [vmem:[%s1 + $0x60] sm:$0xff]
        %v708 = vld [vmem:[%s1 + $0x68] sm:$0xff]
        %v709 = vld [vmem:[%s1 + $0x70] sm:$0xff]
        %v710 = vld [vmem:[%s1 + $0x78] sm:$0xff]
        %v711 = vld [vmem:[%s1 + $0x80] sm:$0xff]
        %v712 = vld [vmem:[%s1 + $0x88] sm:$0xff]
        %v713 = vld [vmem:[%s1 + $0x90] sm:$0xff]
        %v714 = vld [vmem:[%s1 + $0x98] sm:$0xff]
        %v715 = vld [vmem:[%s1 + $0xa0] sm:$0xff]
        %v716 = vld [vmem:[%s1 + $0xa8] sm:$0xff]
        %v717 = vld [vmem:[%s1 + $0xb0] sm:$0xff]
        %v718 = vld [vmem:[%s1 + $0xb8] sm:$0xff]
        %v719 = vld [vmem:[%s1 + $0xc0] sm:$0xff]
        %v720 = vld [vmem:[%s1 + $0xc8] sm:$0xff]
        %v721 = vld [vmem:[%s1 + $0xd0] sm:$0xff]
        %v722 = vld [vmem:[%s1 + $0xd8] sm:$0xff]
        %v723 = vld [vmem:[%s1 + $0xe0] sm:$0xff]
        %v724 = vld [vmem:[%s1 + $0xe8] sm:$0xff]
        %v725 = vld [vmem:[%s1 + $0xf0] sm:$0xff]
        %v726 = vld [vmem:[%s1 + $0xf8] sm:$0xff]
        %v727 = vld [vmem:[%s2] sm:$0x1]
        %v729 = vlaneseq
        %v730 = vshrl.u32 %v729, 7
        %v731 = vsub.s32 0, %v730
        %v732 = vrot.slane %v727, %v731
        %734 = vmatprep.subr.mxu0 0.0
        %735 = vmatpush1.msra.mxu0 %v710
        %736 = vmatprep.subr.mxu0 0.0
        %737 = vmatpush1.msra.mxu0 %v709
        %738 = vmatprep.subr.mxu0 0.0
        %739 = vmatpush1.msra.mxu0 %v708
        %740 = vmatprep.subr.mxu0 0.0
        %741 = vmatpush1.msra.mxu0 %v707
        %742 = vmatprep.subr.mxu0 0.0
        %743 = vmatpush1.msra.mxu0 %v706
        %744 = vmatprep.subr.mxu0 0.0
        %745 = vmatpush1.msra.mxu0 %v705
        %746 = vmatprep.subr.mxu0 0.0
        %747 = vmatpush1.msra.mxu0 %v704
        %748 = vmatprep.subr.mxu0 0.0
        %749 = vmatpush1.msra.mxu0 %v703
        %750 = vmatprep.subr.mxu0 0.0
        %751 = vmatpush1.msra.mxu0 %v702
        %752 = vmatprep.subr.mxu0 0.0
        %753 = vmatpush1.msra.mxu0 %v701
        %754 = vmatprep.subr.mxu0 0.0
        %755 = vmatpush1.msra.mxu0 %v700
        %756 = vmatprep.subr.mxu0 0.0
        %757 = vmatpush1.msra.mxu0 %v699
        %758 = vmatprep.subr.mxu0 0.0
        %759 = vmatpush1.msra.mxu0 %v698
        %760 = vmatprep.subr.mxu0 0.0
        %761 = vmatpush1.msra.mxu0 %v697
        %762 = vmatprep.subr.mxu0 0.0
        %763 = vmatpush1.msra.mxu0 %v696
        %764 = vmatprep.subr.mxu0 0.0
        %765 = vmatpush1.msra.mxu0 %v695
        %766 = vmatprep.subr.mxu0 0.0
        %767 = vmatpush2.msra.mxu0 %v726
        %768 = vmatprep.subr.mxu0 0.0
        %769 = vmatpush2.msra.mxu0 %v725
        %770 = vmatprep.subr.mxu0 0.0
        %771 = vmatpush2.msra.mxu0 %v724
        %772 = vmatprep.subr.mxu0 0.0
        %773 = vmatpush2.msra.mxu0 %v723
        %774 = vmatprep.subr.mxu0 0.0
        %775 = vmatpush2.msra.mxu0 %v722
        %776 = vmatprep.subr.mxu0 0.0
        %777 = vmatpush2.msra.mxu0 %v721
        %778 = vmatprep.subr.mxu0 0.0
        %779 = vmatpush2.msra.mxu0 %v720
        %780 = vmatprep.subr.mxu0 0.0
        %781 = vmatpush2.msra.mxu0 %v719
        %782 = vmatprep.subr.mxu0 0.0
        %783 = vmatpush2.msra.mxu0 %v718
        %784 = vmatprep.subr.mxu0 0.0
        %785 = vmatpush2.msra.mxu0 %v717
        %786 = vmatprep.subr.mxu0 0.0
        %787 = vmatpush2.msra.mxu0 %v716
        %788 = vmatprep.subr.mxu0 0.0
        %789 = vmatpush2.msra.mxu0 %v715
        %790 = vmatprep.subr.mxu0 0.0
        %791 = vmatpush2.msra.mxu0 %v714
        %792 = vmatprep.subr.mxu0 0.0
        %793 = vmatpush2.msra.mxu0 %v713
        %794 = vmatprep.subr.mxu0 0.0
        %795 = vmatpush2.msra.mxu0 %v712
        %796 = vmatprep.subr.mxu0 0.0
        %797 = vmatpush2.msra.mxu0 %v711
        %798 = vmatprep.mubr.f32.mxu0 %v692
        %799 = vmatmul.mubr.f32.gmra.mxu0 %v691
        %v800 = vpop.f32.mrf.mxu0
        %v801 = vadd.f32 %v732, %v800
        %v802 = vpop.f32.mrf.mxu0
        %803 = vmatprep.mubr.f32.mxu0 %v694
        %804 = vmatmul.mubr.f32.gmra.mxu0 %v693
        %v805 = vpop.f32.mrf.mxu0
        %v806 = vadd.f32 %v732, %v805
        %v807 = vpop.f32.mrf.mxu0
        %808 = vdwg.mxu0
        %vm809 = vcmask 523264
        %810 = vst.msk [vmem:[%s686] sm:$0xff] %vm809, %v801
        %811 = vst.msk [vmem:[%s686 + $0x8] sm:$0xff] %vm809, %v806
      $region92: #{_lambda_.7} parent=87 // pred_fallthru
        _
      %v812 = vld [vmem:[%s686] sm:$0xff]
      %v813 = vld [vmem:[%s686 + $0x8] sm:$0xff]
      %v814 = vld [vmem:[%s657] sm:$0x1]
      %v815 = vld [vmem:[%s660] sm:$0x1]
      %v816 = vld [vmem:[%s675] sm:$0x1]
      %v817 = vld [vmem:[%s678] sm:$0x1]
      %v818 = vld [vmem:[%s681] sm:$0x1]
      %vm819 = vcmask 523264
      %v820 = vsel %vm819, %v812, 0.0
      %821 = vadd.xlane.f32.xlu0 %v820
      %v822 = vpop.xlane.xlu0 %821
      %v823 = vsel %vm819, %v813, 0.0
      %824 = vadd.xlane.f32.xlu0 %v823
      %v825 = vpop.xlane.xlu0 %824
      %v826 = vrcp.pop 64.0
      %v827 = vmul.f32 %v822, %v826
      %v828 = vmul.f32 %v825, %v826
      %v829 = vsub.f32 %v812, %v827
      %v830 = vsub.f32 %v813, %v828
      %v831 = vmul.f32 %v829, %v829
      %v832 = vmul.f32 %v830, %v830
      %v833 = vsel %vm819, %v831, 0.0
      %834 = vadd.xlane.f32.xlu0 %v833
      %v835 = vpop.xlane.xlu0 %834
      %v836 = vsel %vm819, %v832, 0.0
      %837 = vadd.xlane.f32.xlu0 %v836
      %v838 = vpop.xlane.xlu0 %837
      %v839 = vmul.f32 %v835, %v826
      %v840 = vmul.f32 %v838, %v826
      %v841 = vadd.f32 %v839, 1e-05
      %v842 = vadd.f32 %v840, 1e-05
      %v843 = vrsqrt.pop %v841
      %v844 = vrsqrt.pop %v842
      %v845 = vmul.f32 %v829, %v843
      %v846 = vmul.f32 %v830, %v844
      %v848 = vlaneseq
      %v849 = vshrl.u32 %v848, 7
      %v850 = vsub.s32 0, %v849
      %v851 = vrot.slane %v814, %v850
      %v853 = vmul.f32 %v845, %v851
      %v854 = vmul.f32 %v846, %v851
      %v856 = vlaneseq
      %v857 = vshrl.u32 %v856, 7
      %v858 = vsub.s32 0, %v857
      %v859 = vrot.slane %v815, %v858
      %v861 = vadd.f32 %v853, %v859
      %v862 = vadd.f32 %v854, %v859
      %v863 = vld [vmem:[%s12] sm:$0xff]
      %v864 = vld [vmem:[%s12 + $0x8] sm:$0xff]
      %vm865 = vcmask 130048
      %v867 = vsel %vm865, %v863, 0
      %v870 = vsel %vm865, %v864, 0
      %872 = vmatprep.subr.mxu0 0.0
      %873 = vmatpush1.msra.mxu0 0.0
      %874 = vmatprep.subr.mxu0 0.0
      %875 = vmatpush1.msra.mxu0 0.0
      %876 = vmatprep.subr.mxu0 0.0
      %877 = vmatpush1.msra.mxu0 0.0
      %878 = vmatprep.subr.mxu0 0.0
      %879 = vmatpush1.msra.mxu0 0.0
      %880 = vmatprep.subr.mxu0 0.0
      %881 = vmatpush1.msra.mxu0 0.0
      %882 = vmatprep.subr.mxu0 0.0
      %883 = vmatpush1.msra.mxu0 0.0
      %884 = vmatprep.subr.mxu0 0.0
      %885 = vmatpush1.msra.mxu0 0.0
      %886 = vmatprep.subr.mxu0 0.0
      %887 = vmatpush1.msra.mxu0 0.0
      %888 = vmatprep.subr.mxu0 0.0
      %889 = vmatpush1.msra.mxu0 0.0
      %890 = vmatprep.subr.mxu0 0.0
      %891 = vmatpush1.msra.mxu0 0.0
      %892 = vmatprep.subr.mxu0 0.0
      %893 = vmatpush1.msra.mxu0 0.0
      %894 = vmatprep.subr.mxu0 0.0
      %895 = vmatpush1.msra.mxu0 0.0
      %896 = vmatprep.subr.mxu0 0.0
      %897 = vmatpush1.msra.mxu0 0.0
      %898 = vmatprep.subr.mxu0 0.0
      %899 = vmatpush1.msra.mxu0 0.0
      %900 = vmatprep.subr.mxu0 0.0
      %901 = vmatpush1.msra.mxu0 %v862
      %902 = vmatprep.subr.mxu0 0.0
      %903 = vmatpush1.msra.mxu0 %v861
      %904 = vmatprep.subr.mxu0 0.0
      %905 = vmatpush2.msra.mxu0 0.0
      %906 = vmatprep.subr.mxu0 0.0
      %907 = vmatpush2.msra.mxu0 0.0
      %908 = vmatprep.subr.mxu0 0.0
      %909 = vmatpush2.msra.mxu0 0.0
      %910 = vmatprep.subr.mxu0 0.0
      %911 = vmatpush2.msra.mxu0 0.0
      %912 = vmatprep.subr.mxu0 0.0
      %913 = vmatpush2.msra.mxu0 0.0
      %914 = vmatprep.subr.mxu0 0.0
      %915 = vmatpush2.msra.mxu0 0.0
      %916 = vmatprep.subr.mxu0 0.0
      %917 = vmatpush2.msra.mxu0 0.0
      %918 = vmatprep.subr.mxu0 0.0
      %919 = vmatpush2.msra.mxu0 0.0
      %920 = vmatprep.subr.mxu0 0.0
      %921 = vmatpush2.msra.mxu0 0.0
      %922 = vmatprep.subr.mxu0 0.0
      %923 = vmatpush2.msra.mxu0 0.0
      %924 = vmatprep.subr.mxu0 0.0
      %925 = vmatpush2.msra.mxu0 0.0
      %926 = vmatprep.subr.mxu0 0.0
      %927 = vmatpush2.msra.mxu0 0.0
      %928 = vmatprep.subr.mxu0 0.0
      %929 = vmatpush2.msra.mxu0 0.0
      %930 = vmatprep.subr.mxu0 0.0
      %931 = vmatpush2.msra.mxu0 0.0
      %932 = vmatprep.subr.mxu0 0.0
      %933 = vmatpush2.msra.mxu0 0.0
      %934 = vmatprep.subr.mxu0 0.0
      %935 = vmatpush2.msra.mxu0 0.0
      %936 = vmatprep.mubr.f32.mxu0 0.0
      %937 = vmatmul.mubr.f32.gmra.mxu0 %v867
      %v938 = vpop.f32.mrf.mxu0
      %v939 = vadd.f32 0.0, %v938
      %v940 = vpop.f32.mrf.mxu0
      %941 = vmatprep.mubr.f32.mxu0 0.0
      %942 = vmatmul.mubr.f32.gmra.mxu0 %v870
      %v943 = vpop.f32.mrf.mxu0
      %v944 = vadd.f32 0.0, %v943
      %v945 = vpop.f32.mrf.mxu0
      %946 = vdwg.mxu0
      %vm947 = vcmp.gt.f32.partialorder %v861, %v939
      %vm948 = vcmp.gt.f32.partialorder %v862, %v944
      %v950 = vlaneseq
      %v951 = vshrl.u32 %v950, 7
      %v952 = vsub.s32 0, %v951
      %v953 = vrot.slane %v817, %v952
      %954 = vset.pattern.permute.xlu0 0
      %955 = vperm.xlu0 %954, %v953
      %v956 = vpop.permute.xlu0 %955
      %v958 = vmul.f32 %v861, %v956
      %v959 = vmul.f32 %v862, %v956
      %v961 = vlaneseq
      %v962 = vshrl.u32 %v961, 7
      %v963 = vsub.s32 0, %v962
      %v964 = vrot.slane %v818, %v963
      %965 = vset.pattern.permute.xlu0 0
      %966 = vperm.xlu0 %965, %v964
      %v967 = vpop.permute.xlu0 %966
      %v969 = vmul.f32 %v861, %v967
      %v970 = vmul.f32 %v862, %v967
      %v971 = vsel %vm947, %v958, %v969
      %v972 = vsel %vm948, %v959, %v970
      %v973 = vld [vmem:[%s13] sm:$0xff]
      %v975 = vsel %vm865, %v973, 0
      %977 = vmatprep.subr.mxu0 0.0
      %978 = vmatpush1.msra.mxu0 0.0
      %979 = vmatprep.subr.mxu0 0.0
      %980 = vmatpush1.msra.mxu0 0.0
      %981 = vmatprep.subr.mxu0 0.0
      %982 = vmatpush1.msra.mxu0 0.0
      %983 = vmatprep.subr.mxu0 0.0
      %984 = vmatpush1.msra.mxu0 0.0
      %985 = vmatprep.subr.mxu0 0.0
      %986 = vmatpush1.msra.mxu0 0.0
      %987 = vmatprep.subr.mxu0 0.0
      %988 = vmatpush1.msra.mxu0 0.0
      %989 = vmatprep.subr.mxu0 0.0
      %990 = vmatpush1.msra.mxu0 0.0
      %991 = vmatprep.subr.mxu0 0.0
      %992 = vmatpush1.msra.mxu0 0.0
      %993 = vmatprep.subr.mxu0 0.0
      %994 = vmatpush1.msra.mxu0 0.0
      %995 = vmatprep.subr.mxu0 0.0
      %996 = vmatpush1.msra.mxu0 0.0
      %997 = vmatprep.subr.mxu0 0.0
      %998 = vmatpush1.msra.mxu0 0.0
      %999 = vmatprep.subr.mxu0 0.0
      %1000 = vmatpush1.msra.mxu0 0.0
      %1001 = vmatprep.subr.mxu0 0.0
      %1002 = vmatpush1.msra.mxu0 0.0
      %1003 = vmatprep.subr.mxu0 0.0
      %1004 = vmatpush1.msra.mxu0 0.0
      %1005 = vmatprep.subr.mxu0 0.0
      %1006 = vmatpush1.msra.mxu0 %v972
      %1007 = vmatprep.subr.mxu0 0.0
      %1008 = vmatpush1.msra.mxu0 %v971
      %1009 = vmatprep.subr.mxu0 0.0
      %1010 = vmatpush2.msra.mxu0 0.0
      %1011 = vmatprep.subr.mxu0 0.0
      %1012 = vmatpush2.msra.mxu0 0.0
      %1013 = vmatprep.subr.mxu0 0.0
      %1014 = vmatpush2.msra.mxu0 0.0
      %1015 = vmatprep.subr.mxu0 0.0
      %1016 = vmatpush2.msra.mxu0 0.0
      %1017 = vmatprep.subr.mxu0 0.0
      %1018 = vmatpush2.msra.mxu0 0.0
      %1019 = vmatprep.subr.mxu0 0.0
      %1020 = vmatpush2.msra.mxu0 0.0
      %1021 = vmatprep.subr.mxu0 0.0
      %1022 = vmatpush2.msra.mxu0 0.0
      %1023 = vmatprep.subr.mxu0 0.0
      %1024 = vmatpush2.msra.mxu0 0.0
      %1025 = vmatprep.subr.mxu0 0.0
      %1026 = vmatpush2.msra.mxu0 0.0
      %1027 = vmatprep.subr.mxu0 0.0
      %1028 = vmatpush2.msra.mxu0 0.0
      %1029 = vmatprep.subr.mxu0 0.0
      %1030 = vmatpush2.msra.mxu0 0.0
      %1031 = vmatprep.subr.mxu0 0.0
      %1032 = vmatpush2.msra.mxu0 0.0
      %1033 = vmatprep.subr.mxu0 0.0
      %1034 = vmatpush2.msra.mxu0 0.0
      %1035 = vmatprep.subr.mxu0 0.0
      %1036 = vmatpush2.msra.mxu0 0.0
      %1037 = vmatprep.subr.mxu0 0.0
      %1038 = vmatpush2.msra.mxu0 0.0
      %1039 = vmatprep.subr.mxu0 0.0
      %1040 = vmatpush2.msra.mxu0 0.0
      %1041 = vmatprep.mubr.f32.mxu0 0.0
      %1042 = vmatmul.mubr.f32.gmra.mxu0 %v975
      %v1043 = vpop.f32.mrf.mxu0
      %v1044 = vadd.f32 0.0, %v1043
      %v1045 = vpop.f32.mrf.mxu0
      %1046 = vdwg.mxu0
      %v1047 = vld [vmem:[%s14] sm:$0xff]
      %v1049 = vsel %vm865, %v1047, 0
      %1051 = vmatprep.subr.mxu0 0.0
      %1052 = vmatpush1.msra.mxu0 0.0
      %1053 = vmatprep.subr.mxu0 0.0
      %1054 = vmatpush1.msra.mxu0 0.0
      %1055 = vmatprep.subr.mxu0 0.0
      %1056 = vmatpush1.msra.mxu0 0.0
      %1057 = vmatprep.subr.mxu0 0.0
      %1058 = vmatpush1.msra.mxu0 0.0
      %1059 = vmatprep.subr.mxu0 0.0
      %1060 = vmatpush1.msra.mxu0 0.0
      %1061 = vmatprep.subr.mxu0 0.0
      %1062 = vmatpush1.msra.mxu0 0.0
      %1063 = vmatprep.subr.mxu0 0.0
      %1064 = vmatpush1.msra.mxu0 0.0
      %1065 = vmatprep.subr.mxu0 0.0
      %1066 = vmatpush1.msra.mxu0 0.0
      %1067 = vmatprep.subr.mxu0 0.0
      %1068 = vmatpush1.msra.mxu0 0.0
      %1069 = vmatprep.subr.mxu0 0.0
      %1070 = vmatpush1.msra.mxu0 0.0
      %1071 = vmatprep.subr.mxu0 0.0
      %1072 = vmatpush1.msra.mxu0 0.0
      %1073 = vmatprep.subr.mxu0 0.0
      %1074 = vmatpush1.msra.mxu0 0.0
      %1075 = vmatprep.subr.mxu0 0.0
      %1076 = vmatpush1.msra.mxu0 0.0
      %1077 = vmatprep.subr.mxu0 0.0
      %1078 = vmatpush1.msra.mxu0 0.0
      %1079 = vmatprep.subr.mxu0 0.0
      %1080 = vmatpush1.msra.mxu0 %v972
      %1081 = vmatprep.subr.mxu0 0.0
      %1082 = vmatpush1.msra.mxu0 %v971
      %1083 = vmatprep.subr.mxu0 0.0
      %1084 = vmatpush2.msra.mxu0 0.0
      %1085 = vmatprep.subr.mxu0 0.0
      %1086 = vmatpush2.msra.mxu0 0.0
      %1087 = vmatprep.subr.mxu0 0.0
      %1088 = vmatpush2.msra.mxu0 0.0
      %1089 = vmatprep.subr.mxu0 0.0
      %1090 = vmatpush2.msra.mxu0 0.0
      %1091 = vmatprep.subr.mxu0 0.0
      %1092 = vmatpush2.msra.mxu0 0.0
      %1093 = vmatprep.subr.mxu0 0.0
      %1094 = vmatpush2.msra.mxu0 0.0
      %1095 = vmatprep.subr.mxu0 0.0
      %1096 = vmatpush2.msra.mxu0 0.0
      %1097 = vmatprep.subr.mxu0 0.0
      %1098 = vmatpush2.msra.mxu0 0.0
      %1099 = vmatprep.subr.mxu0 0.0
      %1100 = vmatpush2.msra.mxu0 0.0
      %1101 = vmatprep.subr.mxu0 0.0
      %1102 = vmatpush2.msra.mxu0 0.0
      %1103 = vmatprep.subr.mxu0 0.0
      %1104 = vmatpush2.msra.mxu0 0.0
      %1105 = vmatprep.subr.mxu0 0.0
      %1106 = vmatpush2.msra.mxu0 0.0
      %1107 = vmatprep.subr.mxu0 0.0
      %1108 = vmatpush2.msra.mxu0 0.0
      %1109 = vmatprep.subr.mxu0 0.0
      %1110 = vmatpush2.msra.mxu0 0.0
      %1111 = vmatprep.subr.mxu0 0.0
      %1112 = vmatpush2.msra.mxu0 0.0
      %1113 = vmatprep.subr.mxu0 0.0
      %1114 = vmatpush2.msra.mxu0 0.0
      %1115 = vmatprep.mubr.f32.mxu0 0.0
      %1116 = vmatmul.mubr.f32.gmra.mxu0 %v1049
      %v1117 = vpop.f32.mrf.mxu0
      %v1118 = vadd.f32 0.0, %v1117
      %v1119 = vpop.f32.mrf.mxu0
      %1120 = vdwg.mxu0
      %v1121 = vsub.f32 0.0, %v1118
      %v1122 = vmul.f32 %v1044, %v1044
      %v1123 = vmul.f32 %v1121, %v1121
      %v1124 = vadd.f32 %v1122, %v1123
      %v1125 = vsel %vm819, %v1124, 0.0
      %1126 = vadd.xlane.f32.xlu0 %v1125
      %v1127 = vpop.xlane.xlu0 %1126
      %v1129 = vsel %vm819, 1.0, 0
      %v1132 = vsel %vm819, %v1124, 0
      %1134 = vmatprep.subr.mxu0 0.0
      %1135 = vmatpush1.xpose.msra.mxu0 0.0
      %1136 = vmatprep.subr.mxu0 0.0
      %1137 = vmatpush1.xpose.msra.mxu0 0.0
      %1138 = vmatprep.subr.mxu0 0.0
      %1139 = vmatpush1.xpose.msra.mxu0 0.0
      %1140 = vmatprep.subr.mxu0 0.0
      %1141 = vmatpush1.xpose.msra.mxu0 0.0
      %1142 = vmatprep.subr.mxu0 0.0
      %1143 = vmatpush1.xpose.msra.mxu0 0.0
      %1144 = vmatprep.subr.mxu0 0.0
      %1145 = vmatpush1.xpose.msra.mxu0 0.0
      %1146 = vmatprep.subr.mxu0 0.0
      %1147 = vmatpush1.xpose.msra.mxu0 0.0
      %1148 = vmatprep.subr.mxu0 0.0
      %1149 = vmatpush1.xpose.msra.mxu0 0.0
      %1150 = vmatprep.subr.mxu0 0.0
      %1151 = vmatpush1.xpose.msra.mxu0 0.0
      %1152 = vmatprep.subr.mxu0 0.0
      %1153 = vmatpush1.xpose.msra.mxu0 0.0
      %1154 = vmatprep.subr.mxu0 0.0
      %1155 = vmatpush1.xpose.msra.mxu0 0.0
      %1156 = vmatprep.subr.mxu0 0.0
      %1157 = vmatpush1.xpose.msra.mxu0 0.0
      %1158 = vmatprep.subr.mxu0 0.0
      %1159 = vmatpush1.xpose.msra.mxu0 0.0
      %1160 = vmatprep.subr.mxu0 0.0
      %1161 = vmatpush1.xpose.msra.mxu0 0.0
      %1162 = vmatprep.subr.mxu0 0.0
      %1163 = vmatpush1.xpose.msra.mxu0 0.0
      %1164 = vmatprep.subr.mxu0 0.0
      %1165 = vmatpush1.xpose.msra.mxu0 %v1132
      %1166 = vmatprep.subr.mxu0 0.0
      %1167 = vmatpush2.xpose.msra.mxu0 0.0
      %1168 = vmatprep.subr.mxu0 0.0
      %1169 = vmatpush2.xpose.msra.mxu0 0.0
      %1170 = vmatprep.subr.mxu0 0.0
      %1171 = vmatpush2.xpose.msra.mxu0 0.0
      %1172 = vmatprep.subr.mxu0 0.0
      %1173 = vmatpush2.xpose.msra.mxu0 0.0
      %1174 = vmatprep.subr.mxu0 0.0
      %1175 = vmatpush2.xpose.msra.mxu0 0.0
      %1176 = vmatprep.subr.mxu0 0.0
      %1177 = vmatpush2.xpose.msra.mxu0 0.0
      %1178 = vmatprep.subr.mxu0 0.0
      %1179 = vmatpush2.xpose.msra.mxu0 0.0
      %1180 = vmatprep.subr.mxu0 0.0
      %1181 = vmatpush2.xpose.msra.mxu0 0.0
      %1182 = vmatprep.subr.mxu0 0.0
      %1183 = vmatpush2.xpose.msra.mxu0 0.0
      %1184 = vmatprep.subr.mxu0 0.0
      %1185 = vmatpush2.xpose.msra.mxu0 0.0
      %1186 = vmatprep.subr.mxu0 0.0
      %1187 = vmatpush2.xpose.msra.mxu0 0.0
      %1188 = vmatprep.subr.mxu0 0.0
      %1189 = vmatpush2.xpose.msra.mxu0 0.0
      %1190 = vmatprep.subr.mxu0 0.0
      %1191 = vmatpush2.xpose.msra.mxu0 0.0
      %1192 = vmatprep.subr.mxu0 0.0
      %1193 = vmatpush2.xpose.msra.mxu0 0.0
      %1194 = vmatprep.subr.mxu0 0.0
      %1195 = vmatpush2.xpose.msra.mxu0 0.0
      %1196 = vmatprep.subr.mxu0 0.0
      %1197 = vmatpush2.xpose.msra.mxu0 0.0
      %1198 = vmatprep.mubr.f32.mxu0 0.0
      %1199 = vmatmul.mubr.f32.gmra.mxu0 %v1129
      %v1200 = vpop.f32.mrf.mxu0
      %v1201 = vadd.f32 0.0, %v1200
      %v1202 = vpop.f32.mrf.mxu0
      %1203 = vdwg.mxu0
      %v1204 = vlaneseq
      %v1205 = vshrl.u32 %v1204, 7
      %v1206 = vlaneseq
      %v1207 = vand.u32 %v1206, 127
      %vm1208 = vcmp.eq.s32.totalorder %v1205, %v1207
      %v1209 = vlaneseq
      %v1210 = vshrl.u32 %v1209, 7
      %v1211 = vsub.s32 0, %v1210
      %v1212 = vrot.slane %v1201, %v1211
      %vm1213 = vcmp.le.f32.partialorder %v1127, %v1212
      %vm1214 = vmor %vm1213, %vm1208
      %v1215 = vsel %vm1214, 1, 0
      %v1216 = vcvt.s32.f32 %v1215
      %vm1217 = vcmask 64512
      %v1218 = vsel %vm1217, 1.0, 0
      %1220 = vmatprep.subr.mxu0 0.0
      %1221 = vmatpush1.msra.mxu0 0.0
      %1222 = vmatprep.subr.mxu0 0.0
      %1223 = vmatpush1.msra.mxu0 0.0
      %1224 = vmatprep.subr.mxu0 0.0
      %1225 = vmatpush1.msra.mxu0 0.0
      %1226 = vmatprep.subr.mxu0 0.0
      %1227 = vmatpush1.msra.mxu0 0.0
      %1228 = vmatprep.subr.mxu0 0.0
      %1229 = vmatpush1.msra.mxu0 0.0
      %1230 = vmatprep.subr.mxu0 0.0
      %1231 = vmatpush1.msra.mxu0 0.0
      %1232 = vmatprep.subr.mxu0 0.0
      %1233 = vmatpush1.msra.mxu0 0.0
      %1234 = vmatprep.subr.mxu0 0.0
      %1235 = vmatpush1.msra.mxu0 0.0
      %1236 = vmatprep.subr.mxu0 0.0
      %1237 = vmatpush1.msra.mxu0 0.0
      %1238 = vmatprep.subr.mxu0 0.0
      %1239 = vmatpush1.msra.mxu0 0.0
      %1240 = vmatprep.subr.mxu0 0.0
      %1241 = vmatpush1.msra.mxu0 0.0
      %1242 = vmatprep.subr.mxu0 0.0
      %1243 = vmatpush1.msra.mxu0 0.0
      %1244 = vmatprep.subr.mxu0 0.0
      %1245 = vmatpush1.msra.mxu0 0.0
      %1246 = vmatprep.subr.mxu0 0.0
      %1247 = vmatpush1.msra.mxu0 0.0
      %1248 = vmatprep.subr.mxu0 0.0
      %1249 = vmatpush1.msra.mxu0 0.0
      %1250 = vmatprep.subr.mxu0 0.0
      %1251 = vmatpush1.msra.mxu0 %v1216
      %1252 = vmatprep.subr.mxu0 0.0
      %1253 = vmatpush2.msra.mxu0 0.0
      %1254 = vmatprep.subr.mxu0 0.0
      %1255 = vmatpush2.msra.mxu0 0.0
      %1256 = vmatprep.subr.mxu0 0.0
      %1257 = vmatpush2.msra.mxu0 0.0
      %1258 = vmatprep.subr.mxu0 0.0
      %1259 = vmatpush2.msra.mxu0 0.0
      %1260 = vmatprep.subr.mxu0 0.0
      %1261 = vmatpush2.msra.mxu0 0.0
      %1262 = vmatprep.subr.mxu0 0.0
      %1263 = vmatpush2.msra.mxu0 0.0
      %1264 = vmatprep.subr.mxu0 0.0
      %1265 = vmatpush2.msra.mxu0 0.0
      %1266 = vmatprep.subr.mxu0 0.0
      %1267 = vmatpush2.msra.mxu0 0.0
      %1268 = vmatprep.subr.mxu0 0.0
      %1269 = vmatpush2.msra.mxu0 0.0
      %1270 = vmatprep.subr.mxu0 0.0
      %1271 = vmatpush2.msra.mxu0 0.0
      %1272 = vmatprep.subr.mxu0 0.0
      %1273 = vmatpush2.msra.mxu0 0.0
      %1274 = vmatprep.subr.mxu0 0.0
      %1275 = vmatpush2.msra.mxu0 0.0
      %1276 = vmatprep.subr.mxu0 0.0
      %1277 = vmatpush2.msra.mxu0 0.0
      %1278 = vmatprep.subr.mxu0 0.0
      %1279 = vmatpush2.msra.mxu0 0.0
      %1280 = vmatprep.subr.mxu0 0.0
      %1281 = vmatpush2.msra.mxu0 0.0
      %1282 = vmatprep.subr.mxu0 0.0
      %1283 = vmatpush2.msra.mxu0 0.0
      %1284 = vmatprep.mubr.f32.mxu0 0.0
      %1285 = vmatmul.mubr.f32.gmra.mxu0 %v1218
      %v1286 = vpop.f32.mrf.mxu0
      %v1287 = vadd.f32 0.0, %v1286
      %v1288 = vpop.f32.mrf.mxu0
      %1289 = vdwg.mxu0
      %vm1290 = vcmp.ge.f32.partialorder %v1287, 4.0
      %v1291 = vsel %vm1290, %v1201, inf
      %vm1292 = vcmask 57344
      %v1293 = vsel %vm1292, %v1291, inf
      %1294 = vmin.xlane.f32.xlu0 %v1293
      %v1295 = vpop.xlane.xlu0 %1294
      %v1296 = vadd.f32 %v1295, 1e-06
      %v1297 = vlaneseq
      %v1298 = vshrl.u32 %v1297, 7
      %v1299 = vsub.s32 0, %v1298
      %v1300 = vrot.slane %v1296, %v1299
      %v1301 = vrcp.pop %v1300
      %v1302 = vmul.f32 %v1127, %v1301
      %v1304 = vlaneseq
      %v1305 = vshrl.u32 %v1304, 7
      %v1306 = vsub.s32 0, %v1305
      %v1307 = vrot.slane %v816, %v1306
      %vm1309 = vcmp.gt.f32.partialorder %v1302, %v1307
      %v1310 = vsel %vm1309, 1, 0
      %v1311 = vcvt.s32.f32 %v1310
      %v1312 = vld [vmem:[%s663] sm:$0x1]
      %v1313 = vld [vmem:[%s669] sm:$0x1]
      %1315 = vset.pattern.permute.xlu0 0
      %1316 = vperm.xlu0 %1315, %v1311
      %v1317 = vpop.permute.xlu0 %1316
      %v1320 = vlaneseq
      %v1321 = vshrl.u32 %v1320, 7
      %v1322 = vsub.s32 0, %v1321
      %v1323 = vrot.slane %v1313, %v1322
      %v1325 = vmul.f32 %v1317, %v1323
      %v1327 = vlaneseq
      %v1328 = vshrl.u32 %v1327, 7
      %v1329 = vsub.s32 0, %v1328
      %v1330 = vrot.slane %v1312, %v1329
      %v1332 = vadd.f32 %v1330, %v1325
      %v1333 = vld [vmem:[%s666] sm:$0x1]
      %v1334 = vld [vmem:[%s672] sm:$0x1]
      %v1336 = vlaneseq
      %v1337 = vshrl.u32 %v1336, 7
      %v1338 = vsub.s32 0, %v1337
      %v1339 = vrot.slane %v1334, %v1338
      %v1341 = vmul.f32 %v1317, %v1339
      %v1343 = vlaneseq
      %v1344 = vshrl.u32 %v1343, 7
      %v1345 = vsub.s32 0, %v1344
      %v1346 = vrot.slane %v1333, %v1345
      %v1348 = vadd.f32 %v1346, %v1341
      %v1349 = vmul.f32 %v1044, %v1332
      %v1350 = vmul.f32 %v1121, %v1348
      %v1351 = vsub.f32 %v1349, %v1350
      %v1352 = vmul.f32 %v1044, %v1348
      %v1353 = vmul.f32 %v1121, %v1332
      %v1354 = vadd.f32 %v1352, %v1353
      %v1355 = vld [vmem:[%s15] sm:$0xff]
      %v1356 = vld [vmem:[%s15 + $0x8] sm:$0xff]
      %v1358 = vsel %vm1217, %v1355, 0
      %v1361 = vsel %vm1217, %v1356, 0
      %1363 = vmatprep.subr.mxu0 0.0
      %1364 = vmatpush1.msra.mxu0 0.0
      %1365 = vmatprep.subr.mxu0 0.0
      %1366 = vmatpush1.msra.mxu0 0.0
      %1367 = vmatprep.subr.mxu0 0.0
      %1368 = vmatpush1.msra.mxu0 0.0
      %1369 = vmatprep.subr.mxu0 0.0
      %1370 = vmatpush1.msra.mxu0 0.0
      %1371 = vmatprep.subr.mxu0 0.0
      %1372 = vmatpush1.msra.mxu0 0.0
      %1373 = vmatprep.subr.mxu0 0.0
      %1374 = vmatpush1.msra.mxu0 0.0
      %1375 = vmatprep.subr.mxu0 0.0
      %1376 = vmatpush1.msra.mxu0 0.0
      %1377 = vmatprep.subr.mxu0 0.0
      %1378 = vmatpush1.msra.mxu0 0.0
      %1379 = vmatprep.subr.mxu0 0.0
      %1380 = vmatpush1.msra.mxu0 0.0
      %1381 = vmatprep.subr.mxu0 0.0
      %1382 = vmatpush1.msra.mxu0 0.0
      %1383 = vmatprep.subr.mxu0 0.0
      %1384 = vmatpush1.msra.mxu0 0.0
      %1385 = vmatprep.subr.mxu0 0.0
      %1386 = vmatpush1.msra.mxu0 0.0
      %1387 = vmatprep.subr.mxu0 0.0
      %1388 = vmatpush1.msra.mxu0 0.0
      %1389 = vmatprep.subr.mxu0 0.0
      %1390 = vmatpush1.msra.mxu0 0.0
      %1391 = vmatprep.subr.mxu0 0.0
      %1392 = vmatpush1.msra.mxu0 0.0
      %1393 = vmatprep.subr.mxu0 0.0
      %1394 = vmatpush1.msra.mxu0 %v1351
      %1395 = vmatprep.subr.mxu0 0.0
      %1396 = vmatpush2.msra.mxu0 0.0
      %1397 = vmatprep.subr.mxu0 0.0
      %1398 = vmatpush2.msra.mxu0 0.0
      %1399 = vmatprep.subr.mxu0 0.0
      %1400 = vmatpush2.msra.mxu0 0.0
      %1401 = vmatprep.subr.mxu0 0.0
      %1402 = vmatpush2.msra.mxu0 0.0
      %1403 = vmatprep.subr.mxu0 0.0
      %1404 = vmatpush2.msra.mxu0 0.0
      %1405 = vmatprep.subr.mxu0 0.0
      %1406 = vmatpush2.msra.mxu0 0.0
      %1407 = vmatprep.subr.mxu0 0.0
      %1408 = vmatpush2.msra.mxu0 0.0
      %1409 = vmatprep.subr.mxu0 0.0
      %1410 = vmatpush2.msra.mxu0 0.0
      %1411 = vmatprep.subr.mxu0 0.0
      %1412 = vmatpush2.msra.mxu0 0.0
      %1413 = vmatprep.subr.mxu0 0.0
      %1414 = vmatpush2.msra.mxu0 0.0
      %1415 = vmatprep.subr.mxu0 0.0
      %1416 = vmatpush2.msra.mxu0 0.0
      %1417 = vmatprep.subr.mxu0 0.0
      %1418 = vmatpush2.msra.mxu0 0.0
      %1419 = vmatprep.subr.mxu0 0.0
      %1420 = vmatpush2.msra.mxu0 0.0
      %1421 = vmatprep.subr.mxu0 0.0
      %1422 = vmatpush2.msra.mxu0 0.0
      %1423 = vmatprep.subr.mxu0 0.0
      %1424 = vmatpush2.msra.mxu0 0.0
      %1425 = vmatprep.subr.mxu0 0.0
      %1426 = vmatpush2.msra.mxu0 0.0
      %1427 = vmatprep.mubr.f32.mxu0 0.0
      %1428 = vmatmul.mubr.f32.gmra.mxu0 %v1358
      %v1429 = vpop.f32.mrf.mxu0
      %v1430 = vadd.f32 0.0, %v1429
      %v1431 = vpop.f32.mrf.mxu0
      %1432 = vmatprep.mubr.f32.mxu0 0.0
      %1433 = vmatmul.mubr.f32.gmra.mxu0 %v1361
      %v1434 = vpop.f32.mrf.mxu0
      %v1435 = vadd.f32 0.0, %v1434
      %v1436 = vpop.f32.mrf.mxu0
      %1437 = vdwg.mxu0
      %v1438 = vld [vmem:[%s16] sm:$0xff]
      %v1439 = vld [vmem:[%s16 + $0x8] sm:$0xff]
      %v1441 = vsel %vm1217, %v1438, 0
      %v1444 = vsel %vm1217, %v1439, 0
      %1446 = vmatprep.subr.mxu0 0.0
      %1447 = vmatpush1.msra.mxu0 0.0
      %1448 = vmatprep.subr.mxu0 0.0
      %1449 = vmatpush1.msra.mxu0 0.0
      %1450 = vmatprep.subr.mxu0 0.0
      %1451 = vmatpush1.msra.mxu0 0.0
      %1452 = vmatprep.subr.mxu0 0.0
      %1453 = vmatpush1.msra.mxu0 0.0
      %1454 = vmatprep.subr.mxu0 0.0
      %1455 = vmatpush1.msra.mxu0 0.0
      %1456 = vmatprep.subr.mxu0 0.0
      %1457 = vmatpush1.msra.mxu0 0.0
      %1458 = vmatprep.subr.mxu0 0.0
      %1459 = vmatpush1.msra.mxu0 0.0
      %1460 = vmatprep.subr.mxu0 0.0
      %1461 = vmatpush1.msra.mxu0 0.0
      %1462 = vmatprep.subr.mxu0 0.0
      %1463 = vmatpush1.msra.mxu0 0.0
      %1464 = vmatprep.subr.mxu0 0.0
      %1465 = vmatpush1.msra.mxu0 0.0
      %1466 = vmatprep.subr.mxu0 0.0
      %1467 = vmatpush1.msra.mxu0 0.0
      %1468 = vmatprep.subr.mxu0 0.0
      %1469 = vmatpush1.msra.mxu0 0.0
      %1470 = vmatprep.subr.mxu0 0.0
      %1471 = vmatpush1.msra.mxu0 0.0
      %1472 = vmatprep.subr.mxu0 0.0
      %1473 = vmatpush1.msra.mxu0 0.0
      %1474 = vmatprep.subr.mxu0 0.0
      %1475 = vmatpush1.msra.mxu0 0.0
      %1476 = vmatprep.subr.mxu0 0.0
      %1477 = vmatpush1.msra.mxu0 %v1354
      %1478 = vmatprep.subr.mxu0 0.0
      %1479 = vmatpush2.msra.mxu0 0.0
      %1480 = vmatprep.subr.mxu0 0.0
      %1481 = vmatpush2.msra.mxu0 0.0
      %1482 = vmatprep.subr.mxu0 0.0
      %1483 = vmatpush2.msra.mxu0 0.0
      %1484 = vmatprep.subr.mxu0 0.0
      %1485 = vmatpush2.msra.mxu0 0.0
      %1486 = vmatprep.subr.mxu0 0.0
      %1487 = vmatpush2.msra.mxu0 0.0
      %1488 = vmatprep.subr.mxu0 0.0
      %1489 = vmatpush2.msra.mxu0 0.0
      %1490 = vmatprep.subr.mxu0 0.0
      %1491 = vmatpush2.msra.mxu0 0.0
      %1492 = vmatprep.subr.mxu0 0.0
      %1493 = vmatpush2.msra.mxu0 0.0
      %1494 = vmatprep.subr.mxu0 0.0
      %1495 = vmatpush2.msra.mxu0 0.0
      %1496 = vmatprep.subr.mxu0 0.0
      %1497 = vmatpush2.msra.mxu0 0.0
      %1498 = vmatprep.subr.mxu0 0.0
      %1499 = vmatpush2.msra.mxu0 0.0
      %1500 = vmatprep.subr.mxu0 0.0
      %1501 = vmatpush2.msra.mxu0 0.0
      %1502 = vmatprep.subr.mxu0 0.0
      %1503 = vmatpush2.msra.mxu0 0.0
      %1504 = vmatprep.subr.mxu0 0.0
      %1505 = vmatpush2.msra.mxu0 0.0
      %1506 = vmatprep.subr.mxu0 0.0
      %1507 = vmatpush2.msra.mxu0 0.0
      %1508 = vmatprep.subr.mxu0 0.0
      %1509 = vmatpush2.msra.mxu0 0.0
      %1510 = vmatprep.mubr.f32.mxu0 0.0
      %1511 = vmatmul.mubr.f32.gmra.mxu0 %v1441
      %v1512 = vpop.f32.mrf.mxu0
      %v1513 = vadd.f32 0.0, %v1512
      %v1514 = vpop.f32.mrf.mxu0
      %1515 = vmatprep.mubr.f32.mxu0 0.0
      %1516 = vmatmul.mubr.f32.gmra.mxu0 %v1444
      %v1517 = vpop.f32.mrf.mxu0
      %v1518 = vadd.f32 0.0, %v1517
      %v1519 = vpop.f32.mrf.mxu0
      %1520 = vdwg.mxu0
      %v1521 = vsub.f32 %v1430, %v1513
      %v1522 = vsub.f32 %v1435, %v1518
      %v1523 = vadd.f32 %v812, %v1521
      %v1524 = vadd.f32 %v813, %v1522
      %1525 = vst.msk [vmem:[%s686] sm:$0xff] %vm819, %v1523
      %1526 = vst.msk [vmem:[%s686 + $0x8] sm:$0xff] %vm819, %v1524
      %p1527 = scmp.lt.s32.totalorder %s32, 1
      %s1528 = scalar_select %p1527, %s32, 1
      %s1529 = smul.addr %s1528, 2
      %s1530 = smul.addr %s1529, 8
      %s1531 = scalar_lea.vmem %s17, %s1530
      // Predicated region
      $region93: #{_lambda_.7} parent=87 // pred_check
        %p1532 = pneg %p465
      $region94: #{_lambda_.7} parent=87 // pred_check_branch
        %1534 = sbr.rel (%p1532) target = $region96
      $region95: #{_lambda_.7} parent=87 // pred_region
        _
      $region96: #{_lambda_.7} parent=87 // pred_fallthru
        _
    $region88: #{_lambda_.7} parent=5 // pred_fallthru
      _
    %p1535 = scmp.le.s32.totalorder 2, %s23
    // Predicated region
    $region97: #{_lambda_.7} parent=5 // pred_check
      %p1536 = pneg %p1535
    $region98: #{_lambda_.7} parent=5 // pred_check_branch
      %1538 = sbr.rel (%p1536) target = $region100
    $region99: #{_lambda_.7} parent=5 // pred_region
      %s1539 = ssub.s32 %s23, 2
      // Predicated region
      $region101: #{_lambda_.7} parent=99 // pred_check
        %p1540 = pneg %p471
      $region102: #{_lambda_.7} parent=99 // pred_check_branch
        %1542 = sbr.rel (%p1540) target = $region104
      $region103: #{_lambda_.7} parent=99 // pred_region
        %p1543 = scmp.lt.s32.totalorder %s34, 1
        %s1544 = scalar_select %p1543, %s34, 1
        %s1545 = smul.addr %s1544, 2
        %s1546 = smul.addr %s1545, 8
        %s1547 = scalar_lea.vmem %s17, %s1546
      $region104: #{_lambda_.7} parent=99 // pred_fallthru
        _
    $region100: #{_lambda_.7} parent=5 // pred_fallthru
      _
  $region6: #{_lambda_.7} parent=0 // loop_footer
    %s27 = sadd.s32 1, %s23
  $region7: #{_lambda_.7} parent=0 // loop_footer_branch
    %22 = sbr.rel target = $region3
  $region8: #{_lambda_.7} parent=0 // loop_exit
    _

// kernel: _lambda_.6
$region0: #{_lambda_.6}
  #allocation0 [shape = 'u32[]', space=smem, size = 0x4, offset = 0x4, fixed_abs, tag = 'smem constant byte address 0x4 - core index']
  #allocation1 [shape = 'u32[144,128]{1,0:T(1,128)}', space=vmem, size = 0x12000, scoped, tag = 'internal scratch']
  %s0 = inlined_call_operand.vmem [shape: f32[2,64,128], index: 0, kind: input, shape index: {}]
  %s1 = inlined_call_operand.vmem [shape: f32[128,32], index: 1, kind: input, shape index: {}]
  %s2 = inlined_call_operand.vmem [shape: f32[1,32], index: 2, kind: input, shape index: {}]
  %s3 = inlined_call_operand.vmem [shape: f32[2,1,32], index: 3, kind: input, shape index: {}]
  %s4 = inlined_call_operand.vmem [shape: f32[2,1,32], index: 4, kind: input, shape index: {}]
  %s5 = inlined_call_operand.vmem [shape: f32[2,1,32], index: 5, kind: input, shape index: {}]
  %s6 = inlined_call_operand.vmem [shape: f32[2,1,32], index: 6, kind: input, shape index: {}]
  %s7 = inlined_call_operand.vmem [shape: f32[2,1,32], index: 7, kind: input, shape index: {}]
  %s8 = inlined_call_operand.vmem [shape: f32[2,1,32], index: 8, kind: input, shape index: {}]
  %s9 = inlined_call_operand.vmem [shape: f32[2,1,1], index: 9, kind: input, shape index: {}]
  %s10 = inlined_call_operand.vmem [shape: f32[2,1,1], index: 10, kind: input, shape index: {}]
  %s11 = inlined_call_operand.vmem [shape: f32[2,1,1], index: 11, kind: input, shape index: {}]
  %s12 = inlined_call_operand.vmem [shape: f32[64,64], index: 12, kind: input, shape index: {}]
  %s13 = inlined_call_operand.vmem [shape: f32[32,64], index: 13, kind: input, shape index: {}]
  %s14 = inlined_call_operand.vmem [shape: f32[32,64], index: 14, kind: input, shape index: {}]
  %s15 = inlined_call_operand.vmem [shape: f32[64,32], index: 15, kind: input, shape index: {}]
  %s16 = inlined_call_operand.vmem [shape: f32[64,32], index: 16, kind: input, shape index: {}]
  %s17 = inlined_call_operand.vmem [shape: f32[2,64,32], index: 17, kind: output, shape index: {}]
  %s18 = sld [smem:[#allocation0]]
  $region105: #{_lambda_.6} parent=0
    _
  %s20 = ssub.s32 1, %s18
  %s21 = scalar_select 0, %s20, %s18
  loop: start=0, step=1, limit=6
  $region2: #{_lambda_.6} parent=0 // loop_pre_header
    _
  $region3: #{_lambda_.6} parent=0 // loop_header
    %s23 = sphi 0, %s27
    %p24 = scmp.ge.s32.totalorder %s23, 6
    %s30 = sphi 0, %s42
    %s31 = sphi 0, %s38
    %s32 = sphi 0, %s30
    %s33 = sphi 0, %s31
    %s34 = sphi 0, %s32
    %s35 = sphi 0, %s33
    %s45 = sphi 0, %s47
    %s48 = sphi 0, %s45
    %s49 = sphi 0, %s48
    %s65 = sphi 0, %s49
    %s69 = sphi 0, %s69
    %s71 = sphi 0, %s69
    %s72 = sphi 0, %s71
    %s86 = sphi 0, %s72
    %s90 = sphi 0, %s90
    %s92 = sphi 0, %s90
    %s93 = sphi 0, %s92
    %s107 = sphi 0, %s93
    %s113 = sphi 0, %s115
    %s116 = sphi 0, %s113
    %s117 = sphi 0, %s116
    %s133 = sphi 0, %s117
    %s139 = sphi 0, %s141
    %s142 = sphi 0, %s139
    %s143 = sphi 0, %s142
    %s159 = sphi 0, %s143
    %s165 = sphi 0, %s167
    %s168 = sphi 0, %s165
    %s169 = sphi 0, %s168
    %s185 = sphi 0, %s169
    %s191 = sphi 0, %s193
    %s194 = sphi 0, %s191
    %s195 = sphi 0, %s194
    %s211 = sphi 0, %s195
    %s217 = sphi 0, %s219
    %s220 = sphi 0, %s217
    %s221 = sphi 0, %s220
    %s237 = sphi 0, %s221
    %s243 = sphi 0, %s245
    %s246 = sphi 0, %s243
    %s247 = sphi 0, %s246
    %s263 = sphi 0, %s247
    %s269 = sphi 0, %s271
    %s272 = sphi 0, %s269
    %s273 = sphi 0, %s272
    %s289 = sphi 0, %s273
    %s295 = sphi 0, %s297
    %s298 = sphi 0, %s295
    %s299 = sphi 0, %s298
    %s315 = sphi 0, %s299
    %s321 = sphi 0, %s323
    %s324 = sphi 0, %s321
    %s325 = sphi 0, %s324
    %s341 = sphi 0, %s325
    %s345 = sphi 0, %s345
    %s347 = sphi 0, %s345
    %s348 = sphi 0, %s347
    %s362 = sphi 0, %s348
    %s366 = sphi 0, %s366
    %s368 = sphi 0, %s366
    %s369 = sphi 0, %s368
    %s383 = sphi 0, %s369
    %s387 = sphi 0, %s387
    %s389 = sphi 0, %s387
    %s390 = sphi 0, %s389
    %s404 = sphi 0, %s390
    %s408 = sphi 0, %s408
    %s410 = sphi 0, %s408
    %s411 = sphi 0, %s410
    %s425 = sphi 0, %s411
    %s429 = sphi 0, %s429
    %s431 = sphi 0, %s429
    %s432 = sphi 0, %s431
    %s446 = sphi 0, %s432
    %s452 = sphi 0, %s454
    %s455 = sphi 0, %s452
    %s456 = sphi 0, %s455
    %s472 = sphi 0, %s456
  $region4: #{_lambda_.6} parent=0 // loop_header_branch
    %26 = sbr.rel (%p24) target = $region8
  $region5: #{_lambda_.6} parent=0 // loop_body
    %s28 = ssub.s32 %s23, 1
    %s29 = ssub.s32 %s23, 2
    %s36 = sadd.s32 1, %s31
    %p37 = scmp.ge.s32.totalorder %s36, 2
    %s38 = scalar_select %p37, 0, %s36
    %s39 = sadd.s32 1, %s30
    %s40 = scalar_select %p37, %s39, %s30
    %p41 = scmp.ge.s32.totalorder %s40, 2
    %s42 = scalar_select %p41, 0, %s40
    %s43 = ssub.s32 %s30, %s42
    %p44 = scmp.eq.s32.totalorder %s43, 0
    %s46 = sadd.s32 %s45, 1
    %s47 = scalar_select %p44, %s45, %s46
    %p50 = pneg %p44
    %p51 = scmp.eq.s32.totalorder %s23, 3
    %p52 = por %p50, %p51
    %p53 = scmp.ne.s32.totalorder %s45, %s48
    %p54 = scmp.eq.s32.totalorder %s23, 0
    %p55 = por %p53, %p54
    %p56 = scmp.ne.s32.totalorder %s45, %s48
    %p57 = scmp.eq.s32.totalorder %s28, 3
    %p58 = por %p56, %p57
    %p59 = scmp.ne.s32.totalorder %s48, %s49
    %p60 = scmp.eq.s32.totalorder %s28, 0
    %p61 = por %p59, %p60
    %p62 = scmp.ne.s32.totalorder %s48, %s49
    %p63 = scmp.eq.s32.totalorder %s29, 3
    %p64 = por %p62, %p63
    %p66 = scmp.ne.s32.totalorder %s49, %s65
    %p67 = scmp.eq.s32.totalorder %s29, 0
    %p68 = por %p66, %p67
    %s70 = sadd.s32 %s69, 1
    %p73 = scmp.eq.s32.totalorder %s23, 3
    %p74 = scmp.ne.s32.totalorder %s69, %s71
    %p75 = scmp.eq.s32.totalorder %s23, 0
    %p76 = por %p74, %p75
    %p77 = scmp.ne.s32.totalorder %s69, %s71
    %p78 = scmp.eq.s32.totalorder %s28, 3
    %p79 = por %p77, %p78
    %p80 = scmp.ne.s32.totalorder %s71, %s72
    %p81 = scmp.eq.s32.totalorder %s28, 0
    %p82 = por %p80, %p81
    %p83 = scmp.ne.s32.totalorder %s71, %s72
    %p84 = scmp.eq.s32.totalorder %s29, 3
    %p85 = por %p83, %p84
    %p87 = scmp.ne.s32.totalorder %s72, %s86
    %p88 = scmp.eq.s32.totalorder %s29, 0
    %p89 = por %p87, %p88
    %s91 = sadd.s32 %s90, 1
    %p94 = scmp.eq.s32.totalorder %s23, 3
    %p95 = scmp.ne.s32.totalorder %s90, %s92
    %p96 = scmp.eq.s32.totalorder %s23, 0
    %p97 = por %p95, %p96
    %p98 = scmp.ne.s32.totalorder %s90, %s92
    %p99 = scmp.eq.s32.totalorder %s28, 3
    %p100 = por %p98, %p99
    %p101 = scmp.ne.s32.totalorder %s92, %s93
    %p102 = scmp.eq.s32.totalorder %s28, 0
    %p103 = por %p101, %p102
    %p104 = scmp.ne.s32.totalorder %s92, %s93
    %p105 = scmp.eq.s32.totalorder %s29, 3
    %p106 = por %p104, %p105
    %p108 = scmp.ne.s32.totalorder %s93, %s107
    %p109 = scmp.eq.s32.totalorder %s29, 0
    %p110 = por %p108, %p109
    %s111 = ssub.s32 %s31, %s38
    %p112 = scmp.eq.s32.totalorder %s111, 0
    %s114 = sadd.s32 %s113, 1
    %s115 = scalar_select %p112, %s113, %s114
    %p118 = pneg %p112
    %p119 = scmp.eq.s32.totalorder %s23, 3
    %p120 = por %p118, %p119
    %p121 = scmp.ne.s32.totalorder %s113, %s116
    %p122 = scmp.eq.s32.totalorder %s23, 0
    %p123 = por %p121, %p122
    %p124 = scmp.ne.s32.totalorder %s113, %s116
    %p125 = scmp.eq.s32.totalorder %s28, 3
    %p126 = por %p124, %p125
    %p127 = scmp.ne.s32.totalorder %s116, %s117
    %p128 = scmp.eq.s32.totalorder %s28, 0
    %p129 = por %p127, %p128
    %p130 = scmp.ne.s32.totalorder %s116, %s117
    %p131 = scmp.eq.s32.totalorder %s29, 3
    %p132 = por %p130, %p131
    %p134 = scmp.ne.s32.totalorder %s117, %s133
    %p135 = scmp.eq.s32.totalorder %s29, 0
    %p136 = por %p134, %p135
    %s137 = ssub.s32 %s31, %s38
    %p138 = scmp.eq.s32.totalorder %s137, 0
    %s140 = sadd.s32 %s139, 1
    %s141 = scalar_select %p138, %s139, %s140
    %p144 = pneg %p138
    %p145 = scmp.eq.s32.totalorder %s23, 3
    %p146 = por %p144, %p145
    %p147 = scmp.ne.s32.totalorder %s139, %s142
    %p148 = scmp.eq.s32.totalorder %s23, 0
    %p149 = por %p147, %p148
    %p150 = scmp.ne.s32.totalorder %s139, %s142
    %p151 = scmp.eq.s32.totalorder %s28, 3
    %p152 = por %p150, %p151
    %p153 = scmp.ne.s32.totalorder %s142, %s143
    %p154 = scmp.eq.s32.totalorder %s28, 0
    %p155 = por %p153, %p154
    %p156 = scmp.ne.s32.totalorder %s142, %s143
    %p157 = scmp.eq.s32.totalorder %s29, 3
    %p158 = por %p156, %p157
    %p160 = scmp.ne.s32.totalorder %s143, %s159
    %p161 = scmp.eq.s32.totalorder %s29, 0
    %p162 = por %p160, %p161
    %s163 = ssub.s32 %s31, %s38
    %p164 = scmp.eq.s32.totalorder %s163, 0
    %s166 = sadd.s32 %s165, 1
    %s167 = scalar_select %p164, %s165, %s166
    %p170 = pneg %p164
    %p171 = scmp.eq.s32.totalorder %s23, 3
    %p172 = por %p170, %p171
    %p173 = scmp.ne.s32.totalorder %s165, %s168
    %p174 = scmp.eq.s32.totalorder %s23, 0
    %p175 = por %p173, %p174
    %p176 = scmp.ne.s32.totalorder %s165, %s168
    %p177 = scmp.eq.s32.totalorder %s28, 3
    %p178 = por %p176, %p177
    %p179 = scmp.ne.s32.totalorder %s168, %s169
    %p180 = scmp.eq.s32.totalorder %s28, 0
    %p181 = por %p179, %p180
    %p182 = scmp.ne.s32.totalorder %s168, %s169
    %p183 = scmp.eq.s32.totalorder %s29, 3
    %p184 = por %p182, %p183
    %p186 = scmp.ne.s32.totalorder %s169, %s185
    %p187 = scmp.eq.s32.totalorder %s29, 0
    %p188 = por %p186, %p187
    %s189 = ssub.s32 %s31, %s38
    %p190 = scmp.eq.s32.totalorder %s189, 0
    %s192 = sadd.s32 %s191, 1
    %s193 = scalar_select %p190, %s191, %s192
    %p196 = pneg %p190
    %p197 = scmp.eq.s32.totalorder %s23, 3
    %p198 = por %p196, %p197
    %p199 = scmp.ne.s32.totalorder %s191, %s194
    %p200 = scmp.eq.s32.totalorder %s23, 0
    %p201 = por %p199, %p200
    %p202 = scmp.ne.s32.totalorder %s191, %s194
    %p203 = scmp.eq.s32.totalorder %s28, 3
    %p204 = por %p202, %p203
    %p205 = scmp.ne.s32.totalorder %s194, %s195
    %p206 = scmp.eq.s32.totalorder %s28, 0
    %p207 = por %p205, %p206
    %p208 = scmp.ne.s32.totalorder %s194, %s195
    %p209 = scmp.eq.s32.totalorder %s29, 3
    %p210 = por %p208, %p209
    %p212 = scmp.ne.s32.totalorder %s195, %s211
    %p213 = scmp.eq.s32.totalorder %s29, 0
    %p214 = por %p212, %p213
    %s215 = ssub.s32 %s31, %s38
    %p216 = scmp.eq.s32.totalorder %s215, 0
    %s218 = sadd.s32 %s217, 1
    %s219 = scalar_select %p216, %s217, %s218
    %p222 = pneg %p216
    %p223 = scmp.eq.s32.totalorder %s23, 3
    %p224 = por %p222, %p223
    %p225 = scmp.ne.s32.totalorder %s217, %s220
    %p226 = scmp.eq.s32.totalorder %s23, 0
    %p227 = por %p225, %p226
    %p228 = scmp.ne.s32.totalorder %s217, %s220
    %p229 = scmp.eq.s32.totalorder %s28, 3
    %p230 = por %p228, %p229
    %p231 = scmp.ne.s32.totalorder %s220, %s221
    %p232 = scmp.eq.s32.totalorder %s28, 0
    %p233 = por %p231, %p232
    %p234 = scmp.ne.s32.totalorder %s220, %s221
    %p235 = scmp.eq.s32.totalorder %s29, 3
    %p236 = por %p234, %p235
    %p238 = scmp.ne.s32.totalorder %s221, %s237
    %p239 = scmp.eq.s32.totalorder %s29, 0
    %p240 = por %p238, %p239
    %s241 = ssub.s32 %s31, %s38
    %p242 = scmp.eq.s32.totalorder %s241, 0
    %s244 = sadd.s32 %s243, 1
    %s245 = scalar_select %p242, %s243, %s244
    %p248 = pneg %p242
    %p249 = scmp.eq.s32.totalorder %s23, 3
    %p250 = por %p248, %p249
    %p251 = scmp.ne.s32.totalorder %s243, %s246
    %p252 = scmp.eq.s32.totalorder %s23, 0
    %p253 = por %p251, %p252
    %p254 = scmp.ne.s32.totalorder %s243, %s246
    %p255 = scmp.eq.s32.totalorder %s28, 3
    %p256 = por %p254, %p255
    %p257 = scmp.ne.s32.totalorder %s246, %s247
    %p258 = scmp.eq.s32.totalorder %s28, 0
    %p259 = por %p257, %p258
    %p260 = scmp.ne.s32.totalorder %s246, %s247
    %p261 = scmp.eq.s32.totalorder %s29, 3
    %p262 = por %p260, %p261
    %p264 = scmp.ne.s32.totalorder %s247, %s263
    %p265 = scmp.eq.s32.totalorder %s29, 0
    %p266 = por %p264, %p265
    %s267 = ssub.s32 %s31, %s38
    %p268 = scmp.eq.s32.totalorder %s267, 0
    %s270 = sadd.s32 %s269, 1
    %s271 = scalar_select %p268, %s269, %s270
    %p274 = pneg %p268
    %p275 = scmp.eq.s32.totalorder %s23, 3
    %p276 = por %p274, %p275
    %p277 = scmp.ne.s32.totalorder %s269, %s272
    %p278 = scmp.eq.s32.totalorder %s23, 0
    %p279 = por %p277, %p278
    %p280 = scmp.ne.s32.totalorder %s269, %s272
    %p281 = scmp.eq.s32.totalorder %s28, 3
    %p282 = por %p280, %p281
    %p283 = scmp.ne.s32.totalorder %s272, %s273
    %p284 = scmp.eq.s32.totalorder %s28, 0
    %p285 = por %p283, %p284
    %p286 = scmp.ne.s32.totalorder %s272, %s273
    %p287 = scmp.eq.s32.totalorder %s29, 3
    %p288 = por %p286, %p287
    %p290 = scmp.ne.s32.totalorder %s273, %s289
    %p291 = scmp.eq.s32.totalorder %s29, 0
    %p292 = por %p290, %p291
    %s293 = ssub.s32 %s31, %s38
    %p294 = scmp.eq.s32.totalorder %s293, 0
    %s296 = sadd.s32 %s295, 1
    %s297 = scalar_select %p294, %s295, %s296
    %p300 = pneg %p294
    %p301 = scmp.eq.s32.totalorder %s23, 3
    %p302 = por %p300, %p301
    %p303 = scmp.ne.s32.totalorder %s295, %s298
    %p304 = scmp.eq.s32.totalorder %s23, 0
    %p305 = por %p303, %p304
    %p306 = scmp.ne.s32.totalorder %s295, %s298
    %p307 = scmp.eq.s32.totalorder %s28, 3
    %p308 = por %p306, %p307
    %p309 = scmp.ne.s32.totalorder %s298, %s299
    %p310 = scmp.eq.s32.totalorder %s28, 0
    %p311 = por %p309, %p310
    %p312 = scmp.ne.s32.totalorder %s298, %s299
    %p313 = scmp.eq.s32.totalorder %s29, 3
    %p314 = por %p312, %p313
    %p316 = scmp.ne.s32.totalorder %s299, %s315
    %p317 = scmp.eq.s32.totalorder %s29, 0
    %p318 = por %p316, %p317
    %s319 = ssub.s32 %s31, %s38
    %p320 = scmp.eq.s32.totalorder %s319, 0
    %s322 = sadd.s32 %s321, 1
    %s323 = scalar_select %p320, %s321, %s322
    %p326 = pneg %p320
    %p327 = scmp.eq.s32.totalorder %s23, 3
    %p328 = por %p326, %p327
    %p329 = scmp.ne.s32.totalorder %s321, %s324
    %p330 = scmp.eq.s32.totalorder %s23, 0
    %p331 = por %p329, %p330
    %p332 = scmp.ne.s32.totalorder %s321, %s324
    %p333 = scmp.eq.s32.totalorder %s28, 3
    %p334 = por %p332, %p333
    %p335 = scmp.ne.s32.totalorder %s324, %s325
    %p336 = scmp.eq.s32.totalorder %s28, 0
    %p337 = por %p335, %p336
    %p338 = scmp.ne.s32.totalorder %s324, %s325
    %p339 = scmp.eq.s32.totalorder %s29, 3
    %p340 = por %p338, %p339
    %p342 = scmp.ne.s32.totalorder %s325, %s341
    %p343 = scmp.eq.s32.totalorder %s29, 0
    %p344 = por %p342, %p343
    %s346 = sadd.s32 %s345, 1
    %p349 = scmp.eq.s32.totalorder %s23, 3
    %p350 = scmp.ne.s32.totalorder %s345, %s347
    %p351 = scmp.eq.s32.totalorder %s23, 0
    %p352 = por %p350, %p351
    %p353 = scmp.ne.s32.totalorder %s345, %s347
    %p354 = scmp.eq.s32.totalorder %s28, 3
    %p355 = por %p353, %p354
    %p356 = scmp.ne.s32.totalorder %s347, %s348
    %p357 = scmp.eq.s32.totalorder %s28, 0
    %p358 = por %p356, %p357
    %p359 = scmp.ne.s32.totalorder %s347, %s348
    %p360 = scmp.eq.s32.totalorder %s29, 3
    %p361 = por %p359, %p360
    %p363 = scmp.ne.s32.totalorder %s348, %s362
    %p364 = scmp.eq.s32.totalorder %s29, 0
    %p365 = por %p363, %p364
    %s367 = sadd.s32 %s366, 1
    %p370 = scmp.eq.s32.totalorder %s23, 3
    %p371 = scmp.ne.s32.totalorder %s366, %s368
    %p372 = scmp.eq.s32.totalorder %s23, 0
    %p373 = por %p371, %p372
    %p374 = scmp.ne.s32.totalorder %s366, %s368
    %p375 = scmp.eq.s32.totalorder %s28, 3
    %p376 = por %p374, %p375
    %p377 = scmp.ne.s32.totalorder %s368, %s369
    %p378 = scmp.eq.s32.totalorder %s28, 0
    %p379 = por %p377, %p378
    %p380 = scmp.ne.s32.totalorder %s368, %s369
    %p381 = scmp.eq.s32.totalorder %s29, 3
    %p382 = por %p380, %p381
    %p384 = scmp.ne.s32.totalorder %s369, %s383
    %p385 = scmp.eq.s32.totalorder %s29, 0
    %p386 = por %p384, %p385
    %s388 = sadd.s32 %s387, 1
    %p391 = scmp.eq.s32.totalorder %s23, 3
    %p392 = scmp.ne.s32.totalorder %s387, %s389
    %p393 = scmp.eq.s32.totalorder %s23, 0
    %p394 = por %p392, %p393
    %p395 = scmp.ne.s32.totalorder %s387, %s389
    %p396 = scmp.eq.s32.totalorder %s28, 3
    %p397 = por %p395, %p396
    %p398 = scmp.ne.s32.totalorder %s389, %s390
    %p399 = scmp.eq.s32.totalorder %s28, 0
    %p400 = por %p398, %p399
    %p401 = scmp.ne.s32.totalorder %s389, %s390
    %p402 = scmp.eq.s32.totalorder %s29, 3
    %p403 = por %p401, %p402
    %p405 = scmp.ne.s32.totalorder %s390, %s404
    %p406 = scmp.eq.s32.totalorder %s29, 0
    %p407 = por %p405, %p406
    %s409 = sadd.s32 %s408, 1
    %p412 = scmp.eq.s32.totalorder %s23, 3
    %p413 = scmp.ne.s32.totalorder %s408, %s410
    %p414 = scmp.eq.s32.totalorder %s23, 0
    %p415 = por %p413, %p414
    %p416 = scmp.ne.s32.totalorder %s408, %s410
    %p417 = scmp.eq.s32.totalorder %s28, 3
    %p418 = por %p416, %p417
    %p419 = scmp.ne.s32.totalorder %s410, %s411
    %p420 = scmp.eq.s32.totalorder %s28, 0
    %p421 = por %p419, %p420
    %p422 = scmp.ne.s32.totalorder %s410, %s411
    %p423 = scmp.eq.s32.totalorder %s29, 3
    %p424 = por %p422, %p423
    %p426 = scmp.ne.s32.totalorder %s411, %s425
    %p427 = scmp.eq.s32.totalorder %s29, 0
    %p428 = por %p426, %p427
    %s430 = sadd.s32 %s429, 1
    %p433 = scmp.eq.s32.totalorder %s23, 3
    %p434 = scmp.ne.s32.totalorder %s429, %s431
    %p435 = scmp.eq.s32.totalorder %s23, 0
    %p436 = por %p434, %p435
    %p437 = scmp.ne.s32.totalorder %s429, %s431
    %p438 = scmp.eq.s32.totalorder %s28, 3
    %p439 = por %p437, %p438
    %p440 = scmp.ne.s32.totalorder %s431, %s432
    %p441 = scmp.eq.s32.totalorder %s28, 0
    %p442 = por %p440, %p441
    %p443 = scmp.ne.s32.totalorder %s431, %s432
    %p444 = scmp.eq.s32.totalorder %s29, 3
    %p445 = por %p443, %p444
    %p447 = scmp.ne.s32.totalorder %s432, %s446
    %p448 = scmp.eq.s32.totalorder %s29, 0
    %p449 = por %p447, %p448
    %s450 = ssub.s32 %s30, %s42
    %p451 = scmp.eq.s32.totalorder %s450, 0
    %s453 = sadd.s32 %s452, 1
    %s454 = scalar_select %p451, %s452, %s453
    %p457 = pneg %p451
    %p458 = scmp.eq.s32.totalorder %s23, 3
    %p459 = por %p457, %p458
    %p460 = scmp.ne.s32.totalorder %s452, %s455
    %p461 = scmp.eq.s32.totalorder %s23, 0
    %p462 = por %p460, %p461
    %p463 = scmp.ne.s32.totalorder %s452, %s455
    %p464 = scmp.eq.s32.totalorder %s28, 3
    %p465 = por %p463, %p464
    %p466 = scmp.ne.s32.totalorder %s455, %s456
    %p467 = scmp.eq.s32.totalorder %s28, 0
    %p468 = por %p466, %p467
    %p469 = scmp.ne.s32.totalorder %s455, %s456
    %p470 = scmp.eq.s32.totalorder %s29, 3
    %p471 = por %p469, %p470
    %p473 = scmp.ne.s32.totalorder %s456, %s472
    %p474 = scmp.eq.s32.totalorder %s29, 0
    %p475 = por %p473, %p474
    %p476 = scmp.le.s32.totalorder 1, %s23
    %p477 = scmp.lt.s32.totalorder %s23, 5
    %p478 = pnand %p476, %p477
    %p479 = pneg %p478
    // Predicated region
    $region9: #{_lambda_.6} parent=5 // pred_check
      _
    $region10: #{_lambda_.6} parent=5 // pred_check_branch
      %481 = sbr.rel (%p478) target = $region12
    $region11: #{_lambda_.6} parent=5 // pred_region
      %s482 = ssub.s32 %s23, 1
      // Predicated region
      $region13: #{_lambda_.6} parent=11 // pred_check
        %p483 = pneg %p82
      $region14: #{_lambda_.6} parent=11 // pred_check_branch
        %485 = sbr.rel (%p483) target = $region16
      $region15: #{_lambda_.6} parent=11 // pred_region
        _
      $region16: #{_lambda_.6} parent=11 // pred_fallthru
        _
      // Predicated region
      $region17: #{_lambda_.6} parent=11 // pred_check
        %p486 = pneg %p103
      $region18: #{_lambda_.6} parent=11 // pred_check_branch
        %488 = sbr.rel (%p486) target = $region20
      $region19: #{_lambda_.6} parent=11 // pred_region
        _
      $region20: #{_lambda_.6} parent=11 // pred_fallthru
        _
      // Predicated region
      $region21: #{_lambda_.6} parent=11 // pred_check
        %p489 = pneg %p358
      $region22: #{_lambda_.6} parent=11 // pred_check_branch
        %491 = sbr.rel (%p489) target = $region24
      $region23: #{_lambda_.6} parent=11 // pred_region
        _
      $region24: #{_lambda_.6} parent=11 // pred_fallthru
        _
      // Predicated region
      $region25: #{_lambda_.6} parent=11 // pred_check
        %p492 = pneg %p379
      $region26: #{_lambda_.6} parent=11 // pred_check_branch
        %494 = sbr.rel (%p492) target = $region28
      $region27: #{_lambda_.6} parent=11 // pred_region
        _
      $region28: #{_lambda_.6} parent=11 // pred_fallthru
        _
      // Predicated region
      $region29: #{_lambda_.6} parent=11 // pred_check
        %p495 = pneg %p400
      $region30: #{_lambda_.6} parent=11 // pred_check_branch
        %497 = sbr.rel (%p495) target = $region32
      $region31: #{_lambda_.6} parent=11 // pred_region
        _
      $region32: #{_lambda_.6} parent=11 // pred_fallthru
        _
      // Predicated region
      $region33: #{_lambda_.6} parent=11 // pred_check
        %p498 = pneg %p421
      $region34: #{_lambda_.6} parent=11 // pred_check_branch
        %500 = sbr.rel (%p498) target = $region36
      $region35: #{_lambda_.6} parent=11 // pred_region
        _
      $region36: #{_lambda_.6} parent=11 // pred_fallthru
        _
      // Predicated region
      $region37: #{_lambda_.6} parent=11 // pred_check
        %p501 = pneg %p442
      $region38: #{_lambda_.6} parent=11 // pred_check_branch
        %503 = sbr.rel (%p501) target = $region40
      $region39: #{_lambda_.6} parent=11 // pred_region
        _
      $region40: #{_lambda_.6} parent=11 // pred_fallthru
        _
    $region12: #{_lambda_.6} parent=5 // pred_fallthru
      _
    %p504 = scmp.lt.s32.totalorder %s23, 4
    // Predicated region
    $region41: #{_lambda_.6} parent=5 // pred_check
      %p505 = pneg %p504
    $region42: #{_lambda_.6} parent=5 // pred_check_branch
      %507 = sbr.rel (%p505) target = $region44
    $region43: #{_lambda_.6} parent=5 // pred_region
      // Predicated region
      $region45: #{_lambda_.6} parent=43 // pred_check
        %p508 = pneg %p55
      $region46: #{_lambda_.6} parent=43 // pred_check_branch
        %510 = sbr.rel (%p508) target = $region48
      $region47: #{_lambda_.6} parent=43 // pred_region
        %p511 = scmp.lt.s32.totalorder %s30, 1
        %s512 = scalar_select %p511, %s30, 1
        %s513 = smul.addr %s512, 8
        %s514 = smul.addr %s513, 8
        %s515 = scalar_lea.vmem %s0, %s514
      $region48: #{_lambda_.6} parent=43 // pred_fallthru
        _
      // Predicated region
      $region49: #{_lambda_.6} parent=43 // pred_check
        %p516 = pneg %p123
      $region50: #{_lambda_.6} parent=43 // pred_check_branch
        %518 = sbr.rel (%p516) target = $region52
      $region51: #{_lambda_.6} parent=43 // pred_region
        %p519 = scmp.lt.s32.totalorder %s31, 1
        %s520 = scalar_select %p519, %s31, 1
        %s521 = scalar_lea.vmem %s3, %s520
      $region52: #{_lambda_.6} parent=43 // pred_fallthru
        _
      // Predicated region
      $region53: #{_lambda_.6} parent=43 // pred_check
        %p522 = pneg %p149
      $region54: #{_lambda_.6} parent=43 // pred_check_branch
        %524 = sbr.rel (%p522) target = $region56
      $region55: #{_lambda_.6} parent=43 // pred_region
        %p525 = scmp.lt.s32.totalorder %s31, 1
        %s526 = scalar_select %p525, %s31, 1
        %s527 = scalar_lea.vmem %s4, %s526
      $region56: #{_lambda_.6} parent=43 // pred_fallthru
        _
      // Predicated region
      $region57: #{_lambda_.6} parent=43 // pred_check
        %p528 = pneg %p175
      $region58: #{_lambda_.6} parent=43 // pred_check_branch
        %530 = sbr.rel (%p528) target = $region60
      $region59: #{_lambda_.6} parent=43 // pred_region
        %p531 = scmp.lt.s32.totalorder %s31, 1
        %s532 = scalar_select %p531, %s31, 1
        %s533 = scalar_lea.vmem %s5, %s532
      $region60: #{_lambda_.6} parent=43 // pred_fallthru
        _
      // Predicated region
      $region61: #{_lambda_.6} parent=43 // pred_check
        %p534 = pneg %p201
      $region62: #{_lambda_.6} parent=43 // pred_check_branch
        %536 = sbr.rel (%p534) target = $region64
      $region63: #{_lambda_.6} parent=43 // pred_region
        %p537 = scmp.lt.s32.totalorder %s31, 1
        %s538 = scalar_select %p537, %s31, 1
        %s539 = scalar_lea.vmem %s6, %s538
      $region64: #{_lambda_.6} parent=43 // pred_fallthru
        _
      // Predicated region
      $region65: #{_lambda_.6} parent=43 // pred_check
        %p540 = pneg %p227
      $region66: #{_lambda_.6} parent=43 // pred_check_branch
        %542 = sbr.rel (%p540) target = $region68
      $region67: #{_lambda_.6} parent=43 // pred_region
        %p543 = scmp.lt.s32.totalorder %s31, 1
        %s544 = scalar_select %p543, %s31, 1
        %s545 = scalar_lea.vmem %s7, %s544
      $region68: #{_lambda_.6} parent=43 // pred_fallthru
        _
      // Predicated region
      $region69: #{_lambda_.6} parent=43 // pred_check
        %p546 = pneg %p253
      $region70: #{_lambda_.6} parent=43 // pred_check_branch
        %548 = sbr.rel (%p546) target = $region72
      $region71: #{_lambda_.6} parent=43 // pred_region
        %p549 = scmp.lt.s32.totalorder %s31, 1
        %s550 = scalar_select %p549, %s31, 1
        %s551 = scalar_lea.vmem %s8, %s550
      $region72: #{_lambda_.6} parent=43 // pred_fallthru
        _
      // Predicated region
      $region73: #{_lambda_.6} parent=43 // pred_check
        %p552 = pneg %p279
      $region74: #{_lambda_.6} parent=43 // pred_check_branch
        %554 = sbr.rel (%p552) target = $region76
      $region75: #{_lambda_.6} parent=43 // pred_region
        %p555 = scmp.lt.s32.totalorder %s31, 1
        %s556 = scalar_select %p555, %s31, 1
        %s557 = scalar_lea.vmem %s9, %s556
      $region76: #{_lambda_.6} parent=43 // pred_fallthru
        _
      // Predicated region
      $region77: #{_lambda_.6} parent=43 // pred_check
        %p558 = pneg %p305
      $region78: #{_lambda_.6} parent=43 // pred_check_branch
        %560 = sbr.rel (%p558) target = $region80
      $region79: #{_lambda_.6} parent=43 // pred_region
        %p561 = scmp.lt.s32.totalorder %s31, 1
        %s562 = scalar_select %p561, %s31, 1
        %s563 = scalar_lea.vmem %s10, %s562
      $region80: #{_lambda_.6} parent=43 // pred_fallthru
        _
      // Predicated region
      $region81: #{_lambda_.6} parent=43 // pred_check
        %p564 = pneg %p331
      $region82: #{_lambda_.6} parent=43 // pred_check_branch
        %566 = sbr.rel (%p564) target = $region84
      $region83: #{_lambda_.6} parent=43 // pred_region
        %p567 = scmp.lt.s32.totalorder %s31, 1
        %s568 = scalar_select %p567, %s31, 1
        %s569 = scalar_lea.vmem %s11, %s568
      $region84: #{_lambda_.6} parent=43 // pred_fallthru
        _
    $region44: #{_lambda_.6} parent=5 // pred_fallthru
      _
    %p570 = scmp.le.s32.totalorder 1, %s23
    %p571 = scmp.lt.s32.totalorder %s23, 5
    %p572 = pnand %p570, %p571
    %p573 = pneg %p572
    // Predicated region
    $region85: #{_lambda_.6} parent=5 // pred_check
      _
    $region86: #{_lambda_.6} parent=5 // pred_check_branch
      %575 = sbr.rel (%p572) target = $region88
    $region87: #{_lambda_.6} parent=5 // pred_region
      %s576 = ssub.s32 %s23, 1
      %p577 = scmp.lt.s32.totalorder %s32, 1
      %s578 = scalar_select %p577, %s32, 1
      %s579 = smul.addr %s578, 8
      %s580 = smul.addr %s579, 8
      %s581 = scalar_lea.vmem %s0, %s580
      %p582 = pneg %p61
      %p583 = pneg %p58
      %p584 = pneg %p82
      %p585 = pneg %p79
      %p586 = pneg %p103
      %p587 = pneg %p100
      %p588 = scmp.lt.s32.totalorder %s33, 1
      %s589 = scalar_select %p588, %s33, 1
      %s590 = scalar_lea.vmem %s3, %s589
      %p591 = pneg %p129
      %p592 = pneg %p126
      %p593 = scmp.lt.s32.totalorder %s33, 1
      %s594 = scalar_select %p593, %s33, 1
      %s595 = scalar_lea.vmem %s4, %s594
      %p596 = pneg %p155
      %p597 = pneg %p152
      %p598 = scmp.lt.s32.totalorder %s33, 1
      %s599 = scalar_select %p598, %s33, 1
      %s600 = scalar_lea.vmem %s5, %s599
      %p601 = pneg %p181
      %p602 = pneg %p178
      %p603 = scmp.lt.s32.totalorder %s33, 1
      %s604 = scalar_select %p603, %s33, 1
      %s605 = scalar_lea.vmem %s6, %s604
      %p606 = pneg %p207
      %p607 = pneg %p204
      %p608 = scmp.lt.s32.totalorder %s33, 1
      %s609 = scalar_select %p608, %s33, 1
      %s610 = scalar_lea.vmem %s7, %s609
      %p611 = pneg %p233
      %p612 = pneg %p230
      %p613 = scmp.lt.s32.totalorder %s33, 1
      %s614 = scalar_select %p613, %s33, 1
      %s615 = scalar_lea.vmem %s8, %s614
      %p616 = pneg %p259
      %p617 = pneg %p256
      %p618 = scmp.lt.s32.totalorder %s33, 1
      %s619 = scalar_select %p618, %s33, 1
      %s620 = scalar_lea.vmem %s9, %s619
      %p621 = pneg %p285
      %p622 = pneg %p282
      %p623 = scmp.lt.s32.totalorder %s33, 1
      %s624 = scalar_select %p623, %s33, 1
      %s625 = scalar_lea.vmem %s10, %s624
      %p626 = pneg %p311
      %p627 = pneg %p308
      %p628 = scmp.lt.s32.totalorder %s33, 1
      %s629 = scalar_select %p628, %s33, 1
      %s630 = scalar_lea.vmem %s11, %s629
      %p631 = pneg %p337
      %p632 = pneg %p334
      %p633 = pneg %p358
      %p634 = pneg %p355
      %p635 = pneg %p379
      %p636 = pneg %p376
      %p637 = pneg %p400
      %p638 = pneg %p397
      %p639 = pneg %p421
      %p640 = pneg %p418
      %p641 = pneg %p442
      %p642 = pneg %p439
      %p643 = pneg %p468
      %p644 = pneg %p465
      %p645 = scmp.lt.s32.totalorder %s32, 1
      %s646 = scalar_select %p645, %s32, 1
      %s647 = smul.addr %s646, 8
      %s648 = smul.addr %s647, 8
      %s649 = scalar_lea.vmem %s17, %s648
      %p650 = scmp.lt.s32.totalorder %s32, 1
      %s651 = scalar_select %p650, %s32, 1
      %s652 = smul.addr %s651, 8
      %s653 = smul.addr %s652, 8
      %s654 = scalar_lea.vmem %s0, %s653
      %p655 = scmp.lt.s32.totalorder %s33, 1
      %s656 = scalar_select %p655, %s33, 1
      %s657 = scalar_lea.vmem %s3, %s656
      %p658 = scmp.lt.s32.totalorder %s33, 1
      %s659 = scalar_select %p658, %s33, 1
      %s660 = scalar_lea.vmem %s4, %s659
      %p661 = scmp.lt.s32.totalorder %s33, 1
      %s662 = scalar_select %p661, %s33, 1
      %s663 = scalar_lea.vmem %s5, %s662
      %p664 = scmp.lt.s32.totalorder %s33, 1
      %s665 = scalar_select %p664, %s33, 1
      %s666 = scalar_lea.vmem %s6, %s665
      %p667 = scmp.lt.s32.totalorder %s33, 1
      %s668 = scalar_select %p667, %s33, 1
      %s669 = scalar_lea.vmem %s7, %s668
      %p670 = scmp.lt.s32.totalorder %s33, 1
      %s671 = scalar_select %p670, %s33, 1
      %s672 = scalar_lea.vmem %s8, %s671
      %p673 = scmp.lt.s32.totalorder %s33, 1
      %s674 = scalar_select %p673, %s33, 1
      %s675 = scalar_lea.vmem %s9, %s674
      %p676 = scmp.lt.s32.totalorder %s33, 1
      %s677 = scalar_select %p676, %s33, 1
      %s678 = scalar_lea.vmem %s10, %s677
      %p679 = scmp.lt.s32.totalorder %s33, 1
      %s680 = scalar_select %p679, %s33, 1
      %s681 = scalar_lea.vmem %s11, %s680
      %p682 = scmp.lt.s32.totalorder %s32, 1
      %s683 = scalar_select %p682, %s32, 1
      %s684 = smul.addr %s683, 8
      %s685 = smul.addr %s684, 8
      %s686 = scalar_lea.vmem %s17, %s685
      %p687 = scmp.eq.s32.totalorder %s33, 0
      // Predicated region
      $region89: #{_lambda_.6} parent=87 // pred_check
        %p688 = pneg %p687
      $region90: #{_lambda_.6} parent=87 // pred_check_branch
        %690 = sbr.rel (%p688) target = $region92
      $region91: #{_lambda_.6} parent=87 // pred_region
        %v691 = vld [vmem:[%s654] sm:$0xff]
        %v692 = vld [vmem:[%s654 + $0x8] sm:$0xff]
        %v693 = vld [vmem:[%s654 + $0x10] sm:$0xff]
        %v694 = vld [vmem:[%s654 + $0x18] sm:$0xff]
        %v695 = vld [vmem:[%s654 + $0x20] sm:$0xff]
        %v696 = vld [vmem:[%s654 + $0x28] sm:$0xff]
        %v697 = vld [vmem:[%s654 + $0x30] sm:$0xff]
        %v698 = vld [vmem:[%s654 + $0x38] sm:$0xff]
        %v699 = vld [vmem:[%s1] sm:$0xff]
        %v700 = vld [vmem:[%s1 + $0x8] sm:$0xff]
        %v701 = vld [vmem:[%s1 + $0x10] sm:$0xff]
        %v702 = vld [vmem:[%s1 + $0x18] sm:$0xff]
        %v703 = vld [vmem:[%s1 + $0x20] sm:$0xff]
        %v704 = vld [vmem:[%s1 + $0x28] sm:$0xff]
        %v705 = vld [vmem:[%s1 + $0x30] sm:$0xff]
        %v706 = vld [vmem:[%s1 + $0x38] sm:$0xff]
        %v707 = vld [vmem:[%s1 + $0x40] sm:$0xff]
        %v708 = vld [vmem:[%s1 + $0x48] sm:$0xff]
        %v709 = vld [vmem:[%s1 + $0x50] sm:$0xff]
        %v710 = vld [vmem:[%s1 + $0x58] sm:$0xff]
        %v711 = vld [vmem:[%s1 + $0x60] sm:$0xff]
        %v712 = vld [vmem:[%s1 + $0x68] sm:$0xff]
        %v713 = vld [vmem:[%s1 + $0x70] sm:$0xff]
        %v714 = vld [vmem:[%s1 + $0x78] sm:$0xff]
        %v715 = vld [vmem:[%s2] sm:$0x1]
        %v717 = vlaneseq
        %v718 = vshrl.u32 %v717, 7
        %v719 = vsub.s32 0, %v718
        %v720 = vrot.slane %v715, %v719
        %722 = vmatprep.subr.mxu0 0.0
        %723 = vmatpush1.msra.mxu0 %v714
        %724 = vmatprep.subr.mxu0 0.0
        %725 = vmatpush1.msra.mxu0 %v713
        %726 = vmatprep.subr.mxu0 0.0
        %727 = vmatpush1.msra.mxu0 %v712
        %728 = vmatprep.subr.mxu0 0.0
        %729 = vmatpush1.msra.mxu0 %v711
        %730 = vmatprep.subr.mxu0 0.0
        %731 = vmatpush1.msra.mxu0 %v710
        %732 = vmatprep.subr.mxu0 0.0
        %733 = vmatpush1.msra.mxu0 %v709
        %734 = vmatprep.subr.mxu0 0.0
        %735 = vmatpush1.msra.mxu0 %v708
        %736 = vmatprep.subr.mxu0 0.0
        %737 = vmatpush1.msra.mxu0 %v707
        %738 = vmatprep.subr.mxu0 0.0
        %739 = vmatpush1.msra.mxu0 %v706
        %740 = vmatprep.subr.mxu0 0.0
        %741 = vmatpush1.msra.mxu0 %v705
        %742 = vmatprep.subr.mxu0 0.0
        %743 = vmatpush1.msra.mxu0 %v704
        %744 = vmatprep.subr.mxu0 0.0
        %745 = vmatpush1.msra.mxu0 %v703
        %746 = vmatprep.subr.mxu0 0.0
        %747 = vmatpush1.msra.mxu0 %v702
        %748 = vmatprep.subr.mxu0 0.0
        %749 = vmatpush1.msra.mxu0 %v701
        %750 = vmatprep.subr.mxu0 0.0
        %751 = vmatpush1.msra.mxu0 %v700
        %752 = vmatprep.subr.mxu0 0.0
        %753 = vmatpush1.msra.mxu0 %v699
        %754 = vmatprep.subr.mxu0 0.0
        %755 = vmatpush2.msra.mxu0 0.0
        %756 = vmatprep.subr.mxu0 0.0
        %757 = vmatpush2.msra.mxu0 0.0
        %758 = vmatprep.subr.mxu0 0.0
        %759 = vmatpush2.msra.mxu0 0.0
        %760 = vmatprep.subr.mxu0 0.0
        %761 = vmatpush2.msra.mxu0 0.0
        %762 = vmatprep.subr.mxu0 0.0
        %763 = vmatpush2.msra.mxu0 0.0
        %764 = vmatprep.subr.mxu0 0.0
        %765 = vmatpush2.msra.mxu0 0.0
        %766 = vmatprep.subr.mxu0 0.0
        %767 = vmatpush2.msra.mxu0 0.0
        %768 = vmatprep.subr.mxu0 0.0
        %769 = vmatpush2.msra.mxu0 0.0
        %770 = vmatprep.subr.mxu0 0.0
        %771 = vmatpush2.msra.mxu0 0.0
        %772 = vmatprep.subr.mxu0 0.0
        %773 = vmatpush2.msra.mxu0 0.0
        %774 = vmatprep.subr.mxu0 0.0
        %775 = vmatpush2.msra.mxu0 0.0
        %776 = vmatprep.subr.mxu0 0.0
        %777 = vmatpush2.msra.mxu0 0.0
        %778 = vmatprep.subr.mxu0 0.0
        %779 = vmatpush2.msra.mxu0 0.0
        %780 = vmatprep.subr.mxu0 0.0
        %781 = vmatpush2.msra.mxu0 0.0
        %782 = vmatprep.subr.mxu0 0.0
        %783 = vmatpush2.msra.mxu0 0.0
        %784 = vmatprep.subr.mxu0 0.0
        %785 = vmatpush2.msra.mxu0 0.0
        %786 = vmatprep.mubr.f32.mxu0 0.0
        %787 = vmatmul.mubr.f32.gmra.mxu0 %v691
        %v788 = vpop.f32.mrf.mxu0
        %v789 = vadd.f32 %v720, %v788
        %v790 = vpop.f32.mrf.mxu0
        %791 = vmatprep.mubr.f32.mxu0 0.0
        %792 = vmatmul.mubr.f32.gmra.mxu0 %v692
        %v793 = vpop.f32.mrf.mxu0
        %v794 = vadd.f32 %v720, %v793
        %v795 = vpop.f32.mrf.mxu0
        %796 = vmatprep.mubr.f32.mxu0 0.0
        %797 = vmatmul.mubr.f32.gmra.mxu0 %v693
        %v798 = vpop.f32.mrf.mxu0
        %v799 = vadd.f32 %v720, %v798
        %v800 = vpop.f32.mrf.mxu0
        %801 = vmatprep.mubr.f32.mxu0 0.0
        %802 = vmatmul.mubr.f32.gmra.mxu0 %v694
        %v803 = vpop.f32.mrf.mxu0
        %v804 = vadd.f32 %v720, %v803
        %v805 = vpop.f32.mrf.mxu0
        %806 = vmatprep.mubr.f32.mxu0 0.0
        %807 = vmatmul.mubr.f32.gmra.mxu0 %v695
        %v808 = vpop.f32.mrf.mxu0
        %v809 = vadd.f32 %v720, %v808
        %v810 = vpop.f32.mrf.mxu0
        %811 = vmatprep.mubr.f32.mxu0 0.0
        %812 = vmatmul.mubr.f32.gmra.mxu0 %v696
        %v813 = vpop.f32.mrf.mxu0
        %v814 = vadd.f32 %v720, %v813
        %v815 = vpop.f32.mrf.mxu0
        %816 = vmatprep.mubr.f32.mxu0 0.0
        %817 = vmatmul.mubr.f32.gmra.mxu0 %v697
        %v818 = vpop.f32.mrf.mxu0
        %v819 = vadd.f32 %v720, %v818
        %v820 = vpop.f32.mrf.mxu0
        %821 = vmatprep.mubr.f32.mxu0 0.0
        %822 = vmatmul.mubr.f32.gmra.mxu0 %v698
        %v823 = vpop.f32.mrf.mxu0
        %v824 = vadd.f32 %v720, %v823
        %v825 = vpop.f32.mrf.mxu0
        %826 = vdwg.mxu0
        %vm827 = vcmask 261120
        %828 = vst.msk [vmem:[%s686] sm:$0xff] %vm827, %v789
        %829 = vst.msk [vmem:[%s686 + $0x8] sm:$0xff] %vm827, %v794
        %830 = vst.msk [vmem:[%s686 + $0x10] sm:$0xff] %vm827, %v799
        %831 = vst.msk [vmem:[%s686 + $0x18] sm:$0xff] %vm827, %v804
        %832 = vst.msk [vmem:[%s686 + $0x20] sm:$0xff] %vm827, %v809
        %833 = vst.msk [vmem:[%s686 + $0x28] sm:$0xff] %vm827, %v814
        %834 = vst.msk [vmem:[%s686 + $0x30] sm:$0xff] %vm827, %v819
        %835 = vst.msk [vmem:[%s686 + $0x38] sm:$0xff] %vm827, %v824
      $region92: #{_lambda_.6} parent=87 // pred_fallthru
        _
      %v836 = vld [vmem:[%s686] sm:$0xff]
      %v837 = vld [vmem:[%s686 + $0x8] sm:$0xff]
      %v838 = vld [vmem:[%s686 + $0x10] sm:$0xff]
      %v839 = vld [vmem:[%s686 + $0x18] sm:$0xff]
      %v840 = vld [vmem:[%s686 + $0x20] sm:$0xff]
      %v841 = vld [vmem:[%s686 + $0x28] sm:$0xff]
      %v842 = vld [vmem:[%s686 + $0x30] sm:$0xff]
      %v843 = vld [vmem:[%s686 + $0x38] sm:$0xff]
      %v844 = vld [vmem:[%s657] sm:$0x1]
      %v845 = vld [vmem:[%s660] sm:$0x1]
      %v846 = vld [vmem:[%s675] sm:$0x1]
      %v847 = vld [vmem:[%s678] sm:$0x1]
      %v848 = vld [vmem:[%s681] sm:$0x1]
      %vm849 = vcmask 261120
      %v850 = vsel %vm849, %v836, 0.0
      %851 = vadd.xlane.f32.xlu0 %v850
      %v852 = vpop.xlane.xlu0 %851
      %v853 = vsel %vm849, %v837, 0.0
      %854 = vadd.xlane.f32.xlu0 %v853
      %v855 = vpop.xlane.xlu0 %854
      %v856 = vsel %vm849, %v838, 0.0
      %857 = vadd.xlane.f32.xlu0 %v856
      %v858 = vpop.xlane.xlu0 %857
      %v859 = vsel %vm849, %v839, 0.0
      %860 = vadd.xlane.f32.xlu0 %v859
      %v861 = vpop.xlane.xlu0 %860
      %v862 = vsel %vm849, %v840, 0.0
      %863 = vadd.xlane.f32.xlu0 %v862
      %v864 = vpop.xlane.xlu0 %863
      %v865 = vsel %vm849, %v841, 0.0
      %866 = vadd.xlane.f32.xlu0 %v865
      %v867 = vpop.xlane.xlu0 %866
      %v868 = vsel %vm849, %v842, 0.0
      %869 = vadd.xlane.f32.xlu0 %v868
      %v870 = vpop.xlane.xlu0 %869
      %v871 = vsel %vm849, %v843, 0.0
      %872 = vadd.xlane.f32.xlu0 %v871
      %v873 = vpop.xlane.xlu0 %872
      %v874 = vrcp.pop 32.0
      %v875 = vmul.f32 %v852, %v874
      %v876 = vmul.f32 %v855, %v874
      %v877 = vmul.f32 %v858, %v874
      %v878 = vmul.f32 %v861, %v874
      %v879 = vmul.f32 %v864, %v874
      %v880 = vmul.f32 %v867, %v874
      %v881 = vmul.f32 %v870, %v874
      %v882 = vmul.f32 %v873, %v874
      %v883 = vsub.f32 %v836, %v875
      %v884 = vsub.f32 %v837, %v876
      %v885 = vsub.f32 %v838, %v877
      %v886 = vsub.f32 %v839, %v878
      %v887 = vsub.f32 %v840, %v879
      %v888 = vsub.f32 %v841, %v880
      %v889 = vsub.f32 %v842, %v881
      %v890 = vsub.f32 %v843, %v882
      %v891 = vmul.f32 %v883, %v883
      %v892 = vmul.f32 %v884, %v884
      %v893 = vmul.f32 %v885, %v885
      %v894 = vmul.f32 %v886, %v886
      %v895 = vmul.f32 %v887, %v887
      %v896 = vmul.f32 %v888, %v888
      %v897 = vmul.f32 %v889, %v889
      %v898 = vmul.f32 %v890, %v890
      %v899 = vsel %vm849, %v891, 0.0
      %900 = vadd.xlane.f32.xlu0 %v899
      %v901 = vpop.xlane.xlu0 %900
      %v902 = vsel %vm849, %v892, 0.0
      %903 = vadd.xlane.f32.xlu0 %v902
      %v904 = vpop.xlane.xlu0 %903
      %v905 = vsel %vm849, %v893, 0.0
      %906 = vadd.xlane.f32.xlu0 %v905
      %v907 = vpop.xlane.xlu0 %906
      %v908 = vsel %vm849, %v894, 0.0
      %909 = vadd.xlane.f32.xlu0 %v908
      %v910 = vpop.xlane.xlu0 %909
      %v911 = vsel %vm849, %v895, 0.0
      %912 = vadd.xlane.f32.xlu0 %v911
      %v913 = vpop.xlane.xlu0 %912
      %v914 = vsel %vm849, %v896, 0.0
      %915 = vadd.xlane.f32.xlu0 %v914
      %v916 = vpop.xlane.xlu0 %915
      %v917 = vsel %vm849, %v897, 0.0
      %918 = vadd.xlane.f32.xlu0 %v917
      %v919 = vpop.xlane.xlu0 %918
      %v920 = vsel %vm849, %v898, 0.0
      %921 = vadd.xlane.f32.xlu0 %v920
      %v922 = vpop.xlane.xlu0 %921
      %v923 = vmul.f32 %v901, %v874
      %v924 = vmul.f32 %v904, %v874
      %v925 = vmul.f32 %v907, %v874
      %v926 = vmul.f32 %v910, %v874
      %v927 = vmul.f32 %v913, %v874
      %v928 = vmul.f32 %v916, %v874
      %v929 = vmul.f32 %v919, %v874
      %v930 = vmul.f32 %v922, %v874
      %v931 = vadd.f32 %v923, 1e-05
      %v932 = vadd.f32 %v924, 1e-05
      %v933 = vadd.f32 %v925, 1e-05
      %v934 = vadd.f32 %v926, 1e-05
      %v935 = vadd.f32 %v927, 1e-05
      %v936 = vadd.f32 %v928, 1e-05
      %v937 = vadd.f32 %v929, 1e-05
      %v938 = vadd.f32 %v930, 1e-05
      %v939 = vrsqrt.pop %v931
      %v940 = vrsqrt.pop %v932
      %v941 = vrsqrt.pop %v933
      %v942 = vrsqrt.pop %v934
      %v943 = vrsqrt.pop %v935
      %v944 = vrsqrt.pop %v936
      %v945 = vrsqrt.pop %v937
      %v946 = vrsqrt.pop %v938
      %v947 = vmul.f32 %v883, %v939
      %v948 = vmul.f32 %v884, %v940
      %v949 = vmul.f32 %v885, %v941
      %v950 = vmul.f32 %v886, %v942
      %v951 = vmul.f32 %v887, %v943
      %v952 = vmul.f32 %v888, %v944
      %v953 = vmul.f32 %v889, %v945
      %v954 = vmul.f32 %v890, %v946
      %v956 = vlaneseq
      %v957 = vshrl.u32 %v956, 7
      %v958 = vsub.s32 0, %v957
      %v959 = vrot.slane %v844, %v958
      %v961 = vmul.f32 %v947, %v959
      %v962 = vmul.f32 %v948, %v959
      %v963 = vmul.f32 %v949, %v959
      %v964 = vmul.f32 %v950, %v959
      %v965 = vmul.f32 %v951, %v959
      %v966 = vmul.f32 %v952, %v959
      %v967 = vmul.f32 %v953, %v959
      %v968 = vmul.f32 %v954, %v959
      %v970 = vlaneseq
      %v971 = vshrl.u32 %v970, 7
      %v972 = vsub.s32 0, %v971
      %v973 = vrot.slane %v845, %v972
      %v975 = vadd.f32 %v961, %v973
      %v976 = vadd.f32 %v962, %v973
      %v977 = vadd.f32 %v963, %v973
      %v978 = vadd.f32 %v964, %v973
      %v979 = vadd.f32 %v965, %v973
      %v980 = vadd.f32 %v966, %v973
      %v981 = vadd.f32 %v967, %v973
      %v982 = vadd.f32 %v968, %v973
      %v983 = vld [vmem:[%s12] sm:$0xff]
      %v984 = vld [vmem:[%s12 + $0x8] sm:$0xff]
      %v985 = vld [vmem:[%s12 + $0x10] sm:$0xff]
      %v986 = vld [vmem:[%s12 + $0x18] sm:$0xff]
      %v987 = vld [vmem:[%s12 + $0x20] sm:$0xff]
      %v988 = vld [vmem:[%s12 + $0x28] sm:$0xff]
      %v989 = vld [vmem:[%s12 + $0x30] sm:$0xff]
      %v990 = vld [vmem:[%s12 + $0x38] sm:$0xff]
      %vm991 = vcmask 523264
      %v993 = vsel %vm991, %v983, 0
      %v996 = vsel %vm991, %v984, 0
      %v999 = vsel %vm991, %v985, 0
      %v1002 = vsel %vm991, %v986, 0
      %v1005 = vsel %vm991, %v987, 0
      %v1008 = vsel %vm991, %v988, 0
      %v1011 = vsel %vm991, %v989, 0
      %v1014 = vsel %vm991, %v990, 0
      %1016 = vmatprep.subr.mxu0 0.0
      %1017 = vmatpush1.msra.mxu0 0.0
      %1018 = vmatprep.subr.mxu0 0.0
      %1019 = vmatpush1.msra.mxu0 0.0
      %1020 = vmatprep.subr.mxu0 0.0
      %1021 = vmatpush1.msra.mxu0 0.0
      %1022 = vmatprep.subr.mxu0 0.0
      %1023 = vmatpush1.msra.mxu0 0.0
      %1024 = vmatprep.subr.mxu0 0.0
      %1025 = vmatpush1.msra.mxu0 0.0
      %1026 = vmatprep.subr.mxu0 0.0
      %1027 = vmatpush1.msra.mxu0 0.0
      %1028 = vmatprep.subr.mxu0 0.0
      %1029 = vmatpush1.msra.mxu0 0.0
      %1030 = vmatprep.subr.mxu0 0.0
      %1031 = vmatpush1.msra.mxu0 0.0
      %1032 = vmatprep.subr.mxu0 0.0
      %1033 = vmatpush1.msra.mxu0 %v982
      %1034 = vmatprep.subr.mxu0 0.0
      %1035 = vmatpush1.msra.mxu0 %v981
      %1036 = vmatprep.subr.mxu0 0.0
      %1037 = vmatpush1.msra.mxu0 %v980
      %1038 = vmatprep.subr.mxu0 0.0
      %1039 = vmatpush1.msra.mxu0 %v979
      %1040 = vmatprep.subr.mxu0 0.0
      %1041 = vmatpush1.msra.mxu0 %v978
      %1042 = vmatprep.subr.mxu0 0.0
      %1043 = vmatpush1.msra.mxu0 %v977
      %1044 = vmatprep.subr.mxu0 0.0
      %1045 = vmatpush1.msra.mxu0 %v976
      %1046 = vmatprep.subr.mxu0 0.0
      %1047 = vmatpush1.msra.mxu0 %v975
      %1048 = vmatprep.subr.mxu0 0.0
      %1049 = vmatpush2.msra.mxu0 0.0
      %1050 = vmatprep.subr.mxu0 0.0
      %1051 = vmatpush2.msra.mxu0 0.0
      %1052 = vmatprep.subr.mxu0 0.0
      %1053 = vmatpush2.msra.mxu0 0.0
      %1054 = vmatprep.subr.mxu0 0.0
      %1055 = vmatpush2.msra.mxu0 0.0
      %1056 = vmatprep.subr.mxu0 0.0
      %1057 = vmatpush2.msra.mxu0 0.0
      %1058 = vmatprep.subr.mxu0 0.0
      %1059 = vmatpush2.msra.mxu0 0.0
      %1060 = vmatprep.subr.mxu0 0.0
      %1061 = vmatpush2.msra.mxu0 0.0
      %1062 = vmatprep.subr.mxu0 0.0
      %1063 = vmatpush2.msra.mxu0 0.0
      %1064 = vmatprep.subr.mxu0 0.0
      %1065 = vmatpush2.msra.mxu0 0.0
      %1066 = vmatprep.subr.mxu0 0.0
      %1067 = vmatpush2.msra.mxu0 0.0
      %1068 = vmatprep.subr.mxu0 0.0
      %1069 = vmatpush2.msra.mxu0 0.0
      %1070 = vmatprep.subr.mxu0 0.0
      %1071 = vmatpush2.msra.mxu0 0.0
      %1072 = vmatprep.subr.mxu0 0.0
      %1073 = vmatpush2.msra.mxu0 0.0
      %1074 = vmatprep.subr.mxu0 0.0
      %1075 = vmatpush2.msra.mxu0 0.0
      %1076 = vmatprep.subr.mxu0 0.0
      %1077 = vmatpush2.msra.mxu0 0.0
      %1078 = vmatprep.subr.mxu0 0.0
      %1079 = vmatpush2.msra.mxu0 0.0
      %1080 = vmatprep.mubr.f32.mxu0 0.0
      %1081 = vmatmul.mubr.f32.gmra.mxu0 %v993
      %v1082 = vpop.f32.mrf.mxu0
      %v1083 = vadd.f32 0.0, %v1082
      %v1084 = vpop.f32.mrf.mxu0
      %1085 = vmatprep.mubr.f32.mxu0 0.0
      %1086 = vmatmul.mubr.f32.gmra.mxu0 %v996
      %v1087 = vpop.f32.mrf.mxu0
      %v1088 = vadd.f32 0.0, %v1087
      %v1089 = vpop.f32.mrf.mxu0
      %1090 = vmatprep.mubr.f32.mxu0 0.0
      %1091 = vmatmul.mubr.f32.gmra.mxu0 %v999
      %v1092 = vpop.f32.mrf.mxu0
      %v1093 = vadd.f32 0.0, %v1092
      %v1094 = vpop.f32.mrf.mxu0
      %1095 = vmatprep.mubr.f32.mxu0 0.0
      %1096 = vmatmul.mubr.f32.gmra.mxu0 %v1002
      %v1097 = vpop.f32.mrf.mxu0
      %v1098 = vadd.f32 0.0, %v1097
      %v1099 = vpop.f32.mrf.mxu0
      %1100 = vmatprep.mubr.f32.mxu0 0.0
      %1101 = vmatmul.mubr.f32.gmra.mxu0 %v1005
      %v1102 = vpop.f32.mrf.mxu0
      %v1103 = vadd.f32 0.0, %v1102
      %v1104 = vpop.f32.mrf.mxu0
      %1105 = vmatprep.mubr.f32.mxu0 0.0
      %1106 = vmatmul.mubr.f32.gmra.mxu0 %v1008
      %v1107 = vpop.f32.mrf.mxu0
      %v1108 = vadd.f32 0.0, %v1107
      %v1109 = vpop.f32.mrf.mxu0
      %1110 = vmatprep.mubr.f32.mxu0 0.0
      %1111 = vmatmul.mubr.f32.gmra.mxu0 %v1011
      %v1112 = vpop.f32.mrf.mxu0
      %v1113 = vadd.f32 0.0, %v1112
      %v1114 = vpop.f32.mrf.mxu0
      %1115 = vmatprep.mubr.f32.mxu0 0.0
      %1116 = vmatmul.mubr.f32.gmra.mxu0 %v1014
      %v1117 = vpop.f32.mrf.mxu0
      %v1118 = vadd.f32 0.0, %v1117
      %v1119 = vpop.f32.mrf.mxu0
      %1120 = vdwg.mxu0
      %vm1121 = vcmp.gt.f32.partialorder %v975, %v1083
      %vm1122 = vcmp.gt.f32.partialorder %v976, %v1088
      %vm1123 = vcmp.gt.f32.partialorder %v977, %v1093
      %vm1124 = vcmp.gt.f32.partialorder %v978, %v1098
      %vm1125 = vcmp.gt.f32.partialorder %v979, %v1103
      %vm1126 = vcmp.gt.f32.partialorder %v980, %v1108
      %vm1127 = vcmp.gt.f32.partialorder %v981, %v1113
      %vm1128 = vcmp.gt.f32.partialorder %v982, %v1118
      %v1130 = vlaneseq
      %v1131 = vshrl.u32 %v1130, 7
      %v1132 = vsub.s32 0, %v1131
      %v1133 = vrot.slane %v847, %v1132
      %1134 = vset.pattern.permute.xlu0 0
      %1135 = vperm.xlu0 %1134, %v1133
      %v1136 = vpop.permute.xlu0 %1135
      %v1138 = vmul.f32 %v975, %v1136
      %v1139 = vmul.f32 %v976, %v1136
      %v1140 = vmul.f32 %v977, %v1136
      %v1141 = vmul.f32 %v978, %v1136
      %v1142 = vmul.f32 %v979, %v1136
      %v1143 = vmul.f32 %v980, %v1136
      %v1144 = vmul.f32 %v981, %v1136
      %v1145 = vmul.f32 %v982, %v1136
      %v1147 = vlaneseq
      %v1148 = vshrl.u32 %v1147, 7
      %v1149 = vsub.s32 0, %v1148
      %v1150 = vrot.slane %v848, %v1149
      %1151 = vset.pattern.permute.xlu0 0
      %1152 = vperm.xlu0 %1151, %v1150
      %v1153 = vpop.permute.xlu0 %1152
      %v1155 = vmul.f32 %v975, %v1153
      %v1156 = vmul.f32 %v976, %v1153
      %v1157 = vmul.f32 %v977, %v1153
      %v1158 = vmul.f32 %v978, %v1153
      %v1159 = vmul.f32 %v979, %v1153
      %v1160 = vmul.f32 %v980, %v1153
      %v1161 = vmul.f32 %v981, %v1153
      %v1162 = vmul.f32 %v982, %v1153
      %v1163 = vsel %vm1121, %v1138, %v1155
      %v1164 = vsel %vm1122, %v1139, %v1156
      %v1165 = vsel %vm1123, %v1140, %v1157
      %v1166 = vsel %vm1124, %v1141, %v1158
      %v1167 = vsel %vm1125, %v1142, %v1159
      %v1168 = vsel %vm1126, %v1143, %v1160
      %v1169 = vsel %vm1127, %v1144, %v1161
      %v1170 = vsel %vm1128, %v1145, %v1162
      %v1171 = vld [vmem:[%s13] sm:$0xff]
      %v1172 = vld [vmem:[%s13 + $0x8] sm:$0xff]
      %v1173 = vld [vmem:[%s13 + $0x10] sm:$0xff]
      %v1174 = vld [vmem:[%s13 + $0x18] sm:$0xff]
      %v1176 = vsel %vm991, %v1171, 0
      %v1179 = vsel %vm991, %v1172, 0
      %v1182 = vsel %vm991, %v1173, 0
      %v1185 = vsel %vm991, %v1174, 0
      %1187 = vmatprep.subr.mxu0 0.0
      %1188 = vmatpush1.msra.mxu0 0.0
      %1189 = vmatprep.subr.mxu0 0.0
      %1190 = vmatpush1.msra.mxu0 0.0
      %1191 = vmatprep.subr.mxu0 0.0
      %1192 = vmatpush1.msra.mxu0 0.0
      %1193 = vmatprep.subr.mxu0 0.0
      %1194 = vmatpush1.msra.mxu0 0.0
      %1195 = vmatprep.subr.mxu0 0.0
      %1196 = vmatpush1.msra.mxu0 0.0
      %1197 = vmatprep.subr.mxu0 0.0
      %1198 = vmatpush1.msra.mxu0 0.0
      %1199 = vmatprep.subr.mxu0 0.0
      %1200 = vmatpush1.msra.mxu0 0.0
      %1201 = vmatprep.subr.mxu0 0.0
      %1202 = vmatpush1.msra.mxu0 0.0
      %1203 = vmatprep.subr.mxu0 0.0
      %1204 = vmatpush1.msra.mxu0 %v1170
      %1205 = vmatprep.subr.mxu0 0.0
      %1206 = vmatpush1.msra.mxu0 %v1169
      %1207 = vmatprep.subr.mxu0 0.0
      %1208 = vmatpush1.msra.mxu0 %v1168
      %1209 = vmatprep.subr.mxu0 0.0
      %1210 = vmatpush1.msra.mxu0 %v1167
      %1211 = vmatprep.subr.mxu0 0.0
      %1212 = vmatpush1.msra.mxu0 %v1166
      %1213 = vmatprep.subr.mxu0 0.0
      %1214 = vmatpush1.msra.mxu0 %v1165
      %1215 = vmatprep.subr.mxu0 0.0
      %1216 = vmatpush1.msra.mxu0 %v1164
      %1217 = vmatprep.subr.mxu0 0.0
      %1218 = vmatpush1.msra.mxu0 %v1163
      %1219 = vmatprep.subr.mxu0 0.0
      %1220 = vmatpush2.msra.mxu0 0.0
      %1221 = vmatprep.subr.mxu0 0.0
      %1222 = vmatpush2.msra.mxu0 0.0
      %1223 = vmatprep.subr.mxu0 0.0
      %1224 = vmatpush2.msra.mxu0 0.0
      %1225 = vmatprep.subr.mxu0 0.0
      %1226 = vmatpush2.msra.mxu0 0.0
      %1227 = vmatprep.subr.mxu0 0.0
      %1228 = vmatpush2.msra.mxu0 0.0
      %1229 = vmatprep.subr.mxu0 0.0
      %1230 = vmatpush2.msra.mxu0 0.0
      %1231 = vmatprep.subr.mxu0 0.0
      %1232 = vmatpush2.msra.mxu0 0.0
      %1233 = vmatprep.subr.mxu0 0.0
      %1234 = vmatpush2.msra.mxu0 0.0
      %1235 = vmatprep.subr.mxu0 0.0
      %1236 = vmatpush2.msra.mxu0 0.0
      %1237 = vmatprep.subr.mxu0 0.0
      %1238 = vmatpush2.msra.mxu0 0.0
      %1239 = vmatprep.subr.mxu0 0.0
      %1240 = vmatpush2.msra.mxu0 0.0
      %1241 = vmatprep.subr.mxu0 0.0
      %1242 = vmatpush2.msra.mxu0 0.0
      %1243 = vmatprep.subr.mxu0 0.0
      %1244 = vmatpush2.msra.mxu0 0.0
      %1245 = vmatprep.subr.mxu0 0.0
      %1246 = vmatpush2.msra.mxu0 0.0
      %1247 = vmatprep.subr.mxu0 0.0
      %1248 = vmatpush2.msra.mxu0 0.0
      %1249 = vmatprep.subr.mxu0 0.0
      %1250 = vmatpush2.msra.mxu0 0.0
      %1251 = vmatprep.mubr.f32.mxu0 0.0
      %1252 = vmatmul.mubr.f32.gmra.mxu0 %v1176
      %v1253 = vpop.f32.mrf.mxu0
      %v1254 = vadd.f32 0.0, %v1253
      %v1255 = vpop.f32.mrf.mxu0
      %1256 = vmatprep.mubr.f32.mxu0 0.0
      %1257 = vmatmul.mubr.f32.gmra.mxu0 %v1179
      %v1258 = vpop.f32.mrf.mxu0
      %v1259 = vadd.f32 0.0, %v1258
      %v1260 = vpop.f32.mrf.mxu0
      %1261 = vmatprep.mubr.f32.mxu0 0.0
      %1262 = vmatmul.mubr.f32.gmra.mxu0 %v1182
      %v1263 = vpop.f32.mrf.mxu0
      %v1264 = vadd.f32 0.0, %v1263
      %v1265 = vpop.f32.mrf.mxu0
      %1266 = vmatprep.mubr.f32.mxu0 0.0
      %1267 = vmatmul.mubr.f32.gmra.mxu0 %v1185
      %v1268 = vpop.f32.mrf.mxu0
      %v1269 = vadd.f32 0.0, %v1268
      %v1270 = vpop.f32.mrf.mxu0
      %1271 = vdwg.mxu0
      %v1272 = vld [vmem:[%s14] sm:$0xff]
      %v1273 = vld [vmem:[%s14 + $0x8] sm:$0xff]
      %v1274 = vld [vmem:[%s14 + $0x10] sm:$0xff]
      %v1275 = vld [vmem:[%s14 + $0x18] sm:$0xff]
      %v1277 = vsel %vm991, %v1272, 0
      %v1280 = vsel %vm991, %v1273, 0
      %v1283 = vsel %vm991, %v1274, 0
      %v1286 = vsel %vm991, %v1275, 0
      %1288 = vmatprep.subr.mxu0 0.0
      %1289 = vmatpush1.msra.mxu0 0.0
      %1290 = vmatprep.subr.mxu0 0.0
      %1291 = vmatpush1.msra.mxu0 0.0
      %1292 = vmatprep.subr.mxu0 0.0
      %1293 = vmatpush1.msra.mxu0 0.0
      %1294 = vmatprep.subr.mxu0 0.0
      %1295 = vmatpush1.msra.mxu0 0.0
      %1296 = vmatprep.subr.mxu0 0.0
      %1297 = vmatpush1.msra.mxu0 0.0
      %1298 = vmatprep.subr.mxu0 0.0
      %1299 = vmatpush1.msra.mxu0 0.0
      %1300 = vmatprep.subr.mxu0 0.0
      %1301 = vmatpush1.msra.mxu0 0.0
      %1302 = vmatprep.subr.mxu0 0.0
      %1303 = vmatpush1.msra.mxu0 0.0
      %1304 = vmatprep.subr.mxu0 0.0
      %1305 = vmatpush1.msra.mxu0 %v1170
      %1306 = vmatprep.subr.mxu0 0.0
      %1307 = vmatpush1.msra.mxu0 %v1169
      %1308 = vmatprep.subr.mxu0 0.0
      %1309 = vmatpush1.msra.mxu0 %v1168
      %1310 = vmatprep.subr.mxu0 0.0
      %1311 = vmatpush1.msra.mxu0 %v1167
      %1312 = vmatprep.subr.mxu0 0.0
      %1313 = vmatpush1.msra.mxu0 %v1166
      %1314 = vmatprep.subr.mxu0 0.0
      %1315 = vmatpush1.msra.mxu0 %v1165
      %1316 = vmatprep.subr.mxu0 0.0
      %1317 = vmatpush1.msra.mxu0 %v1164
      %1318 = vmatprep.subr.mxu0 0.0
      %1319 = vmatpush1.msra.mxu0 %v1163
      %1320 = vmatprep.subr.mxu0 0.0
      %1321 = vmatpush2.msra.mxu0 0.0
      %1322 = vmatprep.subr.mxu0 0.0
      %1323 = vmatpush2.msra.mxu0 0.0
      %1324 = vmatprep.subr.mxu0 0.0
      %1325 = vmatpush2.msra.mxu0 0.0
      %1326 = vmatprep.subr.mxu0 0.0
      %1327 = vmatpush2.msra.mxu0 0.0
      %1328 = vmatprep.subr.mxu0 0.0
      %1329 = vmatpush2.msra.mxu0 0.0
      %1330 = vmatprep.subr.mxu0 0.0
      %1331 = vmatpush2.msra.mxu0 0.0
      %1332 = vmatprep.subr.mxu0 0.0
      %1333 = vmatpush2.msra.mxu0 0.0
      %1334 = vmatprep.subr.mxu0 0.0
      %1335 = vmatpush2.msra.mxu0 0.0
      %1336 = vmatprep.subr.mxu0 0.0
      %1337 = vmatpush2.msra.mxu0 0.0
      %1338 = vmatprep.subr.mxu0 0.0
      %1339 = vmatpush2.msra.mxu0 0.0
      %1340 = vmatprep.subr.mxu0 0.0
      %1341 = vmatpush2.msra.mxu0 0.0
      %1342 = vmatprep.subr.mxu0 0.0
      %1343 = vmatpush2.msra.mxu0 0.0
      %1344 = vmatprep.subr.mxu0 0.0
      %1345 = vmatpush2.msra.mxu0 0.0
      %1346 = vmatprep.subr.mxu0 0.0
      %1347 = vmatpush2.msra.mxu0 0.0
      %1348 = vmatprep.subr.mxu0 0.0
      %1349 = vmatpush2.msra.mxu0 0.0
      %1350 = vmatprep.subr.mxu0 0.0
      %1351 = vmatpush2.msra.mxu0 0.0
      %1352 = vmatprep.mubr.f32.mxu0 0.0
      %1353 = vmatmul.mubr.f32.gmra.mxu0 %v1277
      %v1354 = vpop.f32.mrf.mxu0
      %v1355 = vadd.f32 0.0, %v1354
      %v1356 = vpop.f32.mrf.mxu0
      %1357 = vmatprep.mubr.f32.mxu0 0.0
      %1358 = vmatmul.mubr.f32.gmra.mxu0 %v1280
      %v1359 = vpop.f32.mrf.mxu0
      %v1360 = vadd.f32 0.0, %v1359
      %v1361 = vpop.f32.mrf.mxu0
      %1362 = vmatprep.mubr.f32.mxu0 0.0
      %1363 = vmatmul.mubr.f32.gmra.mxu0 %v1283
      %v1364 = vpop.f32.mrf.mxu0
      %v1365 = vadd.f32 0.0, %v1364
      %v1366 = vpop.f32.mrf.mxu0
      %1367 = vmatprep.mubr.f32.mxu0 0.0
      %1368 = vmatmul.mubr.f32.gmra.mxu0 %v1286
      %v1369 = vpop.f32.mrf.mxu0
      %v1370 = vadd.f32 0.0, %v1369
      %v1371 = vpop.f32.mrf.mxu0
      %1372 = vdwg.mxu0
      %v1373 = vsub.f32 0.0, %v1355
      %v1374 = vsub.f32 0.0, %v1360
      %v1375 = vsub.f32 0.0, %v1365
      %v1376 = vsub.f32 0.0, %v1370
      %v1377 = vmul.f32 %v1254, %v1254
      %v1378 = vmul.f32 %v1259, %v1259
      %v1379 = vmul.f32 %v1264, %v1264
      %v1380 = vmul.f32 %v1269, %v1269
      %v1381 = vmul.f32 %v1373, %v1373
      %v1382 = vmul.f32 %v1374, %v1374
      %v1383 = vmul.f32 %v1375, %v1375
      %v1384 = vmul.f32 %v1376, %v1376
      %v1385 = vadd.f32 %v1377, %v1381
      %v1386 = vadd.f32 %v1378, %v1382
      %v1387 = vadd.f32 %v1379, %v1383
      %v1388 = vadd.f32 %v1380, %v1384
      %v1389 = vsel %vm849, %v1385, 0.0
      %1390 = vadd.xlane.f32.xlu0 %v1389
      %v1391 = vpop.xlane.xlu0 %1390
      %v1392 = vsel %vm849, %v1386, 0.0
      %1393 = vadd.xlane.f32.xlu0 %v1392
      %v1394 = vpop.xlane.xlu0 %1393
      %v1395 = vsel %vm849, %v1387, 0.0
      %1396 = vadd.xlane.f32.xlu0 %v1395
      %v1397 = vpop.xlane.xlu0 %1396
      %v1398 = vsel %vm849, %v1388, 0.0
      %1399 = vadd.xlane.f32.xlu0 %v1398
      %v1400 = vpop.xlane.xlu0 %1399
      %v1402 = vsel %vm849, 1.0, 0
      %v1405 = vsel %vm849, %v1385, 0
      %v1408 = vsel %vm849, %v1386, 0
      %v1411 = vsel %vm849, %v1387, 0
      %v1414 = vsel %vm849, %v1388, 0
      %1416 = vmatprep.subr.mxu0 0.0
      %1417 = vmatpush1.xpose.msra.mxu0 0.0
      %1418 = vmatprep.subr.mxu0 0.0
      %1419 = vmatpush1.xpose.msra.mxu0 0.0
      %1420 = vmatprep.subr.mxu0 0.0
      %1421 = vmatpush1.xpose.msra.mxu0 0.0
      %1422 = vmatprep.subr.mxu0 0.0
      %1423 = vmatpush1.xpose.msra.mxu0 0.0
      %1424 = vmatprep.subr.mxu0 0.0
      %1425 = vmatpush1.xpose.msra.mxu0 0.0
      %1426 = vmatprep.subr.mxu0 0.0
      %1427 = vmatpush1.xpose.msra.mxu0 0.0
      %1428 = vmatprep.subr.mxu0 0.0
      %1429 = vmatpush1.xpose.msra.mxu0 0.0
      %1430 = vmatprep.subr.mxu0 0.0
      %1431 = vmatpush1.xpose.msra.mxu0 0.0
      %1432 = vmatprep.subr.mxu0 0.0
      %1433 = vmatpush1.xpose.msra.mxu0 0.0
      %1434 = vmatprep.subr.mxu0 0.0
      %1435 = vmatpush1.xpose.msra.mxu0 0.0
      %1436 = vmatprep.subr.mxu0 0.0
      %1437 = vmatpush1.xpose.msra.mxu0 0.0
      %1438 = vmatprep.subr.mxu0 0.0
      %1439 = vmatpush1.xpose.msra.mxu0 0.0
      %1440 = vmatprep.subr.mxu0 0.0
      %1441 = vmatpush1.xpose.msra.mxu0 %v1414
      %1442 = vmatprep.subr.mxu0 0.0
      %1443 = vmatpush1.xpose.msra.mxu0 %v1411
      %1444 = vmatprep.subr.mxu0 0.0
      %1445 = vmatpush1.xpose.msra.mxu0 %v1408
      %1446 = vmatprep.subr.mxu0 0.0
      %1447 = vmatpush1.xpose.msra.mxu0 %v1405
      %1448 = vmatprep.subr.mxu0 0.0
      %1449 = vmatpush2.xpose.msra.mxu0 0.0
      %1450 = vmatprep.subr.mxu0 0.0
      %1451 = vmatpush2.xpose.msra.mxu0 0.0
      %1452 = vmatprep.subr.mxu0 0.0
      %1453 = vmatpush2.xpose.msra.mxu0 0.0
      %1454 = vmatprep.subr.mxu0 0.0
      %1455 = vmatpush2.xpose.msra.mxu0 0.0
      %1456 = vmatprep.subr.mxu0 0.0
      %1457 = vmatpush2.xpose.msra.mxu0 0.0
      %1458 = vmatprep.subr.mxu0 0.0
      %1459 = vmatpush2.xpose.msra.mxu0 0.0
      %1460 = vmatprep.subr.mxu0 0.0
      %1461 = vmatpush2.xpose.msra.mxu0 0.0
      %1462 = vmatprep.subr.mxu0 0.0
      %1463 = vmatpush2.xpose.msra.mxu0 0.0
      %1464 = vmatprep.subr.mxu0 0.0
      %1465 = vmatpush2.xpose.msra.mxu0 0.0
      %1466 = vmatprep.subr.mxu0 0.0
      %1467 = vmatpush2.xpose.msra.mxu0 0.0
      %1468 = vmatprep.subr.mxu0 0.0
      %1469 = vmatpush2.xpose.msra.mxu0 0.0
      %1470 = vmatprep.subr.mxu0 0.0
      %1471 = vmatpush2.xpose.msra.mxu0 0.0
      %1472 = vmatprep.subr.mxu0 0.0
      %1473 = vmatpush2.xpose.msra.mxu0 0.0
      %1474 = vmatprep.subr.mxu0 0.0
      %1475 = vmatpush2.xpose.msra.mxu0 0.0
      %1476 = vmatprep.subr.mxu0 0.0
      %1477 = vmatpush2.xpose.msra.mxu0 0.0
      %1478 = vmatprep.subr.mxu0 0.0
      %1479 = vmatpush2.xpose.msra.mxu0 0.0
      %1480 = vmatprep.mubr.f32.mxu0 0.0
      %1481 = vmatmul.mubr.f32.gmra.mxu0 %v1402
      %v1482 = vpop.f32.mrf.mxu0
      %v1483 = vadd.f32 0.0, %v1482
      %v1484 = vpop.f32.mrf.mxu0
      %1485 = vdwg.mxu0
      %v1486 = vlaneseq
      %v1487 = vshrl.u32 %v1486, 7
      %v1488 = vadd.s32 %v1487, 8
      %v1489 = vadd.s32 %v1487, 16
      %v1490 = vadd.s32 %v1487, 24
      %v1491 = vlaneseq
      %v1492 = vand.u32 %v1491, 127
      %vm1493 = vcmp.eq.s32.totalorder %v1487, %v1492
      %vm1494 = vcmp.eq.s32.totalorder %v1488, %v1492
      %vm1495 = vcmp.eq.s32.totalorder %v1489, %v1492
      %vm1496 = vcmp.eq.s32.totalorder %v1490, %v1492
      %v1497 = vlaneseq
      %v1498 = vshrl.u32 %v1497, 7
      %v1499 = vsub.s32 0, %v1498
      %v1500 = vrot.slane %v1483, %v1499
      %vm1501 = vcmp.le.f32.partialorder %v1391, %v1500
      %vm1502 = vcmp.le.f32.partialorder %v1394, %v1500
      %vm1503 = vcmp.le.f32.partialorder %v1397, %v1500
      %vm1504 = vcmp.le.f32.partialorder %v1400, %v1500
      %vm1505 = vmor %vm1501, %vm1493
      %vm1506 = vmor %vm1502, %vm1494
      %vm1507 = vmor %vm1503, %vm1495
      %vm1508 = vmor %vm1504, %vm1496
      %v1509 = vsel %vm1505, 1, 0
      %v1510 = vsel %vm1506, 1, 0
      %v1511 = vsel %vm1507, 1, 0
      %v1512 = vsel %vm1508, 1, 0
      %v1513 = vcvt.s32.f32 %v1509
      %v1514 = vcvt.s32.f32 %v1510
      %v1515 = vcvt.s32.f32 %v1511
      %v1516 = vcvt.s32.f32 %v1512
      %1517 = vmatprep.subr.mxu0 0.0
      %1518 = vmatpush1.msra.mxu0 0.0
      %1519 = vmatprep.subr.mxu0 0.0
      %1520 = vmatpush1.msra.mxu0 0.0
      %1521 = vmatprep.subr.mxu0 0.0
      %1522 = vmatpush1.msra.mxu0 0.0
      %1523 = vmatprep.subr.mxu0 0.0
      %1524 = vmatpush1.msra.mxu0 0.0
      %1525 = vmatprep.subr.mxu0 0.0
      %1526 = vmatpush1.msra.mxu0 0.0
      %1527 = vmatprep.subr.mxu0 0.0
      %1528 = vmatpush1.msra.mxu0 0.0
      %1529 = vmatprep.subr.mxu0 0.0
      %1530 = vmatpush1.msra.mxu0 0.0
      %1531 = vmatprep.subr.mxu0 0.0
      %1532 = vmatpush1.msra.mxu0 0.0
      %1533 = vmatprep.subr.mxu0 0.0
      %1534 = vmatpush1.msra.mxu0 0.0
      %1535 = vmatprep.subr.mxu0 0.0
      %1536 = vmatpush1.msra.mxu0 0.0
      %1537 = vmatprep.subr.mxu0 0.0
      %1538 = vmatpush1.msra.mxu0 0.0
      %1539 = vmatprep.subr.mxu0 0.0
      %1540 = vmatpush1.msra.mxu0 0.0
      %1541 = vmatprep.subr.mxu0 0.0
      %1542 = vmatpush1.msra.mxu0 %v1516
      %1543 = vmatprep.subr.mxu0 0.0
      %1544 = vmatpush1.msra.mxu0 %v1515
      %1545 = vmatprep.subr.mxu0 0.0
      %1546 = vmatpush1.msra.mxu0 %v1514
      %1547 = vmatprep.subr.mxu0 0.0
      %1548 = vmatpush1.msra.mxu0 %v1513
      %1549 = vmatprep.subr.mxu0 0.0
      %1550 = vmatpush2.msra.mxu0 0.0
      %1551 = vmatprep.subr.mxu0 0.0
      %1552 = vmatpush2.msra.mxu0 0.0
      %1553 = vmatprep.subr.mxu0 0.0
      %1554 = vmatpush2.msra.mxu0 0.0
      %1555 = vmatprep.subr.mxu0 0.0
      %1556 = vmatpush2.msra.mxu0 0.0
      %1557 = vmatprep.subr.mxu0 0.0
      %1558 = vmatpush2.msra.mxu0 0.0
      %1559 = vmatprep.subr.mxu0 0.0
      %1560 = vmatpush2.msra.mxu0 0.0
      %1561 = vmatprep.subr.mxu0 0.0
      %1562 = vmatpush2.msra.mxu0 0.0
      %1563 = vmatprep.subr.mxu0 0.0
      %1564 = vmatpush2.msra.mxu0 0.0
      %1565 = vmatprep.subr.mxu0 0.0
      %1566 = vmatpush2.msra.mxu0 0.0
      %1567 = vmatprep.subr.mxu0 0.0
      %1568 = vmatpush2.msra.mxu0 0.0
      %1569 = vmatprep.subr.mxu0 0.0
      %1570 = vmatpush2.msra.mxu0 0.0
      %1571 = vmatprep.subr.mxu0 0.0
      %1572 = vmatpush2.msra.mxu0 0.0
      %1573 = vmatprep.subr.mxu0 0.0
      %1574 = vmatpush2.msra.mxu0 0.0
      %1575 = vmatprep.subr.mxu0 0.0
      %1576 = vmatpush2.msra.mxu0 0.0
      %1577 = vmatprep.subr.mxu0 0.0
      %1578 = vmatpush2.msra.mxu0 0.0
      %1579 = vmatprep.subr.mxu0 0.0
      %1580 = vmatpush2.msra.mxu0 0.0
      %1581 = vmatprep.mubr.f32.mxu0 0.0
      %1582 = vmatmul.mubr.f32.gmra.mxu0 %v1402
      %v1583 = vpop.f32.mrf.mxu0
      %v1584 = vadd.f32 0.0, %v1583
      %v1585 = vpop.f32.mrf.mxu0
      %1586 = vdwg.mxu0
      %vm1587 = vcmp.ge.f32.partialorder %v1584, 16.0
      %v1588 = vsel %vm1587, %v1483, inf
      %vm1589 = vcmask 253952
      %v1590 = vsel %vm1589, %v1588, inf
      %1591 = vmin.xlane.f32.xlu0 %v1590
      %v1592 = vpop.xlane.xlu0 %1591
      %v1593 = vadd.f32 %v1592, 1e-06
      %v1594 = vlaneseq
      %v1595 = vshrl.u32 %v1594, 7
      %v1596 = vsub.s32 0, %v1595
      %v1597 = vrot.slane %v1593, %v1596
      %v1598 = vrcp.pop %v1597
      %v1599 = vmul.f32 %v1391, %v1598
      %v1600 = vmul.f32 %v1394, %v1598
      %v1601 = vmul.f32 %v1397, %v1598
      %v1602 = vmul.f32 %v1400, %v1598
      %v1604 = vlaneseq
      %v1605 = vshrl.u32 %v1604, 7
      %v1606 = vsub.s32 0, %v1605
      %v1607 = vrot.slane %v846, %v1606
      %vm1609 = vcmp.gt.f32.partialorder %v1599, %v1607
      %vm1610 = vcmp.gt.f32.partialorder %v1600, %v1607
      %vm1611 = vcmp.gt.f32.partialorder %v1601, %v1607
      %vm1612 = vcmp.gt.f32.partialorder %v1602, %v1607
      %v1613 = vsel %vm1609, 1, 0
      %v1614 = vsel %vm1610, 1, 0
      %v1615 = vsel %vm1611, 1, 0
      %v1616 = vsel %vm1612, 1, 0
      %v1617 = vcvt.s32.f32 %v1613
      %v1618 = vcvt.s32.f32 %v1614
      %v1619 = vcvt.s32.f32 %v1615
      %v1620 = vcvt.s32.f32 %v1616
      %v1621 = vld [vmem:[%s663] sm:$0x1]
      %v1622 = vld [vmem:[%s669] sm:$0x1]
      %1624 = vset.pattern.permute.xlu0 0
      %1625 = vperm.xlu0 %1624, %v1617
      %v1626 = vpop.permute.xlu0 %1625
      %1629 = vset.pattern.permute.xlu0 0
      %1630 = vperm.xlu0 %1629, %v1618
      %v1631 = vpop.permute.xlu0 %1630
      %1634 = vset.pattern.permute.xlu0 0
      %1635 = vperm.xlu0 %1634, %v1619
      %v1636 = vpop.permute.xlu0 %1635
      %1639 = vset.pattern.permute.xlu0 0
      %1640 = vperm.xlu0 %1639, %v1620
      %v1641 = vpop.permute.xlu0 %1640
      %v1644 = vlaneseq
      %v1645 = vshrl.u32 %v1644, 7
      %v1646 = vsub.s32 0, %v1645
      %v1647 = vrot.slane %v1622, %v1646
      %v1649 = vmul.f32 %v1626, %v1647
      %v1650 = vmul.f32 %v1631, %v1647
      %v1651 = vmul.f32 %v1636, %v1647
      %v1652 = vmul.f32 %v1641, %v1647
      %v1654 = vlaneseq
      %v1655 = vshrl.u32 %v1654, 7
      %v1656 = vsub.s32 0, %v1655
      %v1657 = vrot.slane %v1621, %v1656
      %v1659 = vadd.f32 %v1657, %v1649
      %v1660 = vadd.f32 %v1657, %v1650
      %v1661 = vadd.f32 %v1657, %v1651
      %v1662 = vadd.f32 %v1657, %v1652
      %v1663 = vld [vmem:[%s666] sm:$0x1]
      %v1664 = vld [vmem:[%s672] sm:$0x1]
      %v1666 = vlaneseq
      %v1667 = vshrl.u32 %v1666, 7
      %v1668 = vsub.s32 0, %v1667
      %v1669 = vrot.slane %v1664, %v1668
      %v1671 = vmul.f32 %v1626, %v1669
      %v1672 = vmul.f32 %v1631, %v1669
      %v1673 = vmul.f32 %v1636, %v1669
      %v1674 = vmul.f32 %v1641, %v1669
      %v1676 = vlaneseq
      %v1677 = vshrl.u32 %v1676, 7
      %v1678 = vsub.s32 0, %v1677
      %v1679 = vrot.slane %v1663, %v1678
      %v1681 = vadd.f32 %v1679, %v1671
      %v1682 = vadd.f32 %v1679, %v1672
      %v1683 = vadd.f32 %v1679, %v1673
      %v1684 = vadd.f32 %v1679, %v1674
      %v1685 = vmul.f32 %v1254, %v1659
      %v1686 = vmul.f32 %v1259, %v1660
      %v1687 = vmul.f32 %v1264, %v1661
      %v1688 = vmul.f32 %v1269, %v1662
      %v1689 = vmul.f32 %v1373, %v1681
      %v1690 = vmul.f32 %v1374, %v1682
      %v1691 = vmul.f32 %v1375, %v1683
      %v1692 = vmul.f32 %v1376, %v1684
      %v1693 = vsub.f32 %v1685, %v1689
      %v1694 = vsub.f32 %v1686, %v1690
      %v1695 = vsub.f32 %v1687, %v1691
      %v1696 = vsub.f32 %v1688, %v1692
      %v1697 = vmul.f32 %v1254, %v1681
      %v1698 = vmul.f32 %v1259, %v1682
      %v1699 = vmul.f32 %v1264, %v1683
      %v1700 = vmul.f32 %v1269, %v1684
      %v1701 = vmul.f32 %v1373, %v1659
      %v1702 = vmul.f32 %v1374, %v1660
      %v1703 = vmul.f32 %v1375, %v1661
      %v1704 = vmul.f32 %v1376, %v1662
      %v1705 = vadd.f32 %v1697, %v1701
      %v1706 = vadd.f32 %v1698, %v1702
      %v1707 = vadd.f32 %v1699, %v1703
      %v1708 = vadd.f32 %v1700, %v1704
      %v1709 = vld [vmem:[%s15] sm:$0xff]
      %v1710 = vld [vmem:[%s15 + $0x8] sm:$0xff]
      %v1711 = vld [vmem:[%s15 + $0x10] sm:$0xff]
      %v1712 = vld [vmem:[%s15 + $0x18] sm:$0xff]
      %v1713 = vld [vmem:[%s15 + $0x20] sm:$0xff]
      %v1714 = vld [vmem:[%s15 + $0x28] sm:$0xff]
      %v1715 = vld [vmem:[%s15 + $0x30] sm:$0xff]
      %v1716 = vld [vmem:[%s15 + $0x38] sm:$0xff]
      %v1718 = vsel %vm849, %v1709, 0
      %v1721 = vsel %vm849, %v1710, 0
      %v1724 = vsel %vm849, %v1711, 0
      %v1727 = vsel %vm849, %v1712, 0
      %v1730 = vsel %vm849, %v1713, 0
      %v1733 = vsel %vm849, %v1714, 0
      %v1736 = vsel %vm849, %v1715, 0
      %v1739 = vsel %vm849, %v1716, 0
      %1741 = vmatprep.subr.mxu0 0.0
      %1742 = vmatpush1.msra.mxu0 0.0
      %1743 = vmatprep.subr.mxu0 0.0
      %1744 = vmatpush1.msra.mxu0 0.0
      %1745 = vmatprep.subr.mxu0 0.0
      %1746 = vmatpush1.msra.mxu0 0.0
      %1747 = vmatprep.subr.mxu0 0.0
      %1748 = vmatpush1.msra.mxu0 0.0
      %1749 = vmatprep.subr.mxu0 0.0
      %1750 = vmatpush1.msra.mxu0 0.0
      %1751 = vmatprep.subr.mxu0 0.0
      %1752 = vmatpush1.msra.mxu0 0.0
      %1753 = vmatprep.subr.mxu0 0.0
      %1754 = vmatpush1.msra.mxu0 0.0
      %1755 = vmatprep.subr.mxu0 0.0
      %1756 = vmatpush1.msra.mxu0 0.0
      %1757 = vmatprep.subr.mxu0 0.0
      %1758 = vmatpush1.msra.mxu0 0.0
      %1759 = vmatprep.subr.mxu0 0.0
      %1760 = vmatpush1.msra.mxu0 0.0
      %1761 = vmatprep.subr.mxu0 0.0
      %1762 = vmatpush1.msra.mxu0 0.0
      %1763 = vmatprep.subr.mxu0 0.0
      %1764 = vmatpush1.msra.mxu0 0.0
      %1765 = vmatprep.subr.mxu0 0.0
      %1766 = vmatpush1.msra.mxu0 %v1696
      %1767 = vmatprep.subr.mxu0 0.0
      %1768 = vmatpush1.msra.mxu0 %v1695
      %1769 = vmatprep.subr.mxu0 0.0
      %1770 = vmatpush1.msra.mxu0 %v1694
      %1771 = vmatprep.subr.mxu0 0.0
      %1772 = vmatpush1.msra.mxu0 %v1693
      %1773 = vmatprep.subr.mxu0 0.0
      %1774 = vmatpush2.msra.mxu0 0.0
      %1775 = vmatprep.subr.mxu0 0.0
      %1776 = vmatpush2.msra.mxu0 0.0
      %1777 = vmatprep.subr.mxu0 0.0
      %1778 = vmatpush2.msra.mxu0 0.0
      %1779 = vmatprep.subr.mxu0 0.0
      %1780 = vmatpush2.msra.mxu0 0.0
      %1781 = vmatprep.subr.mxu0 0.0
      %1782 = vmatpush2.msra.mxu0 0.0
      %1783 = vmatprep.subr.mxu0 0.0
      %1784 = vmatpush2.msra.mxu0 0.0
      %1785 = vmatprep.subr.mxu0 0.0
      %1786 = vmatpush2.msra.mxu0 0.0
      %1787 = vmatprep.subr.mxu0 0.0
      %1788 = vmatpush2.msra.mxu0 0.0
      %1789 = vmatprep.subr.mxu0 0.0
      %1790 = vmatpush2.msra.mxu0 0.0
      %1791 = vmatprep.subr.mxu0 0.0
      %1792 = vmatpush2.msra.mxu0 0.0
      %1793 = vmatprep.subr.mxu0 0.0
      %1794 = vmatpush2.msra.mxu0 0.0
      %1795 = vmatprep.subr.mxu0 0.0
      %1796 = vmatpush2.msra.mxu0 0.0
      %1797 = vmatprep.subr.mxu0 0.0
      %1798 = vmatpush2.msra.mxu0 0.0
      %1799 = vmatprep.subr.mxu0 0.0
      %1800 = vmatpush2.msra.mxu0 0.0
      %1801 = vmatprep.subr.mxu0 0.0
      %1802 = vmatpush2.msra.mxu0 0.0
      %1803 = vmatprep.subr.mxu0 0.0
      %1804 = vmatpush2.msra.mxu0 0.0
      %1805 = vmatprep.mubr.f32.mxu0 0.0
      %1806 = vmatmul.mubr.f32.gmra.mxu0 %v1718
      %v1807 = vpop.f32.mrf.mxu0
      %v1808 = vadd.f32 0.0, %v1807
      %v1809 = vpop.f32.mrf.mxu0
      %1810 = vmatprep.mubr.f32.mxu0 0.0
      %1811 = vmatmul.mubr.f32.gmra.mxu0 %v1721
      %v1812 = vpop.f32.mrf.mxu0
      %v1813 = vadd.f32 0.0, %v1812
      %v1814 = vpop.f32.mrf.mxu0
      %1815 = vmatprep.mubr.f32.mxu0 0.0
      %1816 = vmatmul.mubr.f32.gmra.mxu0 %v1724
      %v1817 = vpop.f32.mrf.mxu0
      %v1818 = vadd.f32 0.0, %v1817
      %v1819 = vpop.f32.mrf.mxu0
      %1820 = vmatprep.mubr.f32.mxu0 0.0
      %1821 = vmatmul.mubr.f32.gmra.mxu0 %v1727
      %v1822 = vpop.f32.mrf.mxu0
      %v1823 = vadd.f32 0.0, %v1822
      %v1824 = vpop.f32.mrf.mxu0
      %1825 = vmatprep.mubr.f32.mxu0 0.0
      %1826 = vmatmul.mubr.f32.gmra.mxu0 %v1730
      %v1827 = vpop.f32.mrf.mxu0
      %v1828 = vadd.f32 0.0, %v1827
      %v1829 = vpop.f32.mrf.mxu0
      %1830 = vmatprep.mubr.f32.mxu0 0.0
      %1831 = vmatmul.mubr.f32.gmra.mxu0 %v1733
      %v1832 = vpop.f32.mrf.mxu0
      %v1833 = vadd.f32 0.0, %v1832
      %v1834 = vpop.f32.mrf.mxu0
      %1835 = vmatprep.mubr.f32.mxu0 0.0
      %1836 = vmatmul.mubr.f32.gmra.mxu0 %v1736
      %v1837 = vpop.f32.mrf.mxu0
      %v1838 = vadd.f32 0.0, %v1837
      %v1839 = vpop.f32.mrf.mxu0
      %1840 = vmatprep.mubr.f32.mxu0 0.0
      %1841 = vmatmul.mubr.f32.gmra.mxu0 %v1739
      %v1842 = vpop.f32.mrf.mxu0
      %v1843 = vadd.f32 0.0, %v1842
      %v1844 = vpop.f32.mrf.mxu0
      %1845 = vdwg.mxu0
      %v1846 = vld [vmem:[%s16] sm:$0xff]
      %v1847 = vld [vmem:[%s16 + $0x8] sm:$0xff]
      %v1848 = vld [vmem:[%s16 + $0x10] sm:$0xff]
      %v1849 = vld [vmem:[%s16 + $0x18] sm:$0xff]
      %v1850 = vld [vmem:[%s16 + $0x20] sm:$0xff]
      %v1851 = vld [vmem:[%s16 + $0x28] sm:$0xff]
      %v1852 = vld [vmem:[%s16 + $0x30] sm:$0xff]
      %v1853 = vld [vmem:[%s16 + $0x38] sm:$0xff]
      %v1855 = vsel %vm849, %v1846, 0
      %v1858 = vsel %vm849, %v1847, 0
      %v1861 = vsel %vm849, %v1848, 0
      %v1864 = vsel %vm849, %v1849, 0
      %v1867 = vsel %vm849, %v1850, 0
      %v1870 = vsel %vm849, %v1851, 0
      %v1873 = vsel %vm849, %v1852, 0
      %v1876 = vsel %vm849, %v1853, 0
      %1878 = vmatprep.subr.mxu0 0.0
      %1879 = vmatpush1.msra.mxu0 0.0
      %1880 = vmatprep.subr.mxu0 0.0
      %1881 = vmatpush1.msra.mxu0 0.0
      %1882 = vmatprep.subr.mxu0 0.0
      %1883 = vmatpush1.msra.mxu0 0.0
      %1884 = vmatprep.subr.mxu0 0.0
      %1885 = vmatpush1.msra.mxu0 0.0
      %1886 = vmatprep.subr.mxu0 0.0
      %1887 = vmatpush1.msra.mxu0 0.0
      %1888 = vmatprep.subr.mxu0 0.0
      %1889 = vmatpush1.msra.mxu0 0.0
      %1890 = vmatprep.subr.mxu0 0.0
      %1891 = vmatpush1.msra.mxu0 0.0
      %1892 = vmatprep.subr.mxu0 0.0
      %1893 = vmatpush1.msra.mxu0 0.0
      %1894 = vmatprep.subr.mxu0 0.0
      %1895 = vmatpush1.msra.mxu0 0.0
      %1896 = vmatprep.subr.mxu0 0.0
      %1897 = vmatpush1.msra.mxu0 0.0
      %1898 = vmatprep.subr.mxu0 0.0
      %1899 = vmatpush1.msra.mxu0 0.0
      %1900 = vmatprep.subr.mxu0 0.0
      %1901 = vmatpush1.msra.mxu0 0.0
      %1902 = vmatprep.subr.mxu0 0.0
      %1903 = vmatpush1.msra.mxu0 %v1708
      %1904 = vmatprep.subr.mxu0 0.0
      %1905 = vmatpush1.msra.mxu0 %v1707
      %1906 = vmatprep.subr.mxu0 0.0
      %1907 = vmatpush1.msra.mxu0 %v1706
      %1908 = vmatprep.subr.mxu0 0.0
      %1909 = vmatpush1.msra.mxu0 %v1705
      %1910 = vmatprep.subr.mxu0 0.0
      %1911 = vmatpush2.msra.mxu0 0.0
      %1912 = vmatprep.subr.mxu0 0.0
      %1913 = vmatpush2.msra.mxu0 0.0
      %1914 = vmatprep.subr.mxu0 0.0
      %1915 = vmatpush2.msra.mxu0 0.0
      %1916 = vmatprep.subr.mxu0 0.0
      %1917 = vmatpush2.msra.mxu0 0.0
      %1918 = vmatprep.subr.mxu0 0.0
      %1919 = vmatpush2.msra.mxu0 0.0
      %1920 = vmatprep.subr.mxu0 0.0
      %1921 = vmatpush2.msra.mxu0 0.0
      %1922 = vmatprep.subr.mxu0 0.0
      %1923 = vmatpush2.msra.mxu0 0.0
      %1924 = vmatprep.subr.mxu0 0.0
      %1925 = vmatpush2.msra.mxu0 0.0
      %1926 = vmatprep.subr.mxu0 0.0
      %1927 = vmatpush2.msra.mxu0 0.0
      %1928 = vmatprep.subr.mxu0 0.0
      %1929 = vmatpush2.msra.mxu0 0.0
      %1930 = vmatprep.subr.mxu0 0.0
      %1931 = vmatpush2.msra.mxu0 0.0
      %1932 = vmatprep.subr.mxu0 0.0
      %1933 = vmatpush2.msra.mxu0 0.0
      %1934 = vmatprep.subr.mxu0 0.0
      %1935 = vmatpush2.msra.mxu0 0.0
      %1936 = vmatprep.subr.mxu0 0.0
      %1937 = vmatpush2.msra.mxu0 0.0
      %1938 = vmatprep.subr.mxu0 0.0
      %1939 = vmatpush2.msra.mxu0 0.0
      %1940 = vmatprep.subr.mxu0 0.0
      %1941 = vmatpush2.msra.mxu0 0.0
      %1942 = vmatprep.mubr.f32.mxu0 0.0
      %1943 = vmatmul.mubr.f32.gmra.mxu0 %v1855
      %v1944 = vpop.f32.mrf.mxu0
      %v1945 = vadd.f32 0.0, %v1944
      %v1946 = vpop.f32.mrf.mxu0
      %1947 = vmatprep.mubr.f32.mxu0 0.0
      %1948 = vmatmul.mubr.f32.gmra.mxu0 %v1858
      %v1949 = vpop.f32.mrf.mxu0
      %v1950 = vadd.f32 0.0, %v1949
      %v1951 = vpop.f32.mrf.mxu0
      %1952 = vmatprep.mubr.f32.mxu0 0.0
      %1953 = vmatmul.mubr.f32.gmra.mxu0 %v1861
      %v1954 = vpop.f32.mrf.mxu0
      %v1955 = vadd.f32 0.0, %v1954
      %v1956 = vpop.f32.mrf.mxu0
      %1957 = vmatprep.mubr.f32.mxu0 0.0
      %1958 = vmatmul.mubr.f32.gmra.mxu0 %v1864
      %v1959 = vpop.f32.mrf.mxu0
      %v1960 = vadd.f32 0.0, %v1959
      %v1961 = vpop.f32.mrf.mxu0
      %1962 = vmatprep.mubr.f32.mxu0 0.0
      %1963 = vmatmul.mubr.f32.gmra.mxu0 %v1867
      %v1964 = vpop.f32.mrf.mxu0
      %v1965 = vadd.f32 0.0, %v1964
      %v1966 = vpop.f32.mrf.mxu0
      %1967 = vmatprep.mubr.f32.mxu0 0.0
      %1968 = vmatmul.mubr.f32.gmra.mxu0 %v1870
      %v1969 = vpop.f32.mrf.mxu0
      %v1970 = vadd.f32 0.0, %v1969
      %v1971 = vpop.f32.mrf.mxu0
      %1972 = vmatprep.mubr.f32.mxu0 0.0
      %1973 = vmatmul.mubr.f32.gmra.mxu0 %v1873
      %v1974 = vpop.f32.mrf.mxu0
      %v1975 = vadd.f32 0.0, %v1974
      %v1976 = vpop.f32.mrf.mxu0
      %1977 = vmatprep.mubr.f32.mxu0 0.0
      %1978 = vmatmul.mubr.f32.gmra.mxu0 %v1876
      %v1979 = vpop.f32.mrf.mxu0
      %v1980 = vadd.f32 0.0, %v1979
      %v1981 = vpop.f32.mrf.mxu0
      %1982 = vdwg.mxu0
      %v1983 = vsub.f32 %v1808, %v1945
      %v1984 = vsub.f32 %v1813, %v1950
      %v1985 = vsub.f32 %v1818, %v1955
      %v1986 = vsub.f32 %v1823, %v1960
      %v1987 = vsub.f32 %v1828, %v1965
      %v1988 = vsub.f32 %v1833, %v1970
      %v1989 = vsub.f32 %v1838, %v1975
      %v1990 = vsub.f32 %v1843, %v1980
      %v1991 = vadd.f32 %v836, %v1983
      %v1992 = vadd.f32 %v837, %v1984
      %v1993 = vadd.f32 %v838, %v1985
      %v1994 = vadd.f32 %v839, %v1986
      %v1995 = vadd.f32 %v840, %v1987
      %v1996 = vadd.f32 %v841, %v1988
      %v1997 = vadd.f32 %v842, %v1989
      %v1998 = vadd.f32 %v843, %v1990
      %1999 = vst.msk [vmem:[%s686] sm:$0xff] %vm849, %v1991
      %2000 = vst.msk [vmem:[%s686 + $0x8] sm:$0xff] %vm849, %v1992
      %2001 = vst.msk [vmem:[%s686 + $0x10] sm:$0xff] %vm849, %v1993
      %2002 = vst.msk [vmem:[%s686 + $0x18] sm:$0xff] %vm849, %v1994
      %2003 = vst.msk [vmem:[%s686 + $0x20] sm:$0xff] %vm849, %v1995
      %2004 = vst.msk [vmem:[%s686 + $0x28] sm:$0xff] %vm849, %v1996
      %2005 = vst.msk [vmem:[%s686 + $0x30] sm:$0xff] %vm849, %v1997
      %2006 = vst.msk [vmem:[%s686 + $0x38] sm:$0xff] %vm849, %v1998
      %p2007 = scmp.lt.s32.totalorder %s32, 1
      %s2008 = scalar_select %p2007, %s32, 1
      %s2009 = smul.addr %s2008, 8
      %s2010 = smul.addr %s2009, 8
      %s2011 = scalar_lea.vmem %s17, %s2010
      // Predicated region
      $region93: #{_lambda_.6} parent=87 // pred_check
        %p2012 = pneg %p465
      $region94: #{_lambda_.6} parent=87 // pred_check_branch
        %2014 = sbr.rel (%p2012) target = $region96
      $region95: #{_lambda_.6} parent=87 // pred_region
        _
      $region96: #{_lambda_.6} parent=87 // pred_fallthru
        _
    $region88: #{_lambda_.6} parent=5 // pred_fallthru
      _
    %p2015 = scmp.le.s32.totalorder 2, %s23
    // Predicated region
    $region97: #{_lambda_.6} parent=5 // pred_check
      %p2016 = pneg %p2015
    $region98: #{_lambda_.6} parent=5 // pred_check_branch
      %2018 = sbr.rel (%p2016) target = $region100
    $region99: #{_lambda_.6} parent=5 // pred_region
      %s2019 = ssub.s32 %s23, 2
      // Predicated region
      $region101: #{_lambda_.6} parent=99 // pred_check
        %p2020 = pneg %p471
      $region102: #{_lambda_.6} parent=99 // pred_check_branch
        %2022 = sbr.rel (%p2020) target = $region104
      $region103: #{_lambda_.6} parent=99 // pred_region
        %p2023 = scmp.lt.s32.totalorder %s34, 1
        %s2024 = scalar_select %p2023, %s34, 1
        %s2025 = smul.addr %s2024, 8
        %s2026 = smul.addr %s2025, 8
        %s2027 = scalar_lea.vmem %s17, %s2026
      $region104: #{_lambda_.6} parent=99 // pred_fallthru
        _
    $region100: #{_lambda_.6} parent=5 // pred_fallthru
      _
  $region6: #{_lambda_.6} parent=0 // loop_footer
    %s27 = sadd.s32 1, %s23
  $region7: #{_lambda_.6} parent=0 // loop_footer_branch
    %22 = sbr.rel target = $region3
  $region8: #{_lambda_.6} parent=0 // loop_exit
    _

// kernel: _lambda_.8
$region0: #{_lambda_.8}
  #allocation0 [shape = 'u32[]', space=smem, size = 0x4, offset = 0x4, fixed_abs, tag = 'smem constant byte address 0x4 - core index']
  #allocation1 [shape = 'u32[144,128]{1,0:T(1,128)}', space=vmem, size = 0x12000, scoped, tag = 'internal scratch']
  %s0 = inlined_call_operand.vmem [shape: f32[2,4,512], index: 0, kind: input, shape index: {}]
  %s1 = inlined_call_operand.vmem [shape: f32[512,128], index: 1, kind: input, shape index: {}]
  %s2 = inlined_call_operand.vmem [shape: f32[1,128], index: 2, kind: input, shape index: {}]
  %s3 = inlined_call_operand.vmem [shape: f32[2,1,128], index: 3, kind: input, shape index: {}]
  %s4 = inlined_call_operand.vmem [shape: f32[2,1,128], index: 4, kind: input, shape index: {}]
  %s5 = inlined_call_operand.vmem [shape: f32[2,1,128], index: 5, kind: input, shape index: {}]
  %s6 = inlined_call_operand.vmem [shape: f32[2,1,128], index: 6, kind: input, shape index: {}]
  %s7 = inlined_call_operand.vmem [shape: f32[2,1,128], index: 7, kind: input, shape index: {}]
  %s8 = inlined_call_operand.vmem [shape: f32[2,1,128], index: 8, kind: input, shape index: {}]
  %s9 = inlined_call_operand.vmem [shape: f32[2,1,1], index: 9, kind: input, shape index: {}]
  %s10 = inlined_call_operand.vmem [shape: f32[2,1,1], index: 10, kind: input, shape index: {}]
  %s11 = inlined_call_operand.vmem [shape: f32[2,1,1], index: 11, kind: input, shape index: {}]
  %s12 = inlined_call_operand.vmem [shape: f32[4,4], index: 12, kind: input, shape index: {}]
  %s13 = inlined_call_operand.vmem [shape: f32[2,4], index: 13, kind: input, shape index: {}]
  %s14 = inlined_call_operand.vmem [shape: f32[2,4], index: 14, kind: input, shape index: {}]
  %s15 = inlined_call_operand.vmem [shape: f32[4,2], index: 15, kind: input, shape index: {}]
  %s16 = inlined_call_operand.vmem [shape: f32[4,2], index: 16, kind: input, shape index: {}]
  %s17 = inlined_call_operand.vmem [shape: f32[2,4,128], index: 17, kind: output, shape index: {}]
  %s18 = sld [smem:[#allocation0]]
  $region105: #{_lambda_.8} parent=0
    _
  %s20 = ssub.s32 1, %s18
  %s21 = scalar_select 0, %s20, %s18
  loop: start=0, step=1, limit=6
  $region2: #{_lambda_.8} parent=0 // loop_pre_header
    _
  $region3: #{_lambda_.8} parent=0 // loop_header
    %s23 = sphi 0, %s27
    %p24 = scmp.ge.s32.totalorder %s23, 6
    %s30 = sphi 0, %s42
    %s31 = sphi 0, %s38
    %s32 = sphi 0, %s30
    %s33 = sphi 0, %s31
    %s34 = sphi 0, %s32
    %s35 = sphi 0, %s33
    %s45 = sphi 0, %s47
    %s48 = sphi 0, %s45
    %s49 = sphi 0, %s48
    %s65 = sphi 0, %s49
    %s69 = sphi 0, %s69
    %s71 = sphi 0, %s69
    %s72 = sphi 0, %s71
    %s86 = sphi 0, %s72
    %s90 = sphi 0, %s90
    %s92 = sphi 0, %s90
    %s93 = sphi 0, %s92
    %s107 = sphi 0, %s93
    %s113 = sphi 0, %s115
    %s116 = sphi 0, %s113
    %s117 = sphi 0, %s116
    %s133 = sphi 0, %s117
    %s139 = sphi 0, %s141
    %s142 = sphi 0, %s139
    %s143 = sphi 0, %s142
    %s159 = sphi 0, %s143
    %s165 = sphi 0, %s167
    %s168 = sphi 0, %s165
    %s169 = sphi 0, %s168
    %s185 = sphi 0, %s169
    %s191 = sphi 0, %s193
    %s194 = sphi 0, %s191
    %s195 = sphi 0, %s194
    %s211 = sphi 0, %s195
    %s217 = sphi 0, %s219
    %s220 = sphi 0, %s217
    %s221 = sphi 0, %s220
    %s237 = sphi 0, %s221
    %s243 = sphi 0, %s245
    %s246 = sphi 0, %s243
    %s247 = sphi 0, %s246
    %s263 = sphi 0, %s247
    %s269 = sphi 0, %s271
    %s272 = sphi 0, %s269
    %s273 = sphi 0, %s272
    %s289 = sphi 0, %s273
    %s295 = sphi 0, %s297
    %s298 = sphi 0, %s295
    %s299 = sphi 0, %s298
    %s315 = sphi 0, %s299
    %s321 = sphi 0, %s323
    %s324 = sphi 0, %s321
    %s325 = sphi 0, %s324
    %s341 = sphi 0, %s325
    %s345 = sphi 0, %s345
    %s347 = sphi 0, %s345
    %s348 = sphi 0, %s347
    %s362 = sphi 0, %s348
    %s366 = sphi 0, %s366
    %s368 = sphi 0, %s366
    %s369 = sphi 0, %s368
    %s383 = sphi 0, %s369
    %s387 = sphi 0, %s387
    %s389 = sphi 0, %s387
    %s390 = sphi 0, %s389
    %s404 = sphi 0, %s390
    %s408 = sphi 0, %s408
    %s410 = sphi 0, %s408
    %s411 = sphi 0, %s410
    %s425 = sphi 0, %s411
    %s429 = sphi 0, %s429
    %s431 = sphi 0, %s429
    %s432 = sphi 0, %s431
    %s446 = sphi 0, %s432
    %s452 = sphi 0, %s454
    %s455 = sphi 0, %s452
    %s456 = sphi 0, %s455
    %s472 = sphi 0, %s456
  $region4: #{_lambda_.8} parent=0 // loop_header_branch
    %26 = sbr.rel (%p24) target = $region8
  $region5: #{_lambda_.8} parent=0 // loop_body
    %s28 = ssub.s32 %s23, 1
    %s29 = ssub.s32 %s23, 2
    %s36 = sadd.s32 1, %s31
    %p37 = scmp.ge.s32.totalorder %s36, 2
    %s38 = scalar_select %p37, 0, %s36
    %s39 = sadd.s32 1, %s30
    %s40 = scalar_select %p37, %s39, %s30
    %p41 = scmp.ge.s32.totalorder %s40, 2
    %s42 = scalar_select %p41, 0, %s40
    %s43 = ssub.s32 %s30, %s42
    %p44 = scmp.eq.s32.totalorder %s43, 0
    %s46 = sadd.s32 %s45, 1
    %s47 = scalar_select %p44, %s45, %s46
    %p50 = pneg %p44
    %p51 = scmp.eq.s32.totalorder %s23, 3
    %p52 = por %p50, %p51
    %p53 = scmp.ne.s32.totalorder %s45, %s48
    %p54 = scmp.eq.s32.totalorder %s23, 0
    %p55 = por %p53, %p54
    %p56 = scmp.ne.s32.totalorder %s45, %s48
    %p57 = scmp.eq.s32.totalorder %s28, 3
    %p58 = por %p56, %p57
    %p59 = scmp.ne.s32.totalorder %s48, %s49
    %p60 = scmp.eq.s32.totalorder %s28, 0
    %p61 = por %p59, %p60
    %p62 = scmp.ne.s32.totalorder %s48, %s49
    %p63 = scmp.eq.s32.totalorder %s29, 3
    %p64 = por %p62, %p63
    %p66 = scmp.ne.s32.totalorder %s49, %s65
    %p67 = scmp.eq.s32.totalorder %s29, 0
    %p68 = por %p66, %p67
    %s70 = sadd.s32 %s69, 1
    %p73 = scmp.eq.s32.totalorder %s23, 3
    %p74 = scmp.ne.s32.totalorder %s69, %s71
    %p75 = scmp.eq.s32.totalorder %s23, 0
    %p76 = por %p74, %p75
    %p77 = scmp.ne.s32.totalorder %s69, %s71
    %p78 = scmp.eq.s32.totalorder %s28, 3
    %p79 = por %p77, %p78
    %p80 = scmp.ne.s32.totalorder %s71, %s72
    %p81 = scmp.eq.s32.totalorder %s28, 0
    %p82 = por %p80, %p81
    %p83 = scmp.ne.s32.totalorder %s71, %s72
    %p84 = scmp.eq.s32.totalorder %s29, 3
    %p85 = por %p83, %p84
    %p87 = scmp.ne.s32.totalorder %s72, %s86
    %p88 = scmp.eq.s32.totalorder %s29, 0
    %p89 = por %p87, %p88
    %s91 = sadd.s32 %s90, 1
    %p94 = scmp.eq.s32.totalorder %s23, 3
    %p95 = scmp.ne.s32.totalorder %s90, %s92
    %p96 = scmp.eq.s32.totalorder %s23, 0
    %p97 = por %p95, %p96
    %p98 = scmp.ne.s32.totalorder %s90, %s92
    %p99 = scmp.eq.s32.totalorder %s28, 3
    %p100 = por %p98, %p99
    %p101 = scmp.ne.s32.totalorder %s92, %s93
    %p102 = scmp.eq.s32.totalorder %s28, 0
    %p103 = por %p101, %p102
    %p104 = scmp.ne.s32.totalorder %s92, %s93
    %p105 = scmp.eq.s32.totalorder %s29, 3
    %p106 = por %p104, %p105
    %p108 = scmp.ne.s32.totalorder %s93, %s107
    %p109 = scmp.eq.s32.totalorder %s29, 0
    %p110 = por %p108, %p109
    %s111 = ssub.s32 %s31, %s38
    %p112 = scmp.eq.s32.totalorder %s111, 0
    %s114 = sadd.s32 %s113, 1
    %s115 = scalar_select %p112, %s113, %s114
    %p118 = pneg %p112
    %p119 = scmp.eq.s32.totalorder %s23, 3
    %p120 = por %p118, %p119
    %p121 = scmp.ne.s32.totalorder %s113, %s116
    %p122 = scmp.eq.s32.totalorder %s23, 0
    %p123 = por %p121, %p122
    %p124 = scmp.ne.s32.totalorder %s113, %s116
    %p125 = scmp.eq.s32.totalorder %s28, 3
    %p126 = por %p124, %p125
    %p127 = scmp.ne.s32.totalorder %s116, %s117
    %p128 = scmp.eq.s32.totalorder %s28, 0
    %p129 = por %p127, %p128
    %p130 = scmp.ne.s32.totalorder %s116, %s117
    %p131 = scmp.eq.s32.totalorder %s29, 3
    %p132 = por %p130, %p131
    %p134 = scmp.ne.s32.totalorder %s117, %s133
    %p135 = scmp.eq.s32.totalorder %s29, 0
    %p136 = por %p134, %p135
    %s137 = ssub.s32 %s31, %s38
    %p138 = scmp.eq.s32.totalorder %s137, 0
    %s140 = sadd.s32 %s139, 1
    %s141 = scalar_select %p138, %s139, %s140
    %p144 = pneg %p138
    %p145 = scmp.eq.s32.totalorder %s23, 3
    %p146 = por %p144, %p145
    %p147 = scmp.ne.s32.totalorder %s139, %s142
    %p148 = scmp.eq.s32.totalorder %s23, 0
    %p149 = por %p147, %p148
    %p150 = scmp.ne.s32.totalorder %s139, %s142
    %p151 = scmp.eq.s32.totalorder %s28, 3
    %p152 = por %p150, %p151
    %p153 = scmp.ne.s32.totalorder %s142, %s143
    %p154 = scmp.eq.s32.totalorder %s28, 0
    %p155 = por %p153, %p154
    %p156 = scmp.ne.s32.totalorder %s142, %s143
    %p157 = scmp.eq.s32.totalorder %s29, 3
    %p158 = por %p156, %p157
    %p160 = scmp.ne.s32.totalorder %s143, %s159
    %p161 = scmp.eq.s32.totalorder %s29, 0
    %p162 = por %p160, %p161
    %s163 = ssub.s32 %s31, %s38
    %p164 = scmp.eq.s32.totalorder %s163, 0
    %s166 = sadd.s32 %s165, 1
    %s167 = scalar_select %p164, %s165, %s166
    %p170 = pneg %p164
    %p171 = scmp.eq.s32.totalorder %s23, 3
    %p172 = por %p170, %p171
    %p173 = scmp.ne.s32.totalorder %s165, %s168
    %p174 = scmp.eq.s32.totalorder %s23, 0
    %p175 = por %p173, %p174
    %p176 = scmp.ne.s32.totalorder %s165, %s168
    %p177 = scmp.eq.s32.totalorder %s28, 3
    %p178 = por %p176, %p177
    %p179 = scmp.ne.s32.totalorder %s168, %s169
    %p180 = scmp.eq.s32.totalorder %s28, 0
    %p181 = por %p179, %p180
    %p182 = scmp.ne.s32.totalorder %s168, %s169
    %p183 = scmp.eq.s32.totalorder %s29, 3
    %p184 = por %p182, %p183
    %p186 = scmp.ne.s32.totalorder %s169, %s185
    %p187 = scmp.eq.s32.totalorder %s29, 0
    %p188 = por %p186, %p187
    %s189 = ssub.s32 %s31, %s38
    %p190 = scmp.eq.s32.totalorder %s189, 0
    %s192 = sadd.s32 %s191, 1
    %s193 = scalar_select %p190, %s191, %s192
    %p196 = pneg %p190
    %p197 = scmp.eq.s32.totalorder %s23, 3
    %p198 = por %p196, %p197
    %p199 = scmp.ne.s32.totalorder %s191, %s194
    %p200 = scmp.eq.s32.totalorder %s23, 0
    %p201 = por %p199, %p200
    %p202 = scmp.ne.s32.totalorder %s191, %s194
    %p203 = scmp.eq.s32.totalorder %s28, 3
    %p204 = por %p202, %p203
    %p205 = scmp.ne.s32.totalorder %s194, %s195
    %p206 = scmp.eq.s32.totalorder %s28, 0
    %p207 = por %p205, %p206
    %p208 = scmp.ne.s32.totalorder %s194, %s195
    %p209 = scmp.eq.s32.totalorder %s29, 3
    %p210 = por %p208, %p209
    %p212 = scmp.ne.s32.totalorder %s195, %s211
    %p213 = scmp.eq.s32.totalorder %s29, 0
    %p214 = por %p212, %p213
    %s215 = ssub.s32 %s31, %s38
    %p216 = scmp.eq.s32.totalorder %s215, 0
    %s218 = sadd.s32 %s217, 1
    %s219 = scalar_select %p216, %s217, %s218
    %p222 = pneg %p216
    %p223 = scmp.eq.s32.totalorder %s23, 3
    %p224 = por %p222, %p223
    %p225 = scmp.ne.s32.totalorder %s217, %s220
    %p226 = scmp.eq.s32.totalorder %s23, 0
    %p227 = por %p225, %p226
    %p228 = scmp.ne.s32.totalorder %s217, %s220
    %p229 = scmp.eq.s32.totalorder %s28, 3
    %p230 = por %p228, %p229
    %p231 = scmp.ne.s32.totalorder %s220, %s221
    %p232 = scmp.eq.s32.totalorder %s28, 0
    %p233 = por %p231, %p232
    %p234 = scmp.ne.s32.totalorder %s220, %s221
    %p235 = scmp.eq.s32.totalorder %s29, 3
    %p236 = por %p234, %p235
    %p238 = scmp.ne.s32.totalorder %s221, %s237
    %p239 = scmp.eq.s32.totalorder %s29, 0
    %p240 = por %p238, %p239
    %s241 = ssub.s32 %s31, %s38
    %p242 = scmp.eq.s32.totalorder %s241, 0
    %s244 = sadd.s32 %s243, 1
    %s245 = scalar_select %p242, %s243, %s244
    %p248 = pneg %p242
    %p249 = scmp.eq.s32.totalorder %s23, 3
    %p250 = por %p248, %p249
    %p251 = scmp.ne.s32.totalorder %s243, %s246
    %p252 = scmp.eq.s32.totalorder %s23, 0
    %p253 = por %p251, %p252
    %p254 = scmp.ne.s32.totalorder %s243, %s246
    %p255 = scmp.eq.s32.totalorder %s28, 3
    %p256 = por %p254, %p255
    %p257 = scmp.ne.s32.totalorder %s246, %s247
    %p258 = scmp.eq.s32.totalorder %s28, 0
    %p259 = por %p257, %p258
    %p260 = scmp.ne.s32.totalorder %s246, %s247
    %p261 = scmp.eq.s32.totalorder %s29, 3
    %p262 = por %p260, %p261
    %p264 = scmp.ne.s32.totalorder %s247, %s263
    %p265 = scmp.eq.s32.totalorder %s29, 0
    %p266 = por %p264, %p265
    %s267 = ssub.s32 %s31, %s38
    %p268 = scmp.eq.s32.totalorder %s267, 0
    %s270 = sadd.s32 %s269, 1
    %s271 = scalar_select %p268, %s269, %s270
    %p274 = pneg %p268
    %p275 = scmp.eq.s32.totalorder %s23, 3
    %p276 = por %p274, %p275
    %p277 = scmp.ne.s32.totalorder %s269, %s272
    %p278 = scmp.eq.s32.totalorder %s23, 0
    %p279 = por %p277, %p278
    %p280 = scmp.ne.s32.totalorder %s269, %s272
    %p281 = scmp.eq.s32.totalorder %s28, 3
    %p282 = por %p280, %p281
    %p283 = scmp.ne.s32.totalorder %s272, %s273
    %p284 = scmp.eq.s32.totalorder %s28, 0
    %p285 = por %p283, %p284
    %p286 = scmp.ne.s32.totalorder %s272, %s273
    %p287 = scmp.eq.s32.totalorder %s29, 3
    %p288 = por %p286, %p287
    %p290 = scmp.ne.s32.totalorder %s273, %s289
    %p291 = scmp.eq.s32.totalorder %s29, 0
    %p292 = por %p290, %p291
    %s293 = ssub.s32 %s31, %s38
    %p294 = scmp.eq.s32.totalorder %s293, 0
    %s296 = sadd.s32 %s295, 1
    %s297 = scalar_select %p294, %s295, %s296
    %p300 = pneg %p294
    %p301 = scmp.eq.s32.totalorder %s23, 3
    %p302 = por %p300, %p301
    %p303 = scmp.ne.s32.totalorder %s295, %s298
    %p304 = scmp.eq.s32.totalorder %s23, 0
    %p305 = por %p303, %p304
    %p306 = scmp.ne.s32.totalorder %s295, %s298
    %p307 = scmp.eq.s32.totalorder %s28, 3
    %p308 = por %p306, %p307
    %p309 = scmp.ne.s32.totalorder %s298, %s299
    %p310 = scmp.eq.s32.totalorder %s28, 0
    %p311 = por %p309, %p310
    %p312 = scmp.ne.s32.totalorder %s298, %s299
    %p313 = scmp.eq.s32.totalorder %s29, 3
    %p314 = por %p312, %p313
    %p316 = scmp.ne.s32.totalorder %s299, %s315
    %p317 = scmp.eq.s32.totalorder %s29, 0
    %p318 = por %p316, %p317
    %s319 = ssub.s32 %s31, %s38
    %p320 = scmp.eq.s32.totalorder %s319, 0
    %s322 = sadd.s32 %s321, 1
    %s323 = scalar_select %p320, %s321, %s322
    %p326 = pneg %p320
    %p327 = scmp.eq.s32.totalorder %s23, 3
    %p328 = por %p326, %p327
    %p329 = scmp.ne.s32.totalorder %s321, %s324
    %p330 = scmp.eq.s32.totalorder %s23, 0
    %p331 = por %p329, %p330
    %p332 = scmp.ne.s32.totalorder %s321, %s324
    %p333 = scmp.eq.s32.totalorder %s28, 3
    %p334 = por %p332, %p333
    %p335 = scmp.ne.s32.totalorder %s324, %s325
    %p336 = scmp.eq.s32.totalorder %s28, 0
    %p337 = por %p335, %p336
    %p338 = scmp.ne.s32.totalorder %s324, %s325
    %p339 = scmp.eq.s32.totalorder %s29, 3
    %p340 = por %p338, %p339
    %p342 = scmp.ne.s32.totalorder %s325, %s341
    %p343 = scmp.eq.s32.totalorder %s29, 0
    %p344 = por %p342, %p343
    %s346 = sadd.s32 %s345, 1
    %p349 = scmp.eq.s32.totalorder %s23, 3
    %p350 = scmp.ne.s32.totalorder %s345, %s347
    %p351 = scmp.eq.s32.totalorder %s23, 0
    %p352 = por %p350, %p351
    %p353 = scmp.ne.s32.totalorder %s345, %s347
    %p354 = scmp.eq.s32.totalorder %s28, 3
    %p355 = por %p353, %p354
    %p356 = scmp.ne.s32.totalorder %s347, %s348
    %p357 = scmp.eq.s32.totalorder %s28, 0
    %p358 = por %p356, %p357
    %p359 = scmp.ne.s32.totalorder %s347, %s348
    %p360 = scmp.eq.s32.totalorder %s29, 3
    %p361 = por %p359, %p360
    %p363 = scmp.ne.s32.totalorder %s348, %s362
    %p364 = scmp.eq.s32.totalorder %s29, 0
    %p365 = por %p363, %p364
    %s367 = sadd.s32 %s366, 1
    %p370 = scmp.eq.s32.totalorder %s23, 3
    %p371 = scmp.ne.s32.totalorder %s366, %s368
    %p372 = scmp.eq.s32.totalorder %s23, 0
    %p373 = por %p371, %p372
    %p374 = scmp.ne.s32.totalorder %s366, %s368
    %p375 = scmp.eq.s32.totalorder %s28, 3
    %p376 = por %p374, %p375
    %p377 = scmp.ne.s32.totalorder %s368, %s369
    %p378 = scmp.eq.s32.totalorder %s28, 0
    %p379 = por %p377, %p378
    %p380 = scmp.ne.s32.totalorder %s368, %s369
    %p381 = scmp.eq.s32.totalorder %s29, 3
    %p382 = por %p380, %p381
    %p384 = scmp.ne.s32.totalorder %s369, %s383
    %p385 = scmp.eq.s32.totalorder %s29, 0
    %p386 = por %p384, %p385
    %s388 = sadd.s32 %s387, 1
    %p391 = scmp.eq.s32.totalorder %s23, 3
    %p392 = scmp.ne.s32.totalorder %s387, %s389
    %p393 = scmp.eq.s32.totalorder %s23, 0
    %p394 = por %p392, %p393
    %p395 = scmp.ne.s32.totalorder %s387, %s389
    %p396 = scmp.eq.s32.totalorder %s28, 3
    %p397 = por %p395, %p396
    %p398 = scmp.ne.s32.totalorder %s389, %s390
    %p399 = scmp.eq.s32.totalorder %s28, 0
    %p400 = por %p398, %p399
    %p401 = scmp.ne.s32.totalorder %s389, %s390
    %p402 = scmp.eq.s32.totalorder %s29, 3
    %p403 = por %p401, %p402
    %p405 = scmp.ne.s32.totalorder %s390, %s404
    %p406 = scmp.eq.s32.totalorder %s29, 0
    %p407 = por %p405, %p406
    %s409 = sadd.s32 %s408, 1
    %p412 = scmp.eq.s32.totalorder %s23, 3
    %p413 = scmp.ne.s32.totalorder %s408, %s410
    %p414 = scmp.eq.s32.totalorder %s23, 0
    %p415 = por %p413, %p414
    %p416 = scmp.ne.s32.totalorder %s408, %s410
    %p417 = scmp.eq.s32.totalorder %s28, 3
    %p418 = por %p416, %p417
    %p419 = scmp.ne.s32.totalorder %s410, %s411
    %p420 = scmp.eq.s32.totalorder %s28, 0
    %p421 = por %p419, %p420
    %p422 = scmp.ne.s32.totalorder %s410, %s411
    %p423 = scmp.eq.s32.totalorder %s29, 3
    %p424 = por %p422, %p423
    %p426 = scmp.ne.s32.totalorder %s411, %s425
    %p427 = scmp.eq.s32.totalorder %s29, 0
    %p428 = por %p426, %p427
    %s430 = sadd.s32 %s429, 1
    %p433 = scmp.eq.s32.totalorder %s23, 3
    %p434 = scmp.ne.s32.totalorder %s429, %s431
    %p435 = scmp.eq.s32.totalorder %s23, 0
    %p436 = por %p434, %p435
    %p437 = scmp.ne.s32.totalorder %s429, %s431
    %p438 = scmp.eq.s32.totalorder %s28, 3
    %p439 = por %p437, %p438
    %p440 = scmp.ne.s32.totalorder %s431, %s432
    %p441 = scmp.eq.s32.totalorder %s28, 0
    %p442 = por %p440, %p441
    %p443 = scmp.ne.s32.totalorder %s431, %s432
    %p444 = scmp.eq.s32.totalorder %s29, 3
    %p445 = por %p443, %p444
    %p447 = scmp.ne.s32.totalorder %s432, %s446
    %p448 = scmp.eq.s32.totalorder %s29, 0
    %p449 = por %p447, %p448
    %s450 = ssub.s32 %s30, %s42
    %p451 = scmp.eq.s32.totalorder %s450, 0
    %s453 = sadd.s32 %s452, 1
    %s454 = scalar_select %p451, %s452, %s453
    %p457 = pneg %p451
    %p458 = scmp.eq.s32.totalorder %s23, 3
    %p459 = por %p457, %p458
    %p460 = scmp.ne.s32.totalorder %s452, %s455
    %p461 = scmp.eq.s32.totalorder %s23, 0
    %p462 = por %p460, %p461
    %p463 = scmp.ne.s32.totalorder %s452, %s455
    %p464 = scmp.eq.s32.totalorder %s28, 3
    %p465 = por %p463, %p464
    %p466 = scmp.ne.s32.totalorder %s455, %s456
    %p467 = scmp.eq.s32.totalorder %s28, 0
    %p468 = por %p466, %p467
    %p469 = scmp.ne.s32.totalorder %s455, %s456
    %p470 = scmp.eq.s32.totalorder %s29, 3
    %p471 = por %p469, %p470
    %p473 = scmp.ne.s32.totalorder %s456, %s472
    %p474 = scmp.eq.s32.totalorder %s29, 0
    %p475 = por %p473, %p474
    %p476 = scmp.le.s32.totalorder 1, %s23
    %p477 = scmp.lt.s32.totalorder %s23, 5
    %p478 = pnand %p476, %p477
    %p479 = pneg %p478
    // Predicated region
    $region9: #{_lambda_.8} parent=5 // pred_check
      _
    $region10: #{_lambda_.8} parent=5 // pred_check_branch
      %481 = sbr.rel (%p478) target = $region12
    $region11: #{_lambda_.8} parent=5 // pred_region
      %s482 = ssub.s32 %s23, 1
      // Predicated region
      $region13: #{_lambda_.8} parent=11 // pred_check
        %p483 = pneg %p82
      $region14: #{_lambda_.8} parent=11 // pred_check_branch
        %485 = sbr.rel (%p483) target = $region16
      $region15: #{_lambda_.8} parent=11 // pred_region
        _
      $region16: #{_lambda_.8} parent=11 // pred_fallthru
        _
      // Predicated region
      $region17: #{_lambda_.8} parent=11 // pred_check
        %p486 = pneg %p103
      $region18: #{_lambda_.8} parent=11 // pred_check_branch
        %488 = sbr.rel (%p486) target = $region20
      $region19: #{_lambda_.8} parent=11 // pred_region
        _
      $region20: #{_lambda_.8} parent=11 // pred_fallthru
        _
      // Predicated region
      $region21: #{_lambda_.8} parent=11 // pred_check
        %p489 = pneg %p358
      $region22: #{_lambda_.8} parent=11 // pred_check_branch
        %491 = sbr.rel (%p489) target = $region24
      $region23: #{_lambda_.8} parent=11 // pred_region
        _
      $region24: #{_lambda_.8} parent=11 // pred_fallthru
        _
      // Predicated region
      $region25: #{_lambda_.8} parent=11 // pred_check
        %p492 = pneg %p379
      $region26: #{_lambda_.8} parent=11 // pred_check_branch
        %494 = sbr.rel (%p492) target = $region28
      $region27: #{_lambda_.8} parent=11 // pred_region
        _
      $region28: #{_lambda_.8} parent=11 // pred_fallthru
        _
      // Predicated region
      $region29: #{_lambda_.8} parent=11 // pred_check
        %p495 = pneg %p400
      $region30: #{_lambda_.8} parent=11 // pred_check_branch
        %497 = sbr.rel (%p495) target = $region32
      $region31: #{_lambda_.8} parent=11 // pred_region
        _
      $region32: #{_lambda_.8} parent=11 // pred_fallthru
        _
      // Predicated region
      $region33: #{_lambda_.8} parent=11 // pred_check
        %p498 = pneg %p421
      $region34: #{_lambda_.8} parent=11 // pred_check_branch
        %500 = sbr.rel (%p498) target = $region36
      $region35: #{_lambda_.8} parent=11 // pred_region
        _
      $region36: #{_lambda_.8} parent=11 // pred_fallthru
        _
      // Predicated region
      $region37: #{_lambda_.8} parent=11 // pred_check
        %p501 = pneg %p442
      $region38: #{_lambda_.8} parent=11 // pred_check_branch
        %503 = sbr.rel (%p501) target = $region40
      $region39: #{_lambda_.8} parent=11 // pred_region
        _
      $region40: #{_lambda_.8} parent=11 // pred_fallthru
        _
    $region12: #{_lambda_.8} parent=5 // pred_fallthru
      _
    %p504 = scmp.lt.s32.totalorder %s23, 4
    // Predicated region
    $region41: #{_lambda_.8} parent=5 // pred_check
      %p505 = pneg %p504
    $region42: #{_lambda_.8} parent=5 // pred_check_branch
      %507 = sbr.rel (%p505) target = $region44
    $region43: #{_lambda_.8} parent=5 // pred_region
      // Predicated region
      $region45: #{_lambda_.8} parent=43 // pred_check
        %p508 = pneg %p55
      $region46: #{_lambda_.8} parent=43 // pred_check_branch
        %510 = sbr.rel (%p508) target = $region48
      $region47: #{_lambda_.8} parent=43 // pred_region
        %p511 = scmp.lt.s32.totalorder %s30, 1
        %s512 = scalar_select %p511, %s30, 1
        %s513 = smul.addr %s512, 4
        %s514 = smul.addr %s513, 4
        %s515 = scalar_lea.vmem %s0, %s514
      $region48: #{_lambda_.8} parent=43 // pred_fallthru
        _
      // Predicated region
      $region49: #{_lambda_.8} parent=43 // pred_check
        %p516 = pneg %p123
      $region50: #{_lambda_.8} parent=43 // pred_check_branch
        %518 = sbr.rel (%p516) target = $region52
      $region51: #{_lambda_.8} parent=43 // pred_region
        %p519 = scmp.lt.s32.totalorder %s31, 1
        %s520 = scalar_select %p519, %s31, 1
        %s521 = scalar_lea.vmem %s3, %s520
      $region52: #{_lambda_.8} parent=43 // pred_fallthru
        _
      // Predicated region
      $region53: #{_lambda_.8} parent=43 // pred_check
        %p522 = pneg %p149
      $region54: #{_lambda_.8} parent=43 // pred_check_branch
        %524 = sbr.rel (%p522) target = $region56
      $region55: #{_lambda_.8} parent=43 // pred_region
        %p525 = scmp.lt.s32.totalorder %s31, 1
        %s526 = scalar_select %p525, %s31, 1
        %s527 = scalar_lea.vmem %s4, %s526
      $region56: #{_lambda_.8} parent=43 // pred_fallthru
        _
      // Predicated region
      $region57: #{_lambda_.8} parent=43 // pred_check
        %p528 = pneg %p175
      $region58: #{_lambda_.8} parent=43 // pred_check_branch
        %530 = sbr.rel (%p528) target = $region60
      $region59: #{_lambda_.8} parent=43 // pred_region
        %p531 = scmp.lt.s32.totalorder %s31, 1
        %s532 = scalar_select %p531, %s31, 1
        %s533 = scalar_lea.vmem %s5, %s532
      $region60: #{_lambda_.8} parent=43 // pred_fallthru
        _
      // Predicated region
      $region61: #{_lambda_.8} parent=43 // pred_check
        %p534 = pneg %p201
      $region62: #{_lambda_.8} parent=43 // pred_check_branch
        %536 = sbr.rel (%p534) target = $region64
      $region63: #{_lambda_.8} parent=43 // pred_region
        %p537 = scmp.lt.s32.totalorder %s31, 1
        %s538 = scalar_select %p537, %s31, 1
        %s539 = scalar_lea.vmem %s6, %s538
      $region64: #{_lambda_.8} parent=43 // pred_fallthru
        _
      // Predicated region
      $region65: #{_lambda_.8} parent=43 // pred_check
        %p540 = pneg %p227
      $region66: #{_lambda_.8} parent=43 // pred_check_branch
        %542 = sbr.rel (%p540) target = $region68
      $region67: #{_lambda_.8} parent=43 // pred_region
        %p543 = scmp.lt.s32.totalorder %s31, 1
        %s544 = scalar_select %p543, %s31, 1
        %s545 = scalar_lea.vmem %s7, %s544
      $region68: #{_lambda_.8} parent=43 // pred_fallthru
        _
      // Predicated region
      $region69: #{_lambda_.8} parent=43 // pred_check
        %p546 = pneg %p253
      $region70: #{_lambda_.8} parent=43 // pred_check_branch
        %548 = sbr.rel (%p546) target = $region72
      $region71: #{_lambda_.8} parent=43 // pred_region
        %p549 = scmp.lt.s32.totalorder %s31, 1
        %s550 = scalar_select %p549, %s31, 1
        %s551 = scalar_lea.vmem %s8, %s550
      $region72: #{_lambda_.8} parent=43 // pred_fallthru
        _
      // Predicated region
      $region73: #{_lambda_.8} parent=43 // pred_check
        %p552 = pneg %p279
      $region74: #{_lambda_.8} parent=43 // pred_check_branch
        %554 = sbr.rel (%p552) target = $region76
      $region75: #{_lambda_.8} parent=43 // pred_region
        %p555 = scmp.lt.s32.totalorder %s31, 1
        %s556 = scalar_select %p555, %s31, 1
        %s557 = scalar_lea.vmem %s9, %s556
      $region76: #{_lambda_.8} parent=43 // pred_fallthru
        _
      // Predicated region
      $region77: #{_lambda_.8} parent=43 // pred_check
        %p558 = pneg %p305
      $region78: #{_lambda_.8} parent=43 // pred_check_branch
        %560 = sbr.rel (%p558) target = $region80
      $region79: #{_lambda_.8} parent=43 // pred_region
        %p561 = scmp.lt.s32.totalorder %s31, 1
        %s562 = scalar_select %p561, %s31, 1
        %s563 = scalar_lea.vmem %s10, %s562
      $region80: #{_lambda_.8} parent=43 // pred_fallthru
        _
      // Predicated region
      $region81: #{_lambda_.8} parent=43 // pred_check
        %p564 = pneg %p331
      $region82: #{_lambda_.8} parent=43 // pred_check_branch
        %566 = sbr.rel (%p564) target = $region84
      $region83: #{_lambda_.8} parent=43 // pred_region
        %p567 = scmp.lt.s32.totalorder %s31, 1
        %s568 = scalar_select %p567, %s31, 1
        %s569 = scalar_lea.vmem %s11, %s568
      $region84: #{_lambda_.8} parent=43 // pred_fallthru
        _
    $region44: #{_lambda_.8} parent=5 // pred_fallthru
      _
    %p570 = scmp.le.s32.totalorder 1, %s23
    %p571 = scmp.lt.s32.totalorder %s23, 5
    %p572 = pnand %p570, %p571
    %p573 = pneg %p572
    // Predicated region
    $region85: #{_lambda_.8} parent=5 // pred_check
      _
    $region86: #{_lambda_.8} parent=5 // pred_check_branch
      %575 = sbr.rel (%p572) target = $region88
    $region87: #{_lambda_.8} parent=5 // pred_region
      %s576 = ssub.s32 %s23, 1
      %p577 = scmp.lt.s32.totalorder %s32, 1
      %s578 = scalar_select %p577, %s32, 1
      %s579 = smul.addr %s578, 4
      %s580 = smul.addr %s579, 4
      %s581 = scalar_lea.vmem %s0, %s580
      %p582 = pneg %p61
      %p583 = pneg %p58
      %p584 = pneg %p82
      %p585 = pneg %p79
      %p586 = pneg %p103
      %p587 = pneg %p100
      %p588 = scmp.lt.s32.totalorder %s33, 1
      %s589 = scalar_select %p588, %s33, 1
      %s590 = scalar_lea.vmem %s3, %s589
      %p591 = pneg %p129
      %p592 = pneg %p126
      %p593 = scmp.lt.s32.totalorder %s33, 1
      %s594 = scalar_select %p593, %s33, 1
      %s595 = scalar_lea.vmem %s4, %s594
      %p596 = pneg %p155
      %p597 = pneg %p152
      %p598 = scmp.lt.s32.totalorder %s33, 1
      %s599 = scalar_select %p598, %s33, 1
      %s600 = scalar_lea.vmem %s5, %s599
      %p601 = pneg %p181
      %p602 = pneg %p178
      %p603 = scmp.lt.s32.totalorder %s33, 1
      %s604 = scalar_select %p603, %s33, 1
      %s605 = scalar_lea.vmem %s6, %s604
      %p606 = pneg %p207
      %p607 = pneg %p204
      %p608 = scmp.lt.s32.totalorder %s33, 1
      %s609 = scalar_select %p608, %s33, 1
      %s610 = scalar_lea.vmem %s7, %s609
      %p611 = pneg %p233
      %p612 = pneg %p230
      %p613 = scmp.lt.s32.totalorder %s33, 1
      %s614 = scalar_select %p613, %s33, 1
      %s615 = scalar_lea.vmem %s8, %s614
      %p616 = pneg %p259
      %p617 = pneg %p256
      %p618 = scmp.lt.s32.totalorder %s33, 1
      %s619 = scalar_select %p618, %s33, 1
      %s620 = scalar_lea.vmem %s9, %s619
      %p621 = pneg %p285
      %p622 = pneg %p282
      %p623 = scmp.lt.s32.totalorder %s33, 1
      %s624 = scalar_select %p623, %s33, 1
      %s625 = scalar_lea.vmem %s10, %s624
      %p626 = pneg %p311
      %p627 = pneg %p308
      %p628 = scmp.lt.s32.totalorder %s33, 1
      %s629 = scalar_select %p628, %s33, 1
      %s630 = scalar_lea.vmem %s11, %s629
      %p631 = pneg %p337
      %p632 = pneg %p334
      %p633 = pneg %p358
      %p634 = pneg %p355
      %p635 = pneg %p379
      %p636 = pneg %p376
      %p637 = pneg %p400
      %p638 = pneg %p397
      %p639 = pneg %p421
      %p640 = pneg %p418
      %p641 = pneg %p442
      %p642 = pneg %p439
      %p643 = pneg %p468
      %p644 = pneg %p465
      %p645 = scmp.lt.s32.totalorder %s32, 1
      %s646 = scalar_select %p645, %s32, 1
      %s647 = smul.addr %s646, 4
      %s648 = scalar_lea.vmem %s17, %s647
      %p649 = scmp.lt.s32.totalorder %s32, 1
      %s650 = scalar_select %p649, %s32, 1
      %s651 = smul.addr %s650, 4
      %s652 = smul.addr %s651, 4
      %s653 = scalar_lea.vmem %s0, %s652
      %p654 = scmp.lt.s32.totalorder %s33, 1
      %s655 = scalar_select %p654, %s33, 1
      %s656 = scalar_lea.vmem %s3, %s655
      %p657 = scmp.lt.s32.totalorder %s33, 1
      %s658 = scalar_select %p657, %s33, 1
      %s659 = scalar_lea.vmem %s4, %s658
      %p660 = scmp.lt.s32.totalorder %s33, 1
      %s661 = scalar_select %p660, %s33, 1
      %s662 = scalar_lea.vmem %s5, %s661
      %p663 = scmp.lt.s32.totalorder %s33, 1
      %s664 = scalar_select %p663, %s33, 1
      %s665 = scalar_lea.vmem %s6, %s664
      %p666 = scmp.lt.s32.totalorder %s33, 1
      %s667 = scalar_select %p666, %s33, 1
      %s668 = scalar_lea.vmem %s7, %s667
      %p669 = scmp.lt.s32.totalorder %s33, 1
      %s670 = scalar_select %p669, %s33, 1
      %s671 = scalar_lea.vmem %s8, %s670
      %p672 = scmp.lt.s32.totalorder %s33, 1
      %s673 = scalar_select %p672, %s33, 1
      %s674 = scalar_lea.vmem %s9, %s673
      %p675 = scmp.lt.s32.totalorder %s33, 1
      %s676 = scalar_select %p675, %s33, 1
      %s677 = scalar_lea.vmem %s10, %s676
      %p678 = scmp.lt.s32.totalorder %s33, 1
      %s679 = scalar_select %p678, %s33, 1
      %s680 = scalar_lea.vmem %s11, %s679
      %p681 = scmp.lt.s32.totalorder %s32, 1
      %s682 = scalar_select %p681, %s32, 1
      %s683 = smul.addr %s682, 4
      %s684 = scalar_lea.vmem %s17, %s683
      %p685 = scmp.eq.s32.totalorder %s33, 0
      // Predicated region
      $region89: #{_lambda_.8} parent=87 // pred_check
        %p686 = pneg %p685
      $region90: #{_lambda_.8} parent=87 // pred_check_branch
        %688 = sbr.rel (%p686) target = $region92
      $region91: #{_lambda_.8} parent=87 // pred_region
        %v689 = vld [vmem:[%s653] sm:$0xff]
        %v690 = vld [vmem:[%s653 + $0x8] sm:$0xff]
        %v691 = vld [vmem:[%s1] sm:$0xff]
        %v692 = vld [vmem:[%s1 + $0x8] sm:$0xff]
        %v693 = vld [vmem:[%s1 + $0x10] sm:$0xff]
        %v694 = vld [vmem:[%s1 + $0x18] sm:$0xff]
        %v695 = vld [vmem:[%s1 + $0x20] sm:$0xff]
        %v696 = vld [vmem:[%s1 + $0x28] sm:$0xff]
        %v697 = vld [vmem:[%s1 + $0x30] sm:$0xff]
        %v698 = vld [vmem:[%s1 + $0x38] sm:$0xff]
        %v699 = vld [vmem:[%s1 + $0x40] sm:$0xff]
        %v700 = vld [vmem:[%s1 + $0x48] sm:$0xff]
        %v701 = vld [vmem:[%s1 + $0x50] sm:$0xff]
        %v702 = vld [vmem:[%s1 + $0x58] sm:$0xff]
        %v703 = vld [vmem:[%s1 + $0x60] sm:$0xff]
        %v704 = vld [vmem:[%s1 + $0x68] sm:$0xff]
        %v705 = vld [vmem:[%s1 + $0x70] sm:$0xff]
        %v706 = vld [vmem:[%s1 + $0x78] sm:$0xff]
        %v707 = vld [vmem:[%s1 + $0x80] sm:$0xff]
        %v708 = vld [vmem:[%s1 + $0x88] sm:$0xff]
        %v709 = vld [vmem:[%s1 + $0x90] sm:$0xff]
        %v710 = vld [vmem:[%s1 + $0x98] sm:$0xff]
        %v711 = vld [vmem:[%s1 + $0xa0] sm:$0xff]
        %v712 = vld [vmem:[%s1 + $0xa8] sm:$0xff]
        %v713 = vld [vmem:[%s1 + $0xb0] sm:$0xff]
        %v714 = vld [vmem:[%s1 + $0xb8] sm:$0xff]
        %v715 = vld [vmem:[%s1 + $0xc0] sm:$0xff]
        %v716 = vld [vmem:[%s1 + $0xc8] sm:$0xff]
        %v717 = vld [vmem:[%s1 + $0xd0] sm:$0xff]
        %v718 = vld [vmem:[%s1 + $0xd8] sm:$0xff]
        %v719 = vld [vmem:[%s1 + $0xe0] sm:$0xff]
        %v720 = vld [vmem:[%s1 + $0xe8] sm:$0xff]
        %v721 = vld [vmem:[%s1 + $0xf0] sm:$0xff]
        %v722 = vld [vmem:[%s1 + $0xf8] sm:$0xff]
        %v723 = vld [vmem:[%s1 + $0x100] sm:$0xff]
        %v724 = vld [vmem:[%s1 + $0x108] sm:$0xff]
        %v725 = vld [vmem:[%s1 + $0x110] sm:$0xff]
        %v726 = vld [vmem:[%s1 + $0x118] sm:$0xff]
        %v727 = vld [vmem:[%s1 + $0x120] sm:$0xff]
        %v728 = vld [vmem:[%s1 + $0x128] sm:$0xff]
        %v729 = vld [vmem:[%s1 + $0x130] sm:$0xff]
        %v730 = vld [vmem:[%s1 + $0x138] sm:$0xff]
        %v731 = vld [vmem:[%s1 + $0x140] sm:$0xff]
        %v732 = vld [vmem:[%s1 + $0x148] sm:$0xff]
        %v733 = vld [vmem:[%s1 + $0x150] sm:$0xff]
        %v734 = vld [vmem:[%s1 + $0x158] sm:$0xff]
        %v735 = vld [vmem:[%s1 + $0x160] sm:$0xff]
        %v736 = vld [vmem:[%s1 + $0x168] sm:$0xff]
        %v737 = vld [vmem:[%s1 + $0x170] sm:$0xff]
        %v738 = vld [vmem:[%s1 + $0x178] sm:$0xff]
        %v739 = vld [vmem:[%s1 + $0x180] sm:$0xff]
        %v740 = vld [vmem:[%s1 + $0x188] sm:$0xff]
        %v741 = vld [vmem:[%s1 + $0x190] sm:$0xff]
        %v742 = vld [vmem:[%s1 + $0x198] sm:$0xff]
        %v743 = vld [vmem:[%s1 + $0x1a0] sm:$0xff]
        %v744 = vld [vmem:[%s1 + $0x1a8] sm:$0xff]
        %v745 = vld [vmem:[%s1 + $0x1b0] sm:$0xff]
        %v746 = vld [vmem:[%s1 + $0x1b8] sm:$0xff]
        %v747 = vld [vmem:[%s1 + $0x1c0] sm:$0xff]
        %v748 = vld [vmem:[%s1 + $0x1c8] sm:$0xff]
        %v749 = vld [vmem:[%s1 + $0x1d0] sm:$0xff]
        %v750 = vld [vmem:[%s1 + $0x1d8] sm:$0xff]
        %v751 = vld [vmem:[%s1 + $0x1e0] sm:$0xff]
        %v752 = vld [vmem:[%s1 + $0x1e8] sm:$0xff]
        %v753 = vld [vmem:[%s1 + $0x1f0] sm:$0xff]
        %v754 = vld [vmem:[%s1 + $0x1f8] sm:$0xff]
        %v755 = vld [vmem:[%s2] sm:$0x1]
        %v757 = vlaneseq
        %v758 = vshrl.u32 %v757, 7
        %v759 = vsub.s32 0, %v758
        %v760 = vrot.slane %v755, %v759
        %v764 = vcombine.high %v689, %v689
        %v765 = vcombine.high %v690, %v690
        %768 = vmatprep.subr.mxu0 0.0
        %769 = vmatpush1.msra.mxu0 %v706
        %770 = vmatprep.subr.mxu0 0.0
        %771 = vmatpush1.msra.mxu0 %v705
        %772 = vmatprep.subr.mxu0 0.0
        %773 = vmatpush1.msra.mxu0 %v704
        %774 = vmatprep.subr.mxu0 0.0
        %775 = vmatpush1.msra.mxu0 %v703
        %776 = vmatprep.subr.mxu0 0.0
        %777 = vmatpush1.msra.mxu0 %v702
        %778 = vmatprep.subr.mxu0 0.0
        %779 = vmatpush1.msra.mxu0 %v701
        %780 = vmatprep.subr.mxu0 0.0
        %781 = vmatpush1.msra.mxu0 %v700
        %782 = vmatprep.subr.mxu0 0.0
        %783 = vmatpush1.msra.mxu0 %v699
        %784 = vmatprep.subr.mxu0 0.0
        %785 = vmatpush1.msra.mxu0 %v698
        %786 = vmatprep.subr.mxu0 0.0
        %787 = vmatpush1.msra.mxu0 %v697
        %788 = vmatprep.subr.mxu0 0.0
        %789 = vmatpush1.msra.mxu0 %v696
        %790 = vmatprep.subr.mxu0 0.0
        %791 = vmatpush1.msra.mxu0 %v695
        %792 = vmatprep.subr.mxu0 0.0
        %793 = vmatpush1.msra.mxu0 %v694
        %794 = vmatprep.subr.mxu0 0.0
        %795 = vmatpush1.msra.mxu0 %v693
        %796 = vmatprep.subr.mxu0 0.0
        %797 = vmatpush1.msra.mxu0 %v692
        %798 = vmatprep.subr.mxu0 0.0
        %799 = vmatpush1.msra.mxu0 %v691
        %800 = vmatprep.subr.mxu0 0.0
        %801 = vmatpush2.msra.mxu0 %v722
        %802 = vmatprep.subr.mxu0 0.0
        %803 = vmatpush2.msra.mxu0 %v721
        %804 = vmatprep.subr.mxu0 0.0
        %805 = vmatpush2.msra.mxu0 %v720
        %806 = vmatprep.subr.mxu0 0.0
        %807 = vmatpush2.msra.mxu0 %v719
        %808 = vmatprep.subr.mxu0 0.0
        %809 = vmatpush2.msra.mxu0 %v718
        %810 = vmatprep.subr.mxu0 0.0
        %811 = vmatpush2.msra.mxu0 %v717
        %812 = vmatprep.subr.mxu0 0.0
        %813 = vmatpush2.msra.mxu0 %v716
        %814 = vmatprep.subr.mxu0 0.0
        %815 = vmatpush2.msra.mxu0 %v715
        %816 = vmatprep.subr.mxu0 0.0
        %817 = vmatpush2.msra.mxu0 %v714
        %818 = vmatprep.subr.mxu0 0.0
        %819 = vmatpush2.msra.mxu0 %v713
        %820 = vmatprep.subr.mxu0 0.0
        %821 = vmatpush2.msra.mxu0 %v712
        %822 = vmatprep.subr.mxu0 0.0
        %823 = vmatpush2.msra.mxu0 %v711
        %824 = vmatprep.subr.mxu0 0.0
        %825 = vmatpush2.msra.mxu0 %v710
        %826 = vmatprep.subr.mxu0 0.0
        %827 = vmatpush2.msra.mxu0 %v709
        %828 = vmatprep.subr.mxu0 0.0
        %829 = vmatpush2.msra.mxu0 %v708
        %830 = vmatprep.subr.mxu0 0.0
        %831 = vmatpush2.msra.mxu0 %v707
        %832 = vmatprep.mubr.f32.mxu0 %v764
        %833 = vmatmul.mubr.f32.gmra.mxu0 %v689
        %v834 = vpop.f32.mrf.mxu0
        %v835 = vadd.f32 %v760, %v834
        %v836 = vpop.f32.mrf.mxu0
        %837 = vdwg.mxu0
        %838 = vmatprep.subr.mxu0 0.0
        %839 = vmatpush1.msra.mxu0 %v738
        %840 = vmatprep.subr.mxu0 0.0
        %841 = vmatpush1.msra.mxu0 %v737
        %842 = vmatprep.subr.mxu0 0.0
        %843 = vmatpush1.msra.mxu0 %v736
        %844 = vmatprep.subr.mxu0 0.0
        %845 = vmatpush1.msra.mxu0 %v735
        %846 = vmatprep.subr.mxu0 0.0
        %847 = vmatpush1.msra.mxu0 %v734
        %848 = vmatprep.subr.mxu0 0.0
        %849 = vmatpush1.msra.mxu0 %v733
        %850 = vmatprep.subr.mxu0 0.0
        %851 = vmatpush1.msra.mxu0 %v732
        %852 = vmatprep.subr.mxu0 0.0
        %853 = vmatpush1.msra.mxu0 %v731
        %854 = vmatprep.subr.mxu0 0.0
        %855 = vmatpush1.msra.mxu0 %v730
        %856 = vmatprep.subr.mxu0 0.0
        %857 = vmatpush1.msra.mxu0 %v729
        %858 = vmatprep.subr.mxu0 0.0
        %859 = vmatpush1.msra.mxu0 %v728
        %860 = vmatprep.subr.mxu0 0.0
        %861 = vmatpush1.msra.mxu0 %v727
        %862 = vmatprep.subr.mxu0 0.0
        %863 = vmatpush1.msra.mxu0 %v726
        %864 = vmatprep.subr.mxu0 0.0
        %865 = vmatpush1.msra.mxu0 %v725
        %866 = vmatprep.subr.mxu0 0.0
        %867 = vmatpush1.msra.mxu0 %v724
        %868 = vmatprep.subr.mxu0 0.0
        %869 = vmatpush1.msra.mxu0 %v723
        %870 = vmatprep.subr.mxu0 0.0
        %871 = vmatpush2.msra.mxu0 %v754
        %872 = vmatprep.subr.mxu0 0.0
        %873 = vmatpush2.msra.mxu0 %v753
        %874 = vmatprep.subr.mxu0 0.0
        %875 = vmatpush2.msra.mxu0 %v752
        %876 = vmatprep.subr.mxu0 0.0
        %877 = vmatpush2.msra.mxu0 %v751
        %878 = vmatprep.subr.mxu0 0.0
        %879 = vmatpush2.msra.mxu0 %v750
        %880 = vmatprep.subr.mxu0 0.0
        %881 = vmatpush2.msra.mxu0 %v749
        %882 = vmatprep.subr.mxu0 0.0
        %883 = vmatpush2.msra.mxu0 %v748
        %884 = vmatprep.subr.mxu0 0.0
        %885 = vmatpush2.msra.mxu0 %v747
        %886 = vmatprep.subr.mxu0 0.0
        %887 = vmatpush2.msra.mxu0 %v746
        %888 = vmatprep.subr.mxu0 0.0
        %889 = vmatpush2.msra.mxu0 %v745
        %890 = vmatprep.subr.mxu0 0.0
        %891 = vmatpush2.msra.mxu0 %v744
        %892 = vmatprep.subr.mxu0 0.0
        %893 = vmatpush2.msra.mxu0 %v743
        %894 = vmatprep.subr.mxu0 0.0
        %895 = vmatpush2.msra.mxu0 %v742
        %896 = vmatprep.subr.mxu0 0.0
        %897 = vmatpush2.msra.mxu0 %v741
        %898 = vmatprep.subr.mxu0 0.0
        %899 = vmatpush2.msra.mxu0 %v740
        %900 = vmatprep.subr.mxu0 0.0
        %901 = vmatpush2.msra.mxu0 %v739
        %902 = vmatprep.mubr.f32.mxu0 %v765
        %903 = vmatmul.mubr.f32.gmra.mxu0 %v690
        %v904 = vpop.f32.mrf.mxu0
        %v905 = vadd.f32 %v835, %v904
        %v906 = vpop.f32.mrf.mxu0
        %907 = vdwg.mxu0
        %908 = vst [vmem:[%s684] sm:$0xf] %v905
      $region92: #{_lambda_.8} parent=87 // pred_fallthru
        _
      %v909 = vld [vmem:[%s684] sm:$0xf]
      %v910 = vld [vmem:[%s656] sm:$0x1]
      %v911 = vld [vmem:[%s659] sm:$0x1]
      %v912 = vld [vmem:[%s674] sm:$0x1]
      %v913 = vld [vmem:[%s677] sm:$0x1]
      %v914 = vld [vmem:[%s680] sm:$0x1]
      %vm915 = vcmask 1043456
      %v916 = vsel %vm915, %v909, 0.0
      %917 = vadd.xlane.f32.xlu0 %v916
      %v918 = vpop.xlane.xlu0 %917
      %v919 = vrcp.pop 128.0
      %v920 = vmul.f32 %v918, %v919
      %v921 = vsub.f32 %v909, %v920
      %v922 = vmul.f32 %v921, %v921
      %v923 = vsel %vm915, %v922, 0.0
      %924 = vadd.xlane.f32.xlu0 %v923
      %v925 = vpop.xlane.xlu0 %924
      %v926 = vmul.f32 %v925, %v919
      %v927 = vadd.f32 %v926, 1e-05
      %v928 = vrsqrt.pop %v927
      %v929 = vmul.f32 %v921, %v928
      %v931 = vlaneseq
      %v932 = vshrl.u32 %v931, 7
      %v933 = vsub.s32 0, %v932
      %v934 = vrot.slane %v910, %v933
      %v936 = vmul.f32 %v929, %v934
      %v938 = vlaneseq
      %v939 = vshrl.u32 %v938, 7
      %v940 = vsub.s32 0, %v939
      %v941 = vrot.slane %v911, %v940
      %v943 = vadd.f32 %v936, %v941
      %v944 = vld [vmem:[%s12] sm:$0xf]
      %vm945 = vcmask 31744
      %v947 = vsel %vm945, %v944, 0
      %v950 = vsel %vm915, %v943, 0
      %952 = vmatprep.subr.mxu0 0.0
      %953 = vmatpush1.msra.mxu0 0.0
      %954 = vmatprep.subr.mxu0 0.0
      %955 = vmatpush1.msra.mxu0 0.0
      %956 = vmatprep.subr.mxu0 0.0
      %957 = vmatpush1.msra.mxu0 0.0
      %958 = vmatprep.subr.mxu0 0.0
      %959 = vmatpush1.msra.mxu0 0.0
      %960 = vmatprep.subr.mxu0 0.0
      %961 = vmatpush1.msra.mxu0 0.0
      %962 = vmatprep.subr.mxu0 0.0
      %963 = vmatpush1.msra.mxu0 0.0
      %964 = vmatprep.subr.mxu0 0.0
      %965 = vmatpush1.msra.mxu0 0.0
      %966 = vmatprep.subr.mxu0 0.0
      %967 = vmatpush1.msra.mxu0 0.0
      %968 = vmatprep.subr.mxu0 0.0
      %969 = vmatpush1.msra.mxu0 0.0
      %970 = vmatprep.subr.mxu0 0.0
      %971 = vmatpush1.msra.mxu0 0.0
      %972 = vmatprep.subr.mxu0 0.0
      %973 = vmatpush1.msra.mxu0 0.0
      %974 = vmatprep.subr.mxu0 0.0
      %975 = vmatpush1.msra.mxu0 0.0
      %976 = vmatprep.subr.mxu0 0.0
      %977 = vmatpush1.msra.mxu0 0.0
      %978 = vmatprep.subr.mxu0 0.0
      %979 = vmatpush1.msra.mxu0 0.0
      %980 = vmatprep.subr.mxu0 0.0
      %981 = vmatpush1.msra.mxu0 0.0
      %982 = vmatprep.subr.mxu0 0.0
      %983 = vmatpush1.msra.mxu0 %v950
      %984 = vmatprep.subr.mxu0 0.0
      %985 = vmatpush2.msra.mxu0 0.0
      %986 = vmatprep.subr.mxu0 0.0
      %987 = vmatpush2.msra.mxu0 0.0
      %988 = vmatprep.subr.mxu0 0.0
      %989 = vmatpush2.msra.mxu0 0.0
      %990 = vmatprep.subr.mxu0 0.0
      %991 = vmatpush2.msra.mxu0 0.0
      %992 = vmatprep.subr.mxu0 0.0
      %993 = vmatpush2.msra.mxu0 0.0
      %994 = vmatprep.subr.mxu0 0.0
      %995 = vmatpush2.msra.mxu0 0.0
      %996 = vmatprep.subr.mxu0 0.0
      %997 = vmatpush2.msra.mxu0 0.0
      %998 = vmatprep.subr.mxu0 0.0
      %999 = vmatpush2.msra.mxu0 0.0
      %1000 = vmatprep.subr.mxu0 0.0
      %1001 = vmatpush2.msra.mxu0 0.0
      %1002 = vmatprep.subr.mxu0 0.0
      %1003 = vmatpush2.msra.mxu0 0.0
      %1004 = vmatprep.subr.mxu0 0.0
      %1005 = vmatpush2.msra.mxu0 0.0
      %1006 = vmatprep.subr.mxu0 0.0
      %1007 = vmatpush2.msra.mxu0 0.0
      %1008 = vmatprep.subr.mxu0 0.0
      %1009 = vmatpush2.msra.mxu0 0.0
      %1010 = vmatprep.subr.mxu0 0.0
      %1011 = vmatpush2.msra.mxu0 0.0
      %1012 = vmatprep.subr.mxu0 0.0
      %1013 = vmatpush2.msra.mxu0 0.0
      %1014 = vmatprep.subr.mxu0 0.0
      %1015 = vmatpush2.msra.mxu0 0.0
      %1016 = vmatprep.mubr.f32.mxu0 0.0
      %1017 = vmatmul.mubr.f32.gmra.mxu0 %v947
      %v1018 = vpop.f32.mrf.mxu0
      %v1019 = vadd.f32 0.0, %v1018
      %v1020 = vpop.f32.mrf.mxu0
      %1021 = vdwg.mxu0
      %vm1022 = vcmp.gt.f32.partialorder %v943, %v1019
      %v1024 = vlaneseq
      %v1025 = vshrl.u32 %v1024, 7
      %v1026 = vsub.s32 0, %v1025
      %v1027 = vrot.slane %v913, %v1026
      %1028 = vset.pattern.permute.xlu0 0
      %1029 = vperm.xlu0 %1028, %v1027
      %v1030 = vpop.permute.xlu0 %1029
      %v1032 = vmul.f32 %v943, %v1030
      %v1034 = vlaneseq
      %v1035 = vshrl.u32 %v1034, 7
      %v1036 = vsub.s32 0, %v1035
      %v1037 = vrot.slane %v914, %v1036
      %1038 = vset.pattern.permute.xlu0 0
      %1039 = vperm.xlu0 %1038, %v1037
      %v1040 = vpop.permute.xlu0 %1039
      %v1042 = vmul.f32 %v943, %v1040
      %v1043 = vsel %vm1022, %v1032, %v1042
      %v1044 = vld [vmem:[%s13] sm:$0x3]
      %v1046 = vsel %vm945, %v1044, 0
      %v1049 = vsel %vm915, %v1043, 0
      %1051 = vmatprep.subr.mxu0 0.0
      %1052 = vmatpush1.msra.mxu0 0.0
      %1053 = vmatprep.subr.mxu0 0.0
      %1054 = vmatpush1.msra.mxu0 0.0
      %1055 = vmatprep.subr.mxu0 0.0
      %1056 = vmatpush1.msra.mxu0 0.0
      %1057 = vmatprep.subr.mxu0 0.0
      %1058 = vmatpush1.msra.mxu0 0.0
      %1059 = vmatprep.subr.mxu0 0.0
      %1060 = vmatpush1.msra.mxu0 0.0
      %1061 = vmatprep.subr.mxu0 0.0
      %1062 = vmatpush1.msra.mxu0 0.0
      %1063 = vmatprep.subr.mxu0 0.0
      %1064 = vmatpush1.msra.mxu0 0.0
      %1065 = vmatprep.subr.mxu0 0.0
      %1066 = vmatpush1.msra.mxu0 0.0
      %1067 = vmatprep.subr.mxu0 0.0
      %1068 = vmatpush1.msra.mxu0 0.0
      %1069 = vmatprep.subr.mxu0 0.0
      %1070 = vmatpush1.msra.mxu0 0.0
      %1071 = vmatprep.subr.mxu0 0.0
      %1072 = vmatpush1.msra.mxu0 0.0
      %1073 = vmatprep.subr.mxu0 0.0
      %1074 = vmatpush1.msra.mxu0 0.0
      %1075 = vmatprep.subr.mxu0 0.0
      %1076 = vmatpush1.msra.mxu0 0.0
      %1077 = vmatprep.subr.mxu0 0.0
      %1078 = vmatpush1.msra.mxu0 0.0
      %1079 = vmatprep.subr.mxu0 0.0
      %1080 = vmatpush1.msra.mxu0 0.0
      %1081 = vmatprep.subr.mxu0 0.0
      %1082 = vmatpush1.msra.mxu0 %v1049
      %1083 = vmatprep.subr.mxu0 0.0
      %1084 = vmatpush2.msra.mxu0 0.0
      %1085 = vmatprep.subr.mxu0 0.0
      %1086 = vmatpush2.msra.mxu0 0.0
      %1087 = vmatprep.subr.mxu0 0.0
      %1088 = vmatpush2.msra.mxu0 0.0
      %1089 = vmatprep.subr.mxu0 0.0
      %1090 = vmatpush2.msra.mxu0 0.0
      %1091 = vmatprep.subr.mxu0 0.0
      %1092 = vmatpush2.msra.mxu0 0.0
      %1093 = vmatprep.subr.mxu0 0.0
      %1094 = vmatpush2.msra.mxu0 0.0
      %1095 = vmatprep.subr.mxu0 0.0
      %1096 = vmatpush2.msra.mxu0 0.0
      %1097 = vmatprep.subr.mxu0 0.0
      %1098 = vmatpush2.msra.mxu0 0.0
      %1099 = vmatprep.subr.mxu0 0.0
      %1100 = vmatpush2.msra.mxu0 0.0
      %1101 = vmatprep.subr.mxu0 0.0
      %1102 = vmatpush2.msra.mxu0 0.0
      %1103 = vmatprep.subr.mxu0 0.0
      %1104 = vmatpush2.msra.mxu0 0.0
      %1105 = vmatprep.subr.mxu0 0.0
      %1106 = vmatpush2.msra.mxu0 0.0
      %1107 = vmatprep.subr.mxu0 0.0
      %1108 = vmatpush2.msra.mxu0 0.0
      %1109 = vmatprep.subr.mxu0 0.0
      %1110 = vmatpush2.msra.mxu0 0.0
      %1111 = vmatprep.subr.mxu0 0.0
      %1112 = vmatpush2.msra.mxu0 0.0
      %1113 = vmatprep.subr.mxu0 0.0
      %1114 = vmatpush2.msra.mxu0 0.0
      %1115 = vmatprep.mubr.f32.mxu0 0.0
      %1116 = vmatmul.mubr.f32.gmra.mxu0 %v1046
      %v1117 = vpop.f32.mrf.mxu0
      %v1118 = vadd.f32 0.0, %v1117
      %v1119 = vpop.f32.mrf.mxu0
      %1120 = vdwg.mxu0
      %v1121 = vld [vmem:[%s14] sm:$0x3]
      %v1123 = vsel %vm945, %v1121, 0
      %1125 = vmatprep.subr.mxu0 0.0
      %1126 = vmatpush1.msra.mxu0 0.0
      %1127 = vmatprep.subr.mxu0 0.0
      %1128 = vmatpush1.msra.mxu0 0.0
      %1129 = vmatprep.subr.mxu0 0.0
      %1130 = vmatpush1.msra.mxu0 0.0
      %1131 = vmatprep.subr.mxu0 0.0
      %1132 = vmatpush1.msra.mxu0 0.0
      %1133 = vmatprep.subr.mxu0 0.0
      %1134 = vmatpush1.msra.mxu0 0.0
      %1135 = vmatprep.subr.mxu0 0.0
      %1136 = vmatpush1.msra.mxu0 0.0
      %1137 = vmatprep.subr.mxu0 0.0
      %1138 = vmatpush1.msra.mxu0 0.0
      %1139 = vmatprep.subr.mxu0 0.0
      %1140 = vmatpush1.msra.mxu0 0.0
      %1141 = vmatprep.subr.mxu0 0.0
      %1142 = vmatpush1.msra.mxu0 0.0
      %1143 = vmatprep.subr.mxu0 0.0
      %1144 = vmatpush1.msra.mxu0 0.0
      %1145 = vmatprep.subr.mxu0 0.0
      %1146 = vmatpush1.msra.mxu0 0.0
      %1147 = vmatprep.subr.mxu0 0.0
      %1148 = vmatpush1.msra.mxu0 0.0
      %1149 = vmatprep.subr.mxu0 0.0
      %1150 = vmatpush1.msra.mxu0 0.0
      %1151 = vmatprep.subr.mxu0 0.0
      %1152 = vmatpush1.msra.mxu0 0.0
      %1153 = vmatprep.subr.mxu0 0.0
      %1154 = vmatpush1.msra.mxu0 0.0
      %1155 = vmatprep.subr.mxu0 0.0
      %1156 = vmatpush1.msra.mxu0 %v1049
      %1157 = vmatprep.subr.mxu0 0.0
      %1158 = vmatpush2.msra.mxu0 0.0
      %1159 = vmatprep.subr.mxu0 0.0
      %1160 = vmatpush2.msra.mxu0 0.0
      %1161 = vmatprep.subr.mxu0 0.0
      %1162 = vmatpush2.msra.mxu0 0.0
      %1163 = vmatprep.subr.mxu0 0.0
      %1164 = vmatpush2.msra.mxu0 0.0
      %1165 = vmatprep.subr.mxu0 0.0
      %1166 = vmatpush2.msra.mxu0 0.0
      %1167 = vmatprep.subr.mxu0 0.0
      %1168 = vmatpush2.msra.mxu0 0.0
      %1169 = vmatprep.subr.mxu0 0.0
      %1170 = vmatpush2.msra.mxu0 0.0
      %1171 = vmatprep.subr.mxu0 0.0
      %1172 = vmatpush2.msra.mxu0 0.0
      %1173 = vmatprep.subr.mxu0 0.0
      %1174 = vmatpush2.msra.mxu0 0.0
      %1175 = vmatprep.subr.mxu0 0.0
      %1176 = vmatpush2.msra.mxu0 0.0
      %1177 = vmatprep.subr.mxu0 0.0
      %1178 = vmatpush2.msra.mxu0 0.0
      %1179 = vmatprep.subr.mxu0 0.0
      %1180 = vmatpush2.msra.mxu0 0.0
      %1181 = vmatprep.subr.mxu0 0.0
      %1182 = vmatpush2.msra.mxu0 0.0
      %1183 = vmatprep.subr.mxu0 0.0
      %1184 = vmatpush2.msra.mxu0 0.0
      %1185 = vmatprep.subr.mxu0 0.0
      %1186 = vmatpush2.msra.mxu0 0.0
      %1187 = vmatprep.subr.mxu0 0.0
      %1188 = vmatpush2.msra.mxu0 0.0
      %1189 = vmatprep.mubr.f32.mxu0 0.0
      %1190 = vmatmul.mubr.f32.gmra.mxu0 %v1123
      %v1191 = vpop.f32.mrf.mxu0
      %v1192 = vadd.f32 0.0, %v1191
      %v1193 = vpop.f32.mrf.mxu0
      %1194 = vdwg.mxu0
      %v1195 = vsub.f32 0.0, %v1192
      %v1196 = vmul.f32 %v1118, %v1118
      %v1197 = vmul.f32 %v1195, %v1195
      %v1198 = vadd.f32 %v1196, %v1197
      %vm1199 = vcmask 1041408
      %v1200 = vsel %vm1199, %v1198, 0.0
      %1201 = vadd.xlane.f32.xlu0 %v1200
      %v1202 = vpop.xlane.xlu0 %1201
      %1203 = vmatprep.subr.mxu0 0.0
      %1204 = vmatpush1.xpose.msra.mxu0 0.0
      %1205 = vmatprep.subr.mxu0 0.0
      %1206 = vmatpush1.xpose.msra.mxu0 0.0
      %1207 = vmatprep.subr.mxu0 0.0
      %1208 = vmatpush1.xpose.msra.mxu0 0.0
      %1209 = vmatprep.subr.mxu0 0.0
      %1210 = vmatpush1.xpose.msra.mxu0 0.0
      %1211 = vmatprep.subr.mxu0 0.0
      %1212 = vmatpush1.xpose.msra.mxu0 0.0
      %1213 = vmatprep.subr.mxu0 0.0
      %1214 = vmatpush1.xpose.msra.mxu0 0.0
      %1215 = vmatprep.subr.mxu0 0.0
      %1216 = vmatpush1.xpose.msra.mxu0 0.0
      %1217 = vmatprep.subr.mxu0 0.0
      %1218 = vmatpush1.xpose.msra.mxu0 0.0
      %1219 = vmatprep.subr.mxu0 0.0
      %1220 = vmatpush1.xpose.msra.mxu0 0.0
      %1221 = vmatprep.subr.mxu0 0.0
      %1222 = vmatpush1.xpose.msra.mxu0 0.0
      %1223 = vmatprep.subr.mxu0 0.0
      %1224 = vmatpush1.xpose.msra.mxu0 0.0
      %1225 = vmatprep.subr.mxu0 0.0
      %1226 = vmatpush1.xpose.msra.mxu0 0.0
      %1227 = vmatprep.subr.mxu0 0.0
      %1228 = vmatpush1.xpose.msra.mxu0 0.0
      %1229 = vmatprep.subr.mxu0 0.0
      %1230 = vmatpush1.xpose.msra.mxu0 0.0
      %1231 = vmatprep.subr.mxu0 0.0
      %1232 = vmatpush1.xpose.msra.mxu0 0.0
      %1233 = vmatprep.subr.mxu0 0.0
      %1234 = vmatpush1.xpose.msra.mxu0 %v1198
      %1235 = vmatprep.subr.mxu0 0.0
      %1236 = vmatpush2.xpose.msra.mxu0 0.0
      %1237 = vmatprep.subr.mxu0 0.0
      %1238 = vmatpush2.xpose.msra.mxu0 0.0
      %1239 = vmatprep.subr.mxu0 0.0
      %1240 = vmatpush2.xpose.msra.mxu0 0.0
      %1241 = vmatprep.subr.mxu0 0.0
      %1242 = vmatpush2.xpose.msra.mxu0 0.0
      %1243 = vmatprep.subr.mxu0 0.0
      %1244 = vmatpush2.xpose.msra.mxu0 0.0
      %1245 = vmatprep.subr.mxu0 0.0
      %1246 = vmatpush2.xpose.msra.mxu0 0.0
      %1247 = vmatprep.subr.mxu0 0.0
      %1248 = vmatpush2.xpose.msra.mxu0 0.0
      %1249 = vmatprep.subr.mxu0 0.0
      %1250 = vmatpush2.xpose.msra.mxu0 0.0
      %1251 = vmatprep.subr.mxu0 0.0
      %1252 = vmatpush2.xpose.msra.mxu0 0.0
      %1253 = vmatprep.subr.mxu0 0.0
      %1254 = vmatpush2.xpose.msra.mxu0 0.0
      %1255 = vmatprep.subr.mxu0 0.0
      %1256 = vmatpush2.xpose.msra.mxu0 0.0
      %1257 = vmatprep.subr.mxu0 0.0
      %1258 = vmatpush2.xpose.msra.mxu0 0.0
      %1259 = vmatprep.subr.mxu0 0.0
      %1260 = vmatpush2.xpose.msra.mxu0 0.0
      %1261 = vmatprep.subr.mxu0 0.0
      %1262 = vmatpush2.xpose.msra.mxu0 0.0
      %1263 = vmatprep.subr.mxu0 0.0
      %1264 = vmatpush2.xpose.msra.mxu0 0.0
      %1265 = vmatprep.subr.mxu0 0.0
      %1266 = vmatpush2.xpose.msra.mxu0 0.0
      %1267 = vmatprep.mubr.f32.mxu0 0.0
      %1268 = vmatmul.mubr.f32.gmra.mxu0 1.0
      %v1269 = vpop.f32.mrf.mxu0
      %v1270 = vadd.f32 0.0, %v1269
      %v1271 = vpop.f32.mrf.mxu0
      %1272 = vdwg.mxu0
      %v1273 = vlaneseq
      %v1274 = vshrl.u32 %v1273, 7
      %v1275 = vlaneseq
      %v1276 = vand.u32 %v1275, 127
      %vm1277 = vcmp.eq.s32.totalorder %v1274, %v1276
      %v1278 = vlaneseq
      %v1279 = vshrl.u32 %v1278, 7
      %v1280 = vsub.s32 0, %v1279
      %v1281 = vrot.slane %v1270, %v1280
      %vm1282 = vcmp.le.f32.partialorder %v1202, %v1281
      %vm1283 = vmor %vm1282, %vm1277
      %v1284 = vsel %vm1283, 1, 0
      %v1285 = vcvt.s32.f32 %v1284
      %vm1286 = vcmask 15360
      %v1288 = vsel %vm1286, 1.0, 0
      %v1291 = vsel %vm1199, %v1285, 0
      %1293 = vmatprep.subr.mxu0 0.0
      %1294 = vmatpush1.msra.mxu0 0.0
      %1295 = vmatprep.subr.mxu0 0.0
      %1296 = vmatpush1.msra.mxu0 0.0
      %1297 = vmatprep.subr.mxu0 0.0
      %1298 = vmatpush1.msra.mxu0 0.0
      %1299 = vmatprep.subr.mxu0 0.0
      %1300 = vmatpush1.msra.mxu0 0.0
      %1301 = vmatprep.subr.mxu0 0.0
      %1302 = vmatpush1.msra.mxu0 0.0
      %1303 = vmatprep.subr.mxu0 0.0
      %1304 = vmatpush1.msra.mxu0 0.0
      %1305 = vmatprep.subr.mxu0 0.0
      %1306 = vmatpush1.msra.mxu0 0.0
      %1307 = vmatprep.subr.mxu0 0.0
      %1308 = vmatpush1.msra.mxu0 0.0
      %1309 = vmatprep.subr.mxu0 0.0
      %1310 = vmatpush1.msra.mxu0 0.0
      %1311 = vmatprep.subr.mxu0 0.0
      %1312 = vmatpush1.msra.mxu0 0.0
      %1313 = vmatprep.subr.mxu0 0.0
      %1314 = vmatpush1.msra.mxu0 0.0
      %1315 = vmatprep.subr.mxu0 0.0
      %1316 = vmatpush1.msra.mxu0 0.0
      %1317 = vmatprep.subr.mxu0 0.0
      %1318 = vmatpush1.msra.mxu0 0.0
      %1319 = vmatprep.subr.mxu0 0.0
      %1320 = vmatpush1.msra.mxu0 0.0
      %1321 = vmatprep.subr.mxu0 0.0
      %1322 = vmatpush1.msra.mxu0 0.0
      %1323 = vmatprep.subr.mxu0 0.0
      %1324 = vmatpush1.msra.mxu0 %v1291
      %1325 = vmatprep.subr.mxu0 0.0
      %1326 = vmatpush2.msra.mxu0 0.0
      %1327 = vmatprep.subr.mxu0 0.0
      %1328 = vmatpush2.msra.mxu0 0.0
      %1329 = vmatprep.subr.mxu0 0.0
      %1330 = vmatpush2.msra.mxu0 0.0
      %1331 = vmatprep.subr.mxu0 0.0
      %1332 = vmatpush2.msra.mxu0 0.0
      %1333 = vmatprep.subr.mxu0 0.0
      %1334 = vmatpush2.msra.mxu0 0.0
      %1335 = vmatprep.subr.mxu0 0.0
      %1336 = vmatpush2.msra.mxu0 0.0
      %1337 = vmatprep.subr.mxu0 0.0
      %1338 = vmatpush2.msra.mxu0 0.0
      %1339 = vmatprep.subr.mxu0 0.0
      %1340 = vmatpush2.msra.mxu0 0.0
      %1341 = vmatprep.subr.mxu0 0.0
      %1342 = vmatpush2.msra.mxu0 0.0
      %1343 = vmatprep.subr.mxu0 0.0
      %1344 = vmatpush2.msra.mxu0 0.0
      %1345 = vmatprep.subr.mxu0 0.0
      %1346 = vmatpush2.msra.mxu0 0.0
      %1347 = vmatprep.subr.mxu0 0.0
      %1348 = vmatpush2.msra.mxu0 0.0
      %1349 = vmatprep.subr.mxu0 0.0
      %1350 = vmatpush2.msra.mxu0 0.0
      %1351 = vmatprep.subr.mxu0 0.0
      %1352 = vmatpush2.msra.mxu0 0.0
      %1353 = vmatprep.subr.mxu0 0.0
      %1354 = vmatpush2.msra.mxu0 0.0
      %1355 = vmatprep.subr.mxu0 0.0
      %1356 = vmatpush2.msra.mxu0 0.0
      %1357 = vmatprep.mubr.f32.mxu0 0.0
      %1358 = vmatmul.mubr.f32.gmra.mxu0 %v1288
      %v1359 = vpop.f32.mrf.mxu0
      %v1360 = vadd.f32 0.0, %v1359
      %v1361 = vpop.f32.mrf.mxu0
      %1362 = vdwg.mxu0
      %vm1363 = vcmp.ge.f32.partialorder %v1360, 1.0
      %v1364 = vsel %vm1363, %v1270, inf
      %vm1365 = vcmask 8192
      %v1366 = vsel %vm1365, %v1364, inf
      %1367 = vmin.xlane.f32.xlu0 %v1366
      %v1368 = vpop.xlane.xlu0 %1367
      %v1369 = vadd.f32 %v1368, 1e-06
      %v1370 = vlaneseq
      %v1371 = vshrl.u32 %v1370, 7
      %v1372 = vsub.s32 0, %v1371
      %v1373 = vrot.slane %v1369, %v1372
      %v1374 = vrcp.pop %v1373
      %v1375 = vmul.f32 %v1202, %v1374
      %v1377 = vlaneseq
      %v1378 = vshrl.u32 %v1377, 7
      %v1379 = vsub.s32 0, %v1378
      %v1380 = vrot.slane %v912, %v1379
      %vm1382 = vcmp.gt.f32.partialorder %v1375, %v1380
      %v1383 = vsel %vm1382, 1, 0
      %v1384 = vcvt.s32.f32 %v1383
      %v1385 = vld [vmem:[%s662] sm:$0x1]
      %v1386 = vld [vmem:[%s668] sm:$0x1]
      %1388 = vset.pattern.permute.xlu0 0
      %1389 = vperm.xlu0 %1388, %v1384
      %v1390 = vpop.permute.xlu0 %1389
      %v1393 = vlaneseq
      %v1394 = vshrl.u32 %v1393, 7
      %v1395 = vsub.s32 0, %v1394
      %v1396 = vrot.slane %v1386, %v1395
      %v1398 = vmul.f32 %v1390, %v1396
      %v1400 = vlaneseq
      %v1401 = vshrl.u32 %v1400, 7
      %v1402 = vsub.s32 0, %v1401
      %v1403 = vrot.slane %v1385, %v1402
      %v1405 = vadd.f32 %v1403, %v1398
      %v1406 = vld [vmem:[%s665] sm:$0x1]
      %v1407 = vld [vmem:[%s671] sm:$0x1]
      %v1409 = vlaneseq
      %v1410 = vshrl.u32 %v1409, 7
      %v1411 = vsub.s32 0, %v1410
      %v1412 = vrot.slane %v1407, %v1411
      %v1414 = vmul.f32 %v1390, %v1412
      %v1416 = vlaneseq
      %v1417 = vshrl.u32 %v1416, 7
      %v1418 = vsub.s32 0, %v1417
      %v1419 = vrot.slane %v1406, %v1418
      %v1421 = vadd.f32 %v1419, %v1414
      %v1422 = vmul.f32 %v1118, %v1405
      %v1423 = vmul.f32 %v1195, %v1421
      %v1424 = vsub.f32 %v1422, %v1423
      %v1425 = vmul.f32 %v1118, %v1421
      %v1426 = vmul.f32 %v1195, %v1405
      %v1427 = vadd.f32 %v1425, %v1426
      %v1428 = vld [vmem:[%s15] sm:$0xf]
      %v1430 = vsel %vm1286, %v1428, 0
      %v1433 = vsel %vm1199, %v1424, 0
      %1435 = vmatprep.subr.mxu0 0.0
      %1436 = vmatpush1.msra.mxu0 0.0
      %1437 = vmatprep.subr.mxu0 0.0
      %1438 = vmatpush1.msra.mxu0 0.0
      %1439 = vmatprep.subr.mxu0 0.0
      %1440 = vmatpush1.msra.mxu0 0.0
      %1441 = vmatprep.subr.mxu0 0.0
      %1442 = vmatpush1.msra.mxu0 0.0
      %1443 = vmatprep.subr.mxu0 0.0
      %1444 = vmatpush1.msra.mxu0 0.0
      %1445 = vmatprep.subr.mxu0 0.0
      %1446 = vmatpush1.msra.mxu0 0.0
      %1447 = vmatprep.subr.mxu0 0.0
      %1448 = vmatpush1.msra.mxu0 0.0
      %1449 = vmatprep.subr.mxu0 0.0
      %1450 = vmatpush1.msra.mxu0 0.0
      %1451 = vmatprep.subr.mxu0 0.0
      %1452 = vmatpush1.msra.mxu0 0.0
      %1453 = vmatprep.subr.mxu0 0.0
      %1454 = vmatpush1.msra.mxu0 0.0
      %1455 = vmatprep.subr.mxu0 0.0
      %1456 = vmatpush1.msra.mxu0 0.0
      %1457 = vmatprep.subr.mxu0 0.0
      %1458 = vmatpush1.msra.mxu0 0.0
      %1459 = vmatprep.subr.mxu0 0.0
      %1460 = vmatpush1.msra.mxu0 0.0
      %1461 = vmatprep.subr.mxu0 0.0
      %1462 = vmatpush1.msra.mxu0 0.0
      %1463 = vmatprep.subr.mxu0 0.0
      %1464 = vmatpush1.msra.mxu0 0.0
      %1465 = vmatprep.subr.mxu0 0.0
      %1466 = vmatpush1.msra.mxu0 %v1433
      %1467 = vmatprep.subr.mxu0 0.0
      %1468 = vmatpush2.msra.mxu0 0.0
      %1469 = vmatprep.subr.mxu0 0.0
      %1470 = vmatpush2.msra.mxu0 0.0
      %1471 = vmatprep.subr.mxu0 0.0
      %1472 = vmatpush2.msra.mxu0 0.0
      %1473 = vmatprep.subr.mxu0 0.0
      %1474 = vmatpush2.msra.mxu0 0.0
      %1475 = vmatprep.subr.mxu0 0.0
      %1476 = vmatpush2.msra.mxu0 0.0
      %1477 = vmatprep.subr.mxu0 0.0
      %1478 = vmatpush2.msra.mxu0 0.0
      %1479 = vmatprep.subr.mxu0 0.0
      %1480 = vmatpush2.msra.mxu0 0.0
      %1481 = vmatprep.subr.mxu0 0.0
      %1482 = vmatpush2.msra.mxu0 0.0
      %1483 = vmatprep.subr.mxu0 0.0
      %1484 = vmatpush2.msra.mxu0 0.0
      %1485 = vmatprep.subr.mxu0 0.0
      %1486 = vmatpush2.msra.mxu0 0.0
      %1487 = vmatprep.subr.mxu0 0.0
      %1488 = vmatpush2.msra.mxu0 0.0
      %1489 = vmatprep.subr.mxu0 0.0
      %1490 = vmatpush2.msra.mxu0 0.0
      %1491 = vmatprep.subr.mxu0 0.0
      %1492 = vmatpush2.msra.mxu0 0.0
      %1493 = vmatprep.subr.mxu0 0.0
      %1494 = vmatpush2.msra.mxu0 0.0
      %1495 = vmatprep.subr.mxu0 0.0
      %1496 = vmatpush2.msra.mxu0 0.0
      %1497 = vmatprep.subr.mxu0 0.0
      %1498 = vmatpush2.msra.mxu0 0.0
      %1499 = vmatprep.mubr.f32.mxu0 0.0
      %1500 = vmatmul.mubr.f32.gmra.mxu0 %v1430
      %v1501 = vpop.f32.mrf.mxu0
      %v1502 = vadd.f32 0.0, %v1501
      %v1503 = vpop.f32.mrf.mxu0
      %1504 = vdwg.mxu0
      %v1505 = vld [vmem:[%s16] sm:$0xf]
      %v1507 = vsel %vm1286, %v1505, 0
      %v1510 = vsel %vm1199, %v1427, 0
      %1512 = vmatprep.subr.mxu0 0.0
      %1513 = vmatpush1.msra.mxu0 0.0
      %1514 = vmatprep.subr.mxu0 0.0
      %1515 = vmatpush1.msra.mxu0 0.0
      %1516 = vmatprep.subr.mxu0 0.0
      %1517 = vmatpush1.msra.mxu0 0.0
      %1518 = vmatprep.subr.mxu0 0.0
      %1519 = vmatpush1.msra.mxu0 0.0
      %1520 = vmatprep.subr.mxu0 0.0
      %1521 = vmatpush1.msra.mxu0 0.0
      %1522 = vmatprep.subr.mxu0 0.0
      %1523 = vmatpush1.msra.mxu0 0.0
      %1524 = vmatprep.subr.mxu0 0.0
      %1525 = vmatpush1.msra.mxu0 0.0
      %1526 = vmatprep.subr.mxu0 0.0
      %1527 = vmatpush1.msra.mxu0 0.0
      %1528 = vmatprep.subr.mxu0 0.0
      %1529 = vmatpush1.msra.mxu0 0.0
      %1530 = vmatprep.subr.mxu0 0.0
      %1531 = vmatpush1.msra.mxu0 0.0
      %1532 = vmatprep.subr.mxu0 0.0
      %1533 = vmatpush1.msra.mxu0 0.0
      %1534 = vmatprep.subr.mxu0 0.0
      %1535 = vmatpush1.msra.mxu0 0.0
      %1536 = vmatprep.subr.mxu0 0.0
      %1537 = vmatpush1.msra.mxu0 0.0
      %1538 = vmatprep.subr.mxu0 0.0
      %1539 = vmatpush1.msra.mxu0 0.0
      %1540 = vmatprep.subr.mxu0 0.0
      %1541 = vmatpush1.msra.mxu0 0.0
      %1542 = vmatprep.subr.mxu0 0.0
      %1543 = vmatpush1.msra.mxu0 %v1510
      %1544 = vmatprep.subr.mxu0 0.0
      %1545 = vmatpush2.msra.mxu0 0.0
      %1546 = vmatprep.subr.mxu0 0.0
      %1547 = vmatpush2.msra.mxu0 0.0
      %1548 = vmatprep.subr.mxu0 0.0
      %1549 = vmatpush2.msra.mxu0 0.0
      %1550 = vmatprep.subr.mxu0 0.0
      %1551 = vmatpush2.msra.mxu0 0.0
      %1552 = vmatprep.subr.mxu0 0.0
      %1553 = vmatpush2.msra.mxu0 0.0
      %1554 = vmatprep.subr.mxu0 0.0
      %1555 = vmatpush2.msra.mxu0 0.0
      %1556 = vmatprep.subr.mxu0 0.0
      %1557 = vmatpush2.msra.mxu0 0.0
      %1558 = vmatprep.subr.mxu0 0.0
      %1559 = vmatpush2.msra.mxu0 0.0
      %1560 = vmatprep.subr.mxu0 0.0
      %1561 = vmatpush2.msra.mxu0 0.0
      %1562 = vmatprep.subr.mxu0 0.0
      %1563 = vmatpush2.msra.mxu0 0.0
      %1564 = vmatprep.subr.mxu0 0.0
      %1565 = vmatpush2.msra.mxu0 0.0
      %1566 = vmatprep.subr.mxu0 0.0
      %1567 = vmatpush2.msra.mxu0 0.0
      %1568 = vmatprep.subr.mxu0 0.0
      %1569 = vmatpush2.msra.mxu0 0.0
      %1570 = vmatprep.subr.mxu0 0.0
      %1571 = vmatpush2.msra.mxu0 0.0
      %1572 = vmatprep.subr.mxu0 0.0
      %1573 = vmatpush2.msra.mxu0 0.0
      %1574 = vmatprep.subr.mxu0 0.0
      %1575 = vmatpush2.msra.mxu0 0.0
      %1576 = vmatprep.mubr.f32.mxu0 0.0
      %1577 = vmatmul.mubr.f32.gmra.mxu0 %v1507
      %v1578 = vpop.f32.mrf.mxu0
      %v1579 = vadd.f32 0.0, %v1578
      %v1580 = vpop.f32.mrf.mxu0
      %1581 = vdwg.mxu0
      %v1582 = vsub.f32 %v1502, %v1579
      %v1583 = vadd.f32 %v909, %v1582
      %1584 = vst [vmem:[%s684] sm:$0xf] %v1583
      %p1585 = scmp.lt.s32.totalorder %s32, 1
      %s1586 = scalar_select %p1585, %s32, 1
      %s1587 = smul.addr %s1586, 4
      %s1588 = scalar_lea.vmem %s17, %s1587
      // Predicated region
      $region93: #{_lambda_.8} parent=87 // pred_check
        %p1589 = pneg %p465
      $region94: #{_lambda_.8} parent=87 // pred_check_branch
        %1591 = sbr.rel (%p1589) target = $region96
      $region95: #{_lambda_.8} parent=87 // pred_region
        _
      $region96: #{_lambda_.8} parent=87 // pred_fallthru
        _
    $region88: #{_lambda_.8} parent=5 // pred_fallthru
      _
    %p1592 = scmp.le.s32.totalorder 2, %s23
    // Predicated region
    $region97: #{_lambda_.8} parent=5 // pred_check
      %p1593 = pneg %p1592
    $region98: #{_lambda_.8} parent=5 // pred_check_branch
      %1595 = sbr.rel (%p1593) target = $region100
    $region99: #{_lambda_.8} parent=5 // pred_region
      %s1596 = ssub.s32 %s23, 2
      // Predicated region
      $region101: #{_lambda_.8} parent=99 // pred_check
        %p1597 = pneg %p471
      $region102: #{_lambda_.8} parent=99 // pred_check_branch
        %1599 = sbr.rel (%p1597) target = $region104
      $region103: #{_lambda_.8} parent=99 // pred_region
        %p1600 = scmp.lt.s32.totalorder %s34, 1
        %s1601 = scalar_select %p1600, %s34, 1
        %s1602 = smul.addr %s1601, 4
        %s1603 = scalar_lea.vmem %s17, %s1602
      $region104: #{_lambda_.8} parent=99 // pred_fallthru
        _
    $region100: #{_lambda_.8} parent=5 // pred_fallthru
      _
  $region6: #{_lambda_.8} parent=0 // loop_footer
    %s27 = sadd.s32 1, %s23
  $region7: #{_lambda_.8} parent=0 // loop_footer_branch
    %22 = sbr.rel target = $region3
  $region8: #{_lambda_.8} parent=0 // loop_exit
    _

// kernel: _lambda_.5
$region0: #{_lambda_.5}
  #allocation0 [shape = 'u32[]', space=smem, size = 0x4, offset = 0x4, fixed_abs, tag = 'smem constant byte address 0x4 - core index']
  #allocation1 [shape = 'u32[144,128]{1,0:T(1,128)}', space=vmem, size = 0x12000, scoped, tag = 'internal scratch']
  %s0 = inlined_call_operand.vmem [shape: f32[2,256,8], index: 0, kind: input, shape index: {}]
  %s1 = inlined_call_operand.vmem [shape: f32[8,16], index: 1, kind: input, shape index: {}]
  %s2 = inlined_call_operand.vmem [shape: f32[1,16], index: 2, kind: input, shape index: {}]
  %s3 = inlined_call_operand.vmem [shape: f32[2,1,16], index: 3, kind: input, shape index: {}]
  %s4 = inlined_call_operand.vmem [shape: f32[2,1,16], index: 4, kind: input, shape index: {}]
  %s5 = inlined_call_operand.vmem [shape: f32[2,1,16], index: 5, kind: input, shape index: {}]
  %s6 = inlined_call_operand.vmem [shape: f32[2,1,16], index: 6, kind: input, shape index: {}]
  %s7 = inlined_call_operand.vmem [shape: f32[2,1,16], index: 7, kind: input, shape index: {}]
  %s8 = inlined_call_operand.vmem [shape: f32[2,1,16], index: 8, kind: input, shape index: {}]
  %s9 = inlined_call_operand.vmem [shape: f32[2,1,1], index: 9, kind: input, shape index: {}]
  %s10 = inlined_call_operand.vmem [shape: f32[2,1,1], index: 10, kind: input, shape index: {}]
  %s11 = inlined_call_operand.vmem [shape: f32[2,1,1], index: 11, kind: input, shape index: {}]
  %s12 = inlined_call_operand.vmem [shape: f32[256,256], index: 12, kind: input, shape index: {}]
  %s13 = inlined_call_operand.vmem [shape: f32[128,256], index: 13, kind: input, shape index: {}]
  %s14 = inlined_call_operand.vmem [shape: f32[128,256], index: 14, kind: input, shape index: {}]
  %s15 = inlined_call_operand.vmem [shape: f32[256,128], index: 15, kind: input, shape index: {}]
  %s16 = inlined_call_operand.vmem [shape: f32[256,128], index: 16, kind: input, shape index: {}]
  %s17 = inlined_call_operand.vmem [shape: f32[2,256,16], index: 17, kind: output, shape index: {}]
  %s18 = sld [smem:[#allocation0]]
  $region105: #{_lambda_.5} parent=0
    _
  %s20 = ssub.s32 1, %s18
  %s21 = scalar_select 0, %s20, %s18
  loop: start=0, step=1, limit=6
  $region2: #{_lambda_.5} parent=0 // loop_pre_header
    _
  $region3: #{_lambda_.5} parent=0 // loop_header
    %s23 = sphi 0, %s27
    %p24 = scmp.ge.s32.totalorder %s23, 6
    %s30 = sphi 0, %s42
    %s31 = sphi 0, %s38
    %s32 = sphi 0, %s30
    %s33 = sphi 0, %s31
    %s34 = sphi 0, %s32
    %s35 = sphi 0, %s33
    %s45 = sphi 0, %s47
    %s48 = sphi 0, %s45
    %s49 = sphi 0, %s48
    %s65 = sphi 0, %s49
    %s69 = sphi 0, %s69
    %s71 = sphi 0, %s69
    %s72 = sphi 0, %s71
    %s86 = sphi 0, %s72
    %s90 = sphi 0, %s90
    %s92 = sphi 0, %s90
    %s93 = sphi 0, %s92
    %s107 = sphi 0, %s93
    %s113 = sphi 0, %s115
    %s116 = sphi 0, %s113
    %s117 = sphi 0, %s116
    %s133 = sphi 0, %s117
    %s139 = sphi 0, %s141
    %s142 = sphi 0, %s139
    %s143 = sphi 0, %s142
    %s159 = sphi 0, %s143
    %s165 = sphi 0, %s167
    %s168 = sphi 0, %s165
    %s169 = sphi 0, %s168
    %s185 = sphi 0, %s169
    %s191 = sphi 0, %s193
    %s194 = sphi 0, %s191
    %s195 = sphi 0, %s194
    %s211 = sphi 0, %s195
    %s217 = sphi 0, %s219
    %s220 = sphi 0, %s217
    %s221 = sphi 0, %s220
    %s237 = sphi 0, %s221
    %s243 = sphi 0, %s245
    %s246 = sphi 0, %s243
    %s247 = sphi 0, %s246
    %s263 = sphi 0, %s247
    %s269 = sphi 0, %s271
    %s272 = sphi 0, %s269
    %s273 = sphi 0, %s272
    %s289 = sphi 0, %s273
    %s295 = sphi 0, %s297
    %s298 = sphi 0, %s295
    %s299 = sphi 0, %s298
    %s315 = sphi 0, %s299
    %s321 = sphi 0, %s323
    %s324 = sphi 0, %s321
    %s325 = sphi 0, %s324
    %s341 = sphi 0, %s325
    %s345 = sphi 0, %s345
    %s347 = sphi 0, %s345
    %s348 = sphi 0, %s347
    %s362 = sphi 0, %s348
    %s366 = sphi 0, %s366
    %s368 = sphi 0, %s366
    %s369 = sphi 0, %s368
    %s383 = sphi 0, %s369
    %s387 = sphi 0, %s387
    %s389 = sphi 0, %s387
    %s390 = sphi 0, %s389
    %s404 = sphi 0, %s390
    %s408 = sphi 0, %s408
    %s410 = sphi 0, %s408
    %s411 = sphi 0, %s410
    %s425 = sphi 0, %s411
    %s429 = sphi 0, %s429
    %s431 = sphi 0, %s429
    %s432 = sphi 0, %s431
    %s446 = sphi 0, %s432
    %s452 = sphi 0, %s454
    %s455 = sphi 0, %s452
    %s456 = sphi 0, %s455
    %s472 = sphi 0, %s456
  $region4: #{_lambda_.5} parent=0 // loop_header_branch
    %26 = sbr.rel (%p24) target = $region8
  $region5: #{_lambda_.5} parent=0 // loop_body
    %s28 = ssub.s32 %s23, 1
    %s29 = ssub.s32 %s23, 2
    %s36 = sadd.s32 1, %s31
    %p37 = scmp.ge.s32.totalorder %s36, 2
    %s38 = scalar_select %p37, 0, %s36
    %s39 = sadd.s32 1, %s30
    %s40 = scalar_select %p37, %s39, %s30
    %p41 = scmp.ge.s32.totalorder %s40, 2
    %s42 = scalar_select %p41, 0, %s40
    %s43 = ssub.s32 %s30, %s42
    %p44 = scmp.eq.s32.totalorder %s43, 0
    %s46 = sadd.s32 %s45, 1
    %s47 = scalar_select %p44, %s45, %s46
    %p50 = pneg %p44
    %p51 = scmp.eq.s32.totalorder %s23, 3
    %p52 = por %p50, %p51
    %p53 = scmp.ne.s32.totalorder %s45, %s48
    %p54 = scmp.eq.s32.totalorder %s23, 0
    %p55 = por %p53, %p54
    %p56 = scmp.ne.s32.totalorder %s45, %s48
    %p57 = scmp.eq.s32.totalorder %s28, 3
    %p58 = por %p56, %p57
    %p59 = scmp.ne.s32.totalorder %s48, %s49
    %p60 = scmp.eq.s32.totalorder %s28, 0
    %p61 = por %p59, %p60
    %p62 = scmp.ne.s32.totalorder %s48, %s49
    %p63 = scmp.eq.s32.totalorder %s29, 3
    %p64 = por %p62, %p63
    %p66 = scmp.ne.s32.totalorder %s49, %s65
    %p67 = scmp.eq.s32.totalorder %s29, 0
    %p68 = por %p66, %p67
    %s70 = sadd.s32 %s69, 1
    %p73 = scmp.eq.s32.totalorder %s23, 3
    %p74 = scmp.ne.s32.totalorder %s69, %s71
    %p75 = scmp.eq.s32.totalorder %s23, 0
    %p76 = por %p74, %p75
    %p77 = scmp.ne.s32.totalorder %s69, %s71
    %p78 = scmp.eq.s32.totalorder %s28, 3
    %p79 = por %p77, %p78
    %p80 = scmp.ne.s32.totalorder %s71, %s72
    %p81 = scmp.eq.s32.totalorder %s28, 0
    %p82 = por %p80, %p81
    %p83 = scmp.ne.s32.totalorder %s71, %s72
    %p84 = scmp.eq.s32.totalorder %s29, 3
    %p85 = por %p83, %p84
    %p87 = scmp.ne.s32.totalorder %s72, %s86
    %p88 = scmp.eq.s32.totalorder %s29, 0
    %p89 = por %p87, %p88
    %s91 = sadd.s32 %s90, 1
    %p94 = scmp.eq.s32.totalorder %s23, 3
    %p95 = scmp.ne.s32.totalorder %s90, %s92
    %p96 = scmp.eq.s32.totalorder %s23, 0
    %p97 = por %p95, %p96
    %p98 = scmp.ne.s32.totalorder %s90, %s92
    %p99 = scmp.eq.s32.totalorder %s28, 3
    %p100 = por %p98, %p99
    %p101 = scmp.ne.s32.totalorder %s92, %s93
    %p102 = scmp.eq.s32.totalorder %s28, 0
    %p103 = por %p101, %p102
    %p104 = scmp.ne.s32.totalorder %s92, %s93
    %p105 = scmp.eq.s32.totalorder %s29, 3
    %p106 = por %p104, %p105
    %p108 = scmp.ne.s32.totalorder %s93, %s107
    %p109 = scmp.eq.s32.totalorder %s29, 0
    %p110 = por %p108, %p109
    %s111 = ssub.s32 %s31, %s38
    %p112 = scmp.eq.s32.totalorder %s111, 0
    %s114 = sadd.s32 %s113, 1
    %s115 = scalar_select %p112, %s113, %s114
    %p118 = pneg %p112
    %p119 = scmp.eq.s32.totalorder %s23, 3
    %p120 = por %p118, %p119
    %p121 = scmp.ne.s32.totalorder %s113, %s116
    %p122 = scmp.eq.s32.totalorder %s23, 0
    %p123 = por %p121, %p122
    %p124 = scmp.ne.s32.totalorder %s113, %s116
    %p125 = scmp.eq.s32.totalorder %s28, 3
    %p126 = por %p124, %p125
    %p127 = scmp.ne.s32.totalorder %s116, %s117
    %p128 = scmp.eq.s32.totalorder %s28, 0
    %p129 = por %p127, %p128
    %p130 = scmp.ne.s32.totalorder %s116, %s117
    %p131 = scmp.eq.s32.totalorder %s29, 3
    %p132 = por %p130, %p131
    %p134 = scmp.ne.s32.totalorder %s117, %s133
    %p135 = scmp.eq.s32.totalorder %s29, 0
    %p136 = por %p134, %p135
    %s137 = ssub.s32 %s31, %s38
    %p138 = scmp.eq.s32.totalorder %s137, 0
    %s140 = sadd.s32 %s139, 1
    %s141 = scalar_select %p138, %s139, %s140
    %p144 = pneg %p138
    %p145 = scmp.eq.s32.totalorder %s23, 3
    %p146 = por %p144, %p145
    %p147 = scmp.ne.s32.totalorder %s139, %s142
    %p148 = scmp.eq.s32.totalorder %s23, 0
    %p149 = por %p147, %p148
    %p150 = scmp.ne.s32.totalorder %s139, %s142
    %p151 = scmp.eq.s32.totalorder %s28, 3
    %p152 = por %p150, %p151
    %p153 = scmp.ne.s32.totalorder %s142, %s143
    %p154 = scmp.eq.s32.totalorder %s28, 0
    %p155 = por %p153, %p154
    %p156 = scmp.ne.s32.totalorder %s142, %s143
    %p157 = scmp.eq.s32.totalorder %s29, 3
    %p158 = por %p156, %p157
    %p160 = scmp.ne.s32.totalorder %s143, %s159
    %p161 = scmp.eq.s32.totalorder %s29, 0
    %p162 = por %p160, %p161
    %s163 = ssub.s32 %s31, %s38
    %p164 = scmp.eq.s32.totalorder %s163, 0
    %s166 = sadd.s32 %s165, 1
    %s167 = scalar_select %p164, %s165, %s166
    %p170 = pneg %p164
    %p171 = scmp.eq.s32.totalorder %s23, 3
    %p172 = por %p170, %p171
    %p173 = scmp.ne.s32.totalorder %s165, %s168
    %p174 = scmp.eq.s32.totalorder %s23, 0
    %p175 = por %p173, %p174
    %p176 = scmp.ne.s32.totalorder %s165, %s168
    %p177 = scmp.eq.s32.totalorder %s28, 3
    %p178 = por %p176, %p177
    %p179 = scmp.ne.s32.totalorder %s168, %s169
    %p180 = scmp.eq.s32.totalorder %s28, 0
    %p181 = por %p179, %p180
    %p182 = scmp.ne.s32.totalorder %s168, %s169
    %p183 = scmp.eq.s32.totalorder %s29, 3
    %p184 = por %p182, %p183
    %p186 = scmp.ne.s32.totalorder %s169, %s185
    %p187 = scmp.eq.s32.totalorder %s29, 0
    %p188 = por %p186, %p187
    %s189 = ssub.s32 %s31, %s38
    %p190 = scmp.eq.s32.totalorder %s189, 0
    %s192 = sadd.s32 %s191, 1
    %s193 = scalar_select %p190, %s191, %s192
    %p196 = pneg %p190
    %p197 = scmp.eq.s32.totalorder %s23, 3
    %p198 = por %p196, %p197
    %p199 = scmp.ne.s32.totalorder %s191, %s194
    %p200 = scmp.eq.s32.totalorder %s23, 0
    %p201 = por %p199, %p200
    %p202 = scmp.ne.s32.totalorder %s191, %s194
    %p203 = scmp.eq.s32.totalorder %s28, 3
    %p204 = por %p202, %p203
    %p205 = scmp.ne.s32.totalorder %s194, %s195
    %p206 = scmp.eq.s32.totalorder %s28, 0
    %p207 = por %p205, %p206
    %p208 = scmp.ne.s32.totalorder %s194, %s195
    %p209 = scmp.eq.s32.totalorder %s29, 3
    %p210 = por %p208, %p209
    %p212 = scmp.ne.s32.totalorder %s195, %s211
    %p213 = scmp.eq.s32.totalorder %s29, 0
    %p214 = por %p212, %p213
    %s215 = ssub.s32 %s31, %s38
    %p216 = scmp.eq.s32.totalorder %s215, 0
    %s218 = sadd.s32 %s217, 1
    %s219 = scalar_select %p216, %s217, %s218
    %p222 = pneg %p216
    %p223 = scmp.eq.s32.totalorder %s23, 3
    %p224 = por %p222, %p223
    %p225 = scmp.ne.s32.totalorder %s217, %s220
    %p226 = scmp.eq.s32.totalorder %s23, 0
    %p227 = por %p225, %p226
    %p228 = scmp.ne.s32.totalorder %s217, %s220
    %p229 = scmp.eq.s32.totalorder %s28, 3
    %p230 = por %p228, %p229
    %p231 = scmp.ne.s32.totalorder %s220, %s221
    %p232 = scmp.eq.s32.totalorder %s28, 0
    %p233 = por %p231, %p232
    %p234 = scmp.ne.s32.totalorder %s220, %s221
    %p235 = scmp.eq.s32.totalorder %s29, 3
    %p236 = por %p234, %p235
    %p238 = scmp.ne.s32.totalorder %s221, %s237
    %p239 = scmp.eq.s32.totalorder %s29, 0
    %p240 = por %p238, %p239
    %s241 = ssub.s32 %s31, %s38
    %p242 = scmp.eq.s32.totalorder %s241, 0
    %s244 = sadd.s32 %s243, 1
    %s245 = scalar_select %p242, %s243, %s244
    %p248 = pneg %p242
    %p249 = scmp.eq.s32.totalorder %s23, 3
    %p250 = por %p248, %p249
    %p251 = scmp.ne.s32.totalorder %s243, %s246
    %p252 = scmp.eq.s32.totalorder %s23, 0
    %p253 = por %p251, %p252
    %p254 = scmp.ne.s32.totalorder %s243, %s246
    %p255 = scmp.eq.s32.totalorder %s28, 3
    %p256 = por %p254, %p255
    %p257 = scmp.ne.s32.totalorder %s246, %s247
    %p258 = scmp.eq.s32.totalorder %s28, 0
    %p259 = por %p257, %p258
    %p260 = scmp.ne.s32.totalorder %s246, %s247
    %p261 = scmp.eq.s32.totalorder %s29, 3
    %p262 = por %p260, %p261
    %p264 = scmp.ne.s32.totalorder %s247, %s263
    %p265 = scmp.eq.s32.totalorder %s29, 0
    %p266 = por %p264, %p265
    %s267 = ssub.s32 %s31, %s38
    %p268 = scmp.eq.s32.totalorder %s267, 0
    %s270 = sadd.s32 %s269, 1
    %s271 = scalar_select %p268, %s269, %s270
    %p274 = pneg %p268
    %p275 = scmp.eq.s32.totalorder %s23, 3
    %p276 = por %p274, %p275
    %p277 = scmp.ne.s32.totalorder %s269, %s272
    %p278 = scmp.eq.s32.totalorder %s23, 0
    %p279 = por %p277, %p278
    %p280 = scmp.ne.s32.totalorder %s269, %s272
    %p281 = scmp.eq.s32.totalorder %s28, 3
    %p282 = por %p280, %p281
    %p283 = scmp.ne.s32.totalorder %s272, %s273
    %p284 = scmp.eq.s32.totalorder %s28, 0
    %p285 = por %p283, %p284
    %p286 = scmp.ne.s32.totalorder %s272, %s273
    %p287 = scmp.eq.s32.totalorder %s29, 3
    %p288 = por %p286, %p287
    %p290 = scmp.ne.s32.totalorder %s273, %s289
    %p291 = scmp.eq.s32.totalorder %s29, 0
    %p292 = por %p290, %p291
    %s293 = ssub.s32 %s31, %s38
    %p294 = scmp.eq.s32.totalorder %s293, 0
    %s296 = sadd.s32 %s295, 1
    %s297 = scalar_select %p294, %s295, %s296
    %p300 = pneg %p294
    %p301 = scmp.eq.s32.totalorder %s23, 3
    %p302 = por %p300, %p301
    %p303 = scmp.ne.s32.totalorder %s295, %s298
    %p304 = scmp.eq.s32.totalorder %s23, 0
    %p305 = por %p303, %p304
    %p306 = scmp.ne.s32.totalorder %s295, %s298
    %p307 = scmp.eq.s32.totalorder %s28, 3
    %p308 = por %p306, %p307
    %p309 = scmp.ne.s32.totalorder %s298, %s299
    %p310 = scmp.eq.s32.totalorder %s28, 0
    %p311 = por %p309, %p310
    %p312 = scmp.ne.s32.totalorder %s298, %s299
    %p313 = scmp.eq.s32.totalorder %s29, 3
    %p314 = por %p312, %p313
    %p316 = scmp.ne.s32.totalorder %s299, %s315
    %p317 = scmp.eq.s32.totalorder %s29, 0
    %p318 = por %p316, %p317
    %s319 = ssub.s32 %s31, %s38
    %p320 = scmp.eq.s32.totalorder %s319, 0
    %s322 = sadd.s32 %s321, 1
    %s323 = scalar_select %p320, %s321, %s322
    %p326 = pneg %p320
    %p327 = scmp.eq.s32.totalorder %s23, 3
    %p328 = por %p326, %p327
    %p329 = scmp.ne.s32.totalorder %s321, %s324
    %p330 = scmp.eq.s32.totalorder %s23, 0
    %p331 = por %p329, %p330
    %p332 = scmp.ne.s32.totalorder %s321, %s324
    %p333 = scmp.eq.s32.totalorder %s28, 3
    %p334 = por %p332, %p333
    %p335 = scmp.ne.s32.totalorder %s324, %s325
    %p336 = scmp.eq.s32.totalorder %s28, 0
    %p337 = por %p335, %p336
    %p338 = scmp.ne.s32.totalorder %s324, %s325
    %p339 = scmp.eq.s32.totalorder %s29, 3
    %p340 = por %p338, %p339
    %p342 = scmp.ne.s32.totalorder %s325, %s341
    %p343 = scmp.eq.s32.totalorder %s29, 0
    %p344 = por %p342, %p343
    %s346 = sadd.s32 %s345, 1
    %p349 = scmp.eq.s32.totalorder %s23, 3
    %p350 = scmp.ne.s32.totalorder %s345, %s347
    %p351 = scmp.eq.s32.totalorder %s23, 0
    %p352 = por %p350, %p351
    %p353 = scmp.ne.s32.totalorder %s345, %s347
    %p354 = scmp.eq.s32.totalorder %s28, 3
    %p355 = por %p353, %p354
    %p356 = scmp.ne.s32.totalorder %s347, %s348
    %p357 = scmp.eq.s32.totalorder %s28, 0
    %p358 = por %p356, %p357
    %p359 = scmp.ne.s32.totalorder %s347, %s348
    %p360 = scmp.eq.s32.totalorder %s29, 3
    %p361 = por %p359, %p360
    %p363 = scmp.ne.s32.totalorder %s348, %s362
    %p364 = scmp.eq.s32.totalorder %s29, 0
    %p365 = por %p363, %p364
    %s367 = sadd.s32 %s366, 1
    %p370 = scmp.eq.s32.totalorder %s23, 3
    %p371 = scmp.ne.s32.totalorder %s366, %s368
    %p372 = scmp.eq.s32.totalorder %s23, 0
    %p373 = por %p371, %p372
    %p374 = scmp.ne.s32.totalorder %s366, %s368
    %p375 = scmp.eq.s32.totalorder %s28, 3
    %p376 = por %p374, %p375
    %p377 = scmp.ne.s32.totalorder %s368, %s369
    %p378 = scmp.eq.s32.totalorder %s28, 0
    %p379 = por %p377, %p378
    %p380 = scmp.ne.s32.totalorder %s368, %s369
    %p381 = scmp.eq.s32.totalorder %s29, 3
    %p382 = por %p380, %p381
    %p384 = scmp.ne.s32.totalorder %s369, %s383
    %p385 = scmp.eq.s32.totalorder %s29, 0
    %p386 = por %p384, %p385
    %s388 = sadd.s32 %s387, 1
    %p391 = scmp.eq.s32.totalorder %s23, 3
    %p392 = scmp.ne.s32.totalorder %s387, %s389
    %p393 = scmp.eq.s32.totalorder %s23, 0
    %p394 = por %p392, %p393
    %p395 = scmp.ne.s32.totalorder %s387, %s389
    %p396 = scmp.eq.s32.totalorder %s28, 3
    %p397 = por %p395, %p396
    %p398 = scmp.ne.s32.totalorder %s389, %s390
    %p399 = scmp.eq.s32.totalorder %s28, 0
    %p400 = por %p398, %p399
    %p401 = scmp.ne.s32.totalorder %s389, %s390
    %p402 = scmp.eq.s32.totalorder %s29, 3
    %p403 = por %p401, %p402
    %p405 = scmp.ne.s32.totalorder %s390, %s404
    %p406 = scmp.eq.s32.totalorder %s29, 0
    %p407 = por %p405, %p406
    %s409 = sadd.s32 %s408, 1
    %p412 = scmp.eq.s32.totalorder %s23, 3
    %p413 = scmp.ne.s32.totalorder %s408, %s410
    %p414 = scmp.eq.s32.totalorder %s23, 0
    %p415 = por %p413, %p414
    %p416 = scmp.ne.s32.totalorder %s408, %s410
    %p417 = scmp.eq.s32.totalorder %s28, 3
    %p418 = por %p416, %p417
    %p419 = scmp.ne.s32.totalorder %s410, %s411
    %p420 = scmp.eq.s32.totalorder %s28, 0
    %p421 = por %p419, %p420
    %p422 = scmp.ne.s32.totalorder %s410, %s411
    %p423 = scmp.eq.s32.totalorder %s29, 3
    %p424 = por %p422, %p423
    %p426 = scmp.ne.s32.totalorder %s411, %s425
    %p427 = scmp.eq.s32.totalorder %s29, 0
    %p428 = por %p426, %p427
    %s430 = sadd.s32 %s429, 1
    %p433 = scmp.eq.s32.totalorder %s23, 3
    %p434 = scmp.ne.s32.totalorder %s429, %s431
    %p435 = scmp.eq.s32.totalorder %s23, 0
    %p436 = por %p434, %p435
    %p437 = scmp.ne.s32.totalorder %s429, %s431
    %p438 = scmp.eq.s32.totalorder %s28, 3
    %p439 = por %p437, %p438
    %p440 = scmp.ne.s32.totalorder %s431, %s432
    %p441 = scmp.eq.s32.totalorder %s28, 0
    %p442 = por %p440, %p441
    %p443 = scmp.ne.s32.totalorder %s431, %s432
    %p444 = scmp.eq.s32.totalorder %s29, 3
    %p445 = por %p443, %p444
    %p447 = scmp.ne.s32.totalorder %s432, %s446
    %p448 = scmp.eq.s32.totalorder %s29, 0
    %p449 = por %p447, %p448
    %s450 = ssub.s32 %s30, %s42
    %p451 = scmp.eq.s32.totalorder %s450, 0
    %s453 = sadd.s32 %s452, 1
    %s454 = scalar_select %p451, %s452, %s453
    %p457 = pneg %p451
    %p458 = scmp.eq.s32.totalorder %s23, 3
    %p459 = por %p457, %p458
    %p460 = scmp.ne.s32.totalorder %s452, %s455
    %p461 = scmp.eq.s32.totalorder %s23, 0
    %p462 = por %p460, %p461
    %p463 = scmp.ne.s32.totalorder %s452, %s455
    %p464 = scmp.eq.s32.totalorder %s28, 3
    %p465 = por %p463, %p464
    %p466 = scmp.ne.s32.totalorder %s455, %s456
    %p467 = scmp.eq.s32.totalorder %s28, 0
    %p468 = por %p466, %p467
    %p469 = scmp.ne.s32.totalorder %s455, %s456
    %p470 = scmp.eq.s32.totalorder %s29, 3
    %p471 = por %p469, %p470
    %p473 = scmp.ne.s32.totalorder %s456, %s472
    %p474 = scmp.eq.s32.totalorder %s29, 0
    %p475 = por %p473, %p474
    %p476 = scmp.le.s32.totalorder 1, %s23
    %p477 = scmp.lt.s32.totalorder %s23, 5
    %p478 = pnand %p476, %p477
    %p479 = pneg %p478
    // Predicated region
    $region9: #{_lambda_.5} parent=5 // pred_check
      _
    $region10: #{_lambda_.5} parent=5 // pred_check_branch
      %481 = sbr.rel (%p478) target = $region12
    $region11: #{_lambda_.5} parent=5 // pred_region
      %s482 = ssub.s32 %s23, 1
      // Predicated region
      $region13: #{_lambda_.5} parent=11 // pred_check
        %p483 = pneg %p82
      $region14: #{_lambda_.5} parent=11 // pred_check_branch
        %485 = sbr.rel (%p483) target = $region16
      $region15: #{_lambda_.5} parent=11 // pred_region
        _
      $region16: #{_lambda_.5} parent=11 // pred_fallthru
        _
      // Predicated region
      $region17: #{_lambda_.5} parent=11 // pred_check
        %p486 = pneg %p103
      $region18: #{_lambda_.5} parent=11 // pred_check_branch
        %488 = sbr.rel (%p486) target = $region20
      $region19: #{_lambda_.5} parent=11 // pred_region
        _
      $region20: #{_lambda_.5} parent=11 // pred_fallthru
        _
      // Predicated region
      $region21: #{_lambda_.5} parent=11 // pred_check
        %p489 = pneg %p358
      $region22: #{_lambda_.5} parent=11 // pred_check_branch
        %491 = sbr.rel (%p489) target = $region24
      $region23: #{_lambda_.5} parent=11 // pred_region
        _
      $region24: #{_lambda_.5} parent=11 // pred_fallthru
        _
      // Predicated region
      $region25: #{_lambda_.5} parent=11 // pred_check
        %p492 = pneg %p379
      $region26: #{_lambda_.5} parent=11 // pred_check_branch
        %494 = sbr.rel (%p492) target = $region28
      $region27: #{_lambda_.5} parent=11 // pred_region
        _
      $region28: #{_lambda_.5} parent=11 // pred_fallthru
        _
      // Predicated region
      $region29: #{_lambda_.5} parent=11 // pred_check
        %p495 = pneg %p400
      $region30: #{_lambda_.5} parent=11 // pred_check_branch
        %497 = sbr.rel (%p495) target = $region32
      $region31: #{_lambda_.5} parent=11 // pred_region
        _
      $region32: #{_lambda_.5} parent=11 // pred_fallthru
        _
      // Predicated region
      $region33: #{_lambda_.5} parent=11 // pred_check
        %p498 = pneg %p421
      $region34: #{_lambda_.5} parent=11 // pred_check_branch
        %500 = sbr.rel (%p498) target = $region36
      $region35: #{_lambda_.5} parent=11 // pred_region
        _
      $region36: #{_lambda_.5} parent=11 // pred_fallthru
        _
      // Predicated region
      $region37: #{_lambda_.5} parent=11 // pred_check
        %p501 = pneg %p442
      $region38: #{_lambda_.5} parent=11 // pred_check_branch
        %503 = sbr.rel (%p501) target = $region40
      $region39: #{_lambda_.5} parent=11 // pred_region
        _
      $region40: #{_lambda_.5} parent=11 // pred_fallthru
        _
    $region12: #{_lambda_.5} parent=5 // pred_fallthru
      _
    %p504 = scmp.lt.s32.totalorder %s23, 4
    // Predicated region
    $region41: #{_lambda_.5} parent=5 // pred_check
      %p505 = pneg %p504
    $region42: #{_lambda_.5} parent=5 // pred_check_branch
      %507 = sbr.rel (%p505) target = $region44
    $region43: #{_lambda_.5} parent=5 // pred_region
      // Predicated region
      $region45: #{_lambda_.5} parent=43 // pred_check
        %p508 = pneg %p55
      $region46: #{_lambda_.5} parent=43 // pred_check_branch
        %510 = sbr.rel (%p508) target = $region48
      $region47: #{_lambda_.5} parent=43 // pred_region
        %p511 = scmp.lt.s32.totalorder %s30, 1
        %s512 = scalar_select %p511, %s30, 1
        %s513 = smul.addr %s512, 32
        %s514 = smul.addr %s513, 8
        %s515 = scalar_lea.vmem %s0, %s514
      $region48: #{_lambda_.5} parent=43 // pred_fallthru
        _
      // Predicated region
      $region49: #{_lambda_.5} parent=43 // pred_check
        %p516 = pneg %p123
      $region50: #{_lambda_.5} parent=43 // pred_check_branch
        %518 = sbr.rel (%p516) target = $region52
      $region51: #{_lambda_.5} parent=43 // pred_region
        %p519 = scmp.lt.s32.totalorder %s31, 1
        %s520 = scalar_select %p519, %s31, 1
        %s521 = scalar_lea.vmem %s3, %s520
      $region52: #{_lambda_.5} parent=43 // pred_fallthru
        _
      // Predicated region
      $region53: #{_lambda_.5} parent=43 // pred_check
        %p522 = pneg %p149
      $region54: #{_lambda_.5} parent=43 // pred_check_branch
        %524 = sbr.rel (%p522) target = $region56
      $region55: #{_lambda_.5} parent=43 // pred_region
        %p525 = scmp.lt.s32.totalorder %s31, 1
        %s526 = scalar_select %p525, %s31, 1
        %s527 = scalar_lea.vmem %s4, %s526
      $region56: #{_lambda_.5} parent=43 // pred_fallthru
        _
      // Predicated region
      $region57: #{_lambda_.5} parent=43 // pred_check
        %p528 = pneg %p175
      $region58: #{_lambda_.5} parent=43 // pred_check_branch
        %530 = sbr.rel (%p528) target = $region60
      $region59: #{_lambda_.5} parent=43 // pred_region
        %p531 = scmp.lt.s32.totalorder %s31, 1
        %s532 = scalar_select %p531, %s31, 1
        %s533 = scalar_lea.vmem %s5, %s532
      $region60: #{_lambda_.5} parent=43 // pred_fallthru
        _
      // Predicated region
      $region61: #{_lambda_.5} parent=43 // pred_check
        %p534 = pneg %p201
      $region62: #{_lambda_.5} parent=43 // pred_check_branch
        %536 = sbr.rel (%p534) target = $region64
      $region63: #{_lambda_.5} parent=43 // pred_region
        %p537 = scmp.lt.s32.totalorder %s31, 1
        %s538 = scalar_select %p537, %s31, 1
        %s539 = scalar_lea.vmem %s6, %s538
      $region64: #{_lambda_.5} parent=43 // pred_fallthru
        _
      // Predicated region
      $region65: #{_lambda_.5} parent=43 // pred_check
        %p540 = pneg %p227
      $region66: #{_lambda_.5} parent=43 // pred_check_branch
        %542 = sbr.rel (%p540) target = $region68
      $region67: #{_lambda_.5} parent=43 // pred_region
        %p543 = scmp.lt.s32.totalorder %s31, 1
        %s544 = scalar_select %p543, %s31, 1
        %s545 = scalar_lea.vmem %s7, %s544
      $region68: #{_lambda_.5} parent=43 // pred_fallthru
        _
      // Predicated region
      $region69: #{_lambda_.5} parent=43 // pred_check
        %p546 = pneg %p253
      $region70: #{_lambda_.5} parent=43 // pred_check_branch
        %548 = sbr.rel (%p546) target = $region72
      $region71: #{_lambda_.5} parent=43 // pred_region
        %p549 = scmp.lt.s32.totalorder %s31, 1
        %s550 = scalar_select %p549, %s31, 1
        %s551 = scalar_lea.vmem %s8, %s550
      $region72: #{_lambda_.5} parent=43 // pred_fallthru
        _
      // Predicated region
      $region73: #{_lambda_.5} parent=43 // pred_check
        %p552 = pneg %p279
      $region74: #{_lambda_.5} parent=43 // pred_check_branch
        %554 = sbr.rel (%p552) target = $region76
      $region75: #{_lambda_.5} parent=43 // pred_region
        %p555 = scmp.lt.s32.totalorder %s31, 1
        %s556 = scalar_select %p555, %s31, 1
        %s557 = scalar_lea.vmem %s9, %s556
      $region76: #{_lambda_.5} parent=43 // pred_fallthru
        _
      // Predicated region
      $region77: #{_lambda_.5} parent=43 // pred_check
        %p558 = pneg %p305
      $region78: #{_lambda_.5} parent=43 // pred_check_branch
        %560 = sbr.rel (%p558) target = $region80
      $region79: #{_lambda_.5} parent=43 // pred_region
        %p561 = scmp.lt.s32.totalorder %s31, 1
        %s562 = scalar_select %p561, %s31, 1
        %s563 = scalar_lea.vmem %s10, %s562
      $region80: #{_lambda_.5} parent=43 // pred_fallthru
        _
      // Predicated region
      $region81: #{_lambda_.5} parent=43 // pred_check
        %p564 = pneg %p331
      $region82: #{_lambda_.5} parent=43 // pred_check_branch
        %566 = sbr.rel (%p564) target = $region84
      $region83: #{_lambda_.5} parent=43 // pred_region
        %p567 = scmp.lt.s32.totalorder %s31, 1
        %s568 = scalar_select %p567, %s31, 1
        %s569 = scalar_lea.vmem %s11, %s568
      $region84: #{_lambda_.5} parent=43 // pred_fallthru
        _
    $region44: #{_lambda_.5} parent=5 // pred_fallthru
      _
    %p570 = scmp.le.s32.totalorder 1, %s23
    %p571 = scmp.lt.s32.totalorder %s23, 5
    %p572 = pnand %p570, %p571
    %p573 = pneg %p572
    // Predicated region
    $region85: #{_lambda_.5} parent=5 // pred_check
      _
    $region86: #{_lambda_.5} parent=5 // pred_check_branch
      %575 = sbr.rel (%p572) target = $region88
    $region87: #{_lambda_.5} parent=5 // pred_region
      %s576 = ssub.s32 %s23, 1
      %p577 = scmp.lt.s32.totalorder %s32, 1
      %s578 = scalar_select %p577, %s32, 1
      %s579 = smul.addr %s578, 32
      %s580 = smul.addr %s579, 8
      %s581 = scalar_lea.vmem %s0, %s580
      %p582 = pneg %p61
      %p583 = pneg %p58
      %p584 = pneg %p82
      %p585 = pneg %p79
      %p586 = pneg %p103
      %p587 = pneg %p100
      %p588 = scmp.lt.s32.totalorder %s33, 1
      %s589 = scalar_select %p588, %s33, 1
      %s590 = scalar_lea.vmem %s3, %s589
      %p591 = pneg %p129
      %p592 = pneg %p126
      %p593 = scmp.lt.s32.totalorder %s33, 1
      %s594 = scalar_select %p593, %s33, 1
      %s595 = scalar_lea.vmem %s4, %s594
      %p596 = pneg %p155
      %p597 = pneg %p152
      %p598 = scmp.lt.s32.totalorder %s33, 1
      %s599 = scalar_select %p598, %s33, 1
      %s600 = scalar_lea.vmem %s5, %s599
      %p601 = pneg %p181
      %p602 = pneg %p178
      %p603 = scmp.lt.s32.totalorder %s33, 1
      %s604 = scalar_select %p603, %s33, 1
      %s605 = scalar_lea.vmem %s6, %s604
      %p606 = pneg %p207
      %p607 = pneg %p204
      %p608 = scmp.lt.s32.totalorder %s33, 1
      %s609 = scalar_select %p608, %s33, 1
      %s610 = scalar_lea.vmem %s7, %s609
      %p611 = pneg %p233
      %p612 = pneg %p230
      %p613 = scmp.lt.s32.totalorder %s33, 1
      %s614 = scalar_select %p613, %s33, 1
      %s615 = scalar_lea.vmem %s8, %s614
      %p616 = pneg %p259
      %p617 = pneg %p256
      %p618 = scmp.lt.s32.totalorder %s33, 1
      %s619 = scalar_select %p618, %s33, 1
      %s620 = scalar_lea.vmem %s9, %s619
      %p621 = pneg %p285
      %p622 = pneg %p282
      %p623 = scmp.lt.s32.totalorder %s33, 1
      %s624 = scalar_select %p623, %s33, 1
      %s625 = scalar_lea.vmem %s10, %s624
      %p626 = pneg %p311
      %p627 = pneg %p308
      %p628 = scmp.lt.s32.totalorder %s33, 1
      %s629 = scalar_select %p628, %s33, 1
      %s630 = scalar_lea.vmem %s11, %s629
      %p631 = pneg %p337
      %p632 = pneg %p334
      %p633 = pneg %p358
      %p634 = pneg %p355
      %p635 = pneg %p379
      %p636 = pneg %p376
      %p637 = pneg %p400
      %p638 = pneg %p397
      %p639 = pneg %p421
      %p640 = pneg %p418
      %p641 = pneg %p442
      %p642 = pneg %p439
      %p643 = pneg %p468
      %p644 = pneg %p465
      %p645 = scmp.lt.s32.totalorder %s32, 1
      %s646 = scalar_select %p645, %s32, 1
      %s647 = smul.addr %s646, 32
      %s648 = smul.addr %s647, 8
      %s649 = scalar_lea.vmem %s17, %s648
      %p650 = scmp.lt.s32.totalorder %s32, 1
      %s651 = scalar_select %p650, %s32, 1
      %s652 = smul.addr %s651, 32
      %s653 = smul.addr %s652, 8
      %s654 = scalar_lea.vmem %s0, %s653
      %p655 = scmp.lt.s32.totalorder %s33, 1
      %s656 = scalar_select %p655, %s33, 1
      %s657 = scalar_lea.vmem %s3, %s656
      %p658 = scmp.lt.s32.totalorder %s33, 1
      %s659 = scalar_select %p658, %s33, 1
      %s660 = scalar_lea.vmem %s4, %s659
      %p661 = scmp.lt.s32.totalorder %s33, 1
      %s662 = scalar_select %p661, %s33, 1
      %s663 = scalar_lea.vmem %s5, %s662
      %p664 = scmp.lt.s32.totalorder %s33, 1
      %s665 = scalar_select %p664, %s33, 1
      %s666 = scalar_lea.vmem %s6, %s665
      %p667 = scmp.lt.s32.totalorder %s33, 1
      %s668 = scalar_select %p667, %s33, 1
      %s669 = scalar_lea.vmem %s7, %s668
      %p670 = scmp.lt.s32.totalorder %s33, 1
      %s671 = scalar_select %p670, %s33, 1
      %s672 = scalar_lea.vmem %s8, %s671
      %p673 = scmp.lt.s32.totalorder %s33, 1
      %s674 = scalar_select %p673, %s33, 1
      %s675 = scalar_lea.vmem %s9, %s674
      %p676 = scmp.lt.s32.totalorder %s33, 1
      %s677 = scalar_select %p676, %s33, 1
      %s678 = scalar_lea.vmem %s10, %s677
      %p679 = scmp.lt.s32.totalorder %s33, 1
      %s680 = scalar_select %p679, %s33, 1
      %s681 = scalar_lea.vmem %s11, %s680
      %p682 = scmp.lt.s32.totalorder %s32, 1
      %s683 = scalar_select %p682, %s32, 1
      %s684 = smul.addr %s683, 32
      %s685 = smul.addr %s684, 8
      %s686 = scalar_lea.vmem %s17, %s685
      %p687 = scmp.eq.s32.totalorder %s33, 0
      // Predicated region
      $region89: #{_lambda_.5} parent=87 // pred_check
        %p688 = pneg %p687
      $region90: #{_lambda_.5} parent=87 // pred_check_branch
        %690 = sbr.rel (%p688) target = $region92
      $region91: #{_lambda_.5} parent=87 // pred_region
        %v691 = vld [vmem:[%s654] sm:$0xff]
        %v692 = vld [vmem:[%s654 + $0x8] sm:$0xff]
        %v693 = vld [vmem:[%s654 + $0x10] sm:$0xff]
        %v694 = vld [vmem:[%s654 + $0x18] sm:$0xff]
        %v695 = vld [vmem:[%s654 + $0x20] sm:$0xff]
        %v696 = vld [vmem:[%s654 + $0x28] sm:$0xff]
        %v697 = vld [vmem:[%s654 + $0x30] sm:$0xff]
        %v698 = vld [vmem:[%s654 + $0x38] sm:$0xff]
        %v699 = vld [vmem:[%s654 + $0x40] sm:$0xff]
        %v700 = vld [vmem:[%s654 + $0x48] sm:$0xff]
        %v701 = vld [vmem:[%s654 + $0x50] sm:$0xff]
        %v702 = vld [vmem:[%s654 + $0x58] sm:$0xff]
        %v703 = vld [vmem:[%s654 + $0x60] sm:$0xff]
        %v704 = vld [vmem:[%s654 + $0x68] sm:$0xff]
        %v705 = vld [vmem:[%s654 + $0x70] sm:$0xff]
        %v706 = vld [vmem:[%s654 + $0x78] sm:$0xff]
        %v707 = vld [vmem:[%s654 + $0x80] sm:$0xff]
        %v708 = vld [vmem:[%s654 + $0x88] sm:$0xff]
        %v709 = vld [vmem:[%s654 + $0x90] sm:$0xff]
        %v710 = vld [vmem:[%s654 + $0x98] sm:$0xff]
        %v711 = vld [vmem:[%s654 + $0xa0] sm:$0xff]
        %v712 = vld [vmem:[%s654 + $0xa8] sm:$0xff]
        %v713 = vld [vmem:[%s654 + $0xb0] sm:$0xff]
        %v714 = vld [vmem:[%s654 + $0xb8] sm:$0xff]
        %v715 = vld [vmem:[%s654 + $0xc0] sm:$0xff]
        %v716 = vld [vmem:[%s654 + $0xc8] sm:$0xff]
        %v717 = vld [vmem:[%s654 + $0xd0] sm:$0xff]
        %v718 = vld [vmem:[%s654 + $0xd8] sm:$0xff]
        %v719 = vld [vmem:[%s654 + $0xe0] sm:$0xff]
        %v720 = vld [vmem:[%s654 + $0xe8] sm:$0xff]
        %v721 = vld [vmem:[%s654 + $0xf0] sm:$0xff]
        %v722 = vld [vmem:[%s654 + $0xf8] sm:$0xff]
        %v723 = vld [vmem:[%s1] sm:$0xff]
        %v724 = vld [vmem:[%s2] sm:$0x1]
        %v726 = vlaneseq
        %v727 = vshrl.u32 %v726, 7
        %v728 = vsub.s32 0, %v727
        %v729 = vrot.slane %v724, %v728
        %vm731 = vcmask 64512
        %v733 = vsel %vm731, %v691, 0
        %v736 = vsel %vm731, %v692, 0
        %v739 = vsel %vm731, %v693, 0
        %v742 = vsel %vm731, %v694, 0
        %v745 = vsel %vm731, %v695, 0
        %v748 = vsel %vm731, %v696, 0
        %v751 = vsel %vm731, %v697, 0
        %v754 = vsel %vm731, %v698, 0
        %v757 = vsel %vm731, %v699, 0
        %v760 = vsel %vm731, %v700, 0
        %v763 = vsel %vm731, %v701, 0
        %v766 = vsel %vm731, %v702, 0
        %v769 = vsel %vm731, %v703, 0
        %v772 = vsel %vm731, %v704, 0
        %v775 = vsel %vm731, %v705, 0
        %v778 = vsel %vm731, %v706, 0
        %v781 = vsel %vm731, %v707, 0
        %v784 = vsel %vm731, %v708, 0
        %v787 = vsel %vm731, %v709, 0
        %v790 = vsel %vm731, %v710, 0
        %v793 = vsel %vm731, %v711, 0
        %v796 = vsel %vm731, %v712, 0
        %v799 = vsel %vm731, %v713, 0
        %v802 = vsel %vm731, %v714, 0
        %v805 = vsel %vm731, %v715, 0
        %v808 = vsel %vm731, %v716, 0
        %v811 = vsel %vm731, %v717, 0
        %v814 = vsel %vm731, %v718, 0
        %v817 = vsel %vm731, %v719, 0
        %v820 = vsel %vm731, %v720, 0
        %v823 = vsel %vm731, %v721, 0
        %v826 = vsel %vm731, %v722, 0
        %828 = vmatprep.subr.mxu0 0.0
        %829 = vmatpush1.msra.mxu0 0.0
        %830 = vmatprep.subr.mxu0 0.0
        %831 = vmatpush1.msra.mxu0 0.0
        %832 = vmatprep.subr.mxu0 0.0
        %833 = vmatpush1.msra.mxu0 0.0
        %834 = vmatprep.subr.mxu0 0.0
        %835 = vmatpush1.msra.mxu0 0.0
        %836 = vmatprep.subr.mxu0 0.0
        %837 = vmatpush1.msra.mxu0 0.0
        %838 = vmatprep.subr.mxu0 0.0
        %839 = vmatpush1.msra.mxu0 0.0
        %840 = vmatprep.subr.mxu0 0.0
        %841 = vmatpush1.msra.mxu0 0.0
        %842 = vmatprep.subr.mxu0 0.0
        %843 = vmatpush1.msra.mxu0 0.0
        %844 = vmatprep.subr.mxu0 0.0
        %845 = vmatpush1.msra.mxu0 0.0
        %846 = vmatprep.subr.mxu0 0.0
        %847 = vmatpush1.msra.mxu0 0.0
        %848 = vmatprep.subr.mxu0 0.0
        %849 = vmatpush1.msra.mxu0 0.0
        %850 = vmatprep.subr.mxu0 0.0
        %851 = vmatpush1.msra.mxu0 0.0
        %852 = vmatprep.subr.mxu0 0.0
        %853 = vmatpush1.msra.mxu0 0.0
        %854 = vmatprep.subr.mxu0 0.0
        %855 = vmatpush1.msra.mxu0 0.0
        %856 = vmatprep.subr.mxu0 0.0
        %857 = vmatpush1.msra.mxu0 0.0
        %858 = vmatprep.subr.mxu0 0.0
        %859 = vmatpush1.msra.mxu0 %v723
        %860 = vmatprep.subr.mxu0 0.0
        %861 = vmatpush2.msra.mxu0 0.0
        %862 = vmatprep.subr.mxu0 0.0
        %863 = vmatpush2.msra.mxu0 0.0
        %864 = vmatprep.subr.mxu0 0.0
        %865 = vmatpush2.msra.mxu0 0.0
        %866 = vmatprep.subr.mxu0 0.0
        %867 = vmatpush2.msra.mxu0 0.0
        %868 = vmatprep.subr.mxu0 0.0
        %869 = vmatpush2.msra.mxu0 0.0
        %870 = vmatprep.subr.mxu0 0.0
        %871 = vmatpush2.msra.mxu0 0.0
        %872 = vmatprep.subr.mxu0 0.0
        %873 = vmatpush2.msra.mxu0 0.0
        %874 = vmatprep.subr.mxu0 0.0
        %875 = vmatpush2.msra.mxu0 0.0
        %876 = vmatprep.subr.mxu0 0.0
        %877 = vmatpush2.msra.mxu0 0.0
        %878 = vmatprep.subr.mxu0 0.0
        %879 = vmatpush2.msra.mxu0 0.0
        %880 = vmatprep.subr.mxu0 0.0
        %881 = vmatpush2.msra.mxu0 0.0
        %882 = vmatprep.subr.mxu0 0.0
        %883 = vmatpush2.msra.mxu0 0.0
        %884 = vmatprep.subr.mxu0 0.0
        %885 = vmatpush2.msra.mxu0 0.0
        %886 = vmatprep.subr.mxu0 0.0
        %887 = vmatpush2.msra.mxu0 0.0
        %888 = vmatprep.subr.mxu0 0.0
        %889 = vmatpush2.msra.mxu0 0.0
        %890 = vmatprep.subr.mxu0 0.0
        %891 = vmatpush2.msra.mxu0 0.0
        %892 = vmatprep.mubr.f32.mxu0 0.0
        %893 = vmatmul.mubr.f32.gmra.mxu0 %v733
        %v894 = vpop.f32.mrf.mxu0
        %v895 = vadd.f32 %v729, %v894
        %v896 = vpop.f32.mrf.mxu0
        %897 = vmatprep.mubr.f32.mxu0 0.0
        %898 = vmatmul.mubr.f32.gmra.mxu0 %v736
        %v899 = vpop.f32.mrf.mxu0
        %v900 = vadd.f32 %v729, %v899
        %v901 = vpop.f32.mrf.mxu0
        %902 = vmatprep.mubr.f32.mxu0 0.0
        %903 = vmatmul.mubr.f32.gmra.mxu0 %v739
        %v904 = vpop.f32.mrf.mxu0
        %v905 = vadd.f32 %v729, %v904
        %v906 = vpop.f32.mrf.mxu0
        %907 = vmatprep.mubr.f32.mxu0 0.0
        %908 = vmatmul.mubr.f32.gmra.mxu0 %v742
        %v909 = vpop.f32.mrf.mxu0
        %v910 = vadd.f32 %v729, %v909
        %v911 = vpop.f32.mrf.mxu0
        %912 = vmatprep.mubr.f32.mxu0 0.0
        %913 = vmatmul.mubr.f32.gmra.mxu0 %v745
        %v914 = vpop.f32.mrf.mxu0
        %v915 = vadd.f32 %v729, %v914
        %v916 = vpop.f32.mrf.mxu0
        %917 = vmatprep.mubr.f32.mxu0 0.0
        %918 = vmatmul.mubr.f32.gmra.mxu0 %v748
        %v919 = vpop.f32.mrf.mxu0
        %v920 = vadd.f32 %v729, %v919
        %v921 = vpop.f32.mrf.mxu0
        %922 = vmatprep.mubr.f32.mxu0 0.0
        %923 = vmatmul.mubr.f32.gmra.mxu0 %v751
        %v924 = vpop.f32.mrf.mxu0
        %v925 = vadd.f32 %v729, %v924
        %v926 = vpop.f32.mrf.mxu0
        %927 = vmatprep.mubr.f32.mxu0 0.0
        %928 = vmatmul.mubr.f32.gmra.mxu0 %v754
        %v929 = vpop.f32.mrf.mxu0
        %v930 = vadd.f32 %v729, %v929
        %v931 = vpop.f32.mrf.mxu0
        %932 = vmatprep.mubr.f32.mxu0 0.0
        %933 = vmatmul.mubr.f32.gmra.mxu0 %v757
        %v934 = vpop.f32.mrf.mxu0
        %v935 = vadd.f32 %v729, %v934
        %v936 = vpop.f32.mrf.mxu0
        %937 = vmatprep.mubr.f32.mxu0 0.0
        %938 = vmatmul.mubr.f32.gmra.mxu0 %v760
        %v939 = vpop.f32.mrf.mxu0
        %v940 = vadd.f32 %v729, %v939
        %v941 = vpop.f32.mrf.mxu0
        %942 = vmatprep.mubr.f32.mxu0 0.0
        %943 = vmatmul.mubr.f32.gmra.mxu0 %v763
        %v944 = vpop.f32.mrf.mxu0
        %v945 = vadd.f32 %v729, %v944
        %v946 = vpop.f32.mrf.mxu0
        %947 = vmatprep.mubr.f32.mxu0 0.0
        %948 = vmatmul.mubr.f32.gmra.mxu0 %v766
        %v949 = vpop.f32.mrf.mxu0
        %v950 = vadd.f32 %v729, %v949
        %v951 = vpop.f32.mrf.mxu0
        %952 = vmatprep.mubr.f32.mxu0 0.0
        %953 = vmatmul.mubr.f32.gmra.mxu0 %v769
        %v954 = vpop.f32.mrf.mxu0
        %v955 = vadd.f32 %v729, %v954
        %v956 = vpop.f32.mrf.mxu0
        %957 = vmatprep.mubr.f32.mxu0 0.0
        %958 = vmatmul.mubr.f32.gmra.mxu0 %v772
        %v959 = vpop.f32.mrf.mxu0
        %v960 = vadd.f32 %v729, %v959
        %v961 = vpop.f32.mrf.mxu0
        %962 = vmatprep.mubr.f32.mxu0 0.0
        %963 = vmatmul.mubr.f32.gmra.mxu0 %v775
        %v964 = vpop.f32.mrf.mxu0
        %v965 = vadd.f32 %v729, %v964
        %v966 = vpop.f32.mrf.mxu0
        %967 = vmatprep.mubr.f32.mxu0 0.0
        %968 = vmatmul.mubr.f32.gmra.mxu0 %v778
        %v969 = vpop.f32.mrf.mxu0
        %v970 = vadd.f32 %v729, %v969
        %v971 = vpop.f32.mrf.mxu0
        %972 = vmatprep.mubr.f32.mxu0 0.0
        %973 = vmatmul.mubr.f32.gmra.mxu0 %v781
        %v974 = vpop.f32.mrf.mxu0
        %v975 = vadd.f32 %v729, %v974
        %v976 = vpop.f32.mrf.mxu0
        %977 = vmatprep.mubr.f32.mxu0 0.0
        %978 = vmatmul.mubr.f32.gmra.mxu0 %v784
        %v979 = vpop.f32.mrf.mxu0
        %v980 = vadd.f32 %v729, %v979
        %v981 = vpop.f32.mrf.mxu0
        %982 = vmatprep.mubr.f32.mxu0 0.0
        %983 = vmatmul.mubr.f32.gmra.mxu0 %v787
        %v984 = vpop.f32.mrf.mxu0
        %v985 = vadd.f32 %v729, %v984
        %v986 = vpop.f32.mrf.mxu0
        %987 = vmatprep.mubr.f32.mxu0 0.0
        %988 = vmatmul.mubr.f32.gmra.mxu0 %v790
        %v989 = vpop.f32.mrf.mxu0
        %v990 = vadd.f32 %v729, %v989
        %v991 = vpop.f32.mrf.mxu0
        %992 = vmatprep.mubr.f32.mxu0 0.0
        %993 = vmatmul.mubr.f32.gmra.mxu0 %v793
        %v994 = vpop.f32.mrf.mxu0
        %v995 = vadd.f32 %v729, %v994
        %v996 = vpop.f32.mrf.mxu0
        %997 = vmatprep.mubr.f32.mxu0 0.0
        %998 = vmatmul.mubr.f32.gmra.mxu0 %v796
        %v999 = vpop.f32.mrf.mxu0
        %v1000 = vadd.f32 %v729, %v999
        %v1001 = vpop.f32.mrf.mxu0
        %1002 = vmatprep.mubr.f32.mxu0 0.0
        %1003 = vmatmul.mubr.f32.gmra.mxu0 %v799
        %v1004 = vpop.f32.mrf.mxu0
        %v1005 = vadd.f32 %v729, %v1004
        %v1006 = vpop.f32.mrf.mxu0
        %1007 = vmatprep.mubr.f32.mxu0 0.0
        %1008 = vmatmul.mubr.f32.gmra.mxu0 %v802
        %v1009 = vpop.f32.mrf.mxu0
        %v1010 = vadd.f32 %v729, %v1009
        %v1011 = vpop.f32.mrf.mxu0
        %1012 = vmatprep.mubr.f32.mxu0 0.0
        %1013 = vmatmul.mubr.f32.gmra.mxu0 %v805
        %v1014 = vpop.f32.mrf.mxu0
        %v1015 = vadd.f32 %v729, %v1014
        %v1016 = vpop.f32.mrf.mxu0
        %1017 = vmatprep.mubr.f32.mxu0 0.0
        %1018 = vmatmul.mubr.f32.gmra.mxu0 %v808
        %v1019 = vpop.f32.mrf.mxu0
        %v1020 = vadd.f32 %v729, %v1019
        %v1021 = vpop.f32.mrf.mxu0
        %1022 = vmatprep.mubr.f32.mxu0 0.0
        %1023 = vmatmul.mubr.f32.gmra.mxu0 %v811
        %v1024 = vpop.f32.mrf.mxu0
        %v1025 = vadd.f32 %v729, %v1024
        %v1026 = vpop.f32.mrf.mxu0
        %1027 = vmatprep.mubr.f32.mxu0 0.0
        %1028 = vmatmul.mubr.f32.gmra.mxu0 %v814
        %v1029 = vpop.f32.mrf.mxu0
        %v1030 = vadd.f32 %v729, %v1029
        %v1031 = vpop.f32.mrf.mxu0
        %1032 = vmatprep.mubr.f32.mxu0 0.0
        %1033 = vmatmul.mubr.f32.gmra.mxu0 %v817
        %v1034 = vpop.f32.mrf.mxu0
        %v1035 = vadd.f32 %v729, %v1034
        %v1036 = vpop.f32.mrf.mxu0
        %1037 = vmatprep.mubr.f32.mxu0 0.0
        %1038 = vmatmul.mubr.f32.gmra.mxu0 %v820
        %v1039 = vpop.f32.mrf.mxu0
        %v1040 = vadd.f32 %v729, %v1039
        %v1041 = vpop.f32.mrf.mxu0
        %1042 = vmatprep.mubr.f32.mxu0 0.0
        %1043 = vmatmul.mubr.f32.gmra.mxu0 %v823
        %v1044 = vpop.f32.mrf.mxu0
        %v1045 = vadd.f32 %v729, %v1044
        %v1046 = vpop.f32.mrf.mxu0
        %1047 = vmatprep.mubr.f32.mxu0 0.0
        %1048 = vmatmul.mubr.f32.gmra.mxu0 %v826
        %v1049 = vpop.f32.mrf.mxu0
        %v1050 = vadd.f32 %v729, %v1049
        %v1051 = vpop.f32.mrf.mxu0
        %1052 = vdwg.mxu0
        %vm1053 = vcmask 130048
        %1054 = vst.msk [vmem:[%s686] sm:$0xff] %vm1053, %v895
        %1055 = vst.msk [vmem:[%s686 + $0x8] sm:$0xff] %vm1053, %v900
        %1056 = vst.msk [vmem:[%s686 + $0x10] sm:$0xff] %vm1053, %v905
        %1057 = vst.msk [vmem:[%s686 + $0x18] sm:$0xff] %vm1053, %v910
        %1058 = vst.msk [vmem:[%s686 + $0x20] sm:$0xff] %vm1053, %v915
        %1059 = vst.msk [vmem:[%s686 + $0x28] sm:$0xff] %vm1053, %v920
        %1060 = vst.msk [vmem:[%s686 + $0x30] sm:$0xff] %vm1053, %v925
        %1061 = vst.msk [vmem:[%s686 + $0x38] sm:$0xff] %vm1053, %v930
        %1062 = vst.msk [vmem:[%s686 + $0x40] sm:$0xff] %vm1053, %v935
        %1063 = vst.msk [vmem:[%s686 + $0x48] sm:$0xff] %vm1053, %v940
        %1064 = vst.msk [vmem:[%s686 + $0x50] sm:$0xff] %vm1053, %v945
        %1065 = vst.msk [vmem:[%s686 + $0x58] sm:$0xff] %vm1053, %v950
        %1066 = vst.msk [vmem:[%s686 + $0x60] sm:$0xff] %vm1053, %v955
        %1067 = vst.msk [vmem:[%s686 + $0x68] sm:$0xff] %vm1053, %v960
        %1068 = vst.msk [vmem:[%s686 + $0x70] sm:$0xff] %vm1053, %v965
        %1069 = vst.msk [vmem:[%s686 + $0x78] sm:$0xff] %vm1053, %v970
        %1070 = vst.msk [vmem:[%s686 + $0x80] sm:$0xff] %vm1053, %v975
        %1071 = vst.msk [vmem:[%s686 + $0x88] sm:$0xff] %vm1053, %v980
        %1072 = vst.msk [vmem:[%s686 + $0x90] sm:$0xff] %vm1053, %v985
        %1073 = vst.msk [vmem:[%s686 + $0x98] sm:$0xff] %vm1053, %v990
        %1074 = vst.msk [vmem:[%s686 + $0xa0] sm:$0xff] %vm1053, %v995
        %1075 = vst.msk [vmem:[%s686 + $0xa8] sm:$0xff] %vm1053, %v1000
        %1076 = vst.msk [vmem:[%s686 + $0xb0] sm:$0xff] %vm1053, %v1005
        %1077 = vst.msk [vmem:[%s686 + $0xb8] sm:$0xff] %vm1053, %v1010
        %1078 = vst.msk [vmem:[%s686 + $0xc0] sm:$0xff] %vm1053, %v1015
        %1079 = vst.msk [vmem:[%s686 + $0xc8] sm:$0xff] %vm1053, %v1020
        %1080 = vst.msk [vmem:[%s686 + $0xd0] sm:$0xff] %vm1053, %v1025
        %1081 = vst.msk [vmem:[%s686 + $0xd8] sm:$0xff] %vm1053, %v1030
        %1082 = vst.msk [vmem:[%s686 + $0xe0] sm:$0xff] %vm1053, %v1035
        %1083 = vst.msk [vmem:[%s686 + $0xe8] sm:$0xff] %vm1053, %v1040
        %1084 = vst.msk [vmem:[%s686 + $0xf0] sm:$0xff] %vm1053, %v1045
        %1085 = vst.msk [vmem:[%s686 + $0xf8] sm:$0xff] %vm1053, %v1050
      $region92: #{_lambda_.5} parent=87 // pred_fallthru
        _
      %v1086 = vld [vmem:[%s686] sm:$0xff]
      %v1087 = vld [vmem:[%s686 + $0x8] sm:$0xff]
      %v1088 = vld [vmem:[%s686 + $0x10] sm:$0xff]
      %v1089 = vld [vmem:[%s686 + $0x18] sm:$0xff]
      %v1090 = vld [vmem:[%s686 + $0x20] sm:$0xff]
      %v1091 = vld [vmem:[%s686 + $0x28] sm:$0xff]
      %v1092 = vld [vmem:[%s686 + $0x30] sm:$0xff]
      %v1093 = vld [vmem:[%s686 + $0x38] sm:$0xff]
      %v1094 = vld [vmem:[%s686 + $0x40] sm:$0xff]
      %v1095 = vld [vmem:[%s686 + $0x48] sm:$0xff]
      %v1096 = vld [vmem:[%s686 + $0x50] sm:$0xff]
      %v1097 = vld [vmem:[%s686 + $0x58] sm:$0xff]
      %v1098 = vld [vmem:[%s686 + $0x60] sm:$0xff]
      %v1099 = vld [vmem:[%s686 + $0x68] sm:$0xff]
      %v1100 = vld [vmem:[%s686 + $0x70] sm:$0xff]
      %v1101 = vld [vmem:[%s686 + $0x78] sm:$0xff]
      %v1102 = vld [vmem:[%s686 + $0x80] sm:$0xff]
      %v1103 = vld [vmem:[%s686 + $0x88] sm:$0xff]
      %v1104 = vld [vmem:[%s686 + $0x90] sm:$0xff]
      %v1105 = vld [vmem:[%s686 + $0x98] sm:$0xff]
      %v1106 = vld [vmem:[%s686 + $0xa0] sm:$0xff]
      %v1107 = vld [vmem:[%s686 + $0xa8] sm:$0xff]
      %v1108 = vld [vmem:[%s686 + $0xb0] sm:$0xff]
      %v1109 = vld [vmem:[%s686 + $0xb8] sm:$0xff]
      %v1110 = vld [vmem:[%s686 + $0xc0] sm:$0xff]
      %v1111 = vld [vmem:[%s686 + $0xc8] sm:$0xff]
      %v1112 = vld [vmem:[%s686 + $0xd0] sm:$0xff]
      %v1113 = vld [vmem:[%s686 + $0xd8] sm:$0xff]
      %v1114 = vld [vmem:[%s686 + $0xe0] sm:$0xff]
      %v1115 = vld [vmem:[%s686 + $0xe8] sm:$0xff]
      %v1116 = vld [vmem:[%s686 + $0xf0] sm:$0xff]
      %v1117 = vld [vmem:[%s686 + $0xf8] sm:$0xff]
      %v1118 = vld [vmem:[%s657] sm:$0x1]
      %v1119 = vld [vmem:[%s660] sm:$0x1]
      %v1120 = vld [vmem:[%s675] sm:$0x1]
      %v1121 = vld [vmem:[%s678] sm:$0x1]
      %v1122 = vld [vmem:[%s681] sm:$0x1]
      %vm1123 = vcmask 130048
      %v1124 = vsel %vm1123, %v1086, 0.0
      %1125 = vadd.xlane.f32.xlu0 %v1124
      %v1126 = vpop.xlane.xlu0 %1125
      %v1127 = vsel %vm1123, %v1087, 0.0
      %1128 = vadd.xlane.f32.xlu0 %v1127
      %v1129 = vpop.xlane.xlu0 %1128
      %v1130 = vsel %vm1123, %v1088, 0.0
      %1131 = vadd.xlane.f32.xlu0 %v1130
      %v1132 = vpop.xlane.xlu0 %1131
      %v1133 = vsel %vm1123, %v1089, 0.0
      %1134 = vadd.xlane.f32.xlu0 %v1133
      %v1135 = vpop.xlane.xlu0 %1134
      %v1136 = vsel %vm1123, %v1090, 0.0
      %1137 = vadd.xlane.f32.xlu0 %v1136
      %v1138 = vpop.xlane.xlu0 %1137
      %v1139 = vsel %vm1123, %v1091, 0.0
      %1140 = vadd.xlane.f32.xlu0 %v1139
      %v1141 = vpop.xlane.xlu0 %1140
      %v1142 = vsel %vm1123, %v1092, 0.0
      %1143 = vadd.xlane.f32.xlu0 %v1142
      %v1144 = vpop.xlane.xlu0 %1143
      %v1145 = vsel %vm1123, %v1093, 0.0
      %1146 = vadd.xlane.f32.xlu0 %v1145
      %v1147 = vpop.xlane.xlu0 %1146
      %v1148 = vsel %vm1123, %v1094, 0.0
      %1149 = vadd.xlane.f32.xlu0 %v1148
      %v1150 = vpop.xlane.xlu0 %1149
      %v1151 = vsel %vm1123, %v1095, 0.0
      %1152 = vadd.xlane.f32.xlu0 %v1151
      %v1153 = vpop.xlane.xlu0 %1152
      %v1154 = vsel %vm1123, %v1096, 0.0
      %1155 = vadd.xlane.f32.xlu0 %v1154
      %v1156 = vpop.xlane.xlu0 %1155
      %v1157 = vsel %vm1123, %v1097, 0.0
      %1158 = vadd.xlane.f32.xlu0 %v1157
      %v1159 = vpop.xlane.xlu0 %1158
      %v1160 = vsel %vm1123, %v1098, 0.0
      %1161 = vadd.xlane.f32.xlu0 %v1160
      %v1162 = vpop.xlane.xlu0 %1161
      %v1163 = vsel %vm1123, %v1099, 0.0
      %1164 = vadd.xlane.f32.xlu0 %v1163
      %v1165 = vpop.xlane.xlu0 %1164
      %v1166 = vsel %vm1123, %v1100, 0.0
      %1167 = vadd.xlane.f32.xlu0 %v1166
      %v1168 = vpop.xlane.xlu0 %1167
      %v1169 = vsel %vm1123, %v1101, 0.0
      %1170 = vadd.xlane.f32.xlu0 %v1169
      %v1171 = vpop.xlane.xlu0 %1170
      %v1172 = vsel %vm1123, %v1102, 0.0
      %1173 = vadd.xlane.f32.xlu0 %v1172
      %v1174 = vpop.xlane.xlu0 %1173
      %v1175 = vsel %vm1123, %v1103, 0.0
      %1176 = vadd.xlane.f32.xlu0 %v1175
      %v1177 = vpop.xlane.xlu0 %1176
      %v1178 = vsel %vm1123, %v1104, 0.0
      %1179 = vadd.xlane.f32.xlu0 %v1178
      %v1180 = vpop.xlane.xlu0 %1179
      %v1181 = vsel %vm1123, %v1105, 0.0
      %1182 = vadd.xlane.f32.xlu0 %v1181
      %v1183 = vpop.xlane.xlu0 %1182
      %v1184 = vsel %vm1123, %v1106, 0.0
      %1185 = vadd.xlane.f32.xlu0 %v1184
      %v1186 = vpop.xlane.xlu0 %1185
      %v1187 = vsel %vm1123, %v1107, 0.0
      %1188 = vadd.xlane.f32.xlu0 %v1187
      %v1189 = vpop.xlane.xlu0 %1188
      %v1190 = vsel %vm1123, %v1108, 0.0
      %1191 = vadd.xlane.f32.xlu0 %v1190
      %v1192 = vpop.xlane.xlu0 %1191
      %v1193 = vsel %vm1123, %v1109, 0.0
      %1194 = vadd.xlane.f32.xlu0 %v1193
      %v1195 = vpop.xlane.xlu0 %1194
      %v1196 = vsel %vm1123, %v1110, 0.0
      %1197 = vadd.xlane.f32.xlu0 %v1196
      %v1198 = vpop.xlane.xlu0 %1197
      %v1199 = vsel %vm1123, %v1111, 0.0
      %1200 = vadd.xlane.f32.xlu0 %v1199
      %v1201 = vpop.xlane.xlu0 %1200
      %v1202 = vsel %vm1123, %v1112, 0.0
      %1203 = vadd.xlane.f32.xlu0 %v1202
      %v1204 = vpop.xlane.xlu0 %1203
      %v1205 = vsel %vm1123, %v1113, 0.0
      %1206 = vadd.xlane.f32.xlu0 %v1205
      %v1207 = vpop.xlane.xlu0 %1206
      %v1208 = vsel %vm1123, %v1114, 0.0
      %1209 = vadd.xlane.f32.xlu0 %v1208
      %v1210 = vpop.xlane.xlu0 %1209
      %v1211 = vsel %vm1123, %v1115, 0.0
      %1212 = vadd.xlane.f32.xlu0 %v1211
      %v1213 = vpop.xlane.xlu0 %1212
      %v1214 = vsel %vm1123, %v1116, 0.0
      %1215 = vadd.xlane.f32.xlu0 %v1214
      %v1216 = vpop.xlane.xlu0 %1215
      %v1217 = vsel %vm1123, %v1117, 0.0
      %1218 = vadd.xlane.f32.xlu0 %v1217
      %v1219 = vpop.xlane.xlu0 %1218
      %v1220 = vrcp.pop 16.0
      %v1221 = vmul.f32 %v1126, %v1220
      %v1222 = vmul.f32 %v1129, %v1220
      %v1223 = vmul.f32 %v1132, %v1220
      %v1224 = vmul.f32 %v1135, %v1220
      %v1225 = vmul.f32 %v1138, %v1220
      %v1226 = vmul.f32 %v1141, %v1220
      %v1227 = vmul.f32 %v1144, %v1220
      %v1228 = vmul.f32 %v1147, %v1220
      %v1229 = vmul.f32 %v1150, %v1220
      %v1230 = vmul.f32 %v1153, %v1220
      %v1231 = vmul.f32 %v1156, %v1220
      %v1232 = vmul.f32 %v1159, %v1220
      %v1233 = vmul.f32 %v1162, %v1220
      %v1234 = vmul.f32 %v1165, %v1220
      %v1235 = vmul.f32 %v1168, %v1220
      %v1236 = vmul.f32 %v1171, %v1220
      %v1237 = vmul.f32 %v1174, %v1220
      %v1238 = vmul.f32 %v1177, %v1220
      %v1239 = vmul.f32 %v1180, %v1220
      %v1240 = vmul.f32 %v1183, %v1220
      %v1241 = vmul.f32 %v1186, %v1220
      %v1242 = vmul.f32 %v1189, %v1220
      %v1243 = vmul.f32 %v1192, %v1220
      %v1244 = vmul.f32 %v1195, %v1220
      %v1245 = vmul.f32 %v1198, %v1220
      %v1246 = vmul.f32 %v1201, %v1220
      %v1247 = vmul.f32 %v1204, %v1220
      %v1248 = vmul.f32 %v1207, %v1220
      %v1249 = vmul.f32 %v1210, %v1220
      %v1250 = vmul.f32 %v1213, %v1220
      %v1251 = vmul.f32 %v1216, %v1220
      %v1252 = vmul.f32 %v1219, %v1220
      %v1253 = vsub.f32 %v1086, %v1221
      %v1254 = vsub.f32 %v1087, %v1222
      %v1255 = vsub.f32 %v1088, %v1223
      %v1256 = vsub.f32 %v1089, %v1224
      %v1257 = vsub.f32 %v1090, %v1225
      %v1258 = vsub.f32 %v1091, %v1226
      %v1259 = vsub.f32 %v1092, %v1227
      %v1260 = vsub.f32 %v1093, %v1228
      %v1261 = vsub.f32 %v1094, %v1229
      %v1262 = vsub.f32 %v1095, %v1230
      %v1263 = vsub.f32 %v1096, %v1231
      %v1264 = vsub.f32 %v1097, %v1232
      %v1265 = vsub.f32 %v1098, %v1233
      %v1266 = vsub.f32 %v1099, %v1234
      %v1267 = vsub.f32 %v1100, %v1235
      %v1268 = vsub.f32 %v1101, %v1236
      %v1269 = vsub.f32 %v1102, %v1237
      %v1270 = vsub.f32 %v1103, %v1238
      %v1271 = vsub.f32 %v1104, %v1239
      %v1272 = vsub.f32 %v1105, %v1240
      %v1273 = vsub.f32 %v1106, %v1241
      %v1274 = vsub.f32 %v1107, %v1242
      %v1275 = vsub.f32 %v1108, %v1243
      %v1276 = vsub.f32 %v1109, %v1244
      %v1277 = vsub.f32 %v1110, %v1245
      %v1278 = vsub.f32 %v1111, %v1246
      %v1279 = vsub.f32 %v1112, %v1247
      %v1280 = vsub.f32 %v1113, %v1248
      %v1281 = vsub.f32 %v1114, %v1249
      %v1282 = vsub.f32 %v1115, %v1250
      %v1283 = vsub.f32 %v1116, %v1251
      %v1284 = vsub.f32 %v1117, %v1252
      %v1285 = vmul.f32 %v1253, %v1253
      %v1286 = vmul.f32 %v1254, %v1254
      %v1287 = vmul.f32 %v1255, %v1255
      %v1288 = vmul.f32 %v1256, %v1256
      %v1289 = vmul.f32 %v1257, %v1257
      %v1290 = vmul.f32 %v1258, %v1258
      %v1291 = vmul.f32 %v1259, %v1259
      %v1292 = vmul.f32 %v1260, %v1260
      %v1293 = vmul.f32 %v1261, %v1261
      %v1294 = vmul.f32 %v1262, %v1262
      %v1295 = vmul.f32 %v1263, %v1263
      %v1296 = vmul.f32 %v1264, %v1264
      %v1297 = vmul.f32 %v1265, %v1265
      %v1298 = vmul.f32 %v1266, %v1266
      %v1299 = vmul.f32 %v1267, %v1267
      %v1300 = vmul.f32 %v1268, %v1268
      %v1301 = vmul.f32 %v1269, %v1269
      %v1302 = vmul.f32 %v1270, %v1270
      %v1303 = vmul.f32 %v1271, %v1271
      %v1304 = vmul.f32 %v1272, %v1272
      %v1305 = vmul.f32 %v1273, %v1273
      %v1306 = vmul.f32 %v1274, %v1274
      %v1307 = vmul.f32 %v1275, %v1275
      %v1308 = vmul.f32 %v1276, %v1276
      %v1309 = vmul.f32 %v1277, %v1277
      %v1310 = vmul.f32 %v1278, %v1278
      %v1311 = vmul.f32 %v1279, %v1279
      %v1312 = vmul.f32 %v1280, %v1280
      %v1313 = vmul.f32 %v1281, %v1281
      %v1314 = vmul.f32 %v1282, %v1282
      %v1315 = vmul.f32 %v1283, %v1283
      %v1316 = vmul.f32 %v1284, %v1284
      %v1317 = vsel %vm1123, %v1285, 0.0
      %1318 = vadd.xlane.f32.xlu0 %v1317
      %v1319 = vpop.xlane.xlu0 %1318
      %v1320 = vsel %vm1123, %v1286, 0.0
      %1321 = vadd.xlane.f32.xlu0 %v1320
      %v1322 = vpop.xlane.xlu0 %1321
      %v1323 = vsel %vm1123, %v1287, 0.0
      %1324 = vadd.xlane.f32.xlu0 %v1323
      %v1325 = vpop.xlane.xlu0 %1324
      %v1326 = vsel %vm1123, %v1288, 0.0
      %1327 = vadd.xlane.f32.xlu0 %v1326
      %v1328 = vpop.xlane.xlu0 %1327
      %v1329 = vsel %vm1123, %v1289, 0.0
      %1330 = vadd.xlane.f32.xlu0 %v1329
      %v1331 = vpop.xlane.xlu0 %1330
      %v1332 = vsel %vm1123, %v1290, 0.0
      %1333 = vadd.xlane.f32.xlu0 %v1332
      %v1334 = vpop.xlane.xlu0 %1333
      %v1335 = vsel %vm1123, %v1291, 0.0
      %1336 = vadd.xlane.f32.xlu0 %v1335
      %v1337 = vpop.xlane.xlu0 %1336
      %v1338 = vsel %vm1123, %v1292, 0.0
      %1339 = vadd.xlane.f32.xlu0 %v1338
      %v1340 = vpop.xlane.xlu0 %1339
      %v1341 = vsel %vm1123, %v1293, 0.0
      %1342 = vadd.xlane.f32.xlu0 %v1341
      %v1343 = vpop.xlane.xlu0 %1342
      %v1344 = vsel %vm1123, %v1294, 0.0
      %1345 = vadd.xlane.f32.xlu0 %v1344
      %v1346 = vpop.xlane.xlu0 %1345
      %v1347 = vsel %vm1123, %v1295, 0.0
      %1348 = vadd.xlane.f32.xlu0 %v1347
      %v1349 = vpop.xlane.xlu0 %1348
      %v1350 = vsel %vm1123, %v1296, 0.0
      %1351 = vadd.xlane.f32.xlu0 %v1350
      %v1352 = vpop.xlane.xlu0 %1351
      %v1353 = vsel %vm1123, %v1297, 0.0
      %1354 = vadd.xlane.f32.xlu0 %v1353
      %v1355 = vpop.xlane.xlu0 %1354
      %v1356 = vsel %vm1123, %v1298, 0.0
      %1357 = vadd.xlane.f32.xlu0 %v1356
      %v1358 = vpop.xlane.xlu0 %1357
      %v1359 = vsel %vm1123, %v1299, 0.0
      %1360 = vadd.xlane.f32.xlu0 %v1359
      %v1361 = vpop.xlane.xlu0 %1360
      %v1362 = vsel %vm1123, %v1300, 0.0
      %1363 = vadd.xlane.f32.xlu0 %v1362
      %v1364 = vpop.xlane.xlu0 %1363
      %v1365 = vsel %vm1123, %v1301, 0.0
      %1366 = vadd.xlane.f32.xlu0 %v1365
      %v1367 = vpop.xlane.xlu0 %1366
      %v1368 = vsel %vm1123, %v1302, 0.0
      %1369 = vadd.xlane.f32.xlu0 %v1368
      %v1370 = vpop.xlane.xlu0 %1369
      %v1371 = vsel %vm1123, %v1303, 0.0
      %1372 = vadd.xlane.f32.xlu0 %v1371
      %v1373 = vpop.xlane.xlu0 %1372
      %v1374 = vsel %vm1123, %v1304, 0.0
      %1375 = vadd.xlane.f32.xlu0 %v1374
      %v1376 = vpop.xlane.xlu0 %1375
      %v1377 = vsel %vm1123, %v1305, 0.0
      %1378 = vadd.xlane.f32.xlu0 %v1377
      %v1379 = vpop.xlane.xlu0 %1378
      %v1380 = vsel %vm1123, %v1306, 0.0
      %1381 = vadd.xlane.f32.xlu0 %v1380
      %v1382 = vpop.xlane.xlu0 %1381
      %v1383 = vsel %vm1123, %v1307, 0.0
      %1384 = vadd.xlane.f32.xlu0 %v1383
      %v1385 = vpop.xlane.xlu0 %1384
      %v1386 = vsel %vm1123, %v1308, 0.0
      %1387 = vadd.xlane.f32.xlu0 %v1386
      %v1388 = vpop.xlane.xlu0 %1387
      %v1389 = vsel %vm1123, %v1309, 0.0
      %1390 = vadd.xlane.f32.xlu0 %v1389
      %v1391 = vpop.xlane.xlu0 %1390
      %v1392 = vsel %vm1123, %v1310, 0.0
      %1393 = vadd.xlane.f32.xlu0 %v1392
      %v1394 = vpop.xlane.xlu0 %1393
      %v1395 = vsel %vm1123, %v1311, 0.0
      %1396 = vadd.xlane.f32.xlu0 %v1395
      %v1397 = vpop.xlane.xlu0 %1396
      %v1398 = vsel %vm1123, %v1312, 0.0
      %1399 = vadd.xlane.f32.xlu0 %v1398
      %v1400 = vpop.xlane.xlu0 %1399
      %v1401 = vsel %vm1123, %v1313, 0.0
      %1402 = vadd.xlane.f32.xlu0 %v1401
      %v1403 = vpop.xlane.xlu0 %1402
      %v1404 = vsel %vm1123, %v1314, 0.0
      %1405 = vadd.xlane.f32.xlu0 %v1404
      %v1406 = vpop.xlane.xlu0 %1405
      %v1407 = vsel %vm1123, %v1315, 0.0
      %1408 = vadd.xlane.f32.xlu0 %v1407
      %v1409 = vpop.xlane.xlu0 %1408
      %v1410 = vsel %vm1123, %v1316, 0.0
      %1411 = vadd.xlane.f32.xlu0 %v1410
      %v1412 = vpop.xlane.xlu0 %1411
      %v1413 = vmul.f32 %v1319, %v1220
      %v1414 = vmul.f32 %v1322, %v1220
      %v1415 = vmul.f32 %v1325, %v1220
      %v1416 = vmul.f32 %v1328, %v1220
      %v1417 = vmul.f32 %v1331, %v1220
      %v1418 = vmul.f32 %v1334, %v1220
      %v1419 = vmul.f32 %v1337, %v1220
      %v1420 = vmul.f32 %v1340, %v1220
      %v1421 = vmul.f32 %v1343, %v1220
      %v1422 = vmul.f32 %v1346, %v1220
      %v1423 = vmul.f32 %v1349, %v1220
      %v1424 = vmul.f32 %v1352, %v1220
      %v1425 = vmul.f32 %v1355, %v1220
      %v1426 = vmul.f32 %v1358, %v1220
      %v1427 = vmul.f32 %v1361, %v1220
      %v1428 = vmul.f32 %v1364, %v1220
      %v1429 = vmul.f32 %v1367, %v1220
      %v1430 = vmul.f32 %v1370, %v1220
      %v1431 = vmul.f32 %v1373, %v1220
      %v1432 = vmul.f32 %v1376, %v1220
      %v1433 = vmul.f32 %v1379, %v1220
      %v1434 = vmul.f32 %v1382, %v1220
      %v1435 = vmul.f32 %v1385, %v1220
      %v1436 = vmul.f32 %v1388, %v1220
      %v1437 = vmul.f32 %v1391, %v1220
      %v1438 = vmul.f32 %v1394, %v1220
      %v1439 = vmul.f32 %v1397, %v1220
      %v1440 = vmul.f32 %v1400, %v1220
      %v1441 = vmul.f32 %v1403, %v1220
      %v1442 = vmul.f32 %v1406, %v1220
      %v1443 = vmul.f32 %v1409, %v1220
      %v1444 = vmul.f32 %v1412, %v1220
      %v1445 = vadd.f32 %v1413, 1e-05
      %v1446 = vadd.f32 %v1414, 1e-05
      %v1447 = vadd.f32 %v1415, 1e-05
      %v1448 = vadd.f32 %v1416, 1e-05
      %v1449 = vadd.f32 %v1417, 1e-05
      %v1450 = vadd.f32 %v1418, 1e-05
      %v1451 = vadd.f32 %v1419, 1e-05
      %v1452 = vadd.f32 %v1420, 1e-05
      %v1453 = vadd.f32 %v1421, 1e-05
      %v1454 = vadd.f32 %v1422, 1e-05
      %v1455 = vadd.f32 %v1423, 1e-05
      %v1456 = vadd.f32 %v1424, 1e-05
      %v1457 = vadd.f32 %v1425, 1e-05
      %v1458 = vadd.f32 %v1426, 1e-05
      %v1459 = vadd.f32 %v1427, 1e-05
      %v1460 = vadd.f32 %v1428, 1e-05
      %v1461 = vadd.f32 %v1429, 1e-05
      %v1462 = vadd.f32 %v1430, 1e-05
      %v1463 = vadd.f32 %v1431, 1e-05
      %v1464 = vadd.f32 %v1432, 1e-05
      %v1465 = vadd.f32 %v1433, 1e-05
      %v1466 = vadd.f32 %v1434, 1e-05
      %v1467 = vadd.f32 %v1435, 1e-05
      %v1468 = vadd.f32 %v1436, 1e-05
      %v1469 = vadd.f32 %v1437, 1e-05
      %v1470 = vadd.f32 %v1438, 1e-05
      %v1471 = vadd.f32 %v1439, 1e-05
      %v1472 = vadd.f32 %v1440, 1e-05
      %v1473 = vadd.f32 %v1441, 1e-05
      %v1474 = vadd.f32 %v1442, 1e-05
      %v1475 = vadd.f32 %v1443, 1e-05
      %v1476 = vadd.f32 %v1444, 1e-05
      %v1477 = vrsqrt.pop %v1445
      %v1478 = vrsqrt.pop %v1446
      %v1479 = vrsqrt.pop %v1447
      %v1480 = vrsqrt.pop %v1448
      %v1481 = vrsqrt.pop %v1449
      %v1482 = vrsqrt.pop %v1450
      %v1483 = vrsqrt.pop %v1451
      %v1484 = vrsqrt.pop %v1452
      %v1485 = vrsqrt.pop %v1453
      %v1486 = vrsqrt.pop %v1454
      %v1487 = vrsqrt.pop %v1455
      %v1488 = vrsqrt.pop %v1456
      %v1489 = vrsqrt.pop %v1457
      %v1490 = vrsqrt.pop %v1458
      %v1491 = vrsqrt.pop %v1459
      %v1492 = vrsqrt.pop %v1460
      %v1493 = vrsqrt.pop %v1461
      %v1494 = vrsqrt.pop %v1462
      %v1495 = vrsqrt.pop %v1463
      %v1496 = vrsqrt.pop %v1464
      %v1497 = vrsqrt.pop %v1465
      %v1498 = vrsqrt.pop %v1466
      %v1499 = vrsqrt.pop %v1467
      %v1500 = vrsqrt.pop %v1468
      %v1501 = vrsqrt.pop %v1469
      %v1502 = vrsqrt.pop %v1470
      %v1503 = vrsqrt.pop %v1471
      %v1504 = vrsqrt.pop %v1472
      %v1505 = vrsqrt.pop %v1473
      %v1506 = vrsqrt.pop %v1474
      %v1507 = vrsqrt.pop %v1475
      %v1508 = vrsqrt.pop %v1476
      %v1509 = vmul.f32 %v1253, %v1477
      %v1510 = vmul.f32 %v1254, %v1478
      %v1511 = vmul.f32 %v1255, %v1479
      %v1512 = vmul.f32 %v1256, %v1480
      %v1513 = vmul.f32 %v1257, %v1481
      %v1514 = vmul.f32 %v1258, %v1482
      %v1515 = vmul.f32 %v1259, %v1483
      %v1516 = vmul.f32 %v1260, %v1484
      %v1517 = vmul.f32 %v1261, %v1485
      %v1518 = vmul.f32 %v1262, %v1486
      %v1519 = vmul.f32 %v1263, %v1487
      %v1520 = vmul.f32 %v1264, %v1488
      %v1521 = vmul.f32 %v1265, %v1489
      %v1522 = vmul.f32 %v1266, %v1490
      %v1523 = vmul.f32 %v1267, %v1491
      %v1524 = vmul.f32 %v1268, %v1492
      %v1525 = vmul.f32 %v1269, %v1493
      %v1526 = vmul.f32 %v1270, %v1494
      %v1527 = vmul.f32 %v1271, %v1495
      %v1528 = vmul.f32 %v1272, %v1496
      %v1529 = vmul.f32 %v1273, %v1497
      %v1530 = vmul.f32 %v1274, %v1498
      %v1531 = vmul.f32 %v1275, %v1499
      %v1532 = vmul.f32 %v1276, %v1500
      %v1533 = vmul.f32 %v1277, %v1501
      %v1534 = vmul.f32 %v1278, %v1502
      %v1535 = vmul.f32 %v1279, %v1503
      %v1536 = vmul.f32 %v1280, %v1504
      %v1537 = vmul.f32 %v1281, %v1505
      %v1538 = vmul.f32 %v1282, %v1506
      %v1539 = vmul.f32 %v1283, %v1507
      %v1540 = vmul.f32 %v1284, %v1508
      %v1542 = vlaneseq
      %v1543 = vshrl.u32 %v1542, 7
      %v1544 = vsub.s32 0, %v1543
      %v1545 = vrot.slane %v1118, %v1544
      %v1547 = vmul.f32 %v1509, %v1545
      %v1548 = vmul.f32 %v1510, %v1545
      %v1549 = vmul.f32 %v1511, %v1545
      %v1550 = vmul.f32 %v1512, %v1545
      %v1551 = vmul.f32 %v1513, %v1545
      %v1552 = vmul.f32 %v1514, %v1545
      %v1553 = vmul.f32 %v1515, %v1545
      %v1554 = vmul.f32 %v1516, %v1545
      %v1555 = vmul.f32 %v1517, %v1545
      %v1556 = vmul.f32 %v1518, %v1545
      %v1557 = vmul.f32 %v1519, %v1545
      %v1558 = vmul.f32 %v1520, %v1545
      %v1559 = vmul.f32 %v1521, %v1545
      %v1560 = vmul.f32 %v1522, %v1545
      %v1561 = vmul.f32 %v1523, %v1545
      %v1562 = vmul.f32 %v1524, %v1545
      %v1563 = vmul.f32 %v1525, %v1545
      %v1564 = vmul.f32 %v1526, %v1545
      %v1565 = vmul.f32 %v1527, %v1545
      %v1566 = vmul.f32 %v1528, %v1545
      %v1567 = vmul.f32 %v1529, %v1545
      %v1568 = vmul.f32 %v1530, %v1545
      %v1569 = vmul.f32 %v1531, %v1545
      %v1570 = vmul.f32 %v1532, %v1545
      %v1571 = vmul.f32 %v1533, %v1545
      %v1572 = vmul.f32 %v1534, %v1545
      %v1573 = vmul.f32 %v1535, %v1545
      %v1574 = vmul.f32 %v1536, %v1545
      %v1575 = vmul.f32 %v1537, %v1545
      %v1576 = vmul.f32 %v1538, %v1545
      %v1577 = vmul.f32 %v1539, %v1545
      %v1578 = vmul.f32 %v1540, %v1545
      %v1580 = vlaneseq
      %v1581 = vshrl.u32 %v1580, 7
      %v1582 = vsub.s32 0, %v1581
      %v1583 = vrot.slane %v1119, %v1582
      %v1585 = vadd.f32 %v1547, %v1583
      %v1586 = vadd.f32 %v1548, %v1583
      %v1587 = vadd.f32 %v1549, %v1583
      %v1588 = vadd.f32 %v1550, %v1583
      %v1589 = vadd.f32 %v1551, %v1583
      %v1590 = vadd.f32 %v1552, %v1583
      %v1591 = vadd.f32 %v1553, %v1583
      %v1592 = vadd.f32 %v1554, %v1583
      %v1593 = vadd.f32 %v1555, %v1583
      %v1594 = vadd.f32 %v1556, %v1583
      %v1595 = vadd.f32 %v1557, %v1583
      %v1596 = vadd.f32 %v1558, %v1583
      %v1597 = vadd.f32 %v1559, %v1583
      %v1598 = vadd.f32 %v1560, %v1583
      %v1599 = vadd.f32 %v1561, %v1583
      %v1600 = vadd.f32 %v1562, %v1583
      %v1601 = vadd.f32 %v1563, %v1583
      %v1602 = vadd.f32 %v1564, %v1583
      %v1603 = vadd.f32 %v1565, %v1583
      %v1604 = vadd.f32 %v1566, %v1583
      %v1605 = vadd.f32 %v1567, %v1583
      %v1606 = vadd.f32 %v1568, %v1583
      %v1607 = vadd.f32 %v1569, %v1583
      %v1608 = vadd.f32 %v1570, %v1583
      %v1609 = vadd.f32 %v1571, %v1583
      %v1610 = vadd.f32 %v1572, %v1583
      %v1611 = vadd.f32 %v1573, %v1583
      %v1612 = vadd.f32 %v1574, %v1583
      %v1613 = vadd.f32 %v1575, %v1583
      %v1614 = vadd.f32 %v1576, %v1583
      %v1615 = vadd.f32 %v1577, %v1583
      %v1616 = vadd.f32 %v1578, %v1583
      %v1617 = vld [vmem:[%s12] sm:$0xff]
      %v1618 = vld [vmem:[%s12 + $0x8] sm:$0xff]
      %v1619 = vld [vmem:[%s12 + $0x10] sm:$0xff]
      %v1620 = vld [vmem:[%s12 + $0x18] sm:$0xff]
      %v1621 = vld [vmem:[%s12 + $0x20] sm:$0xff]
      %v1622 = vld [vmem:[%s12 + $0x28] sm:$0xff]
      %v1623 = vld [vmem:[%s12 + $0x30] sm:$0xff]
      %v1624 = vld [vmem:[%s12 + $0x38] sm:$0xff]
      %v1625 = vld [vmem:[%s12 + $0x40] sm:$0xff]
      %v1626 = vld [vmem:[%s12 + $0x48] sm:$0xff]
      %v1627 = vld [vmem:[%s12 + $0x50] sm:$0xff]
      %v1628 = vld [vmem:[%s12 + $0x58] sm:$0xff]
      %v1629 = vld [vmem:[%s12 + $0x60] sm:$0xff]
      %v1630 = vld [vmem:[%s12 + $0x68] sm:$0xff]
      %v1631 = vld [vmem:[%s12 + $0x70] sm:$0xff]
      %v1632 = vld [vmem:[%s12 + $0x78] sm:$0xff]
      %v1633 = vld [vmem:[%s12 + $0x80] sm:$0xff]
      %v1634 = vld [vmem:[%s12 + $0x88] sm:$0xff]
      %v1635 = vld [vmem:[%s12 + $0x90] sm:$0xff]
      %v1636 = vld [vmem:[%s12 + $0x98] sm:$0xff]
      %v1637 = vld [vmem:[%s12 + $0xa0] sm:$0xff]
      %v1638 = vld [vmem:[%s12 + $0xa8] sm:$0xff]
      %v1639 = vld [vmem:[%s12 + $0xb0] sm:$0xff]
      %v1640 = vld [vmem:[%s12 + $0xb8] sm:$0xff]
      %v1641 = vld [vmem:[%s12 + $0xc0] sm:$0xff]
      %v1642 = vld [vmem:[%s12 + $0xc8] sm:$0xff]
      %v1643 = vld [vmem:[%s12 + $0xd0] sm:$0xff]
      %v1644 = vld [vmem:[%s12 + $0xd8] sm:$0xff]
      %v1645 = vld [vmem:[%s12 + $0xe0] sm:$0xff]
      %v1646 = vld [vmem:[%s12 + $0xe8] sm:$0xff]
      %v1647 = vld [vmem:[%s12 + $0xf0] sm:$0xff]
      %v1648 = vld [vmem:[%s12 + $0xf8] sm:$0xff]
      %v1649 = vld [vmem:[%s12 + $0x100] sm:$0xff]
      %v1650 = vld [vmem:[%s12 + $0x108] sm:$0xff]
      %v1651 = vld [vmem:[%s12 + $0x110] sm:$0xff]
      %v1652 = vld [vmem:[%s12 + $0x118] sm:$0xff]
      %v1653 = vld [vmem:[%s12 + $0x120] sm:$0xff]
      %v1654 = vld [vmem:[%s12 + $0x128] sm:$0xff]
      %v1655 = vld [vmem:[%s12 + $0x130] sm:$0xff]
      %v1656 = vld [vmem:[%s12 + $0x138] sm:$0xff]
      %v1657 = vld [vmem:[%s12 + $0x140] sm:$0xff]
      %v1658 = vld [vmem:[%s12 + $0x148] sm:$0xff]
      %v1659 = vld [vmem:[%s12 + $0x150] sm:$0xff]
      %v1660 = vld [vmem:[%s12 + $0x158] sm:$0xff]
      %v1661 = vld [vmem:[%s12 + $0x160] sm:$0xff]
      %v1662 = vld [vmem:[%s12 + $0x168] sm:$0xff]
      %v1663 = vld [vmem:[%s12 + $0x170] sm:$0xff]
      %v1664 = vld [vmem:[%s12 + $0x178] sm:$0xff]
      %v1665 = vld [vmem:[%s12 + $0x180] sm:$0xff]
      %v1666 = vld [vmem:[%s12 + $0x188] sm:$0xff]
      %v1667 = vld [vmem:[%s12 + $0x190] sm:$0xff]
      %v1668 = vld [vmem:[%s12 + $0x198] sm:$0xff]
      %v1669 = vld [vmem:[%s12 + $0x1a0] sm:$0xff]
      %v1670 = vld [vmem:[%s12 + $0x1a8] sm:$0xff]
      %v1671 = vld [vmem:[%s12 + $0x1b0] sm:$0xff]
      %v1672 = vld [vmem:[%s12 + $0x1b8] sm:$0xff]
      %v1673 = vld [vmem:[%s12 + $0x1c0] sm:$0xff]
      %v1674 = vld [vmem:[%s12 + $0x1c8] sm:$0xff]
      %v1675 = vld [vmem:[%s12 + $0x1d0] sm:$0xff]
      %v1676 = vld [vmem:[%s12 + $0x1d8] sm:$0xff]
      %v1677 = vld [vmem:[%s12 + $0x1e0] sm:$0xff]
      %v1678 = vld [vmem:[%s12 + $0x1e8] sm:$0xff]
      %v1679 = vld [vmem:[%s12 + $0x1f0] sm:$0xff]
      %v1680 = vld [vmem:[%s12 + $0x1f8] sm:$0xff]
      %1681 = vmatprep.subr.mxu0 0.0
      %1682 = vmatpush1.msra.mxu0 %v1600
      %1683 = vmatprep.subr.mxu0 0.0
      %1684 = vmatpush1.msra.mxu0 %v1599
      %1685 = vmatprep.subr.mxu0 0.0
      %1686 = vmatpush1.msra.mxu0 %v1598
      %1687 = vmatprep.subr.mxu0 0.0
      %1688 = vmatpush1.msra.mxu0 %v1597
      %1689 = vmatprep.subr.mxu0 0.0
      %1690 = vmatpush1.msra.mxu0 %v1596
      %1691 = vmatprep.subr.mxu0 0.0
      %1692 = vmatpush1.msra.mxu0 %v1595
      %1693 = vmatprep.subr.mxu0 0.0
      %1694 = vmatpush1.msra.mxu0 %v1594
      %1695 = vmatprep.subr.mxu0 0.0
      %1696 = vmatpush1.msra.mxu0 %v1593
      %1697 = vmatprep.subr.mxu0 0.0
      %1698 = vmatpush1.msra.mxu0 %v1592
      %1699 = vmatprep.subr.mxu0 0.0
      %1700 = vmatpush1.msra.mxu0 %v1591
      %1701 = vmatprep.subr.mxu0 0.0
      %1702 = vmatpush1.msra.mxu0 %v1590
      %1703 = vmatprep.subr.mxu0 0.0
      %1704 = vmatpush1.msra.mxu0 %v1589
      %1705 = vmatprep.subr.mxu0 0.0
      %1706 = vmatpush1.msra.mxu0 %v1588
      %1707 = vmatprep.subr.mxu0 0.0
      %1708 = vmatpush1.msra.mxu0 %v1587
      %1709 = vmatprep.subr.mxu0 0.0
      %1710 = vmatpush1.msra.mxu0 %v1586
      %1711 = vmatprep.subr.mxu0 0.0
      %1712 = vmatpush1.msra.mxu0 %v1585
      %1713 = vmatprep.subr.mxu0 0.0
      %1714 = vmatpush2.msra.mxu0 %v1616
      %1715 = vmatprep.subr.mxu0 0.0
      %1716 = vmatpush2.msra.mxu0 %v1615
      %1717 = vmatprep.subr.mxu0 0.0
      %1718 = vmatpush2.msra.mxu0 %v1614
      %1719 = vmatprep.subr.mxu0 0.0
      %1720 = vmatpush2.msra.mxu0 %v1613
      %1721 = vmatprep.subr.mxu0 0.0
      %1722 = vmatpush2.msra.mxu0 %v1612
      %1723 = vmatprep.subr.mxu0 0.0
      %1724 = vmatpush2.msra.mxu0 %v1611
      %1725 = vmatprep.subr.mxu0 0.0
      %1726 = vmatpush2.msra.mxu0 %v1610
      %1727 = vmatprep.subr.mxu0 0.0
      %1728 = vmatpush2.msra.mxu0 %v1609
      %1729 = vmatprep.subr.mxu0 0.0
      %1730 = vmatpush2.msra.mxu0 %v1608
      %1731 = vmatprep.subr.mxu0 0.0
      %1732 = vmatpush2.msra.mxu0 %v1607
      %1733 = vmatprep.subr.mxu0 0.0
      %1734 = vmatpush2.msra.mxu0 %v1606
      %1735 = vmatprep.subr.mxu0 0.0
      %1736 = vmatpush2.msra.mxu0 %v1605
      %1737 = vmatprep.subr.mxu0 0.0
      %1738 = vmatpush2.msra.mxu0 %v1604
      %1739 = vmatprep.subr.mxu0 0.0
      %1740 = vmatpush2.msra.mxu0 %v1603
      %1741 = vmatprep.subr.mxu0 0.0
      %1742 = vmatpush2.msra.mxu0 %v1602
      %1743 = vmatprep.subr.mxu0 0.0
      %1744 = vmatpush2.msra.mxu0 %v1601
      %1745 = vmatprep.mubr.f32.mxu0 %v1618
      %1746 = vmatmul.mubr.f32.gmra.mxu0 %v1617
      %v1747 = vpop.f32.mrf.mxu0
      %v1748 = vadd.f32 0.0, %v1747
      %v1749 = vpop.f32.mrf.mxu0
      %1750 = vmatprep.mubr.f32.mxu0 %v1620
      %1751 = vmatmul.mubr.f32.gmra.mxu0 %v1619
      %v1752 = vpop.f32.mrf.mxu0
      %v1753 = vadd.f32 0.0, %v1752
      %v1754 = vpop.f32.mrf.mxu0
      %1755 = vmatprep.mubr.f32.mxu0 %v1622
      %1756 = vmatmul.mubr.f32.gmra.mxu0 %v1621
      %v1757 = vpop.f32.mrf.mxu0
      %v1758 = vadd.f32 0.0, %v1757
      %v1759 = vpop.f32.mrf.mxu0
      %1760 = vmatprep.mubr.f32.mxu0 %v1624
      %1761 = vmatmul.mubr.f32.gmra.mxu0 %v1623
      %v1762 = vpop.f32.mrf.mxu0
      %v1763 = vadd.f32 0.0, %v1762
      %v1764 = vpop.f32.mrf.mxu0
      %1765 = vmatprep.mubr.f32.mxu0 %v1626
      %1766 = vmatmul.mubr.f32.gmra.mxu0 %v1625
      %v1767 = vpop.f32.mrf.mxu0
      %v1768 = vadd.f32 0.0, %v1767
      %v1769 = vpop.f32.mrf.mxu0
      %1770 = vmatprep.mubr.f32.mxu0 %v1628
      %1771 = vmatmul.mubr.f32.gmra.mxu0 %v1627
      %v1772 = vpop.f32.mrf.mxu0
      %v1773 = vadd.f32 0.0, %v1772
      %v1774 = vpop.f32.mrf.mxu0
      %1775 = vmatprep.mubr.f32.mxu0 %v1630
      %1776 = vmatmul.mubr.f32.gmra.mxu0 %v1629
      %v1777 = vpop.f32.mrf.mxu0
      %v1778 = vadd.f32 0.0, %v1777
      %v1779 = vpop.f32.mrf.mxu0
      %1780 = vmatprep.mubr.f32.mxu0 %v1632
      %1781 = vmatmul.mubr.f32.gmra.mxu0 %v1631
      %v1782 = vpop.f32.mrf.mxu0
      %v1783 = vadd.f32 0.0, %v1782
      %v1784 = vpop.f32.mrf.mxu0
      %1785 = vmatprep.mubr.f32.mxu0 %v1634
      %1786 = vmatmul.mubr.f32.gmra.mxu0 %v1633
      %v1787 = vpop.f32.mrf.mxu0
      %v1788 = vadd.f32 0.0, %v1787
      %v1789 = vpop.f32.mrf.mxu0
      %1790 = vmatprep.mubr.f32.mxu0 %v1636
      %1791 = vmatmul.mubr.f32.gmra.mxu0 %v1635
      %v1792 = vpop.f32.mrf.mxu0
      %v1793 = vadd.f32 0.0, %v1792
      %v1794 = vpop.f32.mrf.mxu0
      %1795 = vmatprep.mubr.f32.mxu0 %v1638
      %1796 = vmatmul.mubr.f32.gmra.mxu0 %v1637
      %v1797 = vpop.f32.mrf.mxu0
      %v1798 = vadd.f32 0.0, %v1797
      %v1799 = vpop.f32.mrf.mxu0
      %1800 = vmatprep.mubr.f32.mxu0 %v1640
      %1801 = vmatmul.mubr.f32.gmra.mxu0 %v1639
      %v1802 = vpop.f32.mrf.mxu0
      %v1803 = vadd.f32 0.0, %v1802
      %v1804 = vpop.f32.mrf.mxu0
      %1805 = vmatprep.mubr.f32.mxu0 %v1642
      %1806 = vmatmul.mubr.f32.gmra.mxu0 %v1641
      %v1807 = vpop.f32.mrf.mxu0
      %v1808 = vadd.f32 0.0, %v1807
      %v1809 = vpop.f32.mrf.mxu0
      %1810 = vmatprep.mubr.f32.mxu0 %v1644
      %1811 = vmatmul.mubr.f32.gmra.mxu0 %v1643
      %v1812 = vpop.f32.mrf.mxu0
      %v1813 = vadd.f32 0.0, %v1812
      %v1814 = vpop.f32.mrf.mxu0
      %1815 = vmatprep.mubr.f32.mxu0 %v1646
      %1816 = vmatmul.mubr.f32.gmra.mxu0 %v1645
      %v1817 = vpop.f32.mrf.mxu0
      %v1818 = vadd.f32 0.0, %v1817
      %v1819 = vpop.f32.mrf.mxu0
      %1820 = vmatprep.mubr.f32.mxu0 %v1648
      %1821 = vmatmul.mubr.f32.gmra.mxu0 %v1647
      %v1822 = vpop.f32.mrf.mxu0
      %v1823 = vadd.f32 0.0, %v1822
      %v1824 = vpop.f32.mrf.mxu0
      %1825 = vmatprep.mubr.f32.mxu0 %v1650
      %1826 = vmatmul.mubr.f32.gmra.mxu0 %v1649
      %v1827 = vpop.f32.mrf.mxu0
      %v1828 = vadd.f32 0.0, %v1827
      %v1829 = vpop.f32.mrf.mxu0
      %1830 = vmatprep.mubr.f32.mxu0 %v1652
      %1831 = vmatmul.mubr.f32.gmra.mxu0 %v1651
      %v1832 = vpop.f32.mrf.mxu0
      %v1833 = vadd.f32 0.0, %v1832
      %v1834 = vpop.f32.mrf.mxu0
      %1835 = vmatprep.mubr.f32.mxu0 %v1654
      %1836 = vmatmul.mubr.f32.gmra.mxu0 %v1653
      %v1837 = vpop.f32.mrf.mxu0
      %v1838 = vadd.f32 0.0, %v1837
      %v1839 = vpop.f32.mrf.mxu0
      %1840 = vmatprep.mubr.f32.mxu0 %v1656
      %1841 = vmatmul.mubr.f32.gmra.mxu0 %v1655
      %v1842 = vpop.f32.mrf.mxu0
      %v1843 = vadd.f32 0.0, %v1842
      %v1844 = vpop.f32.mrf.mxu0
      %1845 = vmatprep.mubr.f32.mxu0 %v1658
      %1846 = vmatmul.mubr.f32.gmra.mxu0 %v1657
      %v1847 = vpop.f32.mrf.mxu0
      %v1848 = vadd.f32 0.0, %v1847
      %v1849 = vpop.f32.mrf.mxu0
      %1850 = vmatprep.mubr.f32.mxu0 %v1660
      %1851 = vmatmul.mubr.f32.gmra.mxu0 %v1659
      %v1852 = vpop.f32.mrf.mxu0
      %v1853 = vadd.f32 0.0, %v1852
      %v1854 = vpop.f32.mrf.mxu0
      %1855 = vmatprep.mubr.f32.mxu0 %v1662
      %1856 = vmatmul.mubr.f32.gmra.mxu0 %v1661
      %v1857 = vpop.f32.mrf.mxu0
      %v1858 = vadd.f32 0.0, %v1857
      %v1859 = vpop.f32.mrf.mxu0
      %1860 = vmatprep.mubr.f32.mxu0 %v1664
      %1861 = vmatmul.mubr.f32.gmra.mxu0 %v1663
      %v1862 = vpop.f32.mrf.mxu0
      %v1863 = vadd.f32 0.0, %v1862
      %v1864 = vpop.f32.mrf.mxu0
      %1865 = vmatprep.mubr.f32.mxu0 %v1666
      %1866 = vmatmul.mubr.f32.gmra.mxu0 %v1665
      %v1867 = vpop.f32.mrf.mxu0
      %v1868 = vadd.f32 0.0, %v1867
      %v1869 = vpop.f32.mrf.mxu0
      %1870 = vmatprep.mubr.f32.mxu0 %v1668
      %1871 = vmatmul.mubr.f32.gmra.mxu0 %v1667
      %v1872 = vpop.f32.mrf.mxu0
      %v1873 = vadd.f32 0.0, %v1872
      %v1874 = vpop.f32.mrf.mxu0
      %1875 = vmatprep.mubr.f32.mxu0 %v1670
      %1876 = vmatmul.mubr.f32.gmra.mxu0 %v1669
      %v1877 = vpop.f32.mrf.mxu0
      %v1878 = vadd.f32 0.0, %v1877
      %v1879 = vpop.f32.mrf.mxu0
      %1880 = vmatprep.mubr.f32.mxu0 %v1672
      %1881 = vmatmul.mubr.f32.gmra.mxu0 %v1671
      %v1882 = vpop.f32.mrf.mxu0
      %v1883 = vadd.f32 0.0, %v1882
      %v1884 = vpop.f32.mrf.mxu0
      %1885 = vmatprep.mubr.f32.mxu0 %v1674
      %1886 = vmatmul.mubr.f32.gmra.mxu0 %v1673
      %v1887 = vpop.f32.mrf.mxu0
      %v1888 = vadd.f32 0.0, %v1887
      %v1889 = vpop.f32.mrf.mxu0
      %1890 = vmatprep.mubr.f32.mxu0 %v1676
      %1891 = vmatmul.mubr.f32.gmra.mxu0 %v1675
      %v1892 = vpop.f32.mrf.mxu0
      %v1893 = vadd.f32 0.0, %v1892
      %v1894 = vpop.f32.mrf.mxu0
      %1895 = vmatprep.mubr.f32.mxu0 %v1678
      %1896 = vmatmul.mubr.f32.gmra.mxu0 %v1677
      %v1897 = vpop.f32.mrf.mxu0
      %v1898 = vadd.f32 0.0, %v1897
      %v1899 = vpop.f32.mrf.mxu0
      %1900 = vmatprep.mubr.f32.mxu0 %v1680
      %1901 = vmatmul.mubr.f32.gmra.mxu0 %v1679
      %v1902 = vpop.f32.mrf.mxu0
      %v1903 = vadd.f32 0.0, %v1902
      %v1904 = vpop.f32.mrf.mxu0
      %1905 = vdwg.mxu0
      %vm1906 = vcmp.gt.f32.partialorder %v1585, %v1748
      %vm1907 = vcmp.gt.f32.partialorder %v1586, %v1753
      %vm1908 = vcmp.gt.f32.partialorder %v1587, %v1758
      %vm1909 = vcmp.gt.f32.partialorder %v1588, %v1763
      %vm1910 = vcmp.gt.f32.partialorder %v1589, %v1768
      %vm1911 = vcmp.gt.f32.partialorder %v1590, %v1773
      %vm1912 = vcmp.gt.f32.partialorder %v1591, %v1778
      %vm1913 = vcmp.gt.f32.partialorder %v1592, %v1783
      %vm1914 = vcmp.gt.f32.partialorder %v1593, %v1788
      %vm1915 = vcmp.gt.f32.partialorder %v1594, %v1793
      %vm1916 = vcmp.gt.f32.partialorder %v1595, %v1798
      %vm1917 = vcmp.gt.f32.partialorder %v1596, %v1803
      %vm1918 = vcmp.gt.f32.partialorder %v1597, %v1808
      %vm1919 = vcmp.gt.f32.partialorder %v1598, %v1813
      %vm1920 = vcmp.gt.f32.partialorder %v1599, %v1818
      %vm1921 = vcmp.gt.f32.partialorder %v1600, %v1823
      %vm1922 = vcmp.gt.f32.partialorder %v1601, %v1828
      %vm1923 = vcmp.gt.f32.partialorder %v1602, %v1833
      %vm1924 = vcmp.gt.f32.partialorder %v1603, %v1838
      %vm1925 = vcmp.gt.f32.partialorder %v1604, %v1843
      %vm1926 = vcmp.gt.f32.partialorder %v1605, %v1848
      %vm1927 = vcmp.gt.f32.partialorder %v1606, %v1853
      %vm1928 = vcmp.gt.f32.partialorder %v1607, %v1858
      %vm1929 = vcmp.gt.f32.partialorder %v1608, %v1863
      %vm1930 = vcmp.gt.f32.partialorder %v1609, %v1868
      %vm1931 = vcmp.gt.f32.partialorder %v1610, %v1873
      %vm1932 = vcmp.gt.f32.partialorder %v1611, %v1878
      %vm1933 = vcmp.gt.f32.partialorder %v1612, %v1883
      %vm1934 = vcmp.gt.f32.partialorder %v1613, %v1888
      %vm1935 = vcmp.gt.f32.partialorder %v1614, %v1893
      %vm1936 = vcmp.gt.f32.partialorder %v1615, %v1898
      %vm1937 = vcmp.gt.f32.partialorder %v1616, %v1903
      %v1939 = vlaneseq
      %v1940 = vshrl.u32 %v1939, 7
      %v1941 = vsub.s32 0, %v1940
      %v1942 = vrot.slane %v1121, %v1941
      %1943 = vset.pattern.permute.xlu0 0
      %1944 = vperm.xlu0 %1943, %v1942
      %v1945 = vpop.permute.xlu0 %1944
      %v1947 = vmul.f32 %v1585, %v1945
      %v1948 = vmul.f32 %v1586, %v1945
      %v1949 = vmul.f32 %v1587, %v1945
      %v1950 = vmul.f32 %v1588, %v1945
      %v1951 = vmul.f32 %v1589, %v1945
      %v1952 = vmul.f32 %v1590, %v1945
      %v1953 = vmul.f32 %v1591, %v1945
      %v1954 = vmul.f32 %v1592, %v1945
      %v1955 = vmul.f32 %v1593, %v1945
      %v1956 = vmul.f32 %v1594, %v1945
      %v1957 = vmul.f32 %v1595, %v1945
      %v1958 = vmul.f32 %v1596, %v1945
      %v1959 = vmul.f32 %v1597, %v1945
      %v1960 = vmul.f32 %v1598, %v1945
      %v1961 = vmul.f32 %v1599, %v1945
      %v1962 = vmul.f32 %v1600, %v1945
      %v1963 = vmul.f32 %v1601, %v1945
      %v1964 = vmul.f32 %v1602, %v1945
      %v1965 = vmul.f32 %v1603, %v1945
      %v1966 = vmul.f32 %v1604, %v1945
      %v1967 = vmul.f32 %v1605, %v1945
      %v1968 = vmul.f32 %v1606, %v1945
      %v1969 = vmul.f32 %v1607, %v1945
      %v1970 = vmul.f32 %v1608, %v1945
      %v1971 = vmul.f32 %v1609, %v1945
      %v1972 = vmul.f32 %v1610, %v1945
      %v1973 = vmul.f32 %v1611, %v1945
      %v1974 = vmul.f32 %v1612, %v1945
      %v1975 = vmul.f32 %v1613, %v1945
      %v1976 = vmul.f32 %v1614, %v1945
      %v1977 = vmul.f32 %v1615, %v1945
      %v1978 = vmul.f32 %v1616, %v1945
      %v1980 = vlaneseq
      %v1981 = vshrl.u32 %v1980, 7
      %v1982 = vsub.s32 0, %v1981
      %v1983 = vrot.slane %v1122, %v1982
      %1984 = vset.pattern.permute.xlu0 0
      %1985 = vperm.xlu0 %1984, %v1983
      %v1986 = vpop.permute.xlu0 %1985
      %v1988 = vmul.f32 %v1585, %v1986
      %v1989 = vmul.f32 %v1586, %v1986
      %v1990 = vmul.f32 %v1587, %v1986
      %v1991 = vmul.f32 %v1588, %v1986
      %v1992 = vmul.f32 %v1589, %v1986
      %v1993 = vmul.f32 %v1590, %v1986
      %v1994 = vmul.f32 %v1591, %v1986
      %v1995 = vmul.f32 %v1592, %v1986
      %v1996 = vmul.f32 %v1593, %v1986
      %v1997 = vmul.f32 %v1594, %v1986
      %v1998 = vmul.f32 %v1595, %v1986
      %v1999 = vmul.f32 %v1596, %v1986
      %v2000 = vmul.f32 %v1597, %v1986
      %v2001 = vmul.f32 %v1598, %v1986
      %v2002 = vmul.f32 %v1599, %v1986
      %v2003 = vmul.f32 %v1600, %v1986
      %v2004 = vmul.f32 %v1601, %v1986
      %v2005 = vmul.f32 %v1602, %v1986
      %v2006 = vmul.f32 %v1603, %v1986
      %v2007 = vmul.f32 %v1604, %v1986
      %v2008 = vmul.f32 %v1605, %v1986
      %v2009 = vmul.f32 %v1606, %v1986
      %v2010 = vmul.f32 %v1607, %v1986
      %v2011 = vmul.f32 %v1608, %v1986
      %v2012 = vmul.f32 %v1609, %v1986
      %v2013 = vmul.f32 %v1610, %v1986
      %v2014 = vmul.f32 %v1611, %v1986
      %v2015 = vmul.f32 %v1612, %v1986
      %v2016 = vmul.f32 %v1613, %v1986
      %v2017 = vmul.f32 %v1614, %v1986
      %v2018 = vmul.f32 %v1615, %v1986
      %v2019 = vmul.f32 %v1616, %v1986
      %v2020 = vsel %vm1906, %v1947, %v1988
      %v2021 = vsel %vm1907, %v1948, %v1989
      %v2022 = vsel %vm1908, %v1949, %v1990
      %v2023 = vsel %vm1909, %v1950, %v1991
      %v2024 = vsel %vm1910, %v1951, %v1992
      %v2025 = vsel %vm1911, %v1952, %v1993
      %v2026 = vsel %vm1912, %v1953, %v1994
      %v2027 = vsel %vm1913, %v1954, %v1995
      %v2028 = vsel %vm1914, %v1955, %v1996
      %v2029 = vsel %vm1915, %v1956, %v1997
      %v2030 = vsel %vm1916, %v1957, %v1998
      %v2031 = vsel %vm1917, %v1958, %v1999
      %v2032 = vsel %vm1918, %v1959, %v2000
      %v2033 = vsel %vm1919, %v1960, %v2001
      %v2034 = vsel %vm1920, %v1961, %v2002
      %v2035 = vsel %vm1921, %v1962, %v2003
      %v2036 = vsel %vm1922, %v1963, %v2004
      %v2037 = vsel %vm1923, %v1964, %v2005
      %v2038 = vsel %vm1924, %v1965, %v2006
      %v2039 = vsel %vm1925, %v1966, %v2007
      %v2040 = vsel %vm1926, %v1967, %v2008
      %v2041 = vsel %vm1927, %v1968, %v2009
      %v2042 = vsel %vm1928, %v1969, %v2010
      %v2043 = vsel %vm1929, %v1970, %v2011
      %v2044 = vsel %vm1930, %v1971, %v2012
      %v2045 = vsel %vm1931, %v1972, %v2013
      %v2046 = vsel %vm1932, %v1973, %v2014
      %v2047 = vsel %vm1933, %v1974, %v2015
      %v2048 = vsel %vm1934, %v1975, %v2016
      %v2049 = vsel %vm1935, %v1976, %v2017
      %v2050 = vsel %vm1936, %v1977, %v2018
      %v2051 = vsel %vm1937, %v1978, %v2019
      %v2052 = vld [vmem:[%s13] sm:$0xff]
      %v2053 = vld [vmem:[%s13 + $0x8] sm:$0xff]
      %v2054 = vld [vmem:[%s13 + $0x10] sm:$0xff]
      %v2055 = vld [vmem:[%s13 + $0x18] sm:$0xff]
      %v2056 = vld [vmem:[%s13 + $0x20] sm:$0xff]
      %v2057 = vld [vmem:[%s13 + $0x28] sm:$0xff]
      %v2058 = vld [vmem:[%s13 + $0x30] sm:$0xff]
      %v2059 = vld [vmem:[%s13 + $0x38] sm:$0xff]
      %v2060 = vld [vmem:[%s13 + $0x40] sm:$0xff]
      %v2061 = vld [vmem:[%s13 + $0x48] sm:$0xff]
      %v2062 = vld [vmem:[%s13 + $0x50] sm:$0xff]
      %v2063 = vld [vmem:[%s13 + $0x58] sm:$0xff]
      %v2064 = vld [vmem:[%s13 + $0x60] sm:$0xff]
      %v2065 = vld [vmem:[%s13 + $0x68] sm:$0xff]
      %v2066 = vld [vmem:[%s13 + $0x70] sm:$0xff]
      %v2067 = vld [vmem:[%s13 + $0x78] sm:$0xff]
      %v2068 = vld [vmem:[%s13 + $0x80] sm:$0xff]
      %v2069 = vld [vmem:[%s13 + $0x88] sm:$0xff]
      %v2070 = vld [vmem:[%s13 + $0x90] sm:$0xff]
      %v2071 = vld [vmem:[%s13 + $0x98] sm:$0xff]
      %v2072 = vld [vmem:[%s13 + $0xa0] sm:$0xff]
      %v2073 = vld [vmem:[%s13 + $0xa8] sm:$0xff]
      %v2074 = vld [vmem:[%s13 + $0xb0] sm:$0xff]
      %v2075 = vld [vmem:[%s13 + $0xb8] sm:$0xff]
      %v2076 = vld [vmem:[%s13 + $0xc0] sm:$0xff]
      %v2077 = vld [vmem:[%s13 + $0xc8] sm:$0xff]
      %v2078 = vld [vmem:[%s13 + $0xd0] sm:$0xff]
      %v2079 = vld [vmem:[%s13 + $0xd8] sm:$0xff]
      %v2080 = vld [vmem:[%s13 + $0xe0] sm:$0xff]
      %v2081 = vld [vmem:[%s13 + $0xe8] sm:$0xff]
      %v2082 = vld [vmem:[%s13 + $0xf0] sm:$0xff]
      %v2083 = vld [vmem:[%s13 + $0xf8] sm:$0xff]
      %2084 = vmatprep.subr.mxu0 0.0
      %2085 = vmatpush1.msra.mxu0 %v2035
      %2086 = vmatprep.subr.mxu0 0.0
      %2087 = vmatpush1.msra.mxu0 %v2034
      %2088 = vmatprep.subr.mxu0 0.0
      %2089 = vmatpush1.msra.mxu0 %v2033
      %2090 = vmatprep.subr.mxu0 0.0
      %2091 = vmatpush1.msra.mxu0 %v2032
      %2092 = vmatprep.subr.mxu0 0.0
      %2093 = vmatpush1.msra.mxu0 %v2031
      %2094 = vmatprep.subr.mxu0 0.0
      %2095 = vmatpush1.msra.mxu0 %v2030
      %2096 = vmatprep.subr.mxu0 0.0
      %2097 = vmatpush1.msra.mxu0 %v2029
      %2098 = vmatprep.subr.mxu0 0.0
      %2099 = vmatpush1.msra.mxu0 %v2028
      %2100 = vmatprep.subr.mxu0 0.0
      %2101 = vmatpush1.msra.mxu0 %v2027
      %2102 = vmatprep.subr.mxu0 0.0
      %2103 = vmatpush1.msra.mxu0 %v2026
      %2104 = vmatprep.subr.mxu0 0.0
      %2105 = vmatpush1.msra.mxu0 %v2025
      %2106 = vmatprep.subr.mxu0 0.0
      %2107 = vmatpush1.msra.mxu0 %v2024
      %2108 = vmatprep.subr.mxu0 0.0
      %2109 = vmatpush1.msra.mxu0 %v2023
      %2110 = vmatprep.subr.mxu0 0.0
      %2111 = vmatpush1.msra.mxu0 %v2022
      %2112 = vmatprep.subr.mxu0 0.0
      %2113 = vmatpush1.msra.mxu0 %v2021
      %2114 = vmatprep.subr.mxu0 0.0
      %2115 = vmatpush1.msra.mxu0 %v2020
      %2116 = vmatprep.subr.mxu0 0.0
      %2117 = vmatpush2.msra.mxu0 %v2051
      %2118 = vmatprep.subr.mxu0 0.0
      %2119 = vmatpush2.msra.mxu0 %v2050
      %2120 = vmatprep.subr.mxu0 0.0
      %2121 = vmatpush2.msra.mxu0 %v2049
      %2122 = vmatprep.subr.mxu0 0.0
      %2123 = vmatpush2.msra.mxu0 %v2048
      %2124 = vmatprep.subr.mxu0 0.0
      %2125 = vmatpush2.msra.mxu0 %v2047
      %2126 = vmatprep.subr.mxu0 0.0
      %2127 = vmatpush2.msra.mxu0 %v2046
      %2128 = vmatprep.subr.mxu0 0.0
      %2129 = vmatpush2.msra.mxu0 %v2045
      %2130 = vmatprep.subr.mxu0 0.0
      %2131 = vmatpush2.msra.mxu0 %v2044
      %2132 = vmatprep.subr.mxu0 0.0
      %2133 = vmatpush2.msra.mxu0 %v2043
      %2134 = vmatprep.subr.mxu0 0.0
      %2135 = vmatpush2.msra.mxu0 %v2042
      %2136 = vmatprep.subr.mxu0 0.0
      %2137 = vmatpush2.msra.mxu0 %v2041
      %2138 = vmatprep.subr.mxu0 0.0
      %2139 = vmatpush2.msra.mxu0 %v2040
      %2140 = vmatprep.subr.mxu0 0.0
      %2141 = vmatpush2.msra.mxu0 %v2039
      %2142 = vmatprep.subr.mxu0 0.0
      %2143 = vmatpush2.msra.mxu0 %v2038
      %2144 = vmatprep.subr.mxu0 0.0
      %2145 = vmatpush2.msra.mxu0 %v2037
      %2146 = vmatprep.subr.mxu0 0.0
      %2147 = vmatpush2.msra.mxu0 %v2036
      %2148 = vmatprep.mubr.f32.mxu0 %v2053
      %2149 = vmatmul.mubr.f32.gmra.mxu0 %v2052
      %v2150 = vpop.f32.mrf.mxu0
      %v2151 = vadd.f32 0.0, %v2150
      %v2152 = vpop.f32.mrf.mxu0
      %2153 = vmatprep.mubr.f32.mxu0 %v2055
      %2154 = vmatmul.mubr.f32.gmra.mxu0 %v2054
      %v2155 = vpop.f32.mrf.mxu0
      %v2156 = vadd.f32 0.0, %v2155
      %v2157 = vpop.f32.mrf.mxu0
      %2158 = vmatprep.mubr.f32.mxu0 %v2057
      %2159 = vmatmul.mubr.f32.gmra.mxu0 %v2056
      %v2160 = vpop.f32.mrf.mxu0
      %v2161 = vadd.f32 0.0, %v2160
      %v2162 = vpop.f32.mrf.mxu0
      %2163 = vmatprep.mubr.f32.mxu0 %v2059
      %2164 = vmatmul.mubr.f32.gmra.mxu0 %v2058
      %v2165 = vpop.f32.mrf.mxu0
      %v2166 = vadd.f32 0.0, %v2165
      %v2167 = vpop.f32.mrf.mxu0
      %2168 = vmatprep.mubr.f32.mxu0 %v2061
      %2169 = vmatmul.mubr.f32.gmra.mxu0 %v2060
      %v2170 = vpop.f32.mrf.mxu0
      %v2171 = vadd.f32 0.0, %v2170
      %v2172 = vpop.f32.mrf.mxu0
      %2173 = vmatprep.mubr.f32.mxu0 %v2063
      %2174 = vmatmul.mubr.f32.gmra.mxu0 %v2062
      %v2175 = vpop.f32.mrf.mxu0
      %v2176 = vadd.f32 0.0, %v2175
      %v2177 = vpop.f32.mrf.mxu0
      %2178 = vmatprep.mubr.f32.mxu0 %v2065
      %2179 = vmatmul.mubr.f32.gmra.mxu0 %v2064
      %v2180 = vpop.f32.mrf.mxu0
      %v2181 = vadd.f32 0.0, %v2180
      %v2182 = vpop.f32.mrf.mxu0
      %2183 = vmatprep.mubr.f32.mxu0 %v2067
      %2184 = vmatmul.mubr.f32.gmra.mxu0 %v2066
      %v2185 = vpop.f32.mrf.mxu0
      %v2186 = vadd.f32 0.0, %v2185
      %v2187 = vpop.f32.mrf.mxu0
      %2188 = vmatprep.mubr.f32.mxu0 %v2069
      %2189 = vmatmul.mubr.f32.gmra.mxu0 %v2068
      %v2190 = vpop.f32.mrf.mxu0
      %v2191 = vadd.f32 0.0, %v2190
      %v2192 = vpop.f32.mrf.mxu0
      %2193 = vmatprep.mubr.f32.mxu0 %v2071
      %2194 = vmatmul.mubr.f32.gmra.mxu0 %v2070
      %v2195 = vpop.f32.mrf.mxu0
      %v2196 = vadd.f32 0.0, %v2195
      %v2197 = vpop.f32.mrf.mxu0
      %2198 = vmatprep.mubr.f32.mxu0 %v2073
      %2199 = vmatmul.mubr.f32.gmra.mxu0 %v2072
      %v2200 = vpop.f32.mrf.mxu0
      %v2201 = vadd.f32 0.0, %v2200
      %v2202 = vpop.f32.mrf.mxu0
      %2203 = vmatprep.mubr.f32.mxu0 %v2075
      %2204 = vmatmul.mubr.f32.gmra.mxu0 %v2074
      %v2205 = vpop.f32.mrf.mxu0
      %v2206 = vadd.f32 0.0, %v2205
      %v2207 = vpop.f32.mrf.mxu0
      %2208 = vmatprep.mubr.f32.mxu0 %v2077
      %2209 = vmatmul.mubr.f32.gmra.mxu0 %v2076
      %v2210 = vpop.f32.mrf.mxu0
      %v2211 = vadd.f32 0.0, %v2210
      %v2212 = vpop.f32.mrf.mxu0
      %2213 = vmatprep.mubr.f32.mxu0 %v2079
      %2214 = vmatmul.mubr.f32.gmra.mxu0 %v2078
      %v2215 = vpop.f32.mrf.mxu0
      %v2216 = vadd.f32 0.0, %v2215
      %v2217 = vpop.f32.mrf.mxu0
      %2218 = vmatprep.mubr.f32.mxu0 %v2081
      %2219 = vmatmul.mubr.f32.gmra.mxu0 %v2080
      %v2220 = vpop.f32.mrf.mxu0
      %v2221 = vadd.f32 0.0, %v2220
      %v2222 = vpop.f32.mrf.mxu0
      %2223 = vmatprep.mubr.f32.mxu0 %v2083
      %2224 = vmatmul.mubr.f32.gmra.mxu0 %v2082
      %v2225 = vpop.f32.mrf.mxu0
      %v2226 = vadd.f32 0.0, %v2225
      %v2227 = vpop.f32.mrf.mxu0
      %2228 = vdwg.mxu0
      %v2229 = vld [vmem:[%s14] sm:$0xff]
      %v2230 = vld [vmem:[%s14 + $0x8] sm:$0xff]
      %v2231 = vld [vmem:[%s14 + $0x10] sm:$0xff]
      %v2232 = vld [vmem:[%s14 + $0x18] sm:$0xff]
      %v2233 = vld [vmem:[%s14 + $0x20] sm:$0xff]
      %v2234 = vld [vmem:[%s14 + $0x28] sm:$0xff]
      %v2235 = vld [vmem:[%s14 + $0x30] sm:$0xff]
      %v2236 = vld [vmem:[%s14 + $0x38] sm:$0xff]
      %v2237 = vld [vmem:[%s14 + $0x40] sm:$0xff]
      %v2238 = vld [vmem:[%s14 + $0x48] sm:$0xff]
      %v2239 = vld [vmem:[%s14 + $0x50] sm:$0xff]
      %v2240 = vld [vmem:[%s14 + $0x58] sm:$0xff]
      %v2241 = vld [vmem:[%s14 + $0x60] sm:$0xff]
      %v2242 = vld [vmem:[%s14 + $0x68] sm:$0xff]
      %v2243 = vld [vmem:[%s14 + $0x70] sm:$0xff]
      %v2244 = vld [vmem:[%s14 + $0x78] sm:$0xff]
      %v2245 = vld [vmem:[%s14 + $0x80] sm:$0xff]
      %v2246 = vld [vmem:[%s14 + $0x88] sm:$0xff]
      %v2247 = vld [vmem:[%s14 + $0x90] sm:$0xff]
      %v2248 = vld [vmem:[%s14 + $0x98] sm:$0xff]
      %v2249 = vld [vmem:[%s14 + $0xa0] sm:$0xff]
      %v2250 = vld [vmem:[%s14 + $0xa8] sm:$0xff]
      %v2251 = vld [vmem:[%s14 + $0xb0] sm:$0xff]
      %v2252 = vld [vmem:[%s14 + $0xb8] sm:$0xff]
      %v2253 = vld [vmem:[%s14 + $0xc0] sm:$0xff]
      %v2254 = vld [vmem:[%s14 + $0xc8] sm:$0xff]
      %v2255 = vld [vmem:[%s14 + $0xd0] sm:$0xff]
      %v2256 = vld [vmem:[%s14 + $0xd8] sm:$0xff]
      %v2257 = vld [vmem:[%s14 + $0xe0] sm:$0xff]
      %v2258 = vld [vmem:[%s14 + $0xe8] sm:$0xff]
      %v2259 = vld [vmem:[%s14 + $0xf0] sm:$0xff]
      %v2260 = vld [vmem:[%s14 + $0xf8] sm:$0xff]
      %2261 = vmatprep.subr.mxu0 0.0
      %2262 = vmatpush1.msra.mxu0 %v2035
      %2263 = vmatprep.subr.mxu0 0.0
      %2264 = vmatpush1.msra.mxu0 %v2034
      %2265 = vmatprep.subr.mxu0 0.0
      %2266 = vmatpush1.msra.mxu0 %v2033
      %2267 = vmatprep.subr.mxu0 0.0
      %2268 = vmatpush1.msra.mxu0 %v2032
      %2269 = vmatprep.subr.mxu0 0.0
      %2270 = vmatpush1.msra.mxu0 %v2031
      %2271 = vmatprep.subr.mxu0 0.0
      %2272 = vmatpush1.msra.mxu0 %v2030
      %2273 = vmatprep.subr.mxu0 0.0
      %2274 = vmatpush1.msra.mxu0 %v2029
      %2275 = vmatprep.subr.mxu0 0.0
      %2276 = vmatpush1.msra.mxu0 %v2028
      %2277 = vmatprep.subr.mxu0 0.0
      %2278 = vmatpush1.msra.mxu0 %v2027
      %2279 = vmatprep.subr.mxu0 0.0
      %2280 = vmatpush1.msra.mxu0 %v2026
      %2281 = vmatprep.subr.mxu0 0.0
      %2282 = vmatpush1.msra.mxu0 %v2025
      %2283 = vmatprep.subr.mxu0 0.0
      %2284 = vmatpush1.msra.mxu0 %v2024
      %2285 = vmatprep.subr.mxu0 0.0
      %2286 = vmatpush1.msra.mxu0 %v2023
      %2287 = vmatprep.subr.mxu0 0.0
      %2288 = vmatpush1.msra.mxu0 %v2022
      %2289 = vmatprep.subr.mxu0 0.0
      %2290 = vmatpush1.msra.mxu0 %v2021
      %2291 = vmatprep.subr.mxu0 0.0
      %2292 = vmatpush1.msra.mxu0 %v2020
      %2293 = vmatprep.subr.mxu0 0.0
      %2294 = vmatpush2.msra.mxu0 %v2051
      %2295 = vmatprep.subr.mxu0 0.0
      %2296 = vmatpush2.msra.mxu0 %v2050
      %2297 = vmatprep.subr.mxu0 0.0
      %2298 = vmatpush2.msra.mxu0 %v2049
      %2299 = vmatprep.subr.mxu0 0.0
      %2300 = vmatpush2.msra.mxu0 %v2048
      %2301 = vmatprep.subr.mxu0 0.0
      %2302 = vmatpush2.msra.mxu0 %v2047
      %2303 = vmatprep.subr.mxu0 0.0
      %2304 = vmatpush2.msra.mxu0 %v2046
      %2305 = vmatprep.subr.mxu0 0.0
      %2306 = vmatpush2.msra.mxu0 %v2045
      %2307 = vmatprep.subr.mxu0 0.0
      %2308 = vmatpush2.msra.mxu0 %v2044
      %2309 = vmatprep.subr.mxu0 0.0
      %2310 = vmatpush2.msra.mxu0 %v2043
      %2311 = vmatprep.subr.mxu0 0.0
      %2312 = vmatpush2.msra.mxu0 %v2042
      %2313 = vmatprep.subr.mxu0 0.0
      %2314 = vmatpush2.msra.mxu0 %v2041
      %2315 = vmatprep.subr.mxu0 0.0
      %2316 = vmatpush2.msra.mxu0 %v2040
      %2317 = vmatprep.subr.mxu0 0.0
      %2318 = vmatpush2.msra.mxu0 %v2039
      %2319 = vmatprep.subr.mxu0 0.0
      %2320 = vmatpush2.msra.mxu0 %v2038
      %2321 = vmatprep.subr.mxu0 0.0
      %2322 = vmatpush2.msra.mxu0 %v2037
      %2323 = vmatprep.subr.mxu0 0.0
      %2324 = vmatpush2.msra.mxu0 %v2036
      %2325 = vmatprep.mubr.f32.mxu0 %v2230
      %2326 = vmatmul.mubr.f32.gmra.mxu0 %v2229
      %v2327 = vpop.f32.mrf.mxu0
      %v2328 = vadd.f32 0.0, %v2327
      %v2329 = vpop.f32.mrf.mxu0
      %2330 = vmatprep.mubr.f32.mxu0 %v2232
      %2331 = vmatmul.mubr.f32.gmra.mxu0 %v2231
      %v2332 = vpop.f32.mrf.mxu0
      %v2333 = vadd.f32 0.0, %v2332
      %v2334 = vpop.f32.mrf.mxu0
      %2335 = vmatprep.mubr.f32.mxu0 %v2234
      %2336 = vmatmul.mubr.f32.gmra.mxu0 %v2233
      %v2337 = vpop.f32.mrf.mxu0
      %v2338 = vadd.f32 0.0, %v2337
      %v2339 = vpop.f32.mrf.mxu0
      %2340 = vmatprep.mubr.f32.mxu0 %v2236
      %2341 = vmatmul.mubr.f32.gmra.mxu0 %v2235
      %v2342 = vpop.f32.mrf.mxu0
      %v2343 = vadd.f32 0.0, %v2342
      %v2344 = vpop.f32.mrf.mxu0
      %2345 = vmatprep.mubr.f32.mxu0 %v2238
      %2346 = vmatmul.mubr.f32.gmra.mxu0 %v2237
      %v2347 = vpop.f32.mrf.mxu0
      %v2348 = vadd.f32 0.0, %v2347
      %v2349 = vpop.f32.mrf.mxu0
      %2350 = vmatprep.mubr.f32.mxu0 %v2240
      %2351 = vmatmul.mubr.f32.gmra.mxu0 %v2239
      %v2352 = vpop.f32.mrf.mxu0
      %v2353 = vadd.f32 0.0, %v2352
      %v2354 = vpop.f32.mrf.mxu0
      %2355 = vmatprep.mubr.f32.mxu0 %v2242
      %2356 = vmatmul.mubr.f32.gmra.mxu0 %v2241
      %v2357 = vpop.f32.mrf.mxu0
      %v2358 = vadd.f32 0.0, %v2357
      %v2359 = vpop.f32.mrf.mxu0
      %2360 = vmatprep.mubr.f32.mxu0 %v2244
      %2361 = vmatmul.mubr.f32.gmra.mxu0 %v2243
      %v2362 = vpop.f32.mrf.mxu0
      %v2363 = vadd.f32 0.0, %v2362
      %v2364 = vpop.f32.mrf.mxu0
      %2365 = vmatprep.mubr.f32.mxu0 %v2246
      %2366 = vmatmul.mubr.f32.gmra.mxu0 %v2245
      %v2367 = vpop.f32.mrf.mxu0
      %v2368 = vadd.f32 0.0, %v2367
      %v2369 = vpop.f32.mrf.mxu0
      %2370 = vmatprep.mubr.f32.mxu0 %v2248
      %2371 = vmatmul.mubr.f32.gmra.mxu0 %v2247
      %v2372 = vpop.f32.mrf.mxu0
      %v2373 = vadd.f32 0.0, %v2372
      %v2374 = vpop.f32.mrf.mxu0
      %2375 = vmatprep.mubr.f32.mxu0 %v2250
      %2376 = vmatmul.mubr.f32.gmra.mxu0 %v2249
      %v2377 = vpop.f32.mrf.mxu0
      %v2378 = vadd.f32 0.0, %v2377
      %v2379 = vpop.f32.mrf.mxu0
      %2380 = vmatprep.mubr.f32.mxu0 %v2252
      %2381 = vmatmul.mubr.f32.gmra.mxu0 %v2251
      %v2382 = vpop.f32.mrf.mxu0
      %v2383 = vadd.f32 0.0, %v2382
      %v2384 = vpop.f32.mrf.mxu0
      %2385 = vmatprep.mubr.f32.mxu0 %v2254
      %2386 = vmatmul.mubr.f32.gmra.mxu0 %v2253
      %v2387 = vpop.f32.mrf.mxu0
      %v2388 = vadd.f32 0.0, %v2387
      %v2389 = vpop.f32.mrf.mxu0
      %2390 = vmatprep.mubr.f32.mxu0 %v2256
      %2391 = vmatmul.mubr.f32.gmra.mxu0 %v2255
      %v2392 = vpop.f32.mrf.mxu0
      %v2393 = vadd.f32 0.0, %v2392
      %v2394 = vpop.f32.mrf.mxu0
      %2395 = vmatprep.mubr.f32.mxu0 %v2258
      %2396 = vmatmul.mubr.f32.gmra.mxu0 %v2257
      %v2397 = vpop.f32.mrf.mxu0
      %v2398 = vadd.f32 0.0, %v2397
      %v2399 = vpop.f32.mrf.mxu0
      %2400 = vmatprep.mubr.f32.mxu0 %v2260
      %2401 = vmatmul.mubr.f32.gmra.mxu0 %v2259
      %v2402 = vpop.f32.mrf.mxu0
      %v2403 = vadd.f32 0.0, %v2402
      %v2404 = vpop.f32.mrf.mxu0
      %2405 = vdwg.mxu0
      %v2406 = vsub.f32 0.0, %v2328
      %v2407 = vsub.f32 0.0, %v2333
      %v2408 = vsub.f32 0.0, %v2338
      %v2409 = vsub.f32 0.0, %v2343
      %v2410 = vsub.f32 0.0, %v2348
      %v2411 = vsub.f32 0.0, %v2353
      %v2412 = vsub.f32 0.0, %v2358
      %v2413 = vsub.f32 0.0, %v2363
      %v2414 = vsub.f32 0.0, %v2368
      %v2415 = vsub.f32 0.0, %v2373
      %v2416 = vsub.f32 0.0, %v2378
      %v2417 = vsub.f32 0.0, %v2383
      %v2418 = vsub.f32 0.0, %v2388
      %v2419 = vsub.f32 0.0, %v2393
      %v2420 = vsub.f32 0.0, %v2398
      %v2421 = vsub.f32 0.0, %v2403
      %v2422 = vmul.f32 %v2151, %v2151
      %v2423 = vmul.f32 %v2156, %v2156
      %v2424 = vmul.f32 %v2161, %v2161
      %v2425 = vmul.f32 %v2166, %v2166
      %v2426 = vmul.f32 %v2171, %v2171
      %v2427 = vmul.f32 %v2176, %v2176
      %v2428 = vmul.f32 %v2181, %v2181
      %v2429 = vmul.f32 %v2186, %v2186
      %v2430 = vmul.f32 %v2191, %v2191
      %v2431 = vmul.f32 %v2196, %v2196
      %v2432 = vmul.f32 %v2201, %v2201
      %v2433 = vmul.f32 %v2206, %v2206
      %v2434 = vmul.f32 %v2211, %v2211
      %v2435 = vmul.f32 %v2216, %v2216
      %v2436 = vmul.f32 %v2221, %v2221
      %v2437 = vmul.f32 %v2226, %v2226
      %v2438 = vmul.f32 %v2406, %v2406
      %v2439 = vmul.f32 %v2407, %v2407
      %v2440 = vmul.f32 %v2408, %v2408
      %v2441 = vmul.f32 %v2409, %v2409
      %v2442 = vmul.f32 %v2410, %v2410
      %v2443 = vmul.f32 %v2411, %v2411
      %v2444 = vmul.f32 %v2412, %v2412
      %v2445 = vmul.f32 %v2413, %v2413
      %v2446 = vmul.f32 %v2414, %v2414
      %v2447 = vmul.f32 %v2415, %v2415
      %v2448 = vmul.f32 %v2416, %v2416
      %v2449 = vmul.f32 %v2417, %v2417
      %v2450 = vmul.f32 %v2418, %v2418
      %v2451 = vmul.f32 %v2419, %v2419
      %v2452 = vmul.f32 %v2420, %v2420
      %v2453 = vmul.f32 %v2421, %v2421
      %v2454 = vadd.f32 %v2422, %v2438
      %v2455 = vadd.f32 %v2423, %v2439
      %v2456 = vadd.f32 %v2424, %v2440
      %v2457 = vadd.f32 %v2425, %v2441
      %v2458 = vadd.f32 %v2426, %v2442
      %v2459 = vadd.f32 %v2427, %v2443
      %v2460 = vadd.f32 %v2428, %v2444
      %v2461 = vadd.f32 %v2429, %v2445
      %v2462 = vadd.f32 %v2430, %v2446
      %v2463 = vadd.f32 %v2431, %v2447
      %v2464 = vadd.f32 %v2432, %v2448
      %v2465 = vadd.f32 %v2433, %v2449
      %v2466 = vadd.f32 %v2434, %v2450
      %v2467 = vadd.f32 %v2435, %v2451
      %v2468 = vadd.f32 %v2436, %v2452
      %v2469 = vadd.f32 %v2437, %v2453
      %v2470 = vsel %vm1123, %v2454, 0.0
      %2471 = vadd.xlane.f32.xlu0 %v2470
      %v2472 = vpop.xlane.xlu0 %2471
      %v2473 = vsel %vm1123, %v2455, 0.0
      %2474 = vadd.xlane.f32.xlu0 %v2473
      %v2475 = vpop.xlane.xlu0 %2474
      %v2476 = vsel %vm1123, %v2456, 0.0
      %2477 = vadd.xlane.f32.xlu0 %v2476
      %v2478 = vpop.xlane.xlu0 %2477
      %v2479 = vsel %vm1123, %v2457, 0.0
      %2480 = vadd.xlane.f32.xlu0 %v2479
      %v2481 = vpop.xlane.xlu0 %2480
      %v2482 = vsel %vm1123, %v2458, 0.0
      %2483 = vadd.xlane.f32.xlu0 %v2482
      %v2484 = vpop.xlane.xlu0 %2483
      %v2485 = vsel %vm1123, %v2459, 0.0
      %2486 = vadd.xlane.f32.xlu0 %v2485
      %v2487 = vpop.xlane.xlu0 %2486
      %v2488 = vsel %vm1123, %v2460, 0.0
      %2489 = vadd.xlane.f32.xlu0 %v2488
      %v2490 = vpop.xlane.xlu0 %2489
      %v2491 = vsel %vm1123, %v2461, 0.0
      %2492 = vadd.xlane.f32.xlu0 %v2491
      %v2493 = vpop.xlane.xlu0 %2492
      %v2494 = vsel %vm1123, %v2462, 0.0
      %2495 = vadd.xlane.f32.xlu0 %v2494
      %v2496 = vpop.xlane.xlu0 %2495
      %v2497 = vsel %vm1123, %v2463, 0.0
      %2498 = vadd.xlane.f32.xlu0 %v2497
      %v2499 = vpop.xlane.xlu0 %2498
      %v2500 = vsel %vm1123, %v2464, 0.0
      %2501 = vadd.xlane.f32.xlu0 %v2500
      %v2502 = vpop.xlane.xlu0 %2501
      %v2503 = vsel %vm1123, %v2465, 0.0
      %2504 = vadd.xlane.f32.xlu0 %v2503
      %v2505 = vpop.xlane.xlu0 %2504
      %v2506 = vsel %vm1123, %v2466, 0.0
      %2507 = vadd.xlane.f32.xlu0 %v2506
      %v2508 = vpop.xlane.xlu0 %2507
      %v2509 = vsel %vm1123, %v2467, 0.0
      %2510 = vadd.xlane.f32.xlu0 %v2509
      %v2511 = vpop.xlane.xlu0 %2510
      %v2512 = vsel %vm1123, %v2468, 0.0
      %2513 = vadd.xlane.f32.xlu0 %v2512
      %v2514 = vpop.xlane.xlu0 %2513
      %v2515 = vsel %vm1123, %v2469, 0.0
      %2516 = vadd.xlane.f32.xlu0 %v2515
      %v2517 = vpop.xlane.xlu0 %2516
      %v2519 = vsel %vm1123, 1.0, 0
      %v2522 = vsel %vm1123, %v2454, 0
      %v2525 = vsel %vm1123, %v2455, 0
      %v2528 = vsel %vm1123, %v2456, 0
      %v2531 = vsel %vm1123, %v2457, 0
      %v2534 = vsel %vm1123, %v2458, 0
      %v2537 = vsel %vm1123, %v2459, 0
      %v2540 = vsel %vm1123, %v2460, 0
      %v2543 = vsel %vm1123, %v2461, 0
      %v2546 = vsel %vm1123, %v2462, 0
      %v2549 = vsel %vm1123, %v2463, 0
      %v2552 = vsel %vm1123, %v2464, 0
      %v2555 = vsel %vm1123, %v2465, 0
      %v2558 = vsel %vm1123, %v2466, 0
      %v2561 = vsel %vm1123, %v2467, 0
      %v2564 = vsel %vm1123, %v2468, 0
      %v2567 = vsel %vm1123, %v2469, 0
      %2569 = vmatprep.subr.mxu0 0.0
      %2570 = vmatpush1.xpose.msra.mxu0 %v2567
      %2571 = vmatprep.subr.mxu0 0.0
      %2572 = vmatpush1.xpose.msra.mxu0 %v2564
      %2573 = vmatprep.subr.mxu0 0.0
      %2574 = vmatpush1.xpose.msra.mxu0 %v2561
      %2575 = vmatprep.subr.mxu0 0.0
      %2576 = vmatpush1.xpose.msra.mxu0 %v2558
      %2577 = vmatprep.subr.mxu0 0.0
      %2578 = vmatpush1.xpose.msra.mxu0 %v2555
      %2579 = vmatprep.subr.mxu0 0.0
      %2580 = vmatpush1.xpose.msra.mxu0 %v2552
      %2581 = vmatprep.subr.mxu0 0.0
      %2582 = vmatpush1.xpose.msra.mxu0 %v2549
      %2583 = vmatprep.subr.mxu0 0.0
      %2584 = vmatpush1.xpose.msra.mxu0 %v2546
      %2585 = vmatprep.subr.mxu0 0.0
      %2586 = vmatpush1.xpose.msra.mxu0 %v2543
      %2587 = vmatprep.subr.mxu0 0.0
      %2588 = vmatpush1.xpose.msra.mxu0 %v2540
      %2589 = vmatprep.subr.mxu0 0.0
      %2590 = vmatpush1.xpose.msra.mxu0 %v2537
      %2591 = vmatprep.subr.mxu0 0.0
      %2592 = vmatpush1.xpose.msra.mxu0 %v2534
      %2593 = vmatprep.subr.mxu0 0.0
      %2594 = vmatpush1.xpose.msra.mxu0 %v2531
      %2595 = vmatprep.subr.mxu0 0.0
      %2596 = vmatpush1.xpose.msra.mxu0 %v2528
      %2597 = vmatprep.subr.mxu0 0.0
      %2598 = vmatpush1.xpose.msra.mxu0 %v2525
      %2599 = vmatprep.subr.mxu0 0.0
      %2600 = vmatpush1.xpose.msra.mxu0 %v2522
      %2601 = vmatprep.subr.mxu0 0.0
      %2602 = vmatpush2.xpose.msra.mxu0 0.0
      %2603 = vmatprep.subr.mxu0 0.0
      %2604 = vmatpush2.xpose.msra.mxu0 0.0
      %2605 = vmatprep.subr.mxu0 0.0
      %2606 = vmatpush2.xpose.msra.mxu0 0.0
      %2607 = vmatprep.subr.mxu0 0.0
      %2608 = vmatpush2.xpose.msra.mxu0 0.0
      %2609 = vmatprep.subr.mxu0 0.0
      %2610 = vmatpush2.xpose.msra.mxu0 0.0
      %2611 = vmatprep.subr.mxu0 0.0
      %2612 = vmatpush2.xpose.msra.mxu0 0.0
      %2613 = vmatprep.subr.mxu0 0.0
      %2614 = vmatpush2.xpose.msra.mxu0 0.0
      %2615 = vmatprep.subr.mxu0 0.0
      %2616 = vmatpush2.xpose.msra.mxu0 0.0
      %2617 = vmatprep.subr.mxu0 0.0
      %2618 = vmatpush2.xpose.msra.mxu0 0.0
      %2619 = vmatprep.subr.mxu0 0.0
      %2620 = vmatpush2.xpose.msra.mxu0 0.0
      %2621 = vmatprep.subr.mxu0 0.0
      %2622 = vmatpush2.xpose.msra.mxu0 0.0
      %2623 = vmatprep.subr.mxu0 0.0
      %2624 = vmatpush2.xpose.msra.mxu0 0.0
      %2625 = vmatprep.subr.mxu0 0.0
      %2626 = vmatpush2.xpose.msra.mxu0 0.0
      %2627 = vmatprep.subr.mxu0 0.0
      %2628 = vmatpush2.xpose.msra.mxu0 0.0
      %2629 = vmatprep.subr.mxu0 0.0
      %2630 = vmatpush2.xpose.msra.mxu0 0.0
      %2631 = vmatprep.subr.mxu0 0.0
      %2632 = vmatpush2.xpose.msra.mxu0 0.0
      %2633 = vmatprep.mubr.f32.mxu0 0.0
      %2634 = vmatmul.mubr.f32.gmra.mxu0 %v2519
      %v2635 = vpop.f32.mrf.mxu0
      %v2636 = vadd.f32 0.0, %v2635
      %v2637 = vpop.f32.mrf.mxu0
      %2638 = vdwg.mxu0
      %v2639 = vlaneseq
      %v2640 = vshrl.u32 %v2639, 7
      %v2641 = vadd.s32 %v2640, 8
      %v2642 = vadd.s32 %v2640, 16
      %v2643 = vadd.s32 %v2640, 24
      %v2644 = vadd.s32 %v2640, 32
      %v2645 = vadd.s32 %v2640, 40
      %v2646 = vadd.s32 %v2640, 48
      %v2647 = vadd.s32 %v2640, 56
      %v2648 = vadd.s32 %v2640, 64
      %v2649 = vadd.s32 %v2640, 72
      %v2650 = vadd.s32 %v2640, 80
      %v2651 = vadd.s32 %v2640, 88
      %v2652 = vadd.s32 %v2640, 96
      %v2653 = vadd.s32 %v2640, 104
      %v2654 = vadd.s32 %v2640, 112
      %v2655 = vadd.s32 %v2640, 120
      %v2656 = vlaneseq
      %v2657 = vand.u32 %v2656, 127
      %vm2658 = vcmp.eq.s32.totalorder %v2640, %v2657
      %vm2659 = vcmp.eq.s32.totalorder %v2641, %v2657
      %vm2660 = vcmp.eq.s32.totalorder %v2642, %v2657
      %vm2661 = vcmp.eq.s32.totalorder %v2643, %v2657
      %vm2662 = vcmp.eq.s32.totalorder %v2644, %v2657
      %vm2663 = vcmp.eq.s32.totalorder %v2645, %v2657
      %vm2664 = vcmp.eq.s32.totalorder %v2646, %v2657
      %vm2665 = vcmp.eq.s32.totalorder %v2647, %v2657
      %vm2666 = vcmp.eq.s32.totalorder %v2648, %v2657
      %vm2667 = vcmp.eq.s32.totalorder %v2649, %v2657
      %vm2668 = vcmp.eq.s32.totalorder %v2650, %v2657
      %vm2669 = vcmp.eq.s32.totalorder %v2651, %v2657
      %vm2670 = vcmp.eq.s32.totalorder %v2652, %v2657
      %vm2671 = vcmp.eq.s32.totalorder %v2653, %v2657
      %vm2672 = vcmp.eq.s32.totalorder %v2654, %v2657
      %vm2673 = vcmp.eq.s32.totalorder %v2655, %v2657
      %v2674 = vlaneseq
      %v2675 = vshrl.u32 %v2674, 7
      %v2676 = vsub.s32 0, %v2675
      %v2677 = vrot.slane %v2636, %v2676
      %vm2678 = vcmp.le.f32.partialorder %v2472, %v2677
      %vm2679 = vcmp.le.f32.partialorder %v2475, %v2677
      %vm2680 = vcmp.le.f32.partialorder %v2478, %v2677
      %vm2681 = vcmp.le.f32.partialorder %v2481, %v2677
      %vm2682 = vcmp.le.f32.partialorder %v2484, %v2677
      %vm2683 = vcmp.le.f32.partialorder %v2487, %v2677
      %vm2684 = vcmp.le.f32.partialorder %v2490, %v2677
      %vm2685 = vcmp.le.f32.partialorder %v2493, %v2677
      %vm2686 = vcmp.le.f32.partialorder %v2496, %v2677
      %vm2687 = vcmp.le.f32.partialorder %v2499, %v2677
      %vm2688 = vcmp.le.f32.partialorder %v2502, %v2677
      %vm2689 = vcmp.le.f32.partialorder %v2505, %v2677
      %vm2690 = vcmp.le.f32.partialorder %v2508, %v2677
      %vm2691 = vcmp.le.f32.partialorder %v2511, %v2677
      %vm2692 = vcmp.le.f32.partialorder %v2514, %v2677
      %vm2693 = vcmp.le.f32.partialorder %v2517, %v2677
      %vm2694 = vmor %vm2678, %vm2658
      %vm2695 = vmor %vm2679, %vm2659
      %vm2696 = vmor %vm2680, %vm2660
      %vm2697 = vmor %vm2681, %vm2661
      %vm2698 = vmor %vm2682, %vm2662
      %vm2699 = vmor %vm2683, %vm2663
      %vm2700 = vmor %vm2684, %vm2664
      %vm2701 = vmor %vm2685, %vm2665
      %vm2702 = vmor %vm2686, %vm2666
      %vm2703 = vmor %vm2687, %vm2667
      %vm2704 = vmor %vm2688, %vm2668
      %vm2705 = vmor %vm2689, %vm2669
      %vm2706 = vmor %vm2690, %vm2670
      %vm2707 = vmor %vm2691, %vm2671
      %vm2708 = vmor %vm2692, %vm2672
      %vm2709 = vmor %vm2693, %vm2673
      %v2710 = vsel %vm2694, 1, 0
      %v2711 = vsel %vm2695, 1, 0
      %v2712 = vsel %vm2696, 1, 0
      %v2713 = vsel %vm2697, 1, 0
      %v2714 = vsel %vm2698, 1, 0
      %v2715 = vsel %vm2699, 1, 0
      %v2716 = vsel %vm2700, 1, 0
      %v2717 = vsel %vm2701, 1, 0
      %v2718 = vsel %vm2702, 1, 0
      %v2719 = vsel %vm2703, 1, 0
      %v2720 = vsel %vm2704, 1, 0
      %v2721 = vsel %vm2705, 1, 0
      %v2722 = vsel %vm2706, 1, 0
      %v2723 = vsel %vm2707, 1, 0
      %v2724 = vsel %vm2708, 1, 0
      %v2725 = vsel %vm2709, 1, 0
      %v2726 = vcvt.s32.f32 %v2710
      %v2727 = vcvt.s32.f32 %v2711
      %v2728 = vcvt.s32.f32 %v2712
      %v2729 = vcvt.s32.f32 %v2713
      %v2730 = vcvt.s32.f32 %v2714
      %v2731 = vcvt.s32.f32 %v2715
      %v2732 = vcvt.s32.f32 %v2716
      %v2733 = vcvt.s32.f32 %v2717
      %v2734 = vcvt.s32.f32 %v2718
      %v2735 = vcvt.s32.f32 %v2719
      %v2736 = vcvt.s32.f32 %v2720
      %v2737 = vcvt.s32.f32 %v2721
      %v2738 = vcvt.s32.f32 %v2722
      %v2739 = vcvt.s32.f32 %v2723
      %v2740 = vcvt.s32.f32 %v2724
      %v2741 = vcvt.s32.f32 %v2725
      %2742 = vmatprep.subr.mxu0 0.0
      %2743 = vmatpush1.msra.mxu0 %v2741
      %2744 = vmatprep.subr.mxu0 0.0
      %2745 = vmatpush1.msra.mxu0 %v2740
      %2746 = vmatprep.subr.mxu0 0.0
      %2747 = vmatpush1.msra.mxu0 %v2739
      %2748 = vmatprep.subr.mxu0 0.0
      %2749 = vmatpush1.msra.mxu0 %v2738
      %2750 = vmatprep.subr.mxu0 0.0
      %2751 = vmatpush1.msra.mxu0 %v2737
      %2752 = vmatprep.subr.mxu0 0.0
      %2753 = vmatpush1.msra.mxu0 %v2736
      %2754 = vmatprep.subr.mxu0 0.0
      %2755 = vmatpush1.msra.mxu0 %v2735
      %2756 = vmatprep.subr.mxu0 0.0
      %2757 = vmatpush1.msra.mxu0 %v2734
      %2758 = vmatprep.subr.mxu0 0.0
      %2759 = vmatpush1.msra.mxu0 %v2733
      %2760 = vmatprep.subr.mxu0 0.0
      %2761 = vmatpush1.msra.mxu0 %v2732
      %2762 = vmatprep.subr.mxu0 0.0
      %2763 = vmatpush1.msra.mxu0 %v2731
      %2764 = vmatprep.subr.mxu0 0.0
      %2765 = vmatpush1.msra.mxu0 %v2730
      %2766 = vmatprep.subr.mxu0 0.0
      %2767 = vmatpush1.msra.mxu0 %v2729
      %2768 = vmatprep.subr.mxu0 0.0
      %2769 = vmatpush1.msra.mxu0 %v2728
      %2770 = vmatprep.subr.mxu0 0.0
      %2771 = vmatpush1.msra.mxu0 %v2727
      %2772 = vmatprep.subr.mxu0 0.0
      %2773 = vmatpush1.msra.mxu0 %v2726
      %2774 = vmatprep.subr.mxu0 0.0
      %2775 = vmatpush2.msra.mxu0 0.0
      %2776 = vmatprep.subr.mxu0 0.0
      %2777 = vmatpush2.msra.mxu0 0.0
      %2778 = vmatprep.subr.mxu0 0.0
      %2779 = vmatpush2.msra.mxu0 0.0
      %2780 = vmatprep.subr.mxu0 0.0
      %2781 = vmatpush2.msra.mxu0 0.0
      %2782 = vmatprep.subr.mxu0 0.0
      %2783 = vmatpush2.msra.mxu0 0.0
      %2784 = vmatprep.subr.mxu0 0.0
      %2785 = vmatpush2.msra.mxu0 0.0
      %2786 = vmatprep.subr.mxu0 0.0
      %2787 = vmatpush2.msra.mxu0 0.0
      %2788 = vmatprep.subr.mxu0 0.0
      %2789 = vmatpush2.msra.mxu0 0.0
      %2790 = vmatprep.subr.mxu0 0.0
      %2791 = vmatpush2.msra.mxu0 0.0
      %2792 = vmatprep.subr.mxu0 0.0
      %2793 = vmatpush2.msra.mxu0 0.0
      %2794 = vmatprep.subr.mxu0 0.0
      %2795 = vmatpush2.msra.mxu0 0.0
      %2796 = vmatprep.subr.mxu0 0.0
      %2797 = vmatpush2.msra.mxu0 0.0
      %2798 = vmatprep.subr.mxu0 0.0
      %2799 = vmatpush2.msra.mxu0 0.0
      %2800 = vmatprep.subr.mxu0 0.0
      %2801 = vmatpush2.msra.mxu0 0.0
      %2802 = vmatprep.subr.mxu0 0.0
      %2803 = vmatpush2.msra.mxu0 0.0
      %2804 = vmatprep.subr.mxu0 0.0
      %2805 = vmatpush2.msra.mxu0 0.0
      %2806 = vmatprep.mubr.f32.mxu0 0.0
      %2807 = vmatmul.mubr.f32.gmra.mxu0 1.0
      %v2808 = vpop.f32.mrf.mxu0
      %v2809 = vadd.f32 0.0, %v2808
      %v2810 = vpop.f32.mrf.mxu0
      %2811 = vdwg.mxu0
      %vm2812 = vcmp.ge.f32.partialorder %v2809, 64.0
      %v2813 = vsel %vm2812, %v2636, inf
      %vm2814 = vcmask 1040384
      %v2815 = vsel %vm2814, %v2813, inf
      %2816 = vmin.xlane.f32.xlu0 %v2815
      %v2817 = vpop.xlane.xlu0 %2816
      %v2818 = vadd.f32 %v2817, 1e-06
      %v2819 = vlaneseq
      %v2820 = vshrl.u32 %v2819, 7
      %v2821 = vsub.s32 0, %v2820
      %v2822 = vrot.slane %v2818, %v2821
      %v2823 = vrcp.pop %v2822
      %v2824 = vmul.f32 %v2472, %v2823
      %v2825 = vmul.f32 %v2475, %v2823
      %v2826 = vmul.f32 %v2478, %v2823
      %v2827 = vmul.f32 %v2481, %v2823
      %v2828 = vmul.f32 %v2484, %v2823
      %v2829 = vmul.f32 %v2487, %v2823
      %v2830 = vmul.f32 %v2490, %v2823
      %v2831 = vmul.f32 %v2493, %v2823
      %v2832 = vmul.f32 %v2496, %v2823
      %v2833 = vmul.f32 %v2499, %v2823
      %v2834 = vmul.f32 %v2502, %v2823
      %v2835 = vmul.f32 %v2505, %v2823
      %v2836 = vmul.f32 %v2508, %v2823
      %v2837 = vmul.f32 %v2511, %v2823
      %v2838 = vmul.f32 %v2514, %v2823
      %v2839 = vmul.f32 %v2517, %v2823
      %v2841 = vlaneseq
      %v2842 = vshrl.u32 %v2841, 7
      %v2843 = vsub.s32 0, %v2842
      %v2844 = vrot.slane %v1120, %v2843
      %vm2846 = vcmp.gt.f32.partialorder %v2824, %v2844
      %vm2847 = vcmp.gt.f32.partialorder %v2825, %v2844
      %vm2848 = vcmp.gt.f32.partialorder %v2826, %v2844
      %vm2849 = vcmp.gt.f32.partialorder %v2827, %v2844
      %vm2850 = vcmp.gt.f32.partialorder %v2828, %v2844
      %vm2851 = vcmp.gt.f32.partialorder %v2829, %v2844
      %vm2852 = vcmp.gt.f32.partialorder %v2830, %v2844
      %vm2853 = vcmp.gt.f32.partialorder %v2831, %v2844
      %vm2854 = vcmp.gt.f32.partialorder %v2832, %v2844
      %vm2855 = vcmp.gt.f32.partialorder %v2833, %v2844
      %vm2856 = vcmp.gt.f32.partialorder %v2834, %v2844
      %vm2857 = vcmp.gt.f32.partialorder %v2835, %v2844
      %vm2858 = vcmp.gt.f32.partialorder %v2836, %v2844
      %vm2859 = vcmp.gt.f32.partialorder %v2837, %v2844
      %vm2860 = vcmp.gt.f32.partialorder %v2838, %v2844
      %vm2861 = vcmp.gt.f32.partialorder %v2839, %v2844
      %v2862 = vsel %vm2846, 1, 0
      %v2863 = vsel %vm2847, 1, 0
      %v2864 = vsel %vm2848, 1, 0
      %v2865 = vsel %vm2849, 1, 0
      %v2866 = vsel %vm2850, 1, 0
      %v2867 = vsel %vm2851, 1, 0
      %v2868 = vsel %vm2852, 1, 0
      %v2869 = vsel %vm2853, 1, 0
      %v2870 = vsel %vm2854, 1, 0
      %v2871 = vsel %vm2855, 1, 0
      %v2872 = vsel %vm2856, 1, 0
      %v2873 = vsel %vm2857, 1, 0
      %v2874 = vsel %vm2858, 1, 0
      %v2875 = vsel %vm2859, 1, 0
      %v2876 = vsel %vm2860, 1, 0
      %v2877 = vsel %vm2861, 1, 0
      %v2878 = vcvt.s32.f32 %v2862
      %v2879 = vcvt.s32.f32 %v2863
      %v2880 = vcvt.s32.f32 %v2864
      %v2881 = vcvt.s32.f32 %v2865
      %v2882 = vcvt.s32.f32 %v2866
      %v2883 = vcvt.s32.f32 %v2867
      %v2884 = vcvt.s32.f32 %v2868
      %v2885 = vcvt.s32.f32 %v2869
      %v2886 = vcvt.s32.f32 %v2870
      %v2887 = vcvt.s32.f32 %v2871
      %v2888 = vcvt.s32.f32 %v2872
      %v2889 = vcvt.s32.f32 %v2873
      %v2890 = vcvt.s32.f32 %v2874
      %v2891 = vcvt.s32.f32 %v2875
      %v2892 = vcvt.s32.f32 %v2876
      %v2893 = vcvt.s32.f32 %v2877
      %v2894 = vld [vmem:[%s663] sm:$0x1]
      %v2895 = vld [vmem:[%s669] sm:$0x1]
      %2897 = vset.pattern.permute.xlu0 0
      %2898 = vperm.xlu0 %2897, %v2878
      %v2899 = vpop.permute.xlu0 %2898
      %2902 = vset.pattern.permute.xlu0 0
      %2903 = vperm.xlu0 %2902, %v2879
      %v2904 = vpop.permute.xlu0 %2903
      %2907 = vset.pattern.permute.xlu0 0
      %2908 = vperm.xlu0 %2907, %v2880
      %v2909 = vpop.permute.xlu0 %2908
      %2912 = vset.pattern.permute.xlu0 0
      %2913 = vperm.xlu0 %2912, %v2881
      %v2914 = vpop.permute.xlu0 %2913
      %2917 = vset.pattern.permute.xlu0 0
      %2918 = vperm.xlu0 %2917, %v2882
      %v2919 = vpop.permute.xlu0 %2918
      %2922 = vset.pattern.permute.xlu0 0
      %2923 = vperm.xlu0 %2922, %v2883
      %v2924 = vpop.permute.xlu0 %2923
      %2927 = vset.pattern.permute.xlu0 0
      %2928 = vperm.xlu0 %2927, %v2884
      %v2929 = vpop.permute.xlu0 %2928
      %2932 = vset.pattern.permute.xlu0 0
      %2933 = vperm.xlu0 %2932, %v2885
      %v2934 = vpop.permute.xlu0 %2933
      %2937 = vset.pattern.permute.xlu0 0
      %2938 = vperm.xlu0 %2937, %v2886
      %v2939 = vpop.permute.xlu0 %2938
      %2942 = vset.pattern.permute.xlu0 0
      %2943 = vperm.xlu0 %2942, %v2887
      %v2944 = vpop.permute.xlu0 %2943
      %2947 = vset.pattern.permute.xlu0 0
      %2948 = vperm.xlu0 %2947, %v2888
      %v2949 = vpop.permute.xlu0 %2948
      %2952 = vset.pattern.permute.xlu0 0
      %2953 = vperm.xlu0 %2952, %v2889
      %v2954 = vpop.permute.xlu0 %2953
      %2957 = vset.pattern.permute.xlu0 0
      %2958 = vperm.xlu0 %2957, %v2890
      %v2959 = vpop.permute.xlu0 %2958
      %2962 = vset.pattern.permute.xlu0 0
      %2963 = vperm.xlu0 %2962, %v2891
      %v2964 = vpop.permute.xlu0 %2963
      %2967 = vset.pattern.permute.xlu0 0
      %2968 = vperm.xlu0 %2967, %v2892
      %v2969 = vpop.permute.xlu0 %2968
      %2972 = vset.pattern.permute.xlu0 0
      %2973 = vperm.xlu0 %2972, %v2893
      %v2974 = vpop.permute.xlu0 %2973
      %v2977 = vlaneseq
      %v2978 = vshrl.u32 %v2977, 7
      %v2979 = vsub.s32 0, %v2978
      %v2980 = vrot.slane %v2895, %v2979
      %v2982 = vmul.f32 %v2899, %v2980
      %v2983 = vmul.f32 %v2904, %v2980
      %v2984 = vmul.f32 %v2909, %v2980
      %v2985 = vmul.f32 %v2914, %v2980
      %v2986 = vmul.f32 %v2919, %v2980
      %v2987 = vmul.f32 %v2924, %v2980
      %v2988 = vmul.f32 %v2929, %v2980
      %v2989 = vmul.f32 %v2934, %v2980
      %v2990 = vmul.f32 %v2939, %v2980
      %v2991 = vmul.f32 %v2944, %v2980
      %v2992 = vmul.f32 %v2949, %v2980
      %v2993 = vmul.f32 %v2954, %v2980
      %v2994 = vmul.f32 %v2959, %v2980
      %v2995 = vmul.f32 %v2964, %v2980
      %v2996 = vmul.f32 %v2969, %v2980
      %v2997 = vmul.f32 %v2974, %v2980
      %v2999 = vlaneseq
      %v3000 = vshrl.u32 %v2999, 7
      %v3001 = vsub.s32 0, %v3000
      %v3002 = vrot.slane %v2894, %v3001
      %v3004 = vadd.f32 %v3002, %v2982
      %v3005 = vadd.f32 %v3002, %v2983
      %v3006 = vadd.f32 %v3002, %v2984
      %v3007 = vadd.f32 %v3002, %v2985
      %v3008 = vadd.f32 %v3002, %v2986
      %v3009 = vadd.f32 %v3002, %v2987
      %v3010 = vadd.f32 %v3002, %v2988
      %v3011 = vadd.f32 %v3002, %v2989
      %v3012 = vadd.f32 %v3002, %v2990
      %v3013 = vadd.f32 %v3002, %v2991
      %v3014 = vadd.f32 %v3002, %v2992
      %v3015 = vadd.f32 %v3002, %v2993
      %v3016 = vadd.f32 %v3002, %v2994
      %v3017 = vadd.f32 %v3002, %v2995
      %v3018 = vadd.f32 %v3002, %v2996
      %v3019 = vadd.f32 %v3002, %v2997
      %v3020 = vld [vmem:[%s666] sm:$0x1]
      %v3021 = vld [vmem:[%s672] sm:$0x1]
      %v3023 = vlaneseq
      %v3024 = vshrl.u32 %v3023, 7
      %v3025 = vsub.s32 0, %v3024
      %v3026 = vrot.slane %v3021, %v3025
      %v3028 = vmul.f32 %v2899, %v3026
      %v3029 = vmul.f32 %v2904, %v3026
      %v3030 = vmul.f32 %v2909, %v3026
      %v3031 = vmul.f32 %v2914, %v3026
      %v3032 = vmul.f32 %v2919, %v3026
      %v3033 = vmul.f32 %v2924, %v3026
      %v3034 = vmul.f32 %v2929, %v3026
      %v3035 = vmul.f32 %v2934, %v3026
      %v3036 = vmul.f32 %v2939, %v3026
      %v3037 = vmul.f32 %v2944, %v3026
      %v3038 = vmul.f32 %v2949, %v3026
      %v3039 = vmul.f32 %v2954, %v3026
      %v3040 = vmul.f32 %v2959, %v3026
      %v3041 = vmul.f32 %v2964, %v3026
      %v3042 = vmul.f32 %v2969, %v3026
      %v3043 = vmul.f32 %v2974, %v3026
      %v3045 = vlaneseq
      %v3046 = vshrl.u32 %v3045, 7
      %v3047 = vsub.s32 0, %v3046
      %v3048 = vrot.slane %v3020, %v3047
      %v3050 = vadd.f32 %v3048, %v3028
      %v3051 = vadd.f32 %v3048, %v3029
      %v3052 = vadd.f32 %v3048, %v3030
      %v3053 = vadd.f32 %v3048, %v3031
      %v3054 = vadd.f32 %v3048, %v3032
      %v3055 = vadd.f32 %v3048, %v3033
      %v3056 = vadd.f32 %v3048, %v3034
      %v3057 = vadd.f32 %v3048, %v3035
      %v3058 = vadd.f32 %v3048, %v3036
      %v3059 = vadd.f32 %v3048, %v3037
      %v3060 = vadd.f32 %v3048, %v3038
      %v3061 = vadd.f32 %v3048, %v3039
      %v3062 = vadd.f32 %v3048, %v3040
      %v3063 = vadd.f32 %v3048, %v3041
      %v3064 = vadd.f32 %v3048, %v3042
      %v3065 = vadd.f32 %v3048, %v3043
      %v3066 = vmul.f32 %v2151, %v3004
      %v3067 = vmul.f32 %v2156, %v3005
      %v3068 = vmul.f32 %v2161, %v3006
      %v3069 = vmul.f32 %v2166, %v3007
      %v3070 = vmul.f32 %v2171, %v3008
      %v3071 = vmul.f32 %v2176, %v3009
      %v3072 = vmul.f32 %v2181, %v3010
      %v3073 = vmul.f32 %v2186, %v3011
      %v3074 = vmul.f32 %v2191, %v3012
      %v3075 = vmul.f32 %v2196, %v3013
      %v3076 = vmul.f32 %v2201, %v3014
      %v3077 = vmul.f32 %v2206, %v3015
      %v3078 = vmul.f32 %v2211, %v3016
      %v3079 = vmul.f32 %v2216, %v3017
      %v3080 = vmul.f32 %v2221, %v3018
      %v3081 = vmul.f32 %v2226, %v3019
      %v3082 = vmul.f32 %v2406, %v3050
      %v3083 = vmul.f32 %v2407, %v3051
      %v3084 = vmul.f32 %v2408, %v3052
      %v3085 = vmul.f32 %v2409, %v3053
      %v3086 = vmul.f32 %v2410, %v3054
      %v3087 = vmul.f32 %v2411, %v3055
      %v3088 = vmul.f32 %v2412, %v3056
      %v3089 = vmul.f32 %v2413, %v3057
      %v3090 = vmul.f32 %v2414, %v3058
      %v3091 = vmul.f32 %v2415, %v3059
      %v3092 = vmul.f32 %v2416, %v3060
      %v3093 = vmul.f32 %v2417, %v3061
      %v3094 = vmul.f32 %v2418, %v3062
      %v3095 = vmul.f32 %v2419, %v3063
      %v3096 = vmul.f32 %v2420, %v3064
      %v3097 = vmul.f32 %v2421, %v3065
      %v3098 = vsub.f32 %v3066, %v3082
      %v3099 = vsub.f32 %v3067, %v3083
      %v3100 = vsub.f32 %v3068, %v3084
      %v3101 = vsub.f32 %v3069, %v3085
      %v3102 = vsub.f32 %v3070, %v3086
      %v3103 = vsub.f32 %v3071, %v3087
      %v3104 = vsub.f32 %v3072, %v3088
      %v3105 = vsub.f32 %v3073, %v3089
      %v3106 = vsub.f32 %v3074, %v3090
      %v3107 = vsub.f32 %v3075, %v3091
      %v3108 = vsub.f32 %v3076, %v3092
      %v3109 = vsub.f32 %v3077, %v3093
      %v3110 = vsub.f32 %v3078, %v3094
      %v3111 = vsub.f32 %v3079, %v3095
      %v3112 = vsub.f32 %v3080, %v3096
      %v3113 = vsub.f32 %v3081, %v3097
      %v3114 = vmul.f32 %v2151, %v3050
      %v3115 = vmul.f32 %v2156, %v3051
      %v3116 = vmul.f32 %v2161, %v3052
      %v3117 = vmul.f32 %v2166, %v3053
      %v3118 = vmul.f32 %v2171, %v3054
      %v3119 = vmul.f32 %v2176, %v3055
      %v3120 = vmul.f32 %v2181, %v3056
      %v3121 = vmul.f32 %v2186, %v3057
      %v3122 = vmul.f32 %v2191, %v3058
      %v3123 = vmul.f32 %v2196, %v3059
      %v3124 = vmul.f32 %v2201, %v3060
      %v3125 = vmul.f32 %v2206, %v3061
      %v3126 = vmul.f32 %v2211, %v3062
      %v3127 = vmul.f32 %v2216, %v3063
      %v3128 = vmul.f32 %v2221, %v3064
      %v3129 = vmul.f32 %v2226, %v3065
      %v3130 = vmul.f32 %v2406, %v3004
      %v3131 = vmul.f32 %v2407, %v3005
      %v3132 = vmul.f32 %v2408, %v3006
      %v3133 = vmul.f32 %v2409, %v3007
      %v3134 = vmul.f32 %v2410, %v3008
      %v3135 = vmul.f32 %v2411, %v3009
      %v3136 = vmul.f32 %v2412, %v3010
      %v3137 = vmul.f32 %v2413, %v3011
      %v3138 = vmul.f32 %v2414, %v3012
      %v3139 = vmul.f32 %v2415, %v3013
      %v3140 = vmul.f32 %v2416, %v3014
      %v3141 = vmul.f32 %v2417, %v3015
      %v3142 = vmul.f32 %v2418, %v3016
      %v3143 = vmul.f32 %v2419, %v3017
      %v3144 = vmul.f32 %v2420, %v3018
      %v3145 = vmul.f32 %v2421, %v3019
      %v3146 = vadd.f32 %v3114, %v3130
      %v3147 = vadd.f32 %v3115, %v3131
      %v3148 = vadd.f32 %v3116, %v3132
      %v3149 = vadd.f32 %v3117, %v3133
      %v3150 = vadd.f32 %v3118, %v3134
      %v3151 = vadd.f32 %v3119, %v3135
      %v3152 = vadd.f32 %v3120, %v3136
      %v3153 = vadd.f32 %v3121, %v3137
      %v3154 = vadd.f32 %v3122, %v3138
      %v3155 = vadd.f32 %v3123, %v3139
      %v3156 = vadd.f32 %v3124, %v3140
      %v3157 = vadd.f32 %v3125, %v3141
      %v3158 = vadd.f32 %v3126, %v3142
      %v3159 = vadd.f32 %v3127, %v3143
      %v3160 = vadd.f32 %v3128, %v3144
      %v3161 = vadd.f32 %v3129, %v3145
      %v3162 = vld [vmem:[%s15] sm:$0xff]
      %v3163 = vld [vmem:[%s15 + $0x8] sm:$0xff]
      %v3164 = vld [vmem:[%s15 + $0x10] sm:$0xff]
      %v3165 = vld [vmem:[%s15 + $0x18] sm:$0xff]
      %v3166 = vld [vmem:[%s15 + $0x20] sm:$0xff]
      %v3167 = vld [vmem:[%s15 + $0x28] sm:$0xff]
      %v3168 = vld [vmem:[%s15 + $0x30] sm:$0xff]
      %v3169 = vld [vmem:[%s15 + $0x38] sm:$0xff]
      %v3170 = vld [vmem:[%s15 + $0x40] sm:$0xff]
      %v3171 = vld [vmem:[%s15 + $0x48] sm:$0xff]
      %v3172 = vld [vmem:[%s15 + $0x50] sm:$0xff]
      %v3173 = vld [vmem:[%s15 + $0x58] sm:$0xff]
      %v3174 = vld [vmem:[%s15 + $0x60] sm:$0xff]
      %v3175 = vld [vmem:[%s15 + $0x68] sm:$0xff]
      %v3176 = vld [vmem:[%s15 + $0x70] sm:$0xff]
      %v3177 = vld [vmem:[%s15 + $0x78] sm:$0xff]
      %v3178 = vld [vmem:[%s15 + $0x80] sm:$0xff]
      %v3179 = vld [vmem:[%s15 + $0x88] sm:$0xff]
      %v3180 = vld [vmem:[%s15 + $0x90] sm:$0xff]
      %v3181 = vld [vmem:[%s15 + $0x98] sm:$0xff]
      %v3182 = vld [vmem:[%s15 + $0xa0] sm:$0xff]
      %v3183 = vld [vmem:[%s15 + $0xa8] sm:$0xff]
      %v3184 = vld [vmem:[%s15 + $0xb0] sm:$0xff]
      %v3185 = vld [vmem:[%s15 + $0xb8] sm:$0xff]
      %v3186 = vld [vmem:[%s15 + $0xc0] sm:$0xff]
      %v3187 = vld [vmem:[%s15 + $0xc8] sm:$0xff]
      %v3188 = vld [vmem:[%s15 + $0xd0] sm:$0xff]
      %v3189 = vld [vmem:[%s15 + $0xd8] sm:$0xff]
      %v3190 = vld [vmem:[%s15 + $0xe0] sm:$0xff]
      %v3191 = vld [vmem:[%s15 + $0xe8] sm:$0xff]
      %v3192 = vld [vmem:[%s15 + $0xf0] sm:$0xff]
      %v3193 = vld [vmem:[%s15 + $0xf8] sm:$0xff]
      %3194 = vmatprep.subr.mxu0 0.0
      %3195 = vmatpush1.msra.mxu0 %v3113
      %3196 = vmatprep.subr.mxu0 0.0
      %3197 = vmatpush1.msra.mxu0 %v3112
      %3198 = vmatprep.subr.mxu0 0.0
      %3199 = vmatpush1.msra.mxu0 %v3111
      %3200 = vmatprep.subr.mxu0 0.0
      %3201 = vmatpush1.msra.mxu0 %v3110
      %3202 = vmatprep.subr.mxu0 0.0
      %3203 = vmatpush1.msra.mxu0 %v3109
      %3204 = vmatprep.subr.mxu0 0.0
      %3205 = vmatpush1.msra.mxu0 %v3108
      %3206 = vmatprep.subr.mxu0 0.0
      %3207 = vmatpush1.msra.mxu0 %v3107
      %3208 = vmatprep.subr.mxu0 0.0
      %3209 = vmatpush1.msra.mxu0 %v3106
      %3210 = vmatprep.subr.mxu0 0.0
      %3211 = vmatpush1.msra.mxu0 %v3105
      %3212 = vmatprep.subr.mxu0 0.0
      %3213 = vmatpush1.msra.mxu0 %v3104
      %3214 = vmatprep.subr.mxu0 0.0
      %3215 = vmatpush1.msra.mxu0 %v3103
      %3216 = vmatprep.subr.mxu0 0.0
      %3217 = vmatpush1.msra.mxu0 %v3102
      %3218 = vmatprep.subr.mxu0 0.0
      %3219 = vmatpush1.msra.mxu0 %v3101
      %3220 = vmatprep.subr.mxu0 0.0
      %3221 = vmatpush1.msra.mxu0 %v3100
      %3222 = vmatprep.subr.mxu0 0.0
      %3223 = vmatpush1.msra.mxu0 %v3099
      %3224 = vmatprep.subr.mxu0 0.0
      %3225 = vmatpush1.msra.mxu0 %v3098
      %3226 = vmatprep.subr.mxu0 0.0
      %3227 = vmatpush2.msra.mxu0 0.0
      %3228 = vmatprep.subr.mxu0 0.0
      %3229 = vmatpush2.msra.mxu0 0.0
      %3230 = vmatprep.subr.mxu0 0.0
      %3231 = vmatpush2.msra.mxu0 0.0
      %3232 = vmatprep.subr.mxu0 0.0
      %3233 = vmatpush2.msra.mxu0 0.0
      %3234 = vmatprep.subr.mxu0 0.0
      %3235 = vmatpush2.msra.mxu0 0.0
      %3236 = vmatprep.subr.mxu0 0.0
      %3237 = vmatpush2.msra.mxu0 0.0
      %3238 = vmatprep.subr.mxu0 0.0
      %3239 = vmatpush2.msra.mxu0 0.0
      %3240 = vmatprep.subr.mxu0 0.0
      %3241 = vmatpush2.msra.mxu0 0.0
      %3242 = vmatprep.subr.mxu0 0.0
      %3243 = vmatpush2.msra.mxu0 0.0
      %3244 = vmatprep.subr.mxu0 0.0
      %3245 = vmatpush2.msra.mxu0 0.0
      %3246 = vmatprep.subr.mxu0 0.0
      %3247 = vmatpush2.msra.mxu0 0.0
      %3248 = vmatprep.subr.mxu0 0.0
      %3249 = vmatpush2.msra.mxu0 0.0
      %3250 = vmatprep.subr.mxu0 0.0
      %3251 = vmatpush2.msra.mxu0 0.0
      %3252 = vmatprep.subr.mxu0 0.0
      %3253 = vmatpush2.msra.mxu0 0.0
      %3254 = vmatprep.subr.mxu0 0.0
      %3255 = vmatpush2.msra.mxu0 0.0
      %3256 = vmatprep.subr.mxu0 0.0
      %3257 = vmatpush2.msra.mxu0 0.0
      %3258 = vmatprep.mubr.f32.mxu0 0.0
      %3259 = vmatmul.mubr.f32.gmra.mxu0 %v3162
      %v3260 = vpop.f32.mrf.mxu0
      %v3261 = vadd.f32 0.0, %v3260
      %v3262 = vpop.f32.mrf.mxu0
      %3263 = vmatprep.mubr.f32.mxu0 0.0
      %3264 = vmatmul.mubr.f32.gmra.mxu0 %v3163
      %v3265 = vpop.f32.mrf.mxu0
      %v3266 = vadd.f32 0.0, %v3265
      %v3267 = vpop.f32.mrf.mxu0
      %3268 = vmatprep.mubr.f32.mxu0 0.0
      %3269 = vmatmul.mubr.f32.gmra.mxu0 %v3164
      %v3270 = vpop.f32.mrf.mxu0
      %v3271 = vadd.f32 0.0, %v3270
      %v3272 = vpop.f32.mrf.mxu0
      %3273 = vmatprep.mubr.f32.mxu0 0.0
      %3274 = vmatmul.mubr.f32.gmra.mxu0 %v3165
      %v3275 = vpop.f32.mrf.mxu0
      %v3276 = vadd.f32 0.0, %v3275
      %v3277 = vpop.f32.mrf.mxu0
      %3278 = vmatprep.mubr.f32.mxu0 0.0
      %3279 = vmatmul.mubr.f32.gmra.mxu0 %v3166
      %v3280 = vpop.f32.mrf.mxu0
      %v3281 = vadd.f32 0.0, %v3280
      %v3282 = vpop.f32.mrf.mxu0
      %3283 = vmatprep.mubr.f32.mxu0 0.0
      %3284 = vmatmul.mubr.f32.gmra.mxu0 %v3167
      %v3285 = vpop.f32.mrf.mxu0
      %v3286 = vadd.f32 0.0, %v3285
      %v3287 = vpop.f32.mrf.mxu0
      %3288 = vmatprep.mubr.f32.mxu0 0.0
      %3289 = vmatmul.mubr.f32.gmra.mxu0 %v3168
      %v3290 = vpop.f32.mrf.mxu0
      %v3291 = vadd.f32 0.0, %v3290
      %v3292 = vpop.f32.mrf.mxu0
      %3293 = vmatprep.mubr.f32.mxu0 0.0
      %3294 = vmatmul.mubr.f32.gmra.mxu0 %v3169
      %v3295 = vpop.f32.mrf.mxu0
      %v3296 = vadd.f32 0.0, %v3295
      %v3297 = vpop.f32.mrf.mxu0
      %3298 = vmatprep.mubr.f32.mxu0 0.0
      %3299 = vmatmul.mubr.f32.gmra.mxu0 %v3170
      %v3300 = vpop.f32.mrf.mxu0
      %v3301 = vadd.f32 0.0, %v3300
      %v3302 = vpop.f32.mrf.mxu0
      %3303 = vmatprep.mubr.f32.mxu0 0.0
      %3304 = vmatmul.mubr.f32.gmra.mxu0 %v3171
      %v3305 = vpop.f32.mrf.mxu0
      %v3306 = vadd.f32 0.0, %v3305
      %v3307 = vpop.f32.mrf.mxu0
      %3308 = vmatprep.mubr.f32.mxu0 0.0
      %3309 = vmatmul.mubr.f32.gmra.mxu0 %v3172
      %v3310 = vpop.f32.mrf.mxu0
      %v3311 = vadd.f32 0.0, %v3310
      %v3312 = vpop.f32.mrf.mxu0
      %3313 = vmatprep.mubr.f32.mxu0 0.0
      %3314 = vmatmul.mubr.f32.gmra.mxu0 %v3173
      %v3315 = vpop.f32.mrf.mxu0
      %v3316 = vadd.f32 0.0, %v3315
      %v3317 = vpop.f32.mrf.mxu0
      %3318 = vmatprep.mubr.f32.mxu0 0.0
      %3319 = vmatmul.mubr.f32.gmra.mxu0 %v3174
      %v3320 = vpop.f32.mrf.mxu0
      %v3321 = vadd.f32 0.0, %v3320
      %v3322 = vpop.f32.mrf.mxu0
      %3323 = vmatprep.mubr.f32.mxu0 0.0
      %3324 = vmatmul.mubr.f32.gmra.mxu0 %v3175
      %v3325 = vpop.f32.mrf.mxu0
      %v3326 = vadd.f32 0.0, %v3325
      %v3327 = vpop.f32.mrf.mxu0
      %3328 = vmatprep.mubr.f32.mxu0 0.0
      %3329 = vmatmul.mubr.f32.gmra.mxu0 %v3176
      %v3330 = vpop.f32.mrf.mxu0
      %v3331 = vadd.f32 0.0, %v3330
      %v3332 = vpop.f32.mrf.mxu0
      %3333 = vmatprep.mubr.f32.mxu0 0.0
      %3334 = vmatmul.mubr.f32.gmra.mxu0 %v3177
      %v3335 = vpop.f32.mrf.mxu0
      %v3336 = vadd.f32 0.0, %v3335
      %v3337 = vpop.f32.mrf.mxu0
      %3338 = vmatprep.mubr.f32.mxu0 0.0
      %3339 = vmatmul.mubr.f32.gmra.mxu0 %v3178
      %v3340 = vpop.f32.mrf.mxu0
      %v3341 = vadd.f32 0.0, %v3340
      %v3342 = vpop.f32.mrf.mxu0
      %3343 = vmatprep.mubr.f32.mxu0 0.0
      %3344 = vmatmul.mubr.f32.gmra.mxu0 %v3179
      %v3345 = vpop.f32.mrf.mxu0
      %v3346 = vadd.f32 0.0, %v3345
      %v3347 = vpop.f32.mrf.mxu0
      %3348 = vmatprep.mubr.f32.mxu0 0.0
      %3349 = vmatmul.mubr.f32.gmra.mxu0 %v3180
      %v3350 = vpop.f32.mrf.mxu0
      %v3351 = vadd.f32 0.0, %v3350
      %v3352 = vpop.f32.mrf.mxu0
      %3353 = vmatprep.mubr.f32.mxu0 0.0
      %3354 = vmatmul.mubr.f32.gmra.mxu0 %v3181
      %v3355 = vpop.f32.mrf.mxu0
      %v3356 = vadd.f32 0.0, %v3355
      %v3357 = vpop.f32.mrf.mxu0
      %3358 = vmatprep.mubr.f32.mxu0 0.0
      %3359 = vmatmul.mubr.f32.gmra.mxu0 %v3182
      %v3360 = vpop.f32.mrf.mxu0
      %v3361 = vadd.f32 0.0, %v3360
      %v3362 = vpop.f32.mrf.mxu0
      %3363 = vmatprep.mubr.f32.mxu0 0.0
      %3364 = vmatmul.mubr.f32.gmra.mxu0 %v3183
      %v3365 = vpop.f32.mrf.mxu0
      %v3366 = vadd.f32 0.0, %v3365
      %v3367 = vpop.f32.mrf.mxu0
      %3368 = vmatprep.mubr.f32.mxu0 0.0
      %3369 = vmatmul.mubr.f32.gmra.mxu0 %v3184
      %v3370 = vpop.f32.mrf.mxu0
      %v3371 = vadd.f32 0.0, %v3370
      %v3372 = vpop.f32.mrf.mxu0
      %3373 = vmatprep.mubr.f32.mxu0 0.0
      %3374 = vmatmul.mubr.f32.gmra.mxu0 %v3185
      %v3375 = vpop.f32.mrf.mxu0
      %v3376 = vadd.f32 0.0, %v3375
      %v3377 = vpop.f32.mrf.mxu0
      %3378 = vmatprep.mubr.f32.mxu0 0.0
      %3379 = vmatmul.mubr.f32.gmra.mxu0 %v3186
      %v3380 = vpop.f32.mrf.mxu0
      %v3381 = vadd.f32 0.0, %v3380
      %v3382 = vpop.f32.mrf.mxu0
      %3383 = vmatprep.mubr.f32.mxu0 0.0
      %3384 = vmatmul.mubr.f32.gmra.mxu0 %v3187
      %v3385 = vpop.f32.mrf.mxu0
      %v3386 = vadd.f32 0.0, %v3385
      %v3387 = vpop.f32.mrf.mxu0
      %3388 = vmatprep.mubr.f32.mxu0 0.0
      %3389 = vmatmul.mubr.f32.gmra.mxu0 %v3188
      %v3390 = vpop.f32.mrf.mxu0
      %v3391 = vadd.f32 0.0, %v3390
      %v3392 = vpop.f32.mrf.mxu0
      %3393 = vmatprep.mubr.f32.mxu0 0.0
      %3394 = vmatmul.mubr.f32.gmra.mxu0 %v3189
      %v3395 = vpop.f32.mrf.mxu0
      %v3396 = vadd.f32 0.0, %v3395
      %v3397 = vpop.f32.mrf.mxu0
      %3398 = vmatprep.mubr.f32.mxu0 0.0
      %3399 = vmatmul.mubr.f32.gmra.mxu0 %v3190
      %v3400 = vpop.f32.mrf.mxu0
      %v3401 = vadd.f32 0.0, %v3400
      %v3402 = vpop.f32.mrf.mxu0
      %3403 = vmatprep.mubr.f32.mxu0 0.0
      %3404 = vmatmul.mubr.f32.gmra.mxu0 %v3191
      %v3405 = vpop.f32.mrf.mxu0
      %v3406 = vadd.f32 0.0, %v3405
      %v3407 = vpop.f32.mrf.mxu0
      %3408 = vmatprep.mubr.f32.mxu0 0.0
      %3409 = vmatmul.mubr.f32.gmra.mxu0 %v3192
      %v3410 = vpop.f32.mrf.mxu0
      %v3411 = vadd.f32 0.0, %v3410
      %v3412 = vpop.f32.mrf.mxu0
      %3413 = vmatprep.mubr.f32.mxu0 0.0
      %3414 = vmatmul.mubr.f32.gmra.mxu0 %v3193
      %v3415 = vpop.f32.mrf.mxu0
      %v3416 = vadd.f32 0.0, %v3415
      %v3417 = vpop.f32.mrf.mxu0
      %3418 = vdwg.mxu0
      %v3419 = vld [vmem:[%s16] sm:$0xff]
      %v3420 = vld [vmem:[%s16 + $0x8] sm:$0xff]
      %v3421 = vld [vmem:[%s16 + $0x10] sm:$0xff]
      %v3422 = vld [vmem:[%s16 + $0x18] sm:$0xff]
      %v3423 = vld [vmem:[%s16 + $0x20] sm:$0xff]
      %v3424 = vld [vmem:[%s16 + $0x28] sm:$0xff]
      %v3425 = vld [vmem:[%s16 + $0x30] sm:$0xff]
      %v3426 = vld [vmem:[%s16 + $0x38] sm:$0xff]
      %v3427 = vld [vmem:[%s16 + $0x40] sm:$0xff]
      %v3428 = vld [vmem:[%s16 + $0x48] sm:$0xff]
      %v3429 = vld [vmem:[%s16 + $0x50] sm:$0xff]
      %v3430 = vld [vmem:[%s16 + $0x58] sm:$0xff]
      %v3431 = vld [vmem:[%s16 + $0x60] sm:$0xff]
      %v3432 = vld [vmem:[%s16 + $0x68] sm:$0xff]
      %v3433 = vld [vmem:[%s16 + $0x70] sm:$0xff]
      %v3434 = vld [vmem:[%s16 + $0x78] sm:$0xff]
      %v3435 = vld [vmem:[%s16 + $0x80] sm:$0xff]
      %v3436 = vld [vmem:[%s16 + $0x88] sm:$0xff]
      %v3437 = vld [vmem:[%s16 + $0x90] sm:$0xff]
      %v3438 = vld [vmem:[%s16 + $0x98] sm:$0xff]
      %v3439 = vld [vmem:[%s16 + $0xa0] sm:$0xff]
      %v3440 = vld [vmem:[%s16 + $0xa8] sm:$0xff]
      %v3441 = vld [vmem:[%s16 + $0xb0] sm:$0xff]
      %v3442 = vld [vmem:[%s16 + $0xb8] sm:$0xff]
      %v3443 = vld [vmem:[%s16 + $0xc0] sm:$0xff]
      %v3444 = vld [vmem:[%s16 + $0xc8] sm:$0xff]
      %v3445 = vld [vmem:[%s16 + $0xd0] sm:$0xff]
      %v3446 = vld [vmem:[%s16 + $0xd8] sm:$0xff]
      %v3447 = vld [vmem:[%s16 + $0xe0] sm:$0xff]
      %v3448 = vld [vmem:[%s16 + $0xe8] sm:$0xff]
      %v3449 = vld [vmem:[%s16 + $0xf0] sm:$0xff]
      %v3450 = vld [vmem:[%s16 + $0xf8] sm:$0xff]
      %3451 = vmatprep.subr.mxu0 0.0
      %3452 = vmatpush1.msra.mxu0 %v3161
      %3453 = vmatprep.subr.mxu0 0.0
      %3454 = vmatpush1.msra.mxu0 %v3160
      %3455 = vmatprep.subr.mxu0 0.0
      %3456 = vmatpush1.msra.mxu0 %v3159
      %3457 = vmatprep.subr.mxu0 0.0
      %3458 = vmatpush1.msra.mxu0 %v3158
      %3459 = vmatprep.subr.mxu0 0.0
      %3460 = vmatpush1.msra.mxu0 %v3157
      %3461 = vmatprep.subr.mxu0 0.0
      %3462 = vmatpush1.msra.mxu0 %v3156
      %3463 = vmatprep.subr.mxu0 0.0
      %3464 = vmatpush1.msra.mxu0 %v3155
      %3465 = vmatprep.subr.mxu0 0.0
      %3466 = vmatpush1.msra.mxu0 %v3154
      %3467 = vmatprep.subr.mxu0 0.0
      %3468 = vmatpush1.msra.mxu0 %v3153
      %3469 = vmatprep.subr.mxu0 0.0
      %3470 = vmatpush1.msra.mxu0 %v3152
      %3471 = vmatprep.subr.mxu0 0.0
      %3472 = vmatpush1.msra.mxu0 %v3151
      %3473 = vmatprep.subr.mxu0 0.0
      %3474 = vmatpush1.msra.mxu0 %v3150
      %3475 = vmatprep.subr.mxu0 0.0
      %3476 = vmatpush1.msra.mxu0 %v3149
      %3477 = vmatprep.subr.mxu0 0.0
      %3478 = vmatpush1.msra.mxu0 %v3148
      %3479 = vmatprep.subr.mxu0 0.0
      %3480 = vmatpush1.msra.mxu0 %v3147
      %3481 = vmatprep.subr.mxu0 0.0
      %3482 = vmatpush1.msra.mxu0 %v3146
      %3483 = vmatprep.subr.mxu0 0.0
      %3484 = vmatpush2.msra.mxu0 0.0
      %3485 = vmatprep.subr.mxu0 0.0
      %3486 = vmatpush2.msra.mxu0 0.0
      %3487 = vmatprep.subr.mxu0 0.0
      %3488 = vmatpush2.msra.mxu0 0.0
      %3489 = vmatprep.subr.mxu0 0.0
      %3490 = vmatpush2.msra.mxu0 0.0
      %3491 = vmatprep.subr.mxu0 0.0
      %3492 = vmatpush2.msra.mxu0 0.0
      %3493 = vmatprep.subr.mxu0 0.0
      %3494 = vmatpush2.msra.mxu0 0.0
      %3495 = vmatprep.subr.mxu0 0.0
      %3496 = vmatpush2.msra.mxu0 0.0
      %3497 = vmatprep.subr.mxu0 0.0
      %3498 = vmatpush2.msra.mxu0 0.0
      %3499 = vmatprep.subr.mxu0 0.0
      %3500 = vmatpush2.msra.mxu0 0.0
      %3501 = vmatprep.subr.mxu0 0.0
      %3502 = vmatpush2.msra.mxu0 0.0
      %3503 = vmatprep.subr.mxu0 0.0
      %3504 = vmatpush2.msra.mxu0 0.0
      %3505 = vmatprep.subr.mxu0 0.0
      %3506 = vmatpush2.msra.mxu0 0.0
      %3507 = vmatprep.subr.mxu0 0.0
      %3508 = vmatpush2.msra.mxu0 0.0
      %3509 = vmatprep.subr.mxu0 0.0
      %3510 = vmatpush2.msra.mxu0 0.0
      %3511 = vmatprep.subr.mxu0 0.0
      %3512 = vmatpush2.msra.mxu0 0.0
      %3513 = vmatprep.subr.mxu0 0.0
      %3514 = vmatpush2.msra.mxu0 0.0
      %3515 = vmatprep.mubr.f32.mxu0 0.0
      %3516 = vmatmul.mubr.f32.gmra.mxu0 %v3419
      %v3517 = vpop.f32.mrf.mxu0
      %v3518 = vadd.f32 0.0, %v3517
      %v3519 = vpop.f32.mrf.mxu0
      %3520 = vmatprep.mubr.f32.mxu0 0.0
      %3521 = vmatmul.mubr.f32.gmra.mxu0 %v3420
      %v3522 = vpop.f32.mrf.mxu0
      %v3523 = vadd.f32 0.0, %v3522
      %v3524 = vpop.f32.mrf.mxu0
      %3525 = vmatprep.mubr.f32.mxu0 0.0
      %3526 = vmatmul.mubr.f32.gmra.mxu0 %v3421
      %v3527 = vpop.f32.mrf.mxu0
      %v3528 = vadd.f32 0.0, %v3527
      %v3529 = vpop.f32.mrf.mxu0
      %3530 = vmatprep.mubr.f32.mxu0 0.0
      %3531 = vmatmul.mubr.f32.gmra.mxu0 %v3422
      %v3532 = vpop.f32.mrf.mxu0
      %v3533 = vadd.f32 0.0, %v3532
      %v3534 = vpop.f32.mrf.mxu0
      %3535 = vmatprep.mubr.f32.mxu0 0.0
      %3536 = vmatmul.mubr.f32.gmra.mxu0 %v3423
      %v3537 = vpop.f32.mrf.mxu0
      %v3538 = vadd.f32 0.0, %v3537
      %v3539 = vpop.f32.mrf.mxu0
      %3540 = vmatprep.mubr.f32.mxu0 0.0
      %3541 = vmatmul.mubr.f32.gmra.mxu0 %v3424
      %v3542 = vpop.f32.mrf.mxu0
      %v3543 = vadd.f32 0.0, %v3542
      %v3544 = vpop.f32.mrf.mxu0
      %3545 = vmatprep.mubr.f32.mxu0 0.0
      %3546 = vmatmul.mubr.f32.gmra.mxu0 %v3425
      %v3547 = vpop.f32.mrf.mxu0
      %v3548 = vadd.f32 0.0, %v3547
      %v3549 = vpop.f32.mrf.mxu0
      %3550 = vmatprep.mubr.f32.mxu0 0.0
      %3551 = vmatmul.mubr.f32.gmra.mxu0 %v3426
      %v3552 = vpop.f32.mrf.mxu0
      %v3553 = vadd.f32 0.0, %v3552
      %v3554 = vpop.f32.mrf.mxu0
      %3555 = vmatprep.mubr.f32.mxu0 0.0
      %3556 = vmatmul.mubr.f32.gmra.mxu0 %v3427
      %v3557 = vpop.f32.mrf.mxu0
      %v3558 = vadd.f32 0.0, %v3557
      %v3559 = vpop.f32.mrf.mxu0
      %3560 = vmatprep.mubr.f32.mxu0 0.0
      %3561 = vmatmul.mubr.f32.gmra.mxu0 %v3428
      %v3562 = vpop.f32.mrf.mxu0
      %v3563 = vadd.f32 0.0, %v3562
      %v3564 = vpop.f32.mrf.mxu0
      %3565 = vmatprep.mubr.f32.mxu0 0.0
      %3566 = vmatmul.mubr.f32.gmra.mxu0 %v3429
      %v3567 = vpop.f32.mrf.mxu0
      %v3568 = vadd.f32 0.0, %v3567
      %v3569 = vpop.f32.mrf.mxu0
      %3570 = vmatprep.mubr.f32.mxu0 0.0
      %3571 = vmatmul.mubr.f32.gmra.mxu0 %v3430
      %v3572 = vpop.f32.mrf.mxu0
      %v3573 = vadd.f32 0.0, %v3572
      %v3574 = vpop.f32.mrf.mxu0
      %3575 = vmatprep.mubr.f32.mxu0 0.0
      %3576 = vmatmul.mubr.f32.gmra.mxu0 %v3431
      %v3577 = vpop.f32.mrf.mxu0
      %v3578 = vadd.f32 0.0, %v3577
      %v3579 = vpop.f32.mrf.mxu0
      %3580 = vmatprep.mubr.f32.mxu0 0.0
      %3581 = vmatmul.mubr.f32.gmra.mxu0 %v3432
      %v3582 = vpop.f32.mrf.mxu0
      %v3583 = vadd.f32 0.0, %v3582
      %v3584 = vpop.f32.mrf.mxu0
      %3585 = vmatprep.mubr.f32.mxu0 0.0
      %3586 = vmatmul.mubr.f32.gmra.mxu0 %v3433
      %v3587 = vpop.f32.mrf.mxu0
      %v3588 = vadd.f32 0.0, %v3587
      %v3589 = vpop.f32.mrf.mxu0
      %3590 = vmatprep.mubr.f32.mxu0 0.0
      %3591 = vmatmul.mubr.f32.gmra.mxu0 %v3434
      %v3592 = vpop.f32.mrf.mxu0
      %v3593 = vadd.f32 0.0, %v3592
      %v3594 = vpop.f32.mrf.mxu0
      %3595 = vmatprep.mubr.f32.mxu0 0.0
      %3596 = vmatmul.mubr.f32.gmra.mxu0 %v3435
      %v3597 = vpop.f32.mrf.mxu0
      %v3598 = vadd.f32 0.0, %v3597
      %v3599 = vpop.f32.mrf.mxu0
      %3600 = vmatprep.mubr.f32.mxu0 0.0
      %3601 = vmatmul.mubr.f32.gmra.mxu0 %v3436
      %v3602 = vpop.f32.mrf.mxu0
      %v3603 = vadd.f32 0.0, %v3602
      %v3604 = vpop.f32.mrf.mxu0
      %3605 = vmatprep.mubr.f32.mxu0 0.0
      %3606 = vmatmul.mubr.f32.gmra.mxu0 %v3437
      %v3607 = vpop.f32.mrf.mxu0
      %v3608 = vadd.f32 0.0, %v3607
      %v3609 = vpop.f32.mrf.mxu0
      %3610 = vmatprep.mubr.f32.mxu0 0.0
      %3611 = vmatmul.mubr.f32.gmra.mxu0 %v3438
      %v3612 = vpop.f32.mrf.mxu0
      %v3613 = vadd.f32 0.0, %v3612
      %v3614 = vpop.f32.mrf.mxu0
      %3615 = vmatprep.mubr.f32.mxu0 0.0
      %3616 = vmatmul.mubr.f32.gmra.mxu0 %v3439
      %v3617 = vpop.f32.mrf.mxu0
      %v3618 = vadd.f32 0.0, %v3617
      %v3619 = vpop.f32.mrf.mxu0
      %3620 = vmatprep.mubr.f32.mxu0 0.0
      %3621 = vmatmul.mubr.f32.gmra.mxu0 %v3440
      %v3622 = vpop.f32.mrf.mxu0
      %v3623 = vadd.f32 0.0, %v3622
      %v3624 = vpop.f32.mrf.mxu0
      %3625 = vmatprep.mubr.f32.mxu0 0.0
      %3626 = vmatmul.mubr.f32.gmra.mxu0 %v3441
      %v3627 = vpop.f32.mrf.mxu0
      %v3628 = vadd.f32 0.0, %v3627
      %v3629 = vpop.f32.mrf.mxu0
      %3630 = vmatprep.mubr.f32.mxu0 0.0
      %3631 = vmatmul.mubr.f32.gmra.mxu0 %v3442
      %v3632 = vpop.f32.mrf.mxu0
      %v3633 = vadd.f32 0.0, %v3632
      %v3634 = vpop.f32.mrf.mxu0
      %3635 = vmatprep.mubr.f32.mxu0 0.0
      %3636 = vmatmul.mubr.f32.gmra.mxu0 %v3443
      %v3637 = vpop.f32.mrf.mxu0
      %v3638 = vadd.f32 0.0, %v3637
      %v3639 = vpop.f32.mrf.mxu0
      %3640 = vmatprep.mubr.f32.mxu0 0.0
      %3641 = vmatmul.mubr.f32.gmra.mxu0 %v3444
      %v3642 = vpop.f32.mrf.mxu0
      %v3643 = vadd.f32 0.0, %v3642
      %v3644 = vpop.f32.mrf.mxu0
      %3645 = vmatprep.mubr.f32.mxu0 0.0
      %3646 = vmatmul.mubr.f32.gmra.mxu0 %v3445
      %v3647 = vpop.f32.mrf.mxu0
      %v3648 = vadd.f32 0.0, %v3647
      %v3649 = vpop.f32.mrf.mxu0
      %3650 = vmatprep.mubr.f32.mxu0 0.0
      %3651 = vmatmul.mubr.f32.gmra.mxu0 %v3446
      %v3652 = vpop.f32.mrf.mxu0
      %v3653 = vadd.f32 0.0, %v3652
      %v3654 = vpop.f32.mrf.mxu0
      %3655 = vmatprep.mubr.f32.mxu0 0.0
      %3656 = vmatmul.mubr.f32.gmra.mxu0 %v3447
      %v3657 = vpop.f32.mrf.mxu0
      %v3658 = vadd.f32 0.0, %v3657
      %v3659 = vpop.f32.mrf.mxu0
      %3660 = vmatprep.mubr.f32.mxu0 0.0
      %3661 = vmatmul.mubr.f32.gmra.mxu0 %v3448
      %v3662 = vpop.f32.mrf.mxu0
      %v3663 = vadd.f32 0.0, %v3662
      %v3664 = vpop.f32.mrf.mxu0
      %3665 = vmatprep.mubr.f32.mxu0 0.0
      %3666 = vmatmul.mubr.f32.gmra.mxu0 %v3449
      %v3667 = vpop.f32.mrf.mxu0
      %v3668 = vadd.f32 0.0, %v3667
      %v3669 = vpop.f32.mrf.mxu0
      %3670 = vmatprep.mubr.f32.mxu0 0.0
      %3671 = vmatmul.mubr.f32.gmra.mxu0 %v3450
      %v3672 = vpop.f32.mrf.mxu0
      %v3673 = vadd.f32 0.0, %v3672
      %v3674 = vpop.f32.mrf.mxu0
      %3675 = vdwg.mxu0
      %v3676 = vsub.f32 %v3261, %v3518
      %v3677 = vsub.f32 %v3266, %v3523
      %v3678 = vsub.f32 %v3271, %v3528
      %v3679 = vsub.f32 %v3276, %v3533
      %v3680 = vsub.f32 %v3281, %v3538
      %v3681 = vsub.f32 %v3286, %v3543
      %v3682 = vsub.f32 %v3291, %v3548
      %v3683 = vsub.f32 %v3296, %v3553
      %v3684 = vsub.f32 %v3301, %v3558
      %v3685 = vsub.f32 %v3306, %v3563
      %v3686 = vsub.f32 %v3311, %v3568
      %v3687 = vsub.f32 %v3316, %v3573
      %v3688 = vsub.f32 %v3321, %v3578
      %v3689 = vsub.f32 %v3326, %v3583
      %v3690 = vsub.f32 %v3331, %v3588
      %v3691 = vsub.f32 %v3336, %v3593
      %v3692 = vsub.f32 %v3341, %v3598
      %v3693 = vsub.f32 %v3346, %v3603
      %v3694 = vsub.f32 %v3351, %v3608
      %v3695 = vsub.f32 %v3356, %v3613
      %v3696 = vsub.f32 %v3361, %v3618
      %v3697 = vsub.f32 %v3366, %v3623
      %v3698 = vsub.f32 %v3371, %v3628
      %v3699 = vsub.f32 %v3376, %v3633
      %v3700 = vsub.f32 %v3381, %v3638
      %v3701 = vsub.f32 %v3386, %v3643
      %v3702 = vsub.f32 %v3391, %v3648
      %v3703 = vsub.f32 %v3396, %v3653
      %v3704 = vsub.f32 %v3401, %v3658
      %v3705 = vsub.f32 %v3406, %v3663
      %v3706 = vsub.f32 %v3411, %v3668
      %v3707 = vsub.f32 %v3416, %v3673
      %v3708 = vadd.f32 %v1086, %v3676
      %v3709 = vadd.f32 %v1087, %v3677
      %v3710 = vadd.f32 %v1088, %v3678
      %v3711 = vadd.f32 %v1089, %v3679
      %v3712 = vadd.f32 %v1090, %v3680
      %v3713 = vadd.f32 %v1091, %v3681
      %v3714 = vadd.f32 %v1092, %v3682
      %v3715 = vadd.f32 %v1093, %v3683
      %v3716 = vadd.f32 %v1094, %v3684
      %v3717 = vadd.f32 %v1095, %v3685
      %v3718 = vadd.f32 %v1096, %v3686
      %v3719 = vadd.f32 %v1097, %v3687
      %v3720 = vadd.f32 %v1098, %v3688
      %v3721 = vadd.f32 %v1099, %v3689
      %v3722 = vadd.f32 %v1100, %v3690
      %v3723 = vadd.f32 %v1101, %v3691
      %v3724 = vadd.f32 %v1102, %v3692
      %v3725 = vadd.f32 %v1103, %v3693
      %v3726 = vadd.f32 %v1104, %v3694
      %v3727 = vadd.f32 %v1105, %v3695
      %v3728 = vadd.f32 %v1106, %v3696
      %v3729 = vadd.f32 %v1107, %v3697
      %v3730 = vadd.f32 %v1108, %v3698
      %v3731 = vadd.f32 %v1109, %v3699
      %v3732 = vadd.f32 %v1110, %v3700
      %v3733 = vadd.f32 %v1111, %v3701
      %v3734 = vadd.f32 %v1112, %v3702
      %v3735 = vadd.f32 %v1113, %v3703
      %v3736 = vadd.f32 %v1114, %v3704
      %v3737 = vadd.f32 %v1115, %v3705
      %v3738 = vadd.f32 %v1116, %v3706
      %v3739 = vadd.f32 %v1117, %v3707
      %3740 = vst.msk [vmem:[%s686] sm:$0xff] %vm1123, %v3708
      %3741 = vst.msk [vmem:[%s686 + $0x8] sm:$0xff] %vm1123, %v3709
      %3742 = vst.msk [vmem:[%s686 + $0x10] sm:$0xff] %vm1123, %v3710
      %3743 = vst.msk [vmem:[%s686 + $0x18] sm:$0xff] %vm1123, %v3711
      %3744 = vst.msk [vmem:[%s686 + $0x20] sm:$0xff] %vm1123, %v3712
      %3745 = vst.msk [vmem:[%s686 + $0x28] sm:$0xff] %vm1123, %v3713
      %3746 = vst.msk [vmem:[%s686 + $0x30] sm:$0xff] %vm1123, %v3714
      %3747 = vst.msk [vmem:[%s686 + $0x38] sm:$0xff] %vm1123, %v3715
      %3748 = vst.msk [vmem:[%s686 + $0x40] sm:$0xff] %vm1123, %v3716
      %3749 = vst.msk [vmem:[%s686 + $0x48] sm:$0xff] %vm1123, %v3717
      %3750 = vst.msk [vmem:[%s686 + $0x50] sm:$0xff] %vm1123, %v3718
      %3751 = vst.msk [vmem:[%s686 + $0x58] sm:$0xff] %vm1123, %v3719
      %3752 = vst.msk [vmem:[%s686 + $0x60] sm:$0xff] %vm1123, %v3720
      %3753 = vst.msk [vmem:[%s686 + $0x68] sm:$0xff] %vm1123, %v3721
      %3754 = vst.msk [vmem:[%s686 + $0x70] sm:$0xff] %vm1123, %v3722
      %3755 = vst.msk [vmem:[%s686 + $0x78] sm:$0xff] %vm1123, %v3723
      %3756 = vst.msk [vmem:[%s686 + $0x80] sm:$0xff] %vm1123, %v3724
      %3757 = vst.msk [vmem:[%s686 + $0x88] sm:$0xff] %vm1123, %v3725
      %3758 = vst.msk [vmem:[%s686 + $0x90] sm:$0xff] %vm1123, %v3726
      %3759 = vst.msk [vmem:[%s686 + $0x98] sm:$0xff] %vm1123, %v3727
      %3760 = vst.msk [vmem:[%s686 + $0xa0] sm:$0xff] %vm1123, %v3728
      %3761 = vst.msk [vmem:[%s686 + $0xa8] sm:$0xff] %vm1123, %v3729
      %3762 = vst.msk [vmem:[%s686 + $0xb0] sm:$0xff] %vm1123, %v3730
      %3763 = vst.msk [vmem:[%s686 + $0xb8] sm:$0xff] %vm1123, %v3731
      %3764 = vst.msk [vmem:[%s686 + $0xc0] sm:$0xff] %vm1123, %v3732
      %3765 = vst.msk [vmem:[%s686 + $0xc8] sm:$0xff] %vm1123, %v3733
      %3766 = vst.msk [vmem:[%s686 + $0xd0] sm:$0xff] %vm1123, %v3734
      %3767 = vst.msk [vmem:[%s686 + $0xd8] sm:$0xff] %vm1123, %v3735
      %3768 = vst.msk [vmem:[%s686 + $0xe0] sm:$0xff] %vm1123, %v3736
      %3769 = vst.msk [vmem:[%s686 + $0xe8] sm:$0xff] %vm1123, %v3737
      %3770 = vst.msk [vmem:[%s686 + $0xf0] sm:$0xff] %vm1123, %v3738
      %3771 = vst.msk [vmem:[%s686 + $0xf8] sm:$0xff] %vm1123, %v3739
      %p3772 = scmp.lt.s32.totalorder %s32, 1
      %s3773 = scalar_select %p3772, %s32, 1
      %s3774 = smul.addr %s3773, 32
      %s3775 = smul.addr %s3774, 8
      %s3776 = scalar_lea.vmem %s17, %s3775
      // Predicated region
      $region93: #{_lambda_.5} parent=87 // pred_check
        %p3777 = pneg %p465
      $region94: #{_lambda_.5} parent=87 // pred_check_branch
        %3779 = sbr.rel (%p3777) target = $region96
      $region95: #{_lambda_.5} parent=87 // pred_region
        _
      $region96: #{_lambda_.5} parent=87 // pred_fallthru
        _
    $region88: #{_lambda_.5} parent=5 // pred_fallthru
      _
    %p3780 = scmp.le.s32.totalorder 2, %s23
    // Predicated region
    $region97: #{_lambda_.5} parent=5 // pred_check
      %p3781 = pneg %p3780
    $region98: #{_lambda_.5} parent=5 // pred_check_branch
      %3783 = sbr.rel (%p3781) target = $region100
    $region99: #{_lambda_.5} parent=5 // pred_region
      %s3784 = ssub.s32 %s23, 2
      // Predicated region
      $region101: #{_lambda_.5} parent=99 // pred_check
        %p3785 = pneg %p471
      $region102: #{_lambda_.5} parent=99 // pred_check_branch
        %3787 = sbr.rel (%p3785) target = $region104
      $region103: #{_lambda_.5} parent=99 // pred_region
        %p3788 = scmp.lt.s32.totalorder %s34, 1
        %s3789 = scalar_select %p3788, %s34, 1
        %s3790 = smul.addr %s3789, 32
        %s3791 = smul.addr %s3790, 8
        %s3792 = scalar_lea.vmem %s17, %s3791
      $region104: #{_lambda_.5} parent=99 // pred_fallthru
        _
    $region100: #{_lambda_.5} parent=5 // pred_fallthru
      _
  $region6: #{_lambda_.5} parent=0 // loop_footer
    %s27 = sadd.s32 1, %s23
  $region7: #{_lambda_.5} parent=0 // loop_footer_branch
    %22 = sbr.rel target = $region3
  $region8: #{_lambda_.5} parent=0 // loop_exit
    _

// kernel: _lambda_.9
$region0: #{_lambda_.9}
  #allocation0 [shape = 'u32[]', space=smem, size = 0x4, offset = 0x4, fixed_abs, tag = 'smem constant byte address 0x4 - core index']
  #allocation1 [shape = 'u32[144,128]{1,0:T(1,128)}', space=vmem, size = 0x12000, scoped, tag = 'internal scratch']
  %s0 = inlined_call_operand.vmem [shape: f32[8,128], index: 0, kind: input, shape index: {}]
  %s1 = inlined_call_operand.vmem [shape: f32[1,128], index: 1, kind: input, shape index: {}]
  %s2 = inlined_call_operand.vmem [shape: f32[1,128], index: 2, kind: input, shape index: {}]
  %s3 = inlined_call_operand.vmem [shape: f32[2,8], index: 3, kind: input, shape index: {}]
  %s4 = inlined_call_operand.vmem [shape: f32[128,5], index: 4, kind: input, shape index: {}]
  %s5 = inlined_call_operand.vmem [shape: f32[1,5], index: 5, kind: input, shape index: {}]
  %s6 = inlined_call_operand.hbm [shape: f32[2,5], index: 6, kind: output, shape index: {}]
  %s7 = sld [smem:[#allocation0]]
  $region34: #{_lambda_.9} parent=0
    _
  %s9 = ssub.s32 1, %s7
  %s10 = scalar_select 0, %s9, %s7
  $region1: #{_lambda_.9} parent=0
    #allocation2 [shape = 'u8[1024]{0}', space=vmem, size = 0x400, scoped, tag = 'output window, operand 0, single buffered']
    #allocation3 [shape = 's32[1]{0}', space=sflag, size = 0x4, scoped, tag = 'scoped memory for _lambda_.9']
    %11 = vsyncpa [#allocation3], 0
    // Predicated region
    $region2: #{_lambda_.9} parent=1 // pred_check
      _
    $region3: #{_lambda_.9} parent=1 // pred_check_branch
      %13 = sbr.rel (0) target = $region5
    $region4: #{_lambda_.9} parent=1 // pred_region
      _
    $region5: #{_lambda_.9} parent=1 // pred_fallthru
      _
    // Predicated region
    $region6: #{_lambda_.9} parent=1 // pred_check
      _
    $region7: #{_lambda_.9} parent=1 // pred_check_branch
      %15 = sbr.rel (0) target = $region9
    $region8: #{_lambda_.9} parent=1 // pred_region
      _
    $region9: #{_lambda_.9} parent=1 // pred_fallthru
      _
    // Predicated region
    $region10: #{_lambda_.9} parent=1 // pred_check
      _
    $region11: #{_lambda_.9} parent=1 // pred_check_branch
      %17 = sbr.rel (0) target = $region13
    $region12: #{_lambda_.9} parent=1 // pred_region
      _
    $region13: #{_lambda_.9} parent=1 // pred_fallthru
      _
    // Predicated region
    $region14: #{_lambda_.9} parent=1 // pred_check
      _
    $region15: #{_lambda_.9} parent=1 // pred_check_branch
      %19 = sbr.rel (0) target = $region17
    $region16: #{_lambda_.9} parent=1 // pred_region
      _
    $region17: #{_lambda_.9} parent=1 // pred_fallthru
      _
    // Predicated region
    $region18: #{_lambda_.9} parent=1 // pred_check
      _
    $region19: #{_lambda_.9} parent=1 // pred_check_branch
      %21 = sbr.rel (0) target = $region21
    $region20: #{_lambda_.9} parent=1 // pred_region
      _
    $region21: #{_lambda_.9} parent=1 // pred_fallthru
      _
    // Predicated region
    $region22: #{_lambda_.9} parent=1 // pred_check
      _
    $region23: #{_lambda_.9} parent=1 // pred_check_branch
      %23 = sbr.rel (0) target = $region25
    $region24: #{_lambda_.9} parent=1 // pred_region
      _
    $region25: #{_lambda_.9} parent=1 // pred_fallthru
      _
    %v24 = vld [vmem:[%s0] sm:$0xff]
    %25 = vadd.xlane.f32.xlu0 %v24
    %v26 = vpop.xlane.xlu0 %25
    %v27 = vrcp.pop 128.0
    %v28 = vmul.f32 %v26, %v27
    %v29 = vsub.f32 %v24, %v28
    %v30 = vmul.f32 %v29, %v29
    %31 = vadd.xlane.f32.xlu0 %v30
    %v32 = vpop.xlane.xlu0 %31
    %v33 = vmul.f32 %v32, %v27
    %v34 = vadd.f32 %v33, 1e-06
    %v35 = vrsqrt.pop %v34
    %v36 = vmul.f32 %v29, %v35
    %v37 = vld [vmem:[%s1] sm:$0x1]
    %v39 = vlaneseq
    %v40 = vshrl.u32 %v39, 7
    %v41 = vsub.s32 0, %v40
    %v42 = vrot.slane %v37, %v41
    %v44 = vmul.f32 %v36, %v42
    %v45 = vld [vmem:[%s2] sm:$0x1]
    %v47 = vlaneseq
    %v48 = vshrl.u32 %v47, 7
    %v49 = vsub.s32 0, %v48
    %v50 = vrot.slane %v45, %v49
    %v52 = vadd.f32 %v44, %v50
    %v53 = vld [vmem:[%s3] sm:$0x3]
    %vm54 = vcmask 64512
    %v56 = vsel %vm54, %v53, 0
    %58 = vmatprep.subr.mxu0 0.0
    %59 = vmatpush1.msra.mxu0 0.0
    %60 = vmatprep.subr.mxu0 0.0
    %61 = vmatpush1.msra.mxu0 0.0
    %62 = vmatprep.subr.mxu0 0.0
    %63 = vmatpush1.msra.mxu0 0.0
    %64 = vmatprep.subr.mxu0 0.0
    %65 = vmatpush1.msra.mxu0 0.0
    %66 = vmatprep.subr.mxu0 0.0
    %67 = vmatpush1.msra.mxu0 0.0
    %68 = vmatprep.subr.mxu0 0.0
    %69 = vmatpush1.msra.mxu0 0.0
    %70 = vmatprep.subr.mxu0 0.0
    %71 = vmatpush1.msra.mxu0 0.0
    %72 = vmatprep.subr.mxu0 0.0
    %73 = vmatpush1.msra.mxu0 0.0
    %74 = vmatprep.subr.mxu0 0.0
    %75 = vmatpush1.msra.mxu0 0.0
    %76 = vmatprep.subr.mxu0 0.0
    %77 = vmatpush1.msra.mxu0 0.0
    %78 = vmatprep.subr.mxu0 0.0
    %79 = vmatpush1.msra.mxu0 0.0
    %80 = vmatprep.subr.mxu0 0.0
    %81 = vmatpush1.msra.mxu0 0.0
    %82 = vmatprep.subr.mxu0 0.0
    %83 = vmatpush1.msra.mxu0 0.0
    %84 = vmatprep.subr.mxu0 0.0
    %85 = vmatpush1.msra.mxu0 0.0
    %86 = vmatprep.subr.mxu0 0.0
    %87 = vmatpush1.msra.mxu0 0.0
    %88 = vmatprep.subr.mxu0 0.0
    %89 = vmatpush1.msra.mxu0 %v52
    %90 = vmatprep.subr.mxu0 0.0
    %91 = vmatpush2.msra.mxu0 0.0
    %92 = vmatprep.subr.mxu0 0.0
    %93 = vmatpush2.msra.mxu0 0.0
    %94 = vmatprep.subr.mxu0 0.0
    %95 = vmatpush2.msra.mxu0 0.0
    %96 = vmatprep.subr.mxu0 0.0
    %97 = vmatpush2.msra.mxu0 0.0
    %98 = vmatprep.subr.mxu0 0.0
    %99 = vmatpush2.msra.mxu0 0.0
    %100 = vmatprep.subr.mxu0 0.0
    %101 = vmatpush2.msra.mxu0 0.0
    %102 = vmatprep.subr.mxu0 0.0
    %103 = vmatpush2.msra.mxu0 0.0
    %104 = vmatprep.subr.mxu0 0.0
    %105 = vmatpush2.msra.mxu0 0.0
    %106 = vmatprep.subr.mxu0 0.0
    %107 = vmatpush2.msra.mxu0 0.0
    %108 = vmatprep.subr.mxu0 0.0
    %109 = vmatpush2.msra.mxu0 0.0
    %110 = vmatprep.subr.mxu0 0.0
    %111 = vmatpush2.msra.mxu0 0.0
    %112 = vmatprep.subr.mxu0 0.0
    %113 = vmatpush2.msra.mxu0 0.0
    %114 = vmatprep.subr.mxu0 0.0
    %115 = vmatpush2.msra.mxu0 0.0
    %116 = vmatprep.subr.mxu0 0.0
    %117 = vmatpush2.msra.mxu0 0.0
    %118 = vmatprep.subr.mxu0 0.0
    %119 = vmatpush2.msra.mxu0 0.0
    %120 = vmatprep.subr.mxu0 0.0
    %121 = vmatpush2.msra.mxu0 0.0
    %122 = vmatprep.mubr.f32.mxu0 0.0
    %123 = vmatmul.mubr.f32.gmra.mxu0 %v56
    %v124 = vpop.f32.mrf.mxu0
    %v125 = vadd.f32 0.0, %v124
    %v126 = vpop.f32.mrf.mxu0
    %127 = vdwg.mxu0
    %v128 = vld [vmem:[%s4] sm:$0xff]
    %v129 = vld [vmem:[%s4 + $0x8] sm:$0xff]
    %v130 = vld [vmem:[%s4 + $0x10] sm:$0xff]
    %v131 = vld [vmem:[%s4 + $0x18] sm:$0xff]
    %v132 = vld [vmem:[%s4 + $0x20] sm:$0xff]
    %v133 = vld [vmem:[%s4 + $0x28] sm:$0xff]
    %v134 = vld [vmem:[%s4 + $0x30] sm:$0xff]
    %v135 = vld [vmem:[%s4 + $0x38] sm:$0xff]
    %v136 = vld [vmem:[%s4 + $0x40] sm:$0xff]
    %v137 = vld [vmem:[%s4 + $0x48] sm:$0xff]
    %v138 = vld [vmem:[%s4 + $0x50] sm:$0xff]
    %v139 = vld [vmem:[%s4 + $0x58] sm:$0xff]
    %v140 = vld [vmem:[%s4 + $0x60] sm:$0xff]
    %v141 = vld [vmem:[%s4 + $0x68] sm:$0xff]
    %v142 = vld [vmem:[%s4 + $0x70] sm:$0xff]
    %v143 = vld [vmem:[%s4 + $0x78] sm:$0xff]
    %v144 = vld [vmem:[%s5] sm:$0x1]
    %v146 = vlaneseq
    %v147 = vshrl.u32 %v146, 7
    %v148 = vsub.s32 0, %v147
    %v149 = vrot.slane %v144, %v148
    %151 = vmatprep.subr.mxu0 0.0
    %152 = vmatpush1.msra.mxu0 %v143
    %153 = vmatprep.subr.mxu0 0.0
    %154 = vmatpush1.msra.mxu0 %v142
    %155 = vmatprep.subr.mxu0 0.0
    %156 = vmatpush1.msra.mxu0 %v141
    %157 = vmatprep.subr.mxu0 0.0
    %158 = vmatpush1.msra.mxu0 %v140
    %159 = vmatprep.subr.mxu0 0.0
    %160 = vmatpush1.msra.mxu0 %v139
    %161 = vmatprep.subr.mxu0 0.0
    %162 = vmatpush1.msra.mxu0 %v138
    %163 = vmatprep.subr.mxu0 0.0
    %164 = vmatpush1.msra.mxu0 %v137
    %165 = vmatprep.subr.mxu0 0.0
    %166 = vmatpush1.msra.mxu0 %v136
    %167 = vmatprep.subr.mxu0 0.0
    %168 = vmatpush1.msra.mxu0 %v135
    %169 = vmatprep.subr.mxu0 0.0
    %170 = vmatpush1.msra.mxu0 %v134
    %171 = vmatprep.subr.mxu0 0.0
    %172 = vmatpush1.msra.mxu0 %v133
    %173 = vmatprep.subr.mxu0 0.0
    %174 = vmatpush1.msra.mxu0 %v132
    %175 = vmatprep.subr.mxu0 0.0
    %176 = vmatpush1.msra.mxu0 %v131
    %177 = vmatprep.subr.mxu0 0.0
    %178 = vmatpush1.msra.mxu0 %v130
    %179 = vmatprep.subr.mxu0 0.0
    %180 = vmatpush1.msra.mxu0 %v129
    %181 = vmatprep.subr.mxu0 0.0
    %182 = vmatpush1.msra.mxu0 %v128
    %183 = vmatprep.subr.mxu0 0.0
    %184 = vmatpush2.msra.mxu0 0.0
    %185 = vmatprep.subr.mxu0 0.0
    %186 = vmatpush2.msra.mxu0 0.0
    %187 = vmatprep.subr.mxu0 0.0
    %188 = vmatpush2.msra.mxu0 0.0
    %189 = vmatprep.subr.mxu0 0.0
    %190 = vmatpush2.msra.mxu0 0.0
    %191 = vmatprep.subr.mxu0 0.0
    %192 = vmatpush2.msra.mxu0 0.0
    %193 = vmatprep.subr.mxu0 0.0
    %194 = vmatpush2.msra.mxu0 0.0
    %195 = vmatprep.subr.mxu0 0.0
    %196 = vmatpush2.msra.mxu0 0.0
    %197 = vmatprep.subr.mxu0 0.0
    %198 = vmatpush2.msra.mxu0 0.0
    %199 = vmatprep.subr.mxu0 0.0
    %200 = vmatpush2.msra.mxu0 0.0
    %201 = vmatprep.subr.mxu0 0.0
    %202 = vmatpush2.msra.mxu0 0.0
    %203 = vmatprep.subr.mxu0 0.0
    %204 = vmatpush2.msra.mxu0 0.0
    %205 = vmatprep.subr.mxu0 0.0
    %206 = vmatpush2.msra.mxu0 0.0
    %207 = vmatprep.subr.mxu0 0.0
    %208 = vmatpush2.msra.mxu0 0.0
    %209 = vmatprep.subr.mxu0 0.0
    %210 = vmatpush2.msra.mxu0 0.0
    %211 = vmatprep.subr.mxu0 0.0
    %212 = vmatpush2.msra.mxu0 0.0
    %213 = vmatprep.subr.mxu0 0.0
    %214 = vmatpush2.msra.mxu0 0.0
    %215 = vmatprep.mubr.f32.mxu0 0.0
    %216 = vmatmul.mubr.f32.gmra.mxu0 %v125
    %v217 = vpop.f32.mrf.mxu0
    %v218 = vadd.f32 %v149, %v217
    %v219 = vpop.f32.mrf.mxu0
    %220 = vdwg.mxu0
    %vm221 = vcmask 33792
    %222 = vst.msk [vmem:[#allocation2] sm:$0x3] %vm221, %v218
    // Predicated region
    $region26: #{_lambda_.9} parent=1 // pred_check
      _
    $region27: #{_lambda_.9} parent=1 // pred_check_branch
      %224 = sbr.rel (0) target = $region29
    $region28: #{_lambda_.9} parent=1 // pred_region
      %s226 = ssub.s32 32, 32
      %227 = vsyncadd [#allocation3], %s226
      %s229 = sshll.u32 [#allocation2], 4
      %s230 = int_to_ptr.vmem [resolvable:$true] %s229
      %232 = dma.vmem_to_hbm [thread:$0]  %s230, 32, %s6, [#allocation3]
    $region29: #{_lambda_.9} parent=1 // pred_fallthru
      _
    // Predicated region
    $region30: #{_lambda_.9} parent=1 // pred_check
      _
    $region31: #{_lambda_.9} parent=1 // pred_check_branch
      %234 = sbr.rel (0) target = $region33
    $region32: #{_lambda_.9} parent=1 // pred_region
      %235 = dma.done [#allocation3], 32
    $region33: #{_lambda_.9} parent=1 // pred_fallthru
      _
    %236 = vsyncpa [#allocation3], 1

</llo_original>
